<compile_context>
chip_gen: v6e
topology: v6e:2x2x1
jax: 0.10.0
libtpu: 0.0.40
codegen_flags: <defaults>
</compile_context>

<pallas_src>
import functools

import jax
import jax.numpy as jnp
from jax.experimental import pallas as pl
from jax.experimental.pallas import tpu as pltpu

NUM_BANDS = 100
NUM_CLASSES = 100
BN_EPS = 1e-5
P = 3                 # universal spatial pad of the slab layout (covers 3x3 and 7x7)
LEAKY_SLOPE = 0.1
NEG_BIG = -3.0e38     # finite f32 "-inf" for masked maxima
CPAD = 128            # channel lane width of all activation slabs


# ---------------------------------------------------------------------------
# Padded-flat slab geometry:  row(y, x) = P + (y + P) * Wp + x,  Wp = W + P.
# ---------------------------------------------------------------------------
def _geom(h, w):
    wp = w + P
    hp = h + 2 * P
    stot = P + hp * wp               # covers every +/- (P*Wp + P) shifted read
    s0 = P + P * wp                  # flat row of pixel (0, 0)
    length = (h - 1) * wp + w        # span of real pixels (pad cols interleaved)
    return dict(H=h, W=w, Wp=wp, Hp=hp, Stot=stot, s0=s0, L=length,
                Spad=((stot + 15) // 16) * 16)


def _flat(g, y, x):
    return P + (y + P) * g["Wp"] + x


# ---------------------------------------------------------------------------
# The fused kernel (one image per grid step)
# ---------------------------------------------------------------------------
def _forward_kernel(x_ref,
                    w1_ref, b1_ref,
                    ca1w1_ref, ca1b1_ref, ca1w2_ref, ca1b2_ref,
                    sa1w_ref, sa1b7_ref, sa1wp_ref, sa1bp_ref,
                    w2_ref, b2_ref,
                    ca2w1_ref, ca2b1_ref, ca2w2_ref, ca2b2_ref,
                    sa2w_ref, sa2b7_ref, sa2wp_ref, sa2bp_ref,
                    w3_ref, b3_ref,
                    fc1w_ref, fc1b_ref, fc2w_ref, fc2b_ref, fc3w_ref, fc3b_ref,
                    out_ref,
                    s_c1, s_x4, s_c2, s_x2,
                    *, g8, g4, g2):
    f32 = jnp.float32

    def leaky(v):
        return jnp.where(v >= 0.0, v, LEAKY_SLOPE * v)

    def row_mask(g):
        # 1.0 on real pixels, 0.0 on the interleaved pad columns of the span.
        pat = jnp.concatenate(
            [jnp.ones((g["W"], 1), f32), jnp.zeros((g["Wp"] - g["W"], 1), f32)],
            axis=0)
        return jnp.concatenate([pat] * g["H"], axis=0)[:g["L"], :]

    def conv3x3(read, w_ref, b_ref, g, cin):
        # 3x3 conv as shifted-slab tap matmuls; taps packed in pairs -> K = 256.
        offs = [(dy - 1) * g["Wp"] + (dx - 1) for dy in range(3) for dx in range(3)]
        length, s0 = g["L"], g["s0"]
        cout = w_ref.shape[1]
        acc = jnp.zeros((length, cout), f32)
        t = 0
        while t < 9:
            n = 2 if t + 1 < 9 else 1
            parts = [read(s0 + offs[t + j], length) for j in range(n)]
            xs = parts[0] if n == 1 else jnp.concatenate(parts, axis=1)
            acc = acc + jnp.dot(xs, w_ref[t * cin:(t + n) * cin, :],
                                preferred_element_type=f32)
            t += n
        return acc + b_ref[...]

    def maxpool_into(src_ref, g_src, g_dst, dst_ref):
        # MaxPool2d(2): strided row selection instead of a dense selection matmul.
        wd = g_dst["W"]
        for i in range(g_dst["H"]):
            r0 = _flat(g_src, 2 * i, 0)
            r1 = _flat(g_src, 2 * i + 1, 0)
            a = src_ref[pl.ds(r0, wd, stride=2), :]
            b = src_ref[pl.ds(r0 + 1, wd, stride=2), :]
            c = src_ref[pl.ds(r1, wd, stride=2), :]
            d = src_ref[pl.ds(r1 + 1, wd, stride=2), :]
            pooled = jnp.maximum(jnp.maximum(a, b), jnp.maximum(c, d))
            o0 = g_dst["s0"] + i * g_dst["Wp"]
            dst_ref[o0:o0 + wd, :] = pooled.astype(dst_ref.dtype)

    def ca_sa(slab_ref, g, real_c, caw1, cab1, caw2, cab2, saw, sab7, sawp, sabp):
        s0, length, wp = g["s0"], g["L"], g["Wp"]
        hh, ww, stot = g["H"], g["W"], g["Stot"]
        cdim = slab_ref.shape[1]
        span = slab_ref[s0:s0 + length, :].astype(f32)
        rmask = row_mask(g)

        # ---- channel attention: sigmoid(fc(avg)) + sigmoid(fc(max)); x *= att
        avg = jnp.sum(span, axis=0, keepdims=True) * (1.0 / float(hh * ww))
        mx = jnp.max(jnp.where(rmask > 0.0, span, NEG_BIG), axis=0, keepdims=True)

        def fc(v):
            z = jnp.maximum(
                jnp.dot(v, caw1[...], preferred_element_type=f32) + cab1[...], 0.0)
            return jax.nn.sigmoid(
                jnp.dot(z, caw2[...], preferred_element_type=f32) + cab2[...])

        att_c = fc(avg) + fc(mx)                    # per-branch sigmoid, summed
        y = span * att_c

        # ---- spatial attention on y: 7x7 conv over [mean_c, max_c] maps
        ymean = jnp.sum(y, axis=1, keepdims=True) * (1.0 / float(real_c))
        if real_c < cdim:
            lmask = jnp.concatenate(
                [jnp.ones((1, real_c), f32), jnp.zeros((1, cdim - real_c), f32)],
                axis=1)
            ymax = jnp.max(jnp.where(lmask > 0.0, y, NEG_BIG), axis=1, keepdims=True)
        else:
            ymax = jnp.max(y, axis=1, keepdims=True)

        mm = jnp.concatenate([jnp.broadcast_to(ymean, (length, 8)),
                              jnp.broadcast_to(ymax, (length, 8))], axis=1)  # (L,16)
        mm_full = jnp.concatenate(
            [jnp.zeros((s0, 16), f32), mm,
             jnp.zeros((stot - s0 - length, 16), f32)], axis=0)   # zero-padded map

        saw_all = saw[...]                                        # (49, 16)
        acc = jnp.zeros((length, 16), f32)
        t = 0
        for dy in range(7):
            for dx in range(7):
                off = (dy - 3) * wp + (dx - 3)
                acc = acc + mm_full[s0 + off:s0 + off + length, :] * saw_all[t:t + 1, :]
                t += 1
        hsa = jnp.maximum(acc[:, 0:8] + acc[:, 8:16] + sab7[...], 0.0)   # (L, 8)
        att_s = jax.nn.sigmoid(
            jnp.sum(hsa * sawp[...], axis=1, keepdims=True) + sabp[...])  # (L, 1)

        # module applies sa(x) * x  ==  y * att_s * y
        slab_ref[s0:s0 + length, :] = (y * y * att_s).astype(slab_ref.dtype)

    def read_in(a, n):
        return x_ref[0, a:a + n, :]

    def read_x4(a, n):
        return s_x4[a:a + n, :]

    def read_x2(a, n):
        return s_x2[a:a + n, :]

    # Pooled-activation slabs must have zero pad regions (their pads ARE read by
    # the next conv).  Re-zero every step so this holds under any grid split.
    s_x4[...] = jnp.zeros_like(s_x4)
    s_x2[...] = jnp.zeros_like(s_x2)

    # ---- block 1: conv1(+BN folded)+LeakyReLU -> maxpool -> ca1*x -> sa1*x ----
    c1 = leaky(conv3x3(read_in, w1_ref, b1_ref, g8, CPAD))
    s_c1[g8["s0"]:g8["s0"] + g8["L"], :] = c1
    maxpool_into(s_c1, g8, g4, s_x4)
    ca_sa(s_x4, g4, 64, ca1w1_ref, ca1b1_ref, ca1w2_ref, ca1b2_ref,
          sa1w_ref, sa1b7_ref, sa1wp_ref, sa1bp_ref)

    # ---- block 2 ----
    c2 = leaky(conv3x3(read_x4, w2_ref, b2_ref, g4, CPAD))
    s_c2[g4["s0"]:g4["s0"] + g4["L"], :] = c2
    maxpool_into(s_c2, g4, g2, s_x2)
    ca_sa(s_x2, g2, 128, ca2w1_ref, ca2b1_ref, ca2w2_ref, ca2b2_ref,
          sa2w_ref, sa2b7_ref, sa2wp_ref, sa2bp_ref)

    # ---- block 3: conv3 -> global avg pool -> classifier ----
    c3 = leaky(conv3x3(read_x2, w3_ref, b3_ref, g2, CPAD))
    pooled = jnp.sum(c3 * row_mask(g2), axis=0, keepdims=True) * \
        (1.0 / float(g2["H"] * g2["W"]))
    h = jnp.dot(pooled, fc1w_ref[...], preferred_element_type=f32) + fc1b_ref[...]
    h = h * jax.nn.sigmoid(h)                       # SiLU
    # TODO(synk): Dropout(0.5) is identity at inference; not modeled.
    h = jnp.dot(h, fc2w_ref[...], preferred_element_type=f32) + fc2b_ref[...]
    h = h * jax.nn.sigmoid(h)
    logits = jnp.dot(h, fc3w_ref[...], preferred_element_type=f32) + fc3b_ref[...]
    out_ref[0] = logits


# ---------------------------------------------------------------------------
# Parameters (BN folded, kernel-ready shapes) and the wrapper
# ---------------------------------------------------------------------------
def init_params(key, in_channels=NUM_BANDS, num_classes=NUM_CLASSES):
    keys = iter(jax.random.split(key, 64))

    def nrm(shape, scale=0.05):
        return jax.random.normal(next(keys), shape, jnp.float32) * scale

    def conv_bn(cin, cout, cout_pad):
        w = nrm((3, 3, cin, cout))
        b = nrm((cout,))
        gamma = 1.0 + nrm((cout,), 0.1)
        beta = nrm((cout,), 0.1)
        mean = nrm((cout,), 0.1)
        var = jnp.abs(nrm((cout,), 0.1)) + 1.0
        s = gamma / jnp.sqrt(var + BN_EPS)
        w = w * s
        bias = (b - mean) * s + beta
        w = jnp.pad(w, ((0, 0), (0, 0), (0, CPAD - cin), (0, cout_pad - cout)))
        bias = jnp.pad(bias, ((0, cout_pad - cout),))
        w = w.reshape(9 * CPAD, cout_pad).astype(jnp.bfloat16)   # taps row-major
        return w, bias.reshape(1, cout_pad).astype(jnp.float32)

    def ca(c, r=16):
        hdim = c // r
        return dict(
            w1=jnp.pad(nrm((c, hdim)), ((0, CPAD - c), (0, 0))),
            b1=nrm((1, hdim)),
            w2=jnp.pad(nrm((hdim, c)), ((0, 0), (0, CPAD - c))),
            b2=jnp.pad(nrm((1, c)), ((0, 0), (0, CPAD - c))))

    def sa():
        w7 = nrm((7, 7, 2, 8))
        w_mean = w7[:, :, 0, :].reshape(49, 8)
        w_max = w7[:, :, 1, :].reshape(49, 8)
        return dict(w=jnp.concatenate([w_mean, w_max], axis=1),   # (49, 16)
                    b7=nrm((1, 8)), wp=nrm((1, 8)), bp=nrm((1, 1)))

    nclass_pad = max(128, ((num_classes + 127) // 128) * 128)

    p = {}
    p["w1"], p["b1"] = conv_bn(in_channels, 64, CPAD)     # block-1 padded to 128 lanes
    p["ca1"], p["sa1"] = ca(64), sa()
    p["w2"], p["b2"] = conv_bn(64, 128, CPAD)
    p["ca2"], p["sa2"] = ca(128), sa()
    p["w3"], p["b3"] = conv_bn(128, 256, 256)
    p["fc1_w"], p["fc1_b"] = nrm((256, 128)), nrm((1, 128))
    p["fc2_w"], p["fc2_b"] = nrm((128, 64)), nrm((1, 64))
    p["fc3_w"] = jnp.pad(nrm((64, num_classes)), ((0, 0), (0, nclass_pad - num_classes)))
    p["fc3_b"] = jnp.pad(nrm((1, num_classes)), ((0, 0), (0, nclass_pad - num_classes)))
    return p


def _build_input_slab(x_nchw, g8):
    b, c, h, w = x_nchw.shape
    x = jnp.transpose(x_nchw, (0, 2, 3, 1)).astype(jnp.float32)
    x = jnp.pad(x, ((0, 0), (0, 0), (0, 0), (0, CPAD - c)))
    buf = jnp.zeros((b, g8["Hp"], g8["Wp"], CPAD), jnp.float32)
    buf = buf.at[:, P:P + h, 0:w, :].set(x)
    slab = buf.reshape(b, g8["Hp"] * g8["Wp"], CPAD)
    slab = jnp.concatenate([jnp.zeros((b, P, CPAD), jnp.float32), slab], axis=1)
    extra = g8["Spad"] - g8["Stot"]
    if extra:
        slab = jnp.pad(slab, ((0, 0), (0, extra), (0, 0)))
    return slab.astype(jnp.bfloat16)


def hyperspectral_cnn_forward(x_nchw, params, num_classes=NUM_CLASSES):
    batch, cin, h, w = x_nchw.shape
    assert h % 4 == 0 and w % 4 == 0, "spatial dims must be divisible by 4"
    assert cin <= CPAD

    g8 = _geom(h, w)
    g4 = _geom(h // 2, w // 2)
    g2 = _geom(h // 4, w // 4)

    x_slab = _build_input_slab(x_nchw, g8)                  # (B, S8, 128) bf16
    nclass_pad = params["fc3_w"].shape[1]

    inputs = [
        x_slab,
        params["w1"], params["b1"],
        params["ca1"]["w1"], params["ca1"]["b1"],
        params["ca1"]["w2"], params["ca1"]["b2"],
        params["sa1"]["w"], params["sa1"]["b7"], params["sa1"]["wp"], params["sa1"]["bp"],
        params["w2"], params["b2"],
        params["ca2"]["w1"], params["ca2"]["b1"],
        params["ca2"]["w2"], params["ca2"]["b2"],
        params["sa2"]["w"], params["sa2"]["b7"], params["sa2"]["wp"], params["sa2"]["bp"],
        params["w3"], params["b3"],
        params["fc1_w"], params["fc1_b"], params["fc2_w"], params["fc2_b"],
        params["fc3_w"], params["fc3_b"],
    ]

    def const_spec(a):
        nd = a.ndim
        return pl.BlockSpec(a.shape, lambda b, _nd=nd: (0,) * _nd)

    in_specs = [pl.BlockSpec((1, x_slab.shape[1], CPAD), lambda b: (b, 0, 0))]
    in_specs += [const_spec(a) for a in inputs[1:]]

    out = pl.pallas_call(
        functools.partial(_forward_kernel, g8=g8, g4=g4, g2=g2),
        out_shape=jax.ShapeDtypeStruct((batch, 1, nclass_pad), jnp.float32),
        grid=(batch,),
        in_specs=in_specs,
        out_specs=pl.BlockSpec((1, 1, nclass_pad), lambda b: (b, 0, 0)),
        scratch_shapes=[
            pltpu.VMEM((g8["Spad"], CPAD), jnp.float32),    # conv1 output (pre-pool)
            pltpu.VMEM((g4["Spad"], CPAD), jnp.bfloat16),   # activations @ 1/2 res
            pltpu.VMEM((g4["Spad"], CPAD), jnp.float32),    # conv2 output (pre-pool)
            pltpu.VMEM((g2["Spad"], CPAD), jnp.bfloat16),   # activations @ 1/4 res
        ],
        compiler_params=pltpu.CompilerParams(
            dimension_semantics=("parallel",),              # v7x: batch split across TCs
            vmem_limit_bytes=32 * 1024 * 1024,
        ),
    )(*inputs)

    return out[:, 0, :num_classes]


if __name__ == "__main__":
    B, C_IN, H, W = 2, NUM_BANDS, 8, 8
    x = jax.random.normal(jax.random.PRNGKey(0), (B, C_IN, H, W), jnp.float32)
    params = init_params(jax.random.PRNGKey(42))

    out = jax.jit(hyperspectral_cnn_forward)(x, params)
    out = jax.block_until_ready(out)
    assert out.shape == (B, NUM_CLASSES), out.shape
    assert bool(jnp.all(jnp.isfinite(out)))
    print("KERNEL_OK")
</pallas_src>

<mosaic_0001>
module attributes {stable_mosaic.version = 11 : i64} {
  func.func @_forward_kernel(%arg0: i32, %arg1: memref<1x160x128xbf16, #tpu.memory_space<vmem>>, %arg2: memref<1152x128xbf16, #tpu.memory_space<vmem>>, %arg3: memref<1x128xf32, #tpu.memory_space<vmem>>, %arg4: memref<128x4xf32, #tpu.memory_space<vmem>>, %arg5: memref<1x4xf32, #tpu.memory_space<vmem>>, %arg6: memref<4x128xf32, #tpu.memory_space<vmem>>, %arg7: memref<1x128xf32, #tpu.memory_space<vmem>>, %arg8: memref<49x16xf32, #tpu.memory_space<vmem>>, %arg9: memref<1x8xf32, #tpu.memory_space<vmem>>, %arg10: memref<1x8xf32, #tpu.memory_space<vmem>>, %arg11: memref<1x1xf32, #tpu.memory_space<vmem>>, %arg12: memref<1152x128xbf16, #tpu.memory_space<vmem>>, %arg13: memref<1x128xf32, #tpu.memory_space<vmem>>, %arg14: memref<128x8xf32, #tpu.memory_space<vmem>>, %arg15: memref<1x8xf32, #tpu.memory_space<vmem>>, %arg16: memref<8x128xf32, #tpu.memory_space<vmem>>, %arg17: memref<1x128xf32, #tpu.memory_space<vmem>>, %arg18: memref<49x16xf32, #tpu.memory_space<vmem>>, %arg19: memref<1x8xf32, #tpu.memory_space<vmem>>, %arg20: memref<1x8xf32, #tpu.memory_space<vmem>>, %arg21: memref<1x1xf32, #tpu.memory_space<vmem>>, %arg22: memref<1152x256xbf16, #tpu.memory_space<vmem>>, %arg23: memref<1x256xf32, #tpu.memory_space<vmem>>, %arg24: memref<256x128xf32, #tpu.memory_space<vmem>>, %arg25: memref<1x128xf32, #tpu.memory_space<vmem>>, %arg26: memref<128x64xf32, #tpu.memory_space<vmem>>, %arg27: memref<1x64xf32, #tpu.memory_space<vmem>>, %arg28: memref<64x128xf32, #tpu.memory_space<vmem>>, %arg29: memref<1x128xf32, #tpu.memory_space<vmem>>, %arg30: memref<1x1x128xf32, #tpu.memory_space<vmem>>, %arg31: memref<160x128xf32, #tpu.memory_space<vmem>>, %arg32: memref<80x128xbf16, #tpu.memory_space<vmem>>, %arg33: memref<80x128xf32, #tpu.memory_space<vmem>>, %arg34: memref<48x128xbf16, #tpu.memory_space<vmem>>) attributes {dimension_semantics = [#tpu.dimension_semantics<parallel>], iteration_bounds = array<i64: 2>, scalar_prefetch = 0 : i64, scratch_operands = 4 : i64, tpu.core_type = #tpu.core_type<tc>, window_params = [{transform_indices = @transform_0, window_bounds = array<i64: 1, 160, 128>}, {pipeline_mode = #tpu.pipeline_mode<synchronous>, transform_indices = @transform_1, window_bounds = array<i64: 1152, 128>}, {pipeline_mode = #tpu.pipeline_mode<synchronous>, transform_indices = @transform_2, window_bounds = array<i64: 1, 128>}, {pipeline_mode = #tpu.pipeline_mode<synchronous>, transform_indices = @transform_3, window_bounds = array<i64: 128, 4>}, {pipeline_mode = #tpu.pipeline_mode<synchronous>, transform_indices = @transform_4, window_bounds = array<i64: 1, 4>}, {pipeline_mode = #tpu.pipeline_mode<synchronous>, transform_indices = @transform_5, window_bounds = array<i64: 4, 128>}, {pipeline_mode = #tpu.pipeline_mode<synchronous>, transform_indices = @transform_6, window_bounds = array<i64: 1, 128>}, {pipeline_mode = #tpu.pipeline_mode<synchronous>, transform_indices = @transform_7, window_bounds = array<i64: 49, 16>}, {pipeline_mode = #tpu.pipeline_mode<synchronous>, transform_indices = @transform_8, window_bounds = array<i64: 1, 8>}, {pipeline_mode = #tpu.pipeline_mode<synchronous>, transform_indices = @transform_9, window_bounds = array<i64: 1, 8>}, {pipeline_mode = #tpu.pipeline_mode<synchronous>, transform_indices = @transform_10, window_bounds = array<i64: 1, 1>}, {pipeline_mode = #tpu.pipeline_mode<synchronous>, transform_indices = @transform_11, window_bounds = array<i64: 1152, 128>}, {pipeline_mode = #tpu.pipeline_mode<synchronous>, transform_indices = @transform_12, window_bounds = array<i64: 1, 128>}, {pipeline_mode = #tpu.pipeline_mode<synchronous>, transform_indices = @transform_13, window_bounds = array<i64: 128, 8>}, {pipeline_mode = #tpu.pipeline_mode<synchronous>, transform_indices = @transform_14, window_bounds = array<i64: 1, 8>}, {pipeline_mode = #tpu.pipeline_mode<synchronous>, transform_indices = @transform_15, window_bounds = array<i64: 8, 128>}, {pipeline_mode = #tpu.pipeline_mode<synchronous>, transform_indices = @transform_16, window_bounds = array<i64: 1, 128>}, {pipeline_mode = #tpu.pipeline_mode<synchronous>, transform_indices = @transform_17, window_bounds = array<i64: 49, 16>}, {pipeline_mode = #tpu.pipeline_mode<synchronous>, transform_indices = @transform_18, window_bounds = array<i64: 1, 8>}, {pipeline_mode = #tpu.pipeline_mode<synchronous>, transform_indices = @transform_19, window_bounds = array<i64: 1, 8>}, {pipeline_mode = #tpu.pipeline_mode<synchronous>, transform_indices = @transform_20, window_bounds = array<i64: 1, 1>}, {pipeline_mode = #tpu.pipeline_mode<synchronous>, transform_indices = @transform_21, window_bounds = array<i64: 1152, 256>}, {pipeline_mode = #tpu.pipeline_mode<synchronous>, transform_indices = @transform_22, window_bounds = array<i64: 1, 256>}, {pipeline_mode = #tpu.pipeline_mode<synchronous>, transform_indices = @transform_23, window_bounds = array<i64: 256, 128>}, {pipeline_mode = #tpu.pipeline_mode<synchronous>, transform_indices = @transform_24, window_bounds = array<i64: 1, 128>}, {pipeline_mode = #tpu.pipeline_mode<synchronous>, transform_indices = @transform_25, window_bounds = array<i64: 128, 64>}, {pipeline_mode = #tpu.pipeline_mode<synchronous>, transform_indices = @transform_26, window_bounds = array<i64: 1, 64>}, {pipeline_mode = #tpu.pipeline_mode<synchronous>, transform_indices = @transform_27, window_bounds = array<i64: 64, 128>}, {pipeline_mode = #tpu.pipeline_mode<synchronous>, transform_indices = @transform_28, window_bounds = array<i64: 1, 128>}, {transform_indices = @transform_29, window_bounds = array<i64: 1, 1, 128>}]} {
    %cst = arith.constant 0.000000e+00 : bf16
    %0 = vector.broadcast %cst : bf16 to vector<80x128xbf16>
    %c0 = arith.constant 0 : index
    %c0_0 = arith.constant 0 : index
    %1 = vector.load %arg32[%c0, %c0_0] : memref<80x128xbf16, #tpu.memory_space<vmem>>, vector<80x128xbf16>
    tpu.vector_store %arg32[%c0, %c0_0], %0 {strides = array<i32>} : memref<80x128xbf16, #tpu.memory_space<vmem>>, vector<80x128xbf16>,
    %cst_1 = arith.constant 0.000000e+00 : bf16
    %2 = vector.broadcast %cst_1 : bf16 to vector<48x128xbf16>
    %c0_2 = arith.constant 0 : index
    %c0_3 = arith.constant 0 : index
    %3 = vector.load %arg34[%c0_2, %c0_3] : memref<48x128xbf16, #tpu.memory_space<vmem>>, vector<48x128xbf16>
    tpu.vector_store %arg34[%c0_2, %c0_3], %2 {strides = array<i32>} : memref<48x128xbf16, #tpu.memory_space<vmem>>, vector<48x128xbf16>,
    %cst_4 = arith.constant 0.000000e+00 : f32
    %4 = vector.broadcast %cst_4 : f32 to vector<85x128xf32>
    %c0_5 = arith.constant 0 : index
    %c24 = arith.constant 24 : index
    %c0_6 = arith.constant 0 : index
    %5 = vector.load %arg1[%c0_5, %c24, %c0_6] : memref<1x160x128xbf16, #tpu.memory_space<vmem>>, vector<1x85x128xbf16>
    %6 = vector.shape_cast %5 : vector<1x85x128xbf16> to vector<85x128xbf16>
    %c0_7 = arith.constant 0 : index
    %c25 = arith.constant 25 : index
    %c0_8 = arith.constant 0 : index
    %7 = vector.load %arg1[%c0_7, %c25, %c0_8] : memref<1x160x128xbf16, #tpu.memory_space<vmem>>, vector<1x85x128xbf16>
    %8 = vector.shape_cast %7 : vector<1x85x128xbf16> to vector<85x128xbf16>
    %9 = tpu.concatenate %6, %8 in 1 : vector<85x128xbf16>, vector<85x128xbf16> -> vector<85x256xbf16>
    %c0_9 = arith.constant 0 : index
    %c0_10 = arith.constant 0 : index
    %10 = vector.load %arg2[%c0_9, %c0_10] : memref<1152x128xbf16, #tpu.memory_space<vmem>>, vector<256x128xbf16>
    %cst_11 = arith.constant dense<0.000000e+00> : vector<85x128xf32>
    %11 = tpu.matmul %9, %10, %cst_11 {dimension_numbers = #tpu.dot_dimension_numbers<[1], [0], [0], [1], [0, 0, 1, 1], [], []>} : vector<85x256xbf16>, vector<256x128xbf16>, vector<85x128xf32> -> vector<85x128xf32>
    %12 = arith.addf %4, %11 : vector<85x128xf32>
    %c0_12 = arith.constant 0 : index
    %c26 = arith.constant 26 : index
    %c0_13 = arith.constant 0 : index
    %13 = vector.load %arg1[%c0_12, %c26, %c0_13] : memref<1x160x128xbf16, #tpu.memory_space<vmem>>, vector<1x85x128xbf16>
    %14 = vector.shape_cast %13 : vector<1x85x128xbf16> to vector<85x128xbf16>
    %c0_14 = arith.constant 0 : index
    %c35 = arith.constant 35 : index
    %c0_15 = arith.constant 0 : index
    %15 = vector.load %arg1[%c0_14, %c35, %c0_15] : memref<1x160x128xbf16, #tpu.memory_space<vmem>>, vector<1x85x128xbf16>
    %16 = vector.shape_cast %15 : vector<1x85x128xbf16> to vector<85x128xbf16>
    %17 = tpu.concatenate %14, %16 in 1 : vector<85x128xbf16>, vector<85x128xbf16> -> vector<85x256xbf16>
    %c256 = arith.constant 256 : index
    %c0_16 = arith.constant 0 : index
    %18 = vector.load %arg2[%c256, %c0_16] : memref<1152x128xbf16, #tpu.memory_space<vmem>>, vector<256x128xbf16>
    %cst_17 = arith.constant dense<0.000000e+00> : vector<85x128xf32>
    %19 = tpu.matmul %17, %18, %cst_17 {dimension_numbers = #tpu.dot_dimension_numbers<[1], [0], [0], [1], [0, 0, 1, 1], [], []>} : vector<85x256xbf16>, vector<256x128xbf16>, vector<85x128xf32> -> vector<85x128xf32>
    %20 = arith.addf %12, %19 : vector<85x128xf32>
    %c0_18 = arith.constant 0 : index
    %c36 = arith.constant 36 : index
    %c0_19 = arith.constant 0 : index
    %21 = vector.load %arg1[%c0_18, %c36, %c0_19] : memref<1x160x128xbf16, #tpu.memory_space<vmem>>, vector<1x85x128xbf16>
    %22 = vector.shape_cast %21 : vector<1x85x128xbf16> to vector<85x128xbf16>
    %c0_20 = arith.constant 0 : index
    %c37 = arith.constant 37 : index
    %c0_21 = arith.constant 0 : index
    %23 = vector.load %arg1[%c0_20, %c37, %c0_21] : memref<1x160x128xbf16, #tpu.memory_space<vmem>>, vector<1x85x128xbf16>
    %24 = vector.shape_cast %23 : vector<1x85x128xbf16> to vector<85x128xbf16>
    %25 = tpu.concatenate %22, %24 in 1 : vector<85x128xbf16>, vector<85x128xbf16> -> vector<85x256xbf16>
    %c512 = arith.constant 512 : index
    %c0_22 = arith.constant 0 : index
    %26 = vector.load %arg2[%c512, %c0_22] : memref<1152x128xbf16, #tpu.memory_space<vmem>>, vector<256x128xbf16>
    %cst_23 = arith.constant dense<0.000000e+00> : vector<85x128xf32>
    %27 = tpu.matmul %25, %26, %cst_23 {dimension_numbers = #tpu.dot_dimension_numbers<[1], [0], [0], [1], [0, 0, 1, 1], [], []>} : vector<85x256xbf16>, vector<256x128xbf16>, vector<85x128xf32> -> vector<85x128xf32>
    %28 = arith.addf %20, %27 : vector<85x128xf32>
    %c0_24 = arith.constant 0 : index
    %c46 = arith.constant 46 : index
    %c0_25 = arith.constant 0 : index
    %29 = vector.load %arg1[%c0_24, %c46, %c0_25] : memref<1x160x128xbf16, #tpu.memory_space<vmem>>, vector<1x85x128xbf16>
    %30 = vector.shape_cast %29 : vector<1x85x128xbf16> to vector<85x128xbf16>
    %c0_26 = arith.constant 0 : index
    %c47 = arith.constant 47 : index
    %c0_27 = arith.constant 0 : index
    %31 = vector.load %arg1[%c0_26, %c47, %c0_27] : memref<1x160x128xbf16, #tpu.memory_space<vmem>>, vector<1x85x128xbf16>
    %32 = vector.shape_cast %31 : vector<1x85x128xbf16> to vector<85x128xbf16>
    %33 = tpu.concatenate %30, %32 in 1 : vector<85x128xbf16>, vector<85x128xbf16> -> vector<85x256xbf16>
    %c768 = arith.constant 768 : index
    %c0_28 = arith.constant 0 : index
    %34 = vector.load %arg2[%c768, %c0_28] : memref<1152x128xbf16, #tpu.memory_space<vmem>>, vector<256x128xbf16>
    %cst_29 = arith.constant dense<0.000000e+00> : vector<85x128xf32>
    %35 = tpu.matmul %33, %34, %cst_29 {dimension_numbers = #tpu.dot_dimension_numbers<[1], [0], [0], [1], [0, 0, 1, 1], [], []>} : vector<85x256xbf16>, vector<256x128xbf16>, vector<85x128xf32> -> vector<85x128xf32>
    %36 = arith.addf %28, %35 : vector<85x128xf32>
    %c0_30 = arith.constant 0 : index
    %c48 = arith.constant 48 : index
    %c0_31 = arith.constant 0 : index
    %37 = vector.load %arg1[%c0_30, %c48, %c0_31] : memref<1x160x128xbf16, #tpu.memory_space<vmem>>, vector<1x85x128xbf16>
    %38 = vector.shape_cast %37 : vector<1x85x128xbf16> to vector<85x128xbf16>
    %c1024 = arith.constant 1024 : index
    %c0_32 = arith.constant 0 : index
    %39 = vector.load %arg2[%c1024, %c0_32] : memref<1152x128xbf16, #tpu.memory_space<vmem>>, vector<128x128xbf16>
    %cst_33 = arith.constant dense<0.000000e+00> : vector<85x128xf32>
    %40 = tpu.matmul %38, %39, %cst_33 {dimension_numbers = #tpu.dot_dimension_numbers<[1], [0], [0], [1], [0, 0, 1, 1], [], []>} : vector<85x128xbf16>, vector<128x128xbf16>, vector<85x128xf32> -> vector<85x128xf32>
    %41 = arith.addf %36, %40 : vector<85x128xf32>
    %c0_34 = arith.constant 0 : index
    %c0_35 = arith.constant 0 : index
    %42 = vector.load %arg3[%c0_34, %c0_35] : memref<1x128xf32, #tpu.memory_space<vmem>>, vector<1x128xf32>
    %43 = vector.broadcast %42 : vector<1x128xf32> to vector<85x128xf32>
    %44 = arith.addf %41, %43 : vector<85x128xf32>
    %cst_36 = arith.constant 0.000000e+00 : f32
    %45 = vector.broadcast %cst_36 : f32 to vector<85x128xf32>
    %46 = arith.cmpf oge, %44, %45 : vector<85x128xf32>
    %cst_37 = arith.constant 1.000000e-01 : f32
    %47 = vector.broadcast %cst_37 : f32 to vector<85x128xf32>
    %48 = arith.mulf %47, %44 : vector<85x128xf32>
    %49 = arith.select %46, %44, %48 : vector<85x128xi1>, vector<85x128xf32>
    %c36_38 = arith.constant 36 : index
    %c0_39 = arith.constant 0 : index
    %50 = vector.load %arg31[%c36_38, %c0_39] : memref<160x128xf32, #tpu.memory_space<vmem>>, vector<85x128xf32>
    tpu.vector_store %arg31[%c36_38, %c0_39], %49 {strides = array<i32>} : memref<160x128xf32, #tpu.memory_space<vmem>>, vector<85x128xf32>,
    %c36_40 = arith.constant 36 : index
    %c0_41 = arith.constant 0 : index
    %51 = tpu.strided_load %arg31[%c36_40, %c0_41] {strides = array<i32: 2, 1>} : memref<160x128xf32, #tpu.memory_space<vmem>>, vector<4x128xf32>
    %c37_42 = arith.constant 37 : index
    %c0_43 = arith.constant 0 : index
    %52 = tpu.strided_load %arg31[%c37_42, %c0_43] {strides = array<i32: 2, 1>} : memref<160x128xf32, #tpu.memory_space<vmem>>, vector<4x128xf32>
    %c47_44 = arith.constant 47 : index
    %c0_45 = arith.constant 0 : index
    %53 = tpu.strided_load %arg31[%c47_44, %c0_45] {strides = array<i32: 2, 1>} : memref<160x128xf32, #tpu.memory_space<vmem>>, vector<4x128xf32>
    %c48_46 = arith.constant 48 : index
    %c0_47 = arith.constant 0 : index
    %54 = tpu.strided_load %arg31[%c48_46, %c0_47] {strides = array<i32: 2, 1>} : memref<160x128xf32, #tpu.memory_space<vmem>>, vector<4x128xf32>
    %55 = arith.maximumf %51, %52 : vector<4x128xf32>
    %56 = arith.maximumf %53, %54 : vector<4x128xf32>
    %57 = arith.maximumf %55, %56 : vector<4x128xf32>
    %58 = arith.truncf %57 : vector<4x128xf32> to vector<4x128xbf16>
    %c24_48 = arith.constant 24 : index
    %c0_49 = arith.constant 0 : index
    %59 = vector.load %arg32[%c24_48, %c0_49] : memref<80x128xbf16, #tpu.memory_space<vmem>>, vector<4x128xbf16>
    tpu.vector_store %arg32[%c24_48, %c0_49], %58 {strides = array<i32>} : memref<80x128xbf16, #tpu.memory_space<vmem>>, vector<4x128xbf16>,
    %c58 = arith.constant 58 : index
    %c0_50 = arith.constant 0 : index
    %60 = tpu.strided_load %arg31[%c58, %c0_50] {strides = array<i32: 2, 1>} : memref<160x128xf32, #tpu.memory_space<vmem>>, vector<4x128xf32>
    %c59 = arith.constant 59 : index
    %c0_51 = arith.constant 0 : index
    %61 = tpu.strided_load %arg31[%c59, %c0_51] {strides = array<i32: 2, 1>} : memref<160x128xf32, #tpu.memory_space<vmem>>, vector<4x128xf32>
    %c69 = arith.constant 69 : index
    %c0_52 = arith.constant 0 : index
    %62 = tpu.strided_load %arg31[%c69, %c0_52] {strides = array<i32: 2, 1>} : memref<160x128xf32, #tpu.memory_space<vmem>>, vector<4x128xf32>
    %c70 = arith.constant 70 : index
    %c0_53 = arith.constant 0 : index
    %63 = tpu.strided_load %arg31[%c70, %c0_53] {strides = array<i32: 2, 1>} : memref<160x128xf32, #tpu.memory_space<vmem>>, vector<4x128xf32>
    %64 = arith.maximumf %60, %61 : vector<4x128xf32>
    %65 = arith.maximumf %62, %63 : vector<4x128xf32>
    %66 = arith.maximumf %64, %65 : vector<4x128xf32>
    %67 = arith.truncf %66 : vector<4x128xf32> to vector<4x128xbf16>
    %c31 = arith.constant 31 : index
    %c0_54 = arith.constant 0 : index
    %68 = vector.load %arg32[%c31, %c0_54] : memref<80x128xbf16, #tpu.memory_space<vmem>>, vector<4x128xbf16>
    tpu.vector_store %arg32[%c31, %c0_54], %67 {strides = array<i32>} : memref<80x128xbf16, #tpu.memory_space<vmem>>, vector<4x128xbf16>,
    %c80 = arith.constant 80 : index
    %c0_55 = arith.constant 0 : index
    %69 = tpu.strided_load %arg31[%c80, %c0_55] {strides = array<i32: 2, 1>} : memref<160x128xf32, #tpu.memory_space<vmem>>, vector<4x128xf32>
    %c81 = arith.constant 81 : index
    %c0_56 = arith.constant 0 : index
    %70 = tpu.strided_load %arg31[%c81, %c0_56] {strides = array<i32: 2, 1>} : memref<160x128xf32, #tpu.memory_space<vmem>>, vector<4x128xf32>
    %c91 = arith.constant 91 : index
    %c0_57 = arith.constant 0 : index
    %71 = tpu.strided_load %arg31[%c91, %c0_57] {strides = array<i32: 2, 1>} : memref<160x128xf32, #tpu.memory_space<vmem>>, vector<4x128xf32>
    %c92 = arith.constant 92 : index
    %c0_58 = arith.constant 0 : index
    %72 = tpu.strided_load %arg31[%c92, %c0_58] {strides = array<i32: 2, 1>} : memref<160x128xf32, #tpu.memory_space<vmem>>, vector<4x128xf32>
    %73 = arith.maximumf %69, %70 : vector<4x128xf32>
    %74 = arith.maximumf %71, %72 : vector<4x128xf32>
    %75 = arith.maximumf %73, %74 : vector<4x128xf32>
    %76 = arith.truncf %75 : vector<4x128xf32> to vector<4x128xbf16>
    %c38 = arith.constant 38 : index
    %c0_59 = arith.constant 0 : index
    %77 = vector.load %arg32[%c38, %c0_59] : memref<80x128xbf16, #tpu.memory_space<vmem>>, vector<4x128xbf16>
    tpu.vector_store %arg32[%c38, %c0_59], %76 {strides = array<i32>} : memref<80x128xbf16, #tpu.memory_space<vmem>>, vector<4x128xbf16>,
    %c102 = arith.constant 102 : index
    %c0_60 = arith.constant 0 : index
    %78 = tpu.strided_load %arg31[%c102, %c0_60] {strides = array<i32: 2, 1>} : memref<160x128xf32, #tpu.memory_space<vmem>>, vector<4x128xf32>
    %c103 = arith.constant 103 : index
    %c0_61 = arith.constant 0 : index
    %79 = tpu.strided_load %arg31[%c103, %c0_61] {strides = array<i32: 2, 1>} : memref<160x128xf32, #tpu.memory_space<vmem>>, vector<4x128xf32>
    %c113 = arith.constant 113 : index
    %c0_62 = arith.constant 0 : index
    %80 = tpu.strided_load %arg31[%c113, %c0_62] {strides = array<i32: 2, 1>} : memref<160x128xf32, #tpu.memory_space<vmem>>, vector<4x128xf32>
    %c114 = arith.constant 114 : index
    %c0_63 = arith.constant 0 : index
    %81 = tpu.strided_load %arg31[%c114, %c0_63] {strides = array<i32: 2, 1>} : memref<160x128xf32, #tpu.memory_space<vmem>>, vector<4x128xf32>
    %82 = arith.maximumf %78, %79 : vector<4x128xf32>
    %83 = arith.maximumf %80, %81 : vector<4x128xf32>
    %84 = arith.maximumf %82, %83 : vector<4x128xf32>
    %85 = arith.truncf %84 : vector<4x128xf32> to vector<4x128xbf16>
    %c45 = arith.constant 45 : index
    %c0_64 = arith.constant 0 : index
    %86 = vector.load %arg32[%c45, %c0_64] : memref<80x128xbf16, #tpu.memory_space<vmem>>, vector<4x128xbf16>
    tpu.vector_store %arg32[%c45, %c0_64], %85 {strides = array<i32>} : memref<80x128xbf16, #tpu.memory_space<vmem>>, vector<4x128xbf16>,
    %c24_65 = arith.constant 24 : index
    %c0_66 = arith.constant 0 : index
    %87 = vector.load %arg32[%c24_65, %c0_66] : memref<80x128xbf16, #tpu.memory_space<vmem>>, vector<25x128xbf16>
    %88 = arith.extf %87 : vector<25x128xbf16> to vector<25x128xf32>
    %cst_67 = arith.constant 1.000000e+00 : f32
    %89 = vector.broadcast %cst_67 : f32 to vector<4x1xf32>
    %cst_68 = arith.constant 0.000000e+00 : f32
    %90 = vector.broadcast %cst_68 : f32 to vector<3x1xf32>
    %91 = tpu.concatenate %89, %90 in 0 : vector<4x1xf32>, vector<3x1xf32> -> vector<7x1xf32>
    %92 = tpu.concatenate %91, %91, %91, %91 in 0 : vector<7x1xf32>, vector<7x1xf32>, vector<7x1xf32>, vector<7x1xf32> -> vector<28x1xf32>
    %93 = vector.extract_strided_slice %92 {offsets = [0, 0], sizes = [25, 1], strides = [1, 1]} : vector<28x1xf32> to vector<25x1xf32>
    %cst_69 = arith.constant dense<0.000000e+00> : vector<128xf32>
    %94 = vector.multi_reduction <add>, %88, %cst_69 [0] : vector<25x128xf32> to vector<128xf32>
    %95 = vector.shape_cast %94 : vector<128xf32> to vector<1x128xf32>
    %cst_70 = arith.constant 6.250000e-02 : f32
    %96 = vector.broadcast %cst_70 : f32 to vector<1x128xf32>
    %97 = arith.mulf %95, %96 : vector<1x128xf32>
    %cst_71 = arith.constant 0.000000e+00 : f32
    %98 = vector.broadcast %cst_71 : f32 to vector<25x1xf32>
    %99 = arith.cmpf ogt, %93, %98 : vector<25x1xf32>
    %cst_72 = arith.constant -3.000000e+38 : f32
    %100 = vector.shape_cast %99 : vector<25x1xi1> to vector<25x1xi1>
    %101 = vector.broadcast %100 : vector<25x1xi1> to vector<25x128xi1>
    %102 = vector.broadcast %cst_72 : f32 to vector<25x128xf32>
    %103 = arith.select %101, %88, %102 : vector<25x128xi1>, vector<25x128xf32>
    %cst_73 = arith.constant dense<0xFF800000> : vector<128xf32>
    %104 = vector.multi_reduction <maximumf>, %103, %cst_73 [0] : vector<25x128xf32> to vector<128xf32>
    %105 = vector.shape_cast %104 : vector<128xf32> to vector<1x128xf32>
    %c0_74 = arith.constant 0 : index
    %c0_75 = arith.constant 0 : index
    %106 = vector.load %arg4[%c0_74, %c0_75] : memref<128x4xf32, #tpu.memory_space<vmem>>, vector<128x4xf32>
    %cst_76 = arith.constant dense<0.000000e+00> : vector<1x4xf32>
    %107 = tpu.matmul %97, %106, %cst_76 {dimension_numbers = #tpu.dot_dimension_numbers<[1], [0], [0], [1], [0, 0, 1, 1], [], []>} : vector<1x128xf32>, vector<128x4xf32>, vector<1x4xf32> -> vector<1x4xf32>
    %c0_77 = arith.constant 0 : index
    %c0_78 = arith.constant 0 : index
    %108 = vector.load %arg5[%c0_77, %c0_78] : memref<1x4xf32, #tpu.memory_space<vmem>>, vector<1x4xf32>
    %109 = arith.addf %107, %108 : vector<1x4xf32>
    %cst_79 = arith.constant 0.000000e+00 : f32
    %110 = vector.broadcast %cst_79 : f32 to vector<1x4xf32>
    %111 = arith.maximumf %109, %110 : vector<1x4xf32>
    %c0_80 = arith.constant 0 : index
    %c0_81 = arith.constant 0 : index
    %112 = vector.load %arg6[%c0_80, %c0_81] : memref<4x128xf32, #tpu.memory_space<vmem>>, vector<4x128xf32>
    %cst_82 = arith.constant dense<0.000000e+00> : vector<1x128xf32>
    %113 = tpu.matmul %111, %112, %cst_82 {dimension_numbers = #tpu.dot_dimension_numbers<[1], [0], [0], [1], [0, 0, 1, 1], [], []>} : vector<1x4xf32>, vector<4x128xf32>, vector<1x128xf32> -> vector<1x128xf32>
    %c0_83 = arith.constant 0 : index
    %c0_84 = arith.constant 0 : index
    %114 = vector.load %arg7[%c0_83, %c0_84] : memref<1x128xf32, #tpu.memory_space<vmem>>, vector<1x128xf32>
    %115 = arith.addf %113, %114 : vector<1x128xf32>
    %116 = arith.negf %115 : vector<1x128xf32>
    %117 = math.exp %116 : vector<1x128xf32>
    %cst_85 = arith.constant 1.000000e+00 : f32
    %118 = vector.broadcast %cst_85 : f32 to vector<1x128xf32>
    %119 = arith.addf %118, %117 : vector<1x128xf32>
    %120 = arith.divf %118, %119 : vector<1x128xf32>
    %c0_86 = arith.constant 0 : index
    %c0_87 = arith.constant 0 : index
    %121 = vector.load %arg4[%c0_86, %c0_87] : memref<128x4xf32, #tpu.memory_space<vmem>>, vector<128x4xf32>
    %cst_88 = arith.constant dense<0.000000e+00> : vector<1x4xf32>
    %122 = tpu.matmul %105, %121, %cst_88 {dimension_numbers = #tpu.dot_dimension_numbers<[1], [0], [0], [1], [0, 0, 1, 1], [], []>} : vector<1x128xf32>, vector<128x4xf32>, vector<1x4xf32> -> vector<1x4xf32>
    %c0_89 = arith.constant 0 : index
    %c0_90 = arith.constant 0 : index
    %123 = vector.load %arg5[%c0_89, %c0_90] : memref<1x4xf32, #tpu.memory_space<vmem>>, vector<1x4xf32>
    %124 = arith.addf %122, %123 : vector<1x4xf32>
    %cst_91 = arith.constant 0.000000e+00 : f32
    %125 = vector.broadcast %cst_91 : f32 to vector<1x4xf32>
    %126 = arith.maximumf %124, %125 : vector<1x4xf32>
    %c0_92 = arith.constant 0 : index
    %c0_93 = arith.constant 0 : index
    %127 = vector.load %arg6[%c0_92, %c0_93] : memref<4x128xf32, #tpu.memory_space<vmem>>, vector<4x128xf32>
    %cst_94 = arith.constant dense<0.000000e+00> : vector<1x128xf32>
    %128 = tpu.matmul %126, %127, %cst_94 {dimension_numbers = #tpu.dot_dimension_numbers<[1], [0], [0], [1], [0, 0, 1, 1], [], []>} : vector<1x4xf32>, vector<4x128xf32>, vector<1x128xf32> -> vector<1x128xf32>
    %c0_95 = arith.constant 0 : index
    %c0_96 = arith.constant 0 : index
    %129 = vector.load %arg7[%c0_95, %c0_96] : memref<1x128xf32, #tpu.memory_space<vmem>>, vector<1x128xf32>
    %130 = arith.addf %128, %129 : vector<1x128xf32>
    %131 = arith.negf %130 : vector<1x128xf32>
    %132 = math.exp %131 : vector<1x128xf32>
    %cst_97 = arith.constant 1.000000e+00 : f32
    %133 = vector.broadcast %cst_97 : f32 to vector<1x128xf32>
    %134 = arith.addf %133, %132 : vector<1x128xf32>
    %135 = arith.divf %133, %134 : vector<1x128xf32>
    %136 = arith.addf %120, %135 : vector<1x128xf32>
    %137 = vector.broadcast %136 : vector<1x128xf32> to vector<25x128xf32>
    %138 = arith.mulf %88, %137 : vector<25x128xf32>
    %cst_98 = arith.constant dense<0.000000e+00> : vector<25xf32>
    %139 = vector.multi_reduction <add>, %138, %cst_98 [1] : vector<25x128xf32> to vector<25xf32>
    %140 = vector.shape_cast %139 : vector<25xf32> to vector<25x1xf32>
    %cst_99 = arith.constant 1.562500e-02 : f32
    %141 = vector.broadcast %cst_99 : f32 to vector<25x1xf32>
    %142 = arith.mulf %140, %141 : vector<25x1xf32>
    %cst_100 = arith.constant 1.000000e+00 : f32
    %143 = vector.broadcast %cst_100 : f32 to vector<1x64xf32>
    %cst_101 = arith.constant 0.000000e+00 : f32
    %144 = vector.broadcast %cst_101 : f32 to vector<1x64xf32>
    %145 = tpu.concatenate %143, %144 in 1 : vector<1x64xf32>, vector<1x64xf32> -> vector<1x128xf32>
    %cst_102 = arith.constant 0.000000e+00 : f32
    %146 = vector.broadcast %cst_102 : f32 to vector<1x128xf32>
    %147 = arith.cmpf ogt, %145, %146 : vector<1x128xf32>
    %cst_103 = arith.constant -3.000000e+38 : f32
    %148 = vector.shape_cast %147 : vector<1x128xi1> to vector<1x128xi1>
    %149 = vector.broadcast %148 : vector<1x128xi1> to vector<25x128xi1>
    %150 = vector.broadcast %cst_103 : f32 to vector<25x128xf32>
    %151 = arith.select %149, %138, %150 : vector<25x128xi1>, vector<25x128xf32>
    %cst_104 = arith.constant dense<0xFF800000> : vector<25xf32>
    %152 = vector.multi_reduction <maximumf>, %151, %cst_104 [1] : vector<25x128xf32> to vector<25xf32>
    %153 = vector.shape_cast %152 : vector<25xf32> to vector<25x1xf32>
    %154 = vector.shape_cast %142 : vector<25x1xf32> to vector<25x1xf32>
    %155 = vector.broadcast %154 : vector<25x1xf32> to vector<25x8xf32>
    %156 = vector.shape_cast %153 : vector<25x1xf32> to vector<25x1xf32>
    %157 = vector.broadcast %156 : vector<25x1xf32> to vector<25x8xf32>
    %158 = tpu.concatenate %155, %157 in 1 : vector<25x8xf32>, vector<25x8xf32> -> vector<25x16xf32>
    %cst_105 = arith.constant 0.000000e+00 : f32
    %159 = vector.broadcast %cst_105 : f32 to vector<24x16xf32>
    %cst_106 = arith.constant 0.000000e+00 : f32
    %160 = vector.broadcast %cst_106 : f32 to vector<24x16xf32>
    %161 = tpu.concatenate %159, %158, %160 in 0 : vector<24x16xf32>, vector<25x16xf32>, vector<24x16xf32> -> vector<73x16xf32>
    %c0_107 = arith.constant 0 : index
    %c0_108 = arith.constant 0 : index
    %162 = vector.load %arg8[%c0_107, %c0_108] : memref<49x16xf32, #tpu.memory_space<vmem>>, vector<49x16xf32>
    %cst_109 = arith.constant 0.000000e+00 : f32
    %163 = vector.broadcast %cst_109 : f32 to vector<25x16xf32>
    %164 = vector.extract_strided_slice %161 {offsets = [0, 0], sizes = [25, 16], strides = [1, 1]} : vector<73x16xf32> to vector<25x16xf32>
    %165 = vector.extract_strided_slice %162 {offsets = [0, 0], sizes = [1, 16], strides = [1, 1]} : vector<49x16xf32> to vector<1x16xf32>
    %166 = vector.broadcast %165 : vector<1x16xf32> to vector<25x16xf32>
    %167 = arith.mulf %164, %166 : vector<25x16xf32>
    %168 = arith.addf %163, %167 : vector<25x16xf32>
    %169 = vector.extract_strided_slice %161 {offsets = [1, 0], sizes = [25, 16], strides = [1, 1]} : vector<73x16xf32> to vector<25x16xf32>
    %170 = vector.extract_strided_slice %162 {offsets = [1, 0], sizes = [1, 16], strides = [1, 1]} : vector<49x16xf32> to vector<1x16xf32>
    %171 = vector.broadcast %170 : vector<1x16xf32> to vector<25x16xf32>
    %172 = arith.mulf %169, %171 : vector<25x16xf32>
    %173 = arith.addf %168, %172 : vector<25x16xf32>
    %174 = vector.extract_strided_slice %161 {offsets = [2, 0], sizes = [25, 16], strides = [1, 1]} : vector<73x16xf32> to vector<25x16xf32>
    %175 = vector.extract_strided_slice %162 {offsets = [2, 0], sizes = [1, 16], strides = [1, 1]} : vector<49x16xf32> to vector<1x16xf32>
    %176 = vector.broadcast %175 : vector<1x16xf32> to vector<25x16xf32>
    %177 = arith.mulf %174, %176 : vector<25x16xf32>
    %178 = arith.addf %173, %177 : vector<25x16xf32>
    %179 = vector.extract_strided_slice %161 {offsets = [3, 0], sizes = [25, 16], strides = [1, 1]} : vector<73x16xf32> to vector<25x16xf32>
    %180 = vector.extract_strided_slice %162 {offsets = [3, 0], sizes = [1, 16], strides = [1, 1]} : vector<49x16xf32> to vector<1x16xf32>
    %181 = vector.broadcast %180 : vector<1x16xf32> to vector<25x16xf32>
    %182 = arith.mulf %179, %181 : vector<25x16xf32>
    %183 = arith.addf %178, %182 : vector<25x16xf32>
    %184 = vector.extract_strided_slice %161 {offsets = [4, 0], sizes = [25, 16], strides = [1, 1]} : vector<73x16xf32> to vector<25x16xf32>
    %185 = vector.extract_strided_slice %162 {offsets = [4, 0], sizes = [1, 16], strides = [1, 1]} : vector<49x16xf32> to vector<1x16xf32>
    %186 = vector.broadcast %185 : vector<1x16xf32> to vector<25x16xf32>
    %187 = arith.mulf %184, %186 : vector<25x16xf32>
    %188 = arith.addf %183, %187 : vector<25x16xf32>
    %189 = vector.extract_strided_slice %161 {offsets = [5, 0], sizes = [25, 16], strides = [1, 1]} : vector<73x16xf32> to vector<25x16xf32>
    %190 = vector.extract_strided_slice %162 {offsets = [5, 0], sizes = [1, 16], strides = [1, 1]} : vector<49x16xf32> to vector<1x16xf32>
    %191 = vector.broadcast %190 : vector<1x16xf32> to vector<25x16xf32>
    %192 = arith.mulf %189, %191 : vector<25x16xf32>
    %193 = arith.addf %188, %192 : vector<25x16xf32>
    %194 = vector.extract_strided_slice %161 {offsets = [6, 0], sizes = [25, 16], strides = [1, 1]} : vector<73x16xf32> to vector<25x16xf32>
    %195 = vector.extract_strided_slice %162 {offsets = [6, 0], sizes = [1, 16], strides = [1, 1]} : vector<49x16xf32> to vector<1x16xf32>
    %196 = vector.broadcast %195 : vector<1x16xf32> to vector<25x16xf32>
    %197 = arith.mulf %194, %196 : vector<25x16xf32>
    %198 = arith.addf %193, %197 : vector<25x16xf32>
    %199 = vector.extract_strided_slice %161 {offsets = [7, 0], sizes = [25, 16], strides = [1, 1]} : vector<73x16xf32> to vector<25x16xf32>
    %200 = vector.extract_strided_slice %162 {offsets = [7, 0], sizes = [1, 16], strides = [1, 1]} : vector<49x16xf32> to vector<1x16xf32>
    %201 = vector.broadcast %200 : vector<1x16xf32> to vector<25x16xf32>
    %202 = arith.mulf %199, %201 : vector<25x16xf32>
    %203 = arith.addf %198, %202 : vector<25x16xf32>
    %204 = vector.extract_strided_slice %161 {offsets = [8, 0], sizes = [25, 16], strides = [1, 1]} : vector<73x16xf32> to vector<25x16xf32>
    %205 = vector.extract_strided_slice %162 {offsets = [8, 0], sizes = [1, 16], strides = [1, 1]} : vector<49x16xf32> to vector<1x16xf32>
    %206 = vector.broadcast %205 : vector<1x16xf32> to vector<25x16xf32>
    %207 = arith.mulf %204, %206 : vector<25x16xf32>
    %208 = arith.addf %203, %207 : vector<25x16xf32>
    %209 = vector.extract_strided_slice %161 {offsets = [9, 0], sizes = [25, 16], strides = [1, 1]} : vector<73x16xf32> to vector<25x16xf32>
    %210 = vector.extract_strided_slice %162 {offsets = [9, 0], sizes = [1, 16], strides = [1, 1]} : vector<49x16xf32> to vector<1x16xf32>
    %211 = vector.broadcast %210 : vector<1x16xf32> to vector<25x16xf32>
    %212 = arith.mulf %209, %211 : vector<25x16xf32>
    %213 = arith.addf %208, %212 : vector<25x16xf32>
    %214 = vector.extract_strided_slice %161 {offsets = [10, 0], sizes = [25, 16], strides = [1, 1]} : vector<73x16xf32> to vector<25x16xf32>
    %215 = vector.extract_strided_slice %162 {offsets = [10, 0], sizes = [1, 16], strides = [1, 1]} : vector<49x16xf32> to vector<1x16xf32>
    %216 = vector.broadcast %215 : vector<1x16xf32> to vector<25x16xf32>
    %217 = arith.mulf %214, %216 : vector<25x16xf32>
    %218 = arith.addf %213, %217 : vector<25x16xf32>
    %219 = vector.extract_strided_slice %161 {offsets = [11, 0], sizes = [25, 16], strides = [1, 1]} : vector<73x16xf32> to vector<25x16xf32>
    %220 = vector.extract_strided_slice %162 {offsets = [11, 0], sizes = [1, 16], strides = [1, 1]} : vector<49x16xf32> to vector<1x16xf32>
    %221 = vector.broadcast %220 : vector<1x16xf32> to vector<25x16xf32>
    %222 = arith.mulf %219, %221 : vector<25x16xf32>
    %223 = arith.addf %218, %222 : vector<25x16xf32>
    %224 = vector.extract_strided_slice %161 {offsets = [12, 0], sizes = [25, 16], strides = [1, 1]} : vector<73x16xf32> to vector<25x16xf32>
    %225 = vector.extract_strided_slice %162 {offsets = [12, 0], sizes = [1, 16], strides = [1, 1]} : vector<49x16xf32> to vector<1x16xf32>
    %226 = vector.broadcast %225 : vector<1x16xf32> to vector<25x16xf32>
    %227 = arith.mulf %224, %226 : vector<25x16xf32>
    %228 = arith.addf %223, %227 : vector<25x16xf32>
    %229 = vector.extract_strided_slice %161 {offsets = [13, 0], sizes = [25, 16], strides = [1, 1]} : vector<73x16xf32> to vector<25x16xf32>
    %230 = vector.extract_strided_slice %162 {offsets = [13, 0], sizes = [1, 16], strides = [1, 1]} : vector<49x16xf32> to vector<1x16xf32>
    %231 = vector.broadcast %230 : vector<1x16xf32> to vector<25x16xf32>
    %232 = arith.mulf %229, %231 : vector<25x16xf32>
    %233 = arith.addf %228, %232 : vector<25x16xf32>
    %234 = vector.extract_strided_slice %161 {offsets = [14, 0], sizes = [25, 16], strides = [1, 1]} : vector<73x16xf32> to vector<25x16xf32>
    %235 = vector.extract_strided_slice %162 {offsets = [14, 0], sizes = [1, 16], strides = [1, 1]} : vector<49x16xf32> to vector<1x16xf32>
    %236 = vector.broadcast %235 : vector<1x16xf32> to vector<25x16xf32>
    %237 = arith.mulf %234, %236 : vector<25x16xf32>
    %238 = arith.addf %233, %237 : vector<25x16xf32>
    %239 = vector.extract_strided_slice %161 {offsets = [15, 0], sizes = [25, 16], strides = [1, 1]} : vector<73x16xf32> to vector<25x16xf32>
    %240 = vector.extract_strided_slice %162 {offsets = [15, 0], sizes = [1, 16], strides = [1, 1]} : vector<49x16xf32> to vector<1x16xf32>
    %241 = vector.broadcast %240 : vector<1x16xf32> to vector<25x16xf32>
    %242 = arith.mulf %239, %241 : vector<25x16xf32>
    %243 = arith.addf %238, %242 : vector<25x16xf32>
    %244 = vector.extract_strided_slice %161 {offsets = [16, 0], sizes = [25, 16], strides = [1, 1]} : vector<73x16xf32> to vector<25x16xf32>
    %245 = vector.extract_strided_slice %162 {offsets = [16, 0], sizes = [1, 16], strides = [1, 1]} : vector<49x16xf32> to vector<1x16xf32>
    %246 = vector.broadcast %245 : vector<1x16xf32> to vector<25x16xf32>
    %247 = arith.mulf %244, %246 : vector<25x16xf32>
    %248 = arith.addf %243, %247 : vector<25x16xf32>
    %249 = vector.extract_strided_slice %161 {offsets = [17, 0], sizes = [25, 16], strides = [1, 1]} : vector<73x16xf32> to vector<25x16xf32>
    %250 = vector.extract_strided_slice %162 {offsets = [17, 0], sizes = [1, 16], strides = [1, 1]} : vector<49x16xf32> to vector<1x16xf32>
    %251 = vector.broadcast %250 : vector<1x16xf32> to vector<25x16xf32>
    %252 = arith.mulf %249, %251 : vector<25x16xf32>
    %253 = arith.addf %248, %252 : vector<25x16xf32>
    %254 = vector.extract_strided_slice %161 {offsets = [18, 0], sizes = [25, 16], strides = [1, 1]} : vector<73x16xf32> to vector<25x16xf32>
    %255 = vector.extract_strided_slice %162 {offsets = [18, 0], sizes = [1, 16], strides = [1, 1]} : vector<49x16xf32> to vector<1x16xf32>
    %256 = vector.broadcast %255 : vector<1x16xf32> to vector<25x16xf32>
    %257 = arith.mulf %254, %256 : vector<25x16xf32>
    %258 = arith.addf %253, %257 : vector<25x16xf32>
    %259 = vector.extract_strided_slice %161 {offsets = [19, 0], sizes = [25, 16], strides = [1, 1]} : vector<73x16xf32> to vector<25x16xf32>
    %260 = vector.extract_strided_slice %162 {offsets = [19, 0], sizes = [1, 16], strides = [1, 1]} : vector<49x16xf32> to vector<1x16xf32>
    %261 = vector.broadcast %260 : vector<1x16xf32> to vector<25x16xf32>
    %262 = arith.mulf %259, %261 : vector<25x16xf32>
    %263 = arith.addf %258, %262 : vector<25x16xf32>
    %264 = vector.extract_strided_slice %161 {offsets = [20, 0], sizes = [25, 16], strides = [1, 1]} : vector<73x16xf32> to vector<25x16xf32>
    %265 = vector.extract_strided_slice %162 {offsets = [20, 0], sizes = [1, 16], strides = [1, 1]} : vector<49x16xf32> to vector<1x16xf32>
    %266 = vector.broadcast %265 : vector<1x16xf32> to vector<25x16xf32>
    %267 = arith.mulf %264, %266 : vector<25x16xf32>
    %268 = arith.addf %263, %267 : vector<25x16xf32>
    %269 = vector.extract_strided_slice %161 {offsets = [21, 0], sizes = [25, 16], strides = [1, 1]} : vector<73x16xf32> to vector<25x16xf32>
    %270 = vector.extract_strided_slice %162 {offsets = [21, 0], sizes = [1, 16], strides = [1, 1]} : vector<49x16xf32> to vector<1x16xf32>
    %271 = vector.broadcast %270 : vector<1x16xf32> to vector<25x16xf32>
    %272 = arith.mulf %269, %271 : vector<25x16xf32>
    %273 = arith.addf %268, %272 : vector<25x16xf32>
    %274 = vector.extract_strided_slice %161 {offsets = [22, 0], sizes = [25, 16], strides = [1, 1]} : vector<73x16xf32> to vector<25x16xf32>
    %275 = vector.extract_strided_slice %162 {offsets = [22, 0], sizes = [1, 16], strides = [1, 1]} : vector<49x16xf32> to vector<1x16xf32>
    %276 = vector.broadcast %275 : vector<1x16xf32> to vector<25x16xf32>
    %277 = arith.mulf %274, %276 : vector<25x16xf32>
    %278 = arith.addf %273, %277 : vector<25x16xf32>
    %279 = vector.extract_strided_slice %161 {offsets = [23, 0], sizes = [25, 16], strides = [1, 1]} : vector<73x16xf32> to vector<25x16xf32>
    %280 = vector.extract_strided_slice %162 {offsets = [23, 0], sizes = [1, 16], strides = [1, 1]} : vector<49x16xf32> to vector<1x16xf32>
    %281 = vector.broadcast %280 : vector<1x16xf32> to vector<25x16xf32>
    %282 = arith.mulf %279, %281 : vector<25x16xf32>
    %283 = arith.addf %278, %282 : vector<25x16xf32>
    %284 = vector.extract_strided_slice %161 {offsets = [24, 0], sizes = [25, 16], strides = [1, 1]} : vector<73x16xf32> to vector<25x16xf32>
    %285 = vector.extract_strided_slice %162 {offsets = [24, 0], sizes = [1, 16], strides = [1, 1]} : vector<49x16xf32> to vector<1x16xf32>
    %286 = vector.broadcast %285 : vector<1x16xf32> to vector<25x16xf32>
    %287 = arith.mulf %284, %286 : vector<25x16xf32>
    %288 = arith.addf %283, %287 : vector<25x16xf32>
    %289 = vector.extract_strided_slice %161 {offsets = [25, 0], sizes = [25, 16], strides = [1, 1]} : vector<73x16xf32> to vector<25x16xf32>
    %290 = vector.extract_strided_slice %162 {offsets = [25, 0], sizes = [1, 16], strides = [1, 1]} : vector<49x16xf32> to vector<1x16xf32>
    %291 = vector.broadcast %290 : vector<1x16xf32> to vector<25x16xf32>
    %292 = arith.mulf %289, %291 : vector<25x16xf32>
    %293 = arith.addf %288, %292 : vector<25x16xf32>
    %294 = vector.extract_strided_slice %161 {offsets = [26, 0], sizes = [25, 16], strides = [1, 1]} : vector<73x16xf32> to vector<25x16xf32>
    %295 = vector.extract_strided_slice %162 {offsets = [26, 0], sizes = [1, 16], strides = [1, 1]} : vector<49x16xf32> to vector<1x16xf32>
    %296 = vector.broadcast %295 : vector<1x16xf32> to vector<25x16xf32>
    %297 = arith.mulf %294, %296 : vector<25x16xf32>
    %298 = arith.addf %293, %297 : vector<25x16xf32>
    %299 = vector.extract_strided_slice %161 {offsets = [27, 0], sizes = [25, 16], strides = [1, 1]} : vector<73x16xf32> to vector<25x16xf32>
    %300 = vector.extract_strided_slice %162 {offsets = [27, 0], sizes = [1, 16], strides = [1, 1]} : vector<49x16xf32> to vector<1x16xf32>
    %301 = vector.broadcast %300 : vector<1x16xf32> to vector<25x16xf32>
    %302 = arith.mulf %299, %301 : vector<25x16xf32>
    %303 = arith.addf %298, %302 : vector<25x16xf32>
    %304 = vector.extract_strided_slice %161 {offsets = [28, 0], sizes = [25, 16], strides = [1, 1]} : vector<73x16xf32> to vector<25x16xf32>
    %305 = vector.extract_strided_slice %162 {offsets = [28, 0], sizes = [1, 16], strides = [1, 1]} : vector<49x16xf32> to vector<1x16xf32>
    %306 = vector.broadcast %305 : vector<1x16xf32> to vector<25x16xf32>
    %307 = arith.mulf %304, %306 : vector<25x16xf32>
    %308 = arith.addf %303, %307 : vector<25x16xf32>
    %309 = vector.extract_strided_slice %161 {offsets = [29, 0], sizes = [25, 16], strides = [1, 1]} : vector<73x16xf32> to vector<25x16xf32>
    %310 = vector.extract_strided_slice %162 {offsets = [29, 0], sizes = [1, 16], strides = [1, 1]} : vector<49x16xf32> to vector<1x16xf32>
    %311 = vector.broadcast %310 : vector<1x16xf32> to vector<25x16xf32>
    %312 = arith.mulf %309, %311 : vector<25x16xf32>
    %313 = arith.addf %308, %312 : vector<25x16xf32>
    %314 = vector.extract_strided_slice %161 {offsets = [30, 0], sizes = [25, 16], strides = [1, 1]} : vector<73x16xf32> to vector<25x16xf32>
    %315 = vector.extract_strided_slice %162 {offsets = [30, 0], sizes = [1, 16], strides = [1, 1]} : vector<49x16xf32> to vector<1x16xf32>
    %316 = vector.broadcast %315 : vector<1x16xf32> to vector<25x16xf32>
    %317 = arith.mulf %314, %316 : vector<25x16xf32>
    %318 = arith.addf %313, %317 : vector<25x16xf32>
    %319 = vector.extract_strided_slice %161 {offsets = [31, 0], sizes = [25, 16], strides = [1, 1]} : vector<73x16xf32> to vector<25x16xf32>
    %320 = vector.extract_strided_slice %162 {offsets = [31, 0], sizes = [1, 16], strides = [1, 1]} : vector<49x16xf32> to vector<1x16xf32>
    %321 = vector.broadcast %320 : vector<1x16xf32> to vector<25x16xf32>
    %322 = arith.mulf %319, %321 : vector<25x16xf32>
    %323 = arith.addf %318, %322 : vector<25x16xf32>
    %324 = vector.extract_strided_slice %161 {offsets = [32, 0], sizes = [25, 16], strides = [1, 1]} : vector<73x16xf32> to vector<25x16xf32>
    %325 = vector.extract_strided_slice %162 {offsets = [32, 0], sizes = [1, 16], strides = [1, 1]} : vector<49x16xf32> to vector<1x16xf32>
    %326 = vector.broadcast %325 : vector<1x16xf32> to vector<25x16xf32>
    %327 = arith.mulf %324, %326 : vector<25x16xf32>
    %328 = arith.addf %323, %327 : vector<25x16xf32>
    %329 = vector.extract_strided_slice %161 {offsets = [33, 0], sizes = [25, 16], strides = [1, 1]} : vector<73x16xf32> to vector<25x16xf32>
    %330 = vector.extract_strided_slice %162 {offsets = [33, 0], sizes = [1, 16], strides = [1, 1]} : vector<49x16xf32> to vector<1x16xf32>
    %331 = vector.broadcast %330 : vector<1x16xf32> to vector<25x16xf32>
    %332 = arith.mulf %329, %331 : vector<25x16xf32>
    %333 = arith.addf %328, %332 : vector<25x16xf32>
    %334 = vector.extract_strided_slice %161 {offsets = [34, 0], sizes = [25, 16], strides = [1, 1]} : vector<73x16xf32> to vector<25x16xf32>
    %335 = vector.extract_strided_slice %162 {offsets = [34, 0], sizes = [1, 16], strides = [1, 1]} : vector<49x16xf32> to vector<1x16xf32>
    %336 = vector.broadcast %335 : vector<1x16xf32> to vector<25x16xf32>
    %337 = arith.mulf %334, %336 : vector<25x16xf32>
    %338 = arith.addf %333, %337 : vector<25x16xf32>
    %339 = vector.extract_strided_slice %161 {offsets = [35, 0], sizes = [25, 16], strides = [1, 1]} : vector<73x16xf32> to vector<25x16xf32>
    %340 = vector.extract_strided_slice %162 {offsets = [35, 0], sizes = [1, 16], strides = [1, 1]} : vector<49x16xf32> to vector<1x16xf32>
    %341 = vector.broadcast %340 : vector<1x16xf32> to vector<25x16xf32>
    %342 = arith.mulf %339, %341 : vector<25x16xf32>
    %343 = arith.addf %338, %342 : vector<25x16xf32>
    %344 = vector.extract_strided_slice %161 {offsets = [36, 0], sizes = [25, 16], strides = [1, 1]} : vector<73x16xf32> to vector<25x16xf32>
    %345 = vector.extract_strided_slice %162 {offsets = [36, 0], sizes = [1, 16], strides = [1, 1]} : vector<49x16xf32> to vector<1x16xf32>
    %346 = vector.broadcast %345 : vector<1x16xf32> to vector<25x16xf32>
    %347 = arith.mulf %344, %346 : vector<25x16xf32>
    %348 = arith.addf %343, %347 : vector<25x16xf32>
    %349 = vector.extract_strided_slice %161 {offsets = [37, 0], sizes = [25, 16], strides = [1, 1]} : vector<73x16xf32> to vector<25x16xf32>
    %350 = vector.extract_strided_slice %162 {offsets = [37, 0], sizes = [1, 16], strides = [1, 1]} : vector<49x16xf32> to vector<1x16xf32>
    %351 = vector.broadcast %350 : vector<1x16xf32> to vector<25x16xf32>
    %352 = arith.mulf %349, %351 : vector<25x16xf32>
    %353 = arith.addf %348, %352 : vector<25x16xf32>
    %354 = vector.extract_strided_slice %161 {offsets = [38, 0], sizes = [25, 16], strides = [1, 1]} : vector<73x16xf32> to vector<25x16xf32>
    %355 = vector.extract_strided_slice %162 {offsets = [38, 0], sizes = [1, 16], strides = [1, 1]} : vector<49x16xf32> to vector<1x16xf32>
    %356 = vector.broadcast %355 : vector<1x16xf32> to vector<25x16xf32>
    %357 = arith.mulf %354, %356 : vector<25x16xf32>
    %358 = arith.addf %353, %357 : vector<25x16xf32>
    %359 = vector.extract_strided_slice %161 {offsets = [39, 0], sizes = [25, 16], strides = [1, 1]} : vector<73x16xf32> to vector<25x16xf32>
    %360 = vector.extract_strided_slice %162 {offsets = [39, 0], sizes = [1, 16], strides = [1, 1]} : vector<49x16xf32> to vector<1x16xf32>
    %361 = vector.broadcast %360 : vector<1x16xf32> to vector<25x16xf32>
    %362 = arith.mulf %359, %361 : vector<25x16xf32>
    %363 = arith.addf %358, %362 : vector<25x16xf32>
    %364 = vector.extract_strided_slice %161 {offsets = [40, 0], sizes = [25, 16], strides = [1, 1]} : vector<73x16xf32> to vector<25x16xf32>
    %365 = vector.extract_strided_slice %162 {offsets = [40, 0], sizes = [1, 16], strides = [1, 1]} : vector<49x16xf32> to vector<1x16xf32>
    %366 = vector.broadcast %365 : vector<1x16xf32> to vector<25x16xf32>
    %367 = arith.mulf %364, %366 : vector<25x16xf32>
    %368 = arith.addf %363, %367 : vector<25x16xf32>
    %369 = vector.extract_strided_slice %161 {offsets = [41, 0], sizes = [25, 16], strides = [1, 1]} : vector<73x16xf32> to vector<25x16xf32>
    %370 = vector.extract_strided_slice %162 {offsets = [41, 0], sizes = [1, 16], strides = [1, 1]} : vector<49x16xf32> to vector<1x16xf32>
    %371 = vector.broadcast %370 : vector<1x16xf32> to vector<25x16xf32>
    %372 = arith.mulf %369, %371 : vector<25x16xf32>
    %373 = arith.addf %368, %372 : vector<25x16xf32>
    %374 = vector.extract_strided_slice %161 {offsets = [42, 0], sizes = [25, 16], strides = [1, 1]} : vector<73x16xf32> to vector<25x16xf32>
    %375 = vector.extract_strided_slice %162 {offsets = [42, 0], sizes = [1, 16], strides = [1, 1]} : vector<49x16xf32> to vector<1x16xf32>
    %376 = vector.broadcast %375 : vector<1x16xf32> to vector<25x16xf32>
    %377 = arith.mulf %374, %376 : vector<25x16xf32>
    %378 = arith.addf %373, %377 : vector<25x16xf32>
    %379 = vector.extract_strided_slice %161 {offsets = [43, 0], sizes = [25, 16], strides = [1, 1]} : vector<73x16xf32> to vector<25x16xf32>
    %380 = vector.extract_strided_slice %162 {offsets = [43, 0], sizes = [1, 16], strides = [1, 1]} : vector<49x16xf32> to vector<1x16xf32>
    %381 = vector.broadcast %380 : vector<1x16xf32> to vector<25x16xf32>
    %382 = arith.mulf %379, %381 : vector<25x16xf32>
    %383 = arith.addf %378, %382 : vector<25x16xf32>
    %384 = vector.extract_strided_slice %161 {offsets = [44, 0], sizes = [25, 16], strides = [1, 1]} : vector<73x16xf32> to vector<25x16xf32>
    %385 = vector.extract_strided_slice %162 {offsets = [44, 0], sizes = [1, 16], strides = [1, 1]} : vector<49x16xf32> to vector<1x16xf32>
    %386 = vector.broadcast %385 : vector<1x16xf32> to vector<25x16xf32>
    %387 = arith.mulf %384, %386 : vector<25x16xf32>
    %388 = arith.addf %383, %387 : vector<25x16xf32>
    %389 = vector.extract_strided_slice %161 {offsets = [45, 0], sizes = [25, 16], strides = [1, 1]} : vector<73x16xf32> to vector<25x16xf32>
    %390 = vector.extract_strided_slice %162 {offsets = [45, 0], sizes = [1, 16], strides = [1, 1]} : vector<49x16xf32> to vector<1x16xf32>
    %391 = vector.broadcast %390 : vector<1x16xf32> to vector<25x16xf32>
    %392 = arith.mulf %389, %391 : vector<25x16xf32>
    %393 = arith.addf %388, %392 : vector<25x16xf32>
    %394 = vector.extract_strided_slice %161 {offsets = [46, 0], sizes = [25, 16], strides = [1, 1]} : vector<73x16xf32> to vector<25x16xf32>
    %395 = vector.extract_strided_slice %162 {offsets = [46, 0], sizes = [1, 16], strides = [1, 1]} : vector<49x16xf32> to vector<1x16xf32>
    %396 = vector.broadcast %395 : vector<1x16xf32> to vector<25x16xf32>
    %397 = arith.mulf %394, %396 : vector<25x16xf32>
    %398 = arith.addf %393, %397 : vector<25x16xf32>
    %399 = vector.extract_strided_slice %161 {offsets = [47, 0], sizes = [25, 16], strides = [1, 1]} : vector<73x16xf32> to vector<25x16xf32>
    %400 = vector.extract_strided_slice %162 {offsets = [47, 0], sizes = [1, 16], strides = [1, 1]} : vector<49x16xf32> to vector<1x16xf32>
    %401 = vector.broadcast %400 : vector<1x16xf32> to vector<25x16xf32>
    %402 = arith.mulf %399, %401 : vector<25x16xf32>
    %403 = arith.addf %398, %402 : vector<25x16xf32>
    %404 = vector.extract_strided_slice %161 {offsets = [48, 0], sizes = [25, 16], strides = [1, 1]} : vector<73x16xf32> to vector<25x16xf32>
    %405 = vector.extract_strided_slice %162 {offsets = [48, 0], sizes = [1, 16], strides = [1, 1]} : vector<49x16xf32> to vector<1x16xf32>
    %406 = vector.broadcast %405 : vector<1x16xf32> to vector<25x16xf32>
    %407 = arith.mulf %404, %406 : vector<25x16xf32>
    %408 = arith.addf %403, %407 : vector<25x16xf32>
    %409 = vector.extract_strided_slice %408 {offsets = [0, 0], sizes = [25, 8], strides = [1, 1]} : vector<25x16xf32> to vector<25x8xf32>
    %410 = vector.extract_strided_slice %408 {offsets = [0, 8], sizes = [25, 8], strides = [1, 1]} : vector<25x16xf32> to vector<25x8xf32>
    %411 = arith.addf %409, %410 : vector<25x8xf32>
    %c0_110 = arith.constant 0 : index
    %c0_111 = arith.constant 0 : index
    %412 = vector.load %arg9[%c0_110, %c0_111] : memref<1x8xf32, #tpu.memory_space<vmem>>, vector<1x8xf32>
    %413 = vector.broadcast %412 : vector<1x8xf32> to vector<25x8xf32>
    %414 = arith.addf %411, %413 : vector<25x8xf32>
    %cst_112 = arith.constant 0.000000e+00 : f32
    %415 = vector.broadcast %cst_112 : f32 to vector<25x8xf32>
    %416 = arith.maximumf %414, %415 : vector<25x8xf32>
    %c0_113 = arith.constant 0 : index
    %c0_114 = arith.constant 0 : index
    %417 = vector.load %arg10[%c0_113, %c0_114] : memref<1x8xf32, #tpu.memory_space<vmem>>, vector<1x8xf32>
    %418 = vector.broadcast %417 : vector<1x8xf32> to vector<25x8xf32>
    %419 = arith.mulf %416, %418 : vector<25x8xf32>
    %cst_115 = arith.constant dense<0.000000e+00> : vector<25xf32>
    %420 = vector.multi_reduction <add>, %419, %cst_115 [1] : vector<25x8xf32> to vector<25xf32>
    %421 = vector.shape_cast %420 : vector<25xf32> to vector<25x1xf32>
    %c0_116 = arith.constant 0 : index
    %c0_117 = arith.constant 0 : index
    %422 = vector.load %arg11[%c0_116, %c0_117] : memref<1x1xf32, #tpu.memory_space<vmem>>, vector<1x1xf32>
    %423 = vector.broadcast %422 : vector<1x1xf32> to vector<25x1xf32>
    %424 = arith.addf %421, %423 : vector<25x1xf32>
    %425 = arith.negf %424 : vector<25x1xf32>
    %426 = math.exp %425 : vector<25x1xf32>
    %cst_118 = arith.constant 1.000000e+00 : f32
    %427 = vector.broadcast %cst_118 : f32 to vector<25x1xf32>
    %428 = arith.addf %427, %426 : vector<25x1xf32>
    %429 = arith.divf %427, %428 : vector<25x1xf32>
    %430 = arith.mulf %138, %138 : vector<25x128xf32>
    %431 = vector.broadcast %429 : vector<25x1xf32> to vector<25x128xf32>
    %432 = arith.mulf %430, %431 : vector<25x128xf32>
    %433 = arith.truncf %432 : vector<25x128xf32> to vector<25x128xbf16>
    %c24_119 = arith.constant 24 : index
    %c0_120 = arith.constant 0 : index
    %434 = vector.load %arg32[%c24_119, %c0_120] : memref<80x128xbf16, #tpu.memory_space<vmem>>, vector<25x128xbf16>
    tpu.vector_store %arg32[%c24_119, %c0_120], %433 {strides = array<i32>} : memref<80x128xbf16, #tpu.memory_space<vmem>>, vector<25x128xbf16>,
    %cst_121 = arith.constant 0.000000e+00 : f32
    %435 = vector.broadcast %cst_121 : f32 to vector<25x128xf32>
    %c16 = arith.constant 16 : index
    %c0_122 = arith.constant 0 : index
    %436 = vector.load %arg32[%c16, %c0_122] : memref<80x128xbf16, #tpu.memory_space<vmem>>, vector<25x128xbf16>
    %c17 = arith.constant 17 : index
    %c0_123 = arith.constant 0 : index
    %437 = vector.load %arg32[%c17, %c0_123] : memref<80x128xbf16, #tpu.memory_space<vmem>>, vector<25x128xbf16>
    %438 = tpu.concatenate %436, %437 in 1 : vector<25x128xbf16>, vector<25x128xbf16> -> vector<25x256xbf16>
    %c0_124 = arith.constant 0 : index
    %c0_125 = arith.constant 0 : index
    %439 = vector.load %arg12[%c0_124, %c0_125] : memref<1152x128xbf16, #tpu.memory_space<vmem>>, vector<256x128xbf16>
    %cst_126 = arith.constant dense<0.000000e+00> : vector<25x128xf32>
    %440 = tpu.matmul %438, %439, %cst_126 {dimension_numbers = #tpu.dot_dimension_numbers<[1], [0], [0], [1], [0, 0, 1, 1], [], []>} : vector<25x256xbf16>, vector<256x128xbf16>, vector<25x128xf32> -> vector<25x128xf32>
    %441 = arith.addf %435, %440 : vector<25x128xf32>
    %c18 = arith.constant 18 : index
    %c0_127 = arith.constant 0 : index
    %442 = vector.load %arg32[%c18, %c0_127] : memref<80x128xbf16, #tpu.memory_space<vmem>>, vector<25x128xbf16>
    %c23 = arith.constant 23 : index
    %c0_128 = arith.constant 0 : index
    %443 = vector.load %arg32[%c23, %c0_128] : memref<80x128xbf16, #tpu.memory_space<vmem>>, vector<25x128xbf16>
    %444 = tpu.concatenate %442, %443 in 1 : vector<25x128xbf16>, vector<25x128xbf16> -> vector<25x256xbf16>
    %c256_129 = arith.constant 256 : index
    %c0_130 = arith.constant 0 : index
    %445 = vector.load %arg12[%c256_129, %c0_130] : memref<1152x128xbf16, #tpu.memory_space<vmem>>, vector<256x128xbf16>
    %cst_131 = arith.constant dense<0.000000e+00> : vector<25x128xf32>
    %446 = tpu.matmul %444, %445, %cst_131 {dimension_numbers = #tpu.dot_dimension_numbers<[1], [0], [0], [1], [0, 0, 1, 1], [], []>} : vector<25x256xbf16>, vector<256x128xbf16>, vector<25x128xf32> -> vector<25x128xf32>
    %447 = arith.addf %441, %446 : vector<25x128xf32>
    %c24_132 = arith.constant 24 : index
    %c0_133 = arith.constant 0 : index
    %448 = vector.load %arg32[%c24_132, %c0_133] : memref<80x128xbf16, #tpu.memory_space<vmem>>, vector<25x128xbf16>
    %c25_134 = arith.constant 25 : index
    %c0_135 = arith.constant 0 : index
    %449 = vector.load %arg32[%c25_134, %c0_135] : memref<80x128xbf16, #tpu.memory_space<vmem>>, vector<25x128xbf16>
    %450 = tpu.concatenate %448, %449 in 1 : vector<25x128xbf16>, vector<25x128xbf16> -> vector<25x256xbf16>
    %c512_136 = arith.constant 512 : index
    %c0_137 = arith.constant 0 : index
    %451 = vector.load %arg12[%c512_136, %c0_137] : memref<1152x128xbf16, #tpu.memory_space<vmem>>, vector<256x128xbf16>
    %cst_138 = arith.constant dense<0.000000e+00> : vector<25x128xf32>
    %452 = tpu.matmul %450, %451, %cst_138 {dimension_numbers = #tpu.dot_dimension_numbers<[1], [0], [0], [1], [0, 0, 1, 1], [], []>} : vector<25x256xbf16>, vector<256x128xbf16>, vector<25x128xf32> -> vector<25x128xf32>
    %453 = arith.addf %447, %452 : vector<25x128xf32>
    %c30 = arith.constant 30 : index
    %c0_139 = arith.constant 0 : index
    %454 = vector.load %arg32[%c30, %c0_139] : memref<80x128xbf16, #tpu.memory_space<vmem>>, vector<25x128xbf16>
    %c31_140 = arith.constant 31 : index
    %c0_141 = arith.constant 0 : index
    %455 = vector.load %arg32[%c31_140, %c0_141] : memref<80x128xbf16, #tpu.memory_space<vmem>>, vector<25x128xbf16>
    %456 = tpu.concatenate %454, %455 in 1 : vector<25x128xbf16>, vector<25x128xbf16> -> vector<25x256xbf16>
    %c768_142 = arith.constant 768 : index
    %c0_143 = arith.constant 0 : index
    %457 = vector.load %arg12[%c768_142, %c0_143] : memref<1152x128xbf16, #tpu.memory_space<vmem>>, vector<256x128xbf16>
    %cst_144 = arith.constant dense<0.000000e+00> : vector<25x128xf32>
    %458 = tpu.matmul %456, %457, %cst_144 {dimension_numbers = #tpu.dot_dimension_numbers<[1], [0], [0], [1], [0, 0, 1, 1], [], []>} : vector<25x256xbf16>, vector<256x128xbf16>, vector<25x128xf32> -> vector<25x128xf32>
    %459 = arith.addf %453, %458 : vector<25x128xf32>
    %c32 = arith.constant 32 : index
    %c0_145 = arith.constant 0 : index
    %460 = vector.load %arg32[%c32, %c0_145] : memref<80x128xbf16, #tpu.memory_space<vmem>>, vector<25x128xbf16>
    %c1024_146 = arith.constant 1024 : index
    %c0_147 = arith.constant 0 : index
    %461 = vector.load %arg12[%c1024_146, %c0_147] : memref<1152x128xbf16, #tpu.memory_space<vmem>>, vector<128x128xbf16>
    %cst_148 = arith.constant dense<0.000000e+00> : vector<25x128xf32>
    %462 = tpu.matmul %460, %461, %cst_148 {dimension_numbers = #tpu.dot_dimension_numbers<[1], [0], [0], [1], [0, 0, 1, 1], [], []>} : vector<25x128xbf16>, vector<128x128xbf16>, vector<25x128xf32> -> vector<25x128xf32>
    %463 = arith.addf %459, %462 : vector<25x128xf32>
    %c0_149 = arith.constant 0 : index
    %c0_150 = arith.constant 0 : index
    %464 = vector.load %arg13[%c0_149, %c0_150] : memref<1x128xf32, #tpu.memory_space<vmem>>, vector<1x128xf32>
    %465 = vector.broadcast %464 : vector<1x128xf32> to vector<25x128xf32>
    %466 = arith.addf %463, %465 : vector<25x128xf32>
    %cst_151 = arith.constant 0.000000e+00 : f32
    %467 = vector.broadcast %cst_151 : f32 to vector<25x128xf32>
    %468 = arith.cmpf oge, %466, %467 : vector<25x128xf32>
    %cst_152 = arith.constant 1.000000e-01 : f32
    %469 = vector.broadcast %cst_152 : f32 to vector<25x128xf32>
    %470 = arith.mulf %469, %466 : vector<25x128xf32>
    %471 = arith.select %468, %466, %470 : vector<25x128xi1>, vector<25x128xf32>
    %c24_153 = arith.constant 24 : index
    %c0_154 = arith.constant 0 : index
    %472 = vector.load %arg33[%c24_153, %c0_154] : memref<80x128xf32, #tpu.memory_space<vmem>>, vector<25x128xf32>
    tpu.vector_store %arg33[%c24_153, %c0_154], %471 {strides = array<i32>} : memref<80x128xf32, #tpu.memory_space<vmem>>, vector<25x128xf32>,
    %c24_155 = arith.constant 24 : index
    %c0_156 = arith.constant 0 : index
    %473 = tpu.strided_load %arg33[%c24_155, %c0_156] {strides = array<i32: 2, 1>} : memref<80x128xf32, #tpu.memory_space<vmem>>, vector<2x128xf32>
    %c25_157 = arith.constant 25 : index
    %c0_158 = arith.constant 0 : index
    %474 = tpu.strided_load %arg33[%c25_157, %c0_158] {strides = array<i32: 2, 1>} : memref<80x128xf32, #tpu.memory_space<vmem>>, vector<2x128xf32>
    %c31_159 = arith.constant 31 : index
    %c0_160 = arith.constant 0 : index
    %475 = tpu.strided_load %arg33[%c31_159, %c0_160] {strides = array<i32: 2, 1>} : memref<80x128xf32, #tpu.memory_space<vmem>>, vector<2x128xf32>
    %c32_161 = arith.constant 32 : index
    %c0_162 = arith.constant 0 : index
    %476 = tpu.strided_load %arg33[%c32_161, %c0_162] {strides = array<i32: 2, 1>} : memref<80x128xf32, #tpu.memory_space<vmem>>, vector<2x128xf32>
    %477 = arith.maximumf %473, %474 : vector<2x128xf32>
    %478 = arith.maximumf %475, %476 : vector<2x128xf32>
    %479 = arith.maximumf %477, %478 : vector<2x128xf32>
    %480 = arith.truncf %479 : vector<2x128xf32> to vector<2x128xbf16>
    %c18_163 = arith.constant 18 : index
    %c0_164 = arith.constant 0 : index
    %481 = vector.load %arg34[%c18_163, %c0_164] : memref<48x128xbf16, #tpu.memory_space<vmem>>, vector<2x128xbf16>
    tpu.vector_store %arg34[%c18_163, %c0_164], %480 {strides = array<i32>} : memref<48x128xbf16, #tpu.memory_space<vmem>>, vector<2x128xbf16>,
    %c38_165 = arith.constant 38 : index
    %c0_166 = arith.constant 0 : index
    %482 = tpu.strided_load %arg33[%c38_165, %c0_166] {strides = array<i32: 2, 1>} : memref<80x128xf32, #tpu.memory_space<vmem>>, vector<2x128xf32>
    %c39 = arith.constant 39 : index
    %c0_167 = arith.constant 0 : index
    %483 = tpu.strided_load %arg33[%c39, %c0_167] {strides = array<i32: 2, 1>} : memref<80x128xf32, #tpu.memory_space<vmem>>, vector<2x128xf32>
    %c45_168 = arith.constant 45 : index
    %c0_169 = arith.constant 0 : index
    %484 = tpu.strided_load %arg33[%c45_168, %c0_169] {strides = array<i32: 2, 1>} : memref<80x128xf32, #tpu.memory_space<vmem>>, vector<2x128xf32>
    %c46_170 = arith.constant 46 : index
    %c0_171 = arith.constant 0 : index
    %485 = tpu.strided_load %arg33[%c46_170, %c0_171] {strides = array<i32: 2, 1>} : memref<80x128xf32, #tpu.memory_space<vmem>>, vector<2x128xf32>
    %486 = arith.maximumf %482, %483 : vector<2x128xf32>
    %487 = arith.maximumf %484, %485 : vector<2x128xf32>
    %488 = arith.maximumf %486, %487 : vector<2x128xf32>
    %489 = arith.truncf %488 : vector<2x128xf32> to vector<2x128xbf16>
    %c23_172 = arith.constant 23 : index
    %c0_173 = arith.constant 0 : index
    %490 = vector.load %arg34[%c23_172, %c0_173] : memref<48x128xbf16, #tpu.memory_space<vmem>>, vector<2x128xbf16>
    tpu.vector_store %arg34[%c23_172, %c0_173], %489 {strides = array<i32>} : memref<48x128xbf16, #tpu.memory_space<vmem>>, vector<2x128xbf16>,
    %c18_174 = arith.constant 18 : index
    %c0_175 = arith.constant 0 : index
    %491 = vector.load %arg34[%c18_174, %c0_175] : memref<48x128xbf16, #tpu.memory_space<vmem>>, vector<7x128xbf16>
    %492 = arith.extf %491 : vector<7x128xbf16> to vector<7x128xf32>
    %cst_176 = arith.constant 1.000000e+00 : f32
    %493 = vector.broadcast %cst_176 : f32 to vector<2x1xf32>
    %cst_177 = arith.constant 0.000000e+00 : f32
    %494 = vector.broadcast %cst_177 : f32 to vector<3x1xf32>
    %495 = tpu.concatenate %493, %494 in 0 : vector<2x1xf32>, vector<3x1xf32> -> vector<5x1xf32>
    %496 = tpu.concatenate %495, %495 in 0 : vector<5x1xf32>, vector<5x1xf32> -> vector<10x1xf32>
    %497 = vector.extract_strided_slice %496 {offsets = [0, 0], sizes = [7, 1], strides = [1, 1]} : vector<10x1xf32> to vector<7x1xf32>
    %cst_178 = arith.constant dense<0.000000e+00> : vector<128xf32>
    %498 = vector.multi_reduction <add>, %492, %cst_178 [0] : vector<7x128xf32> to vector<128xf32>
    %499 = vector.shape_cast %498 : vector<128xf32> to vector<1x128xf32>
    %cst_179 = arith.constant 2.500000e-01 : f32
    %500 = vector.broadcast %cst_179 : f32 to vector<1x128xf32>
    %501 = arith.mulf %499, %500 : vector<1x128xf32>
    %cst_180 = arith.constant 0.000000e+00 : f32
    %502 = vector.broadcast %cst_180 : f32 to vector<7x1xf32>
    %503 = arith.cmpf ogt, %497, %502 : vector<7x1xf32>
    %cst_181 = arith.constant -3.000000e+38 : f32
    %504 = vector.shape_cast %503 : vector<7x1xi1> to vector<7x1xi1>
    %505 = vector.broadcast %504 : vector<7x1xi1> to vector<7x128xi1>
    %506 = vector.broadcast %cst_181 : f32 to vector<7x128xf32>
    %507 = arith.select %505, %492, %506 : vector<7x128xi1>, vector<7x128xf32>
    %cst_182 = arith.constant dense<0xFF800000> : vector<128xf32>
    %508 = vector.multi_reduction <maximumf>, %507, %cst_182 [0] : vector<7x128xf32> to vector<128xf32>
    %509 = vector.shape_cast %508 : vector<128xf32> to vector<1x128xf32>
    %c0_183 = arith.constant 0 : index
    %c0_184 = arith.constant 0 : index
    %510 = vector.load %arg14[%c0_183, %c0_184] : memref<128x8xf32, #tpu.memory_space<vmem>>, vector<128x8xf32>
    %cst_185 = arith.constant dense<0.000000e+00> : vector<1x8xf32>
    %511 = tpu.matmul %501, %510, %cst_185 {dimension_numbers = #tpu.dot_dimension_numbers<[1], [0], [0], [1], [0, 0, 1, 1], [], []>} : vector<1x128xf32>, vector<128x8xf32>, vector<1x8xf32> -> vector<1x8xf32>
    %c0_186 = arith.constant 0 : index
    %c0_187 = arith.constant 0 : index
    %512 = vector.load %arg15[%c0_186, %c0_187] : memref<1x8xf32, #tpu.memory_space<vmem>>, vector<1x8xf32>
    %513 = arith.addf %511, %512 : vector<1x8xf32>
    %cst_188 = arith.constant 0.000000e+00 : f32
    %514 = vector.broadcast %cst_188 : f32 to vector<1x8xf32>
    %515 = arith.maximumf %513, %514 : vector<1x8xf32>
    %c0_189 = arith.constant 0 : index
    %c0_190 = arith.constant 0 : index
    %516 = vector.load %arg16[%c0_189, %c0_190] : memref<8x128xf32, #tpu.memory_space<vmem>>, vector<8x128xf32>
    %cst_191 = arith.constant dense<0.000000e+00> : vector<1x128xf32>
    %517 = tpu.matmul %515, %516, %cst_191 {dimension_numbers = #tpu.dot_dimension_numbers<[1], [0], [0], [1], [0, 0, 1, 1], [], []>} : vector<1x8xf32>, vector<8x128xf32>, vector<1x128xf32> -> vector<1x128xf32>
    %c0_192 = arith.constant 0 : index
    %c0_193 = arith.constant 0 : index
    %518 = vector.load %arg17[%c0_192, %c0_193] : memref<1x128xf32, #tpu.memory_space<vmem>>, vector<1x128xf32>
    %519 = arith.addf %517, %518 : vector<1x128xf32>
    %520 = arith.negf %519 : vector<1x128xf32>
    %521 = math.exp %520 : vector<1x128xf32>
    %cst_194 = arith.constant 1.000000e+00 : f32
    %522 = vector.broadcast %cst_194 : f32 to vector<1x128xf32>
    %523 = arith.addf %522, %521 : vector<1x128xf32>
    %524 = arith.divf %522, %523 : vector<1x128xf32>
    %c0_195 = arith.constant 0 : index
    %c0_196 = arith.constant 0 : index
    %525 = vector.load %arg14[%c0_195, %c0_196] : memref<128x8xf32, #tpu.memory_space<vmem>>, vector<128x8xf32>
    %cst_197 = arith.constant dense<0.000000e+00> : vector<1x8xf32>
    %526 = tpu.matmul %509, %525, %cst_197 {dimension_numbers = #tpu.dot_dimension_numbers<[1], [0], [0], [1], [0, 0, 1, 1], [], []>} : vector<1x128xf32>, vector<128x8xf32>, vector<1x8xf32> -> vector<1x8xf32>
    %c0_198 = arith.constant 0 : index
    %c0_199 = arith.constant 0 : index
    %527 = vector.load %arg15[%c0_198, %c0_199] : memref<1x8xf32, #tpu.memory_space<vmem>>, vector<1x8xf32>
    %528 = arith.addf %526, %527 : vector<1x8xf32>
    %cst_200 = arith.constant 0.000000e+00 : f32
    %529 = vector.broadcast %cst_200 : f32 to vector<1x8xf32>
    %530 = arith.maximumf %528, %529 : vector<1x8xf32>
    %c0_201 = arith.constant 0 : index
    %c0_202 = arith.constant 0 : index
    %531 = vector.load %arg16[%c0_201, %c0_202] : memref<8x128xf32, #tpu.memory_space<vmem>>, vector<8x128xf32>
    %cst_203 = arith.constant dense<0.000000e+00> : vector<1x128xf32>
    %532 = tpu.matmul %530, %531, %cst_203 {dimension_numbers = #tpu.dot_dimension_numbers<[1], [0], [0], [1], [0, 0, 1, 1], [], []>} : vector<1x8xf32>, vector<8x128xf32>, vector<1x128xf32> -> vector<1x128xf32>
    %c0_204 = arith.constant 0 : index
    %c0_205 = arith.constant 0 : index
    %533 = vector.load %arg17[%c0_204, %c0_205] : memref<1x128xf32, #tpu.memory_space<vmem>>, vector<1x128xf32>
    %534 = arith.addf %532, %533 : vector<1x128xf32>
    %535 = arith.negf %534 : vector<1x128xf32>
    %536 = math.exp %535 : vector<1x128xf32>
    %cst_206 = arith.constant 1.000000e+00 : f32
    %537 = vector.broadcast %cst_206 : f32 to vector<1x128xf32>
    %538 = arith.addf %537, %536 : vector<1x128xf32>
    %539 = arith.divf %537, %538 : vector<1x128xf32>
    %540 = arith.addf %524, %539 : vector<1x128xf32>
    %541 = vector.broadcast %540 : vector<1x128xf32> to vector<7x128xf32>
    %542 = arith.mulf %492, %541 : vector<7x128xf32>
    %cst_207 = arith.constant dense<0.000000e+00> : vector<7xf32>
    %543 = vector.multi_reduction <add>, %542, %cst_207 [1] : vector<7x128xf32> to vector<7xf32>
    %544 = vector.shape_cast %543 : vector<7xf32> to vector<7x1xf32>
    %cst_208 = arith.constant 7.812500e-03 : f32
    %545 = vector.broadcast %cst_208 : f32 to vector<7x1xf32>
    %546 = arith.mulf %544, %545 : vector<7x1xf32>
    %cst_209 = arith.constant dense<0xFF800000> : vector<7xf32>
    %547 = vector.multi_reduction <maximumf>, %542, %cst_209 [1] : vector<7x128xf32> to vector<7xf32>
    %548 = vector.shape_cast %547 : vector<7xf32> to vector<7x1xf32>
    %549 = vector.shape_cast %546 : vector<7x1xf32> to vector<7x1xf32>
    %550 = vector.broadcast %549 : vector<7x1xf32> to vector<7x8xf32>
    %551 = vector.shape_cast %548 : vector<7x1xf32> to vector<7x1xf32>
    %552 = vector.broadcast %551 : vector<7x1xf32> to vector<7x8xf32>
    %553 = tpu.concatenate %550, %552 in 1 : vector<7x8xf32>, vector<7x8xf32> -> vector<7x16xf32>
    %cst_210 = arith.constant 0.000000e+00 : f32
    %554 = vector.broadcast %cst_210 : f32 to vector<18x16xf32>
    %cst_211 = arith.constant 0.000000e+00 : f32
    %555 = vector.broadcast %cst_211 : f32 to vector<18x16xf32>
    %556 = tpu.concatenate %554, %553, %555 in 0 : vector<18x16xf32>, vector<7x16xf32>, vector<18x16xf32> -> vector<43x16xf32>
    %c0_212 = arith.constant 0 : index
    %c0_213 = arith.constant 0 : index
    %557 = vector.load %arg18[%c0_212, %c0_213] : memref<49x16xf32, #tpu.memory_space<vmem>>, vector<49x16xf32>
    %cst_214 = arith.constant 0.000000e+00 : f32
    %558 = vector.broadcast %cst_214 : f32 to vector<7x16xf32>
    %559 = vector.extract_strided_slice %556 {offsets = [0, 0], sizes = [7, 16], strides = [1, 1]} : vector<43x16xf32> to vector<7x16xf32>
    %560 = vector.extract_strided_slice %557 {offsets = [0, 0], sizes = [1, 16], strides = [1, 1]} : vector<49x16xf32> to vector<1x16xf32>
    %561 = vector.broadcast %560 : vector<1x16xf32> to vector<7x16xf32>
    %562 = arith.mulf %559, %561 : vector<7x16xf32>
    %563 = arith.addf %558, %562 : vector<7x16xf32>
    %564 = vector.extract_strided_slice %556 {offsets = [1, 0], sizes = [7, 16], strides = [1, 1]} : vector<43x16xf32> to vector<7x16xf32>
    %565 = vector.extract_strided_slice %557 {offsets = [1, 0], sizes = [1, 16], strides = [1, 1]} : vector<49x16xf32> to vector<1x16xf32>
    %566 = vector.broadcast %565 : vector<1x16xf32> to vector<7x16xf32>
    %567 = arith.mulf %564, %566 : vector<7x16xf32>
    %568 = arith.addf %563, %567 : vector<7x16xf32>
    %569 = vector.extract_strided_slice %556 {offsets = [2, 0], sizes = [7, 16], strides = [1, 1]} : vector<43x16xf32> to vector<7x16xf32>
    %570 = vector.extract_strided_slice %557 {offsets = [2, 0], sizes = [1, 16], strides = [1, 1]} : vector<49x16xf32> to vector<1x16xf32>
    %571 = vector.broadcast %570 : vector<1x16xf32> to vector<7x16xf32>
    %572 = arith.mulf %569, %571 : vector<7x16xf32>
    %573 = arith.addf %568, %572 : vector<7x16xf32>
    %574 = vector.extract_strided_slice %556 {offsets = [3, 0], sizes = [7, 16], strides = [1, 1]} : vector<43x16xf32> to vector<7x16xf32>
    %575 = vector.extract_strided_slice %557 {offsets = [3, 0], sizes = [1, 16], strides = [1, 1]} : vector<49x16xf32> to vector<1x16xf32>
    %576 = vector.broadcast %575 : vector<1x16xf32> to vector<7x16xf32>
    %577 = arith.mulf %574, %576 : vector<7x16xf32>
    %578 = arith.addf %573, %577 : vector<7x16xf32>
    %579 = vector.extract_strided_slice %556 {offsets = [4, 0], sizes = [7, 16], strides = [1, 1]} : vector<43x16xf32> to vector<7x16xf32>
    %580 = vector.extract_strided_slice %557 {offsets = [4, 0], sizes = [1, 16], strides = [1, 1]} : vector<49x16xf32> to vector<1x16xf32>
    %581 = vector.broadcast %580 : vector<1x16xf32> to vector<7x16xf32>
    %582 = arith.mulf %579, %581 : vector<7x16xf32>
    %583 = arith.addf %578, %582 : vector<7x16xf32>
    %584 = vector.extract_strided_slice %556 {offsets = [5, 0], sizes = [7, 16], strides = [1, 1]} : vector<43x16xf32> to vector<7x16xf32>
    %585 = vector.extract_strided_slice %557 {offsets = [5, 0], sizes = [1, 16], strides = [1, 1]} : vector<49x16xf32> to vector<1x16xf32>
    %586 = vector.broadcast %585 : vector<1x16xf32> to vector<7x16xf32>
    %587 = arith.mulf %584, %586 : vector<7x16xf32>
    %588 = arith.addf %583, %587 : vector<7x16xf32>
    %589 = vector.extract_strided_slice %556 {offsets = [6, 0], sizes = [7, 16], strides = [1, 1]} : vector<43x16xf32> to vector<7x16xf32>
    %590 = vector.extract_strided_slice %557 {offsets = [6, 0], sizes = [1, 16], strides = [1, 1]} : vector<49x16xf32> to vector<1x16xf32>
    %591 = vector.broadcast %590 : vector<1x16xf32> to vector<7x16xf32>
    %592 = arith.mulf %589, %591 : vector<7x16xf32>
    %593 = arith.addf %588, %592 : vector<7x16xf32>
    %594 = vector.extract_strided_slice %556 {offsets = [5, 0], sizes = [7, 16], strides = [1, 1]} : vector<43x16xf32> to vector<7x16xf32>
    %595 = vector.extract_strided_slice %557 {offsets = [7, 0], sizes = [1, 16], strides = [1, 1]} : vector<49x16xf32> to vector<1x16xf32>
    %596 = vector.broadcast %595 : vector<1x16xf32> to vector<7x16xf32>
    %597 = arith.mulf %594, %596 : vector<7x16xf32>
    %598 = arith.addf %593, %597 : vector<7x16xf32>
    %599 = vector.extract_strided_slice %556 {offsets = [6, 0], sizes = [7, 16], strides = [1, 1]} : vector<43x16xf32> to vector<7x16xf32>
    %600 = vector.extract_strided_slice %557 {offsets = [8, 0], sizes = [1, 16], strides = [1, 1]} : vector<49x16xf32> to vector<1x16xf32>
    %601 = vector.broadcast %600 : vector<1x16xf32> to vector<7x16xf32>
    %602 = arith.mulf %599, %601 : vector<7x16xf32>
    %603 = arith.addf %598, %602 : vector<7x16xf32>
    %604 = vector.extract_strided_slice %556 {offsets = [7, 0], sizes = [7, 16], strides = [1, 1]} : vector<43x16xf32> to vector<7x16xf32>
    %605 = vector.extract_strided_slice %557 {offsets = [9, 0], sizes = [1, 16], strides = [1, 1]} : vector<49x16xf32> to vector<1x16xf32>
    %606 = vector.broadcast %605 : vector<1x16xf32> to vector<7x16xf32>
    %607 = arith.mulf %604, %606 : vector<7x16xf32>
    %608 = arith.addf %603, %607 : vector<7x16xf32>
    %609 = vector.extract_strided_slice %556 {offsets = [8, 0], sizes = [7, 16], strides = [1, 1]} : vector<43x16xf32> to vector<7x16xf32>
    %610 = vector.extract_strided_slice %557 {offsets = [10, 0], sizes = [1, 16], strides = [1, 1]} : vector<49x16xf32> to vector<1x16xf32>
    %611 = vector.broadcast %610 : vector<1x16xf32> to vector<7x16xf32>
    %612 = arith.mulf %609, %611 : vector<7x16xf32>
    %613 = arith.addf %608, %612 : vector<7x16xf32>
    %614 = vector.extract_strided_slice %556 {offsets = [9, 0], sizes = [7, 16], strides = [1, 1]} : vector<43x16xf32> to vector<7x16xf32>
    %615 = vector.extract_strided_slice %557 {offsets = [11, 0], sizes = [1, 16], strides = [1, 1]} : vector<49x16xf32> to vector<1x16xf32>
    %616 = vector.broadcast %615 : vector<1x16xf32> to vector<7x16xf32>
    %617 = arith.mulf %614, %616 : vector<7x16xf32>
    %618 = arith.addf %613, %617 : vector<7x16xf32>
    %619 = vector.extract_strided_slice %556 {offsets = [10, 0], sizes = [7, 16], strides = [1, 1]} : vector<43x16xf32> to vector<7x16xf32>
    %620 = vector.extract_strided_slice %557 {offsets = [12, 0], sizes = [1, 16], strides = [1, 1]} : vector<49x16xf32> to vector<1x16xf32>
    %621 = vector.broadcast %620 : vector<1x16xf32> to vector<7x16xf32>
    %622 = arith.mulf %619, %621 : vector<7x16xf32>
    %623 = arith.addf %618, %622 : vector<7x16xf32>
    %624 = vector.extract_strided_slice %556 {offsets = [11, 0], sizes = [7, 16], strides = [1, 1]} : vector<43x16xf32> to vector<7x16xf32>
    %625 = vector.extract_strided_slice %557 {offsets = [13, 0], sizes = [1, 16], strides = [1, 1]} : vector<49x16xf32> to vector<1x16xf32>
    %626 = vector.broadcast %625 : vector<1x16xf32> to vector<7x16xf32>
    %627 = arith.mulf %624, %626 : vector<7x16xf32>
    %628 = arith.addf %623, %627 : vector<7x16xf32>
    %629 = vector.extract_strided_slice %556 {offsets = [10, 0], sizes = [7, 16], strides = [1, 1]} : vector<43x16xf32> to vector<7x16xf32>
    %630 = vector.extract_strided_slice %557 {offsets = [14, 0], sizes = [1, 16], strides = [1, 1]} : vector<49x16xf32> to vector<1x16xf32>
    %631 = vector.broadcast %630 : vector<1x16xf32> to vector<7x16xf32>
    %632 = arith.mulf %629, %631 : vector<7x16xf32>
    %633 = arith.addf %628, %632 : vector<7x16xf32>
    %634 = vector.extract_strided_slice %556 {offsets = [11, 0], sizes = [7, 16], strides = [1, 1]} : vector<43x16xf32> to vector<7x16xf32>
    %635 = vector.extract_strided_slice %557 {offsets = [15, 0], sizes = [1, 16], strides = [1, 1]} : vector<49x16xf32> to vector<1x16xf32>
    %636 = vector.broadcast %635 : vector<1x16xf32> to vector<7x16xf32>
    %637 = arith.mulf %634, %636 : vector<7x16xf32>
    %638 = arith.addf %633, %637 : vector<7x16xf32>
    %639 = vector.extract_strided_slice %556 {offsets = [12, 0], sizes = [7, 16], strides = [1, 1]} : vector<43x16xf32> to vector<7x16xf32>
    %640 = vector.extract_strided_slice %557 {offsets = [16, 0], sizes = [1, 16], strides = [1, 1]} : vector<49x16xf32> to vector<1x16xf32>
    %641 = vector.broadcast %640 : vector<1x16xf32> to vector<7x16xf32>
    %642 = arith.mulf %639, %641 : vector<7x16xf32>
    %643 = arith.addf %638, %642 : vector<7x16xf32>
    %644 = vector.extract_strided_slice %556 {offsets = [13, 0], sizes = [7, 16], strides = [1, 1]} : vector<43x16xf32> to vector<7x16xf32>
    %645 = vector.extract_strided_slice %557 {offsets = [17, 0], sizes = [1, 16], strides = [1, 1]} : vector<49x16xf32> to vector<1x16xf32>
    %646 = vector.broadcast %645 : vector<1x16xf32> to vector<7x16xf32>
    %647 = arith.mulf %644, %646 : vector<7x16xf32>
    %648 = arith.addf %643, %647 : vector<7x16xf32>
    %649 = vector.extract_strided_slice %556 {offsets = [14, 0], sizes = [7, 16], strides = [1, 1]} : vector<43x16xf32> to vector<7x16xf32>
    %650 = vector.extract_strided_slice %557 {offsets = [18, 0], sizes = [1, 16], strides = [1, 1]} : vector<49x16xf32> to vector<1x16xf32>
    %651 = vector.broadcast %650 : vector<1x16xf32> to vector<7x16xf32>
    %652 = arith.mulf %649, %651 : vector<7x16xf32>
    %653 = arith.addf %648, %652 : vector<7x16xf32>
    %654 = vector.extract_strided_slice %556 {offsets = [15, 0], sizes = [7, 16], strides = [1, 1]} : vector<43x16xf32> to vector<7x16xf32>
    %655 = vector.extract_strided_slice %557 {offsets = [19, 0], sizes = [1, 16], strides = [1, 1]} : vector<49x16xf32> to vector<1x16xf32>
    %656 = vector.broadcast %655 : vector<1x16xf32> to vector<7x16xf32>
    %657 = arith.mulf %654, %656 : vector<7x16xf32>
    %658 = arith.addf %653, %657 : vector<7x16xf32>
    %659 = vector.extract_strided_slice %556 {offsets = [16, 0], sizes = [7, 16], strides = [1, 1]} : vector<43x16xf32> to vector<7x16xf32>
    %660 = vector.extract_strided_slice %557 {offsets = [20, 0], sizes = [1, 16], strides = [1, 1]} : vector<49x16xf32> to vector<1x16xf32>
    %661 = vector.broadcast %660 : vector<1x16xf32> to vector<7x16xf32>
    %662 = arith.mulf %659, %661 : vector<7x16xf32>
    %663 = arith.addf %658, %662 : vector<7x16xf32>
    %664 = vector.extract_strided_slice %556 {offsets = [15, 0], sizes = [7, 16], strides = [1, 1]} : vector<43x16xf32> to vector<7x16xf32>
    %665 = vector.extract_strided_slice %557 {offsets = [21, 0], sizes = [1, 16], strides = [1, 1]} : vector<49x16xf32> to vector<1x16xf32>
    %666 = vector.broadcast %665 : vector<1x16xf32> to vector<7x16xf32>
    %667 = arith.mulf %664, %666 : vector<7x16xf32>
    %668 = arith.addf %663, %667 : vector<7x16xf32>
    %669 = vector.extract_strided_slice %556 {offsets = [16, 0], sizes = [7, 16], strides = [1, 1]} : vector<43x16xf32> to vector<7x16xf32>
    %670 = vector.extract_strided_slice %557 {offsets = [22, 0], sizes = [1, 16], strides = [1, 1]} : vector<49x16xf32> to vector<1x16xf32>
    %671 = vector.broadcast %670 : vector<1x16xf32> to vector<7x16xf32>
    %672 = arith.mulf %669, %671 : vector<7x16xf32>
    %673 = arith.addf %668, %672 : vector<7x16xf32>
    %674 = vector.extract_strided_slice %556 {offsets = [17, 0], sizes = [7, 16], strides = [1, 1]} : vector<43x16xf32> to vector<7x16xf32>
    %675 = vector.extract_strided_slice %557 {offsets = [23, 0], sizes = [1, 16], strides = [1, 1]} : vector<49x16xf32> to vector<1x16xf32>
    %676 = vector.broadcast %675 : vector<1x16xf32> to vector<7x16xf32>
    %677 = arith.mulf %674, %676 : vector<7x16xf32>
    %678 = arith.addf %673, %677 : vector<7x16xf32>
    %679 = vector.extract_strided_slice %556 {offsets = [18, 0], sizes = [7, 16], strides = [1, 1]} : vector<43x16xf32> to vector<7x16xf32>
    %680 = vector.extract_strided_slice %557 {offsets = [24, 0], sizes = [1, 16], strides = [1, 1]} : vector<49x16xf32> to vector<1x16xf32>
    %681 = vector.broadcast %680 : vector<1x16xf32> to vector<7x16xf32>
    %682 = arith.mulf %679, %681 : vector<7x16xf32>
    %683 = arith.addf %678, %682 : vector<7x16xf32>
    %684 = vector.extract_strided_slice %556 {offsets = [19, 0], sizes = [7, 16], strides = [1, 1]} : vector<43x16xf32> to vector<7x16xf32>
    %685 = vector.extract_strided_slice %557 {offsets = [25, 0], sizes = [1, 16], strides = [1, 1]} : vector<49x16xf32> to vector<1x16xf32>
    %686 = vector.broadcast %685 : vector<1x16xf32> to vector<7x16xf32>
    %687 = arith.mulf %684, %686 : vector<7x16xf32>
    %688 = arith.addf %683, %687 : vector<7x16xf32>
    %689 = vector.extract_strided_slice %556 {offsets = [20, 0], sizes = [7, 16], strides = [1, 1]} : vector<43x16xf32> to vector<7x16xf32>
    %690 = vector.extract_strided_slice %557 {offsets = [26, 0], sizes = [1, 16], strides = [1, 1]} : vector<49x16xf32> to vector<1x16xf32>
    %691 = vector.broadcast %690 : vector<1x16xf32> to vector<7x16xf32>
    %692 = arith.mulf %689, %691 : vector<7x16xf32>
    %693 = arith.addf %688, %692 : vector<7x16xf32>
    %694 = vector.extract_strided_slice %556 {offsets = [21, 0], sizes = [7, 16], strides = [1, 1]} : vector<43x16xf32> to vector<7x16xf32>
    %695 = vector.extract_strided_slice %557 {offsets = [27, 0], sizes = [1, 16], strides = [1, 1]} : vector<49x16xf32> to vector<1x16xf32>
    %696 = vector.broadcast %695 : vector<1x16xf32> to vector<7x16xf32>
    %697 = arith.mulf %694, %696 : vector<7x16xf32>
    %698 = arith.addf %693, %697 : vector<7x16xf32>
    %699 = vector.extract_strided_slice %556 {offsets = [20, 0], sizes = [7, 16], strides = [1, 1]} : vector<43x16xf32> to vector<7x16xf32>
    %700 = vector.extract_strided_slice %557 {offsets = [28, 0], sizes = [1, 16], strides = [1, 1]} : vector<49x16xf32> to vector<1x16xf32>
    %701 = vector.broadcast %700 : vector<1x16xf32> to vector<7x16xf32>
    %702 = arith.mulf %699, %701 : vector<7x16xf32>
    %703 = arith.addf %698, %702 : vector<7x16xf32>
    %704 = vector.extract_strided_slice %556 {offsets = [21, 0], sizes = [7, 16], strides = [1, 1]} : vector<43x16xf32> to vector<7x16xf32>
    %705 = vector.extract_strided_slice %557 {offsets = [29, 0], sizes = [1, 16], strides = [1, 1]} : vector<49x16xf32> to vector<1x16xf32>
    %706 = vector.broadcast %705 : vector<1x16xf32> to vector<7x16xf32>
    %707 = arith.mulf %704, %706 : vector<7x16xf32>
    %708 = arith.addf %703, %707 : vector<7x16xf32>
    %709 = vector.extract_strided_slice %556 {offsets = [22, 0], sizes = [7, 16], strides = [1, 1]} : vector<43x16xf32> to vector<7x16xf32>
    %710 = vector.extract_strided_slice %557 {offsets = [30, 0], sizes = [1, 16], strides = [1, 1]} : vector<49x16xf32> to vector<1x16xf32>
    %711 = vector.broadcast %710 : vector<1x16xf32> to vector<7x16xf32>
    %712 = arith.mulf %709, %711 : vector<7x16xf32>
    %713 = arith.addf %708, %712 : vector<7x16xf32>
    %714 = vector.extract_strided_slice %556 {offsets = [23, 0], sizes = [7, 16], strides = [1, 1]} : vector<43x16xf32> to vector<7x16xf32>
    %715 = vector.extract_strided_slice %557 {offsets = [31, 0], sizes = [1, 16], strides = [1, 1]} : vector<49x16xf32> to vector<1x16xf32>
    %716 = vector.broadcast %715 : vector<1x16xf32> to vector<7x16xf32>
    %717 = arith.mulf %714, %716 : vector<7x16xf32>
    %718 = arith.addf %713, %717 : vector<7x16xf32>
    %719 = vector.extract_strided_slice %556 {offsets = [24, 0], sizes = [7, 16], strides = [1, 1]} : vector<43x16xf32> to vector<7x16xf32>
    %720 = vector.extract_strided_slice %557 {offsets = [32, 0], sizes = [1, 16], strides = [1, 1]} : vector<49x16xf32> to vector<1x16xf32>
    %721 = vector.broadcast %720 : vector<1x16xf32> to vector<7x16xf32>
    %722 = arith.mulf %719, %721 : vector<7x16xf32>
    %723 = arith.addf %718, %722 : vector<7x16xf32>
    %724 = vector.extract_strided_slice %556 {offsets = [25, 0], sizes = [7, 16], strides = [1, 1]} : vector<43x16xf32> to vector<7x16xf32>
    %725 = vector.extract_strided_slice %557 {offsets = [33, 0], sizes = [1, 16], strides = [1, 1]} : vector<49x16xf32> to vector<1x16xf32>
    %726 = vector.broadcast %725 : vector<1x16xf32> to vector<7x16xf32>
    %727 = arith.mulf %724, %726 : vector<7x16xf32>
    %728 = arith.addf %723, %727 : vector<7x16xf32>
    %729 = vector.extract_strided_slice %556 {offsets = [26, 0], sizes = [7, 16], strides = [1, 1]} : vector<43x16xf32> to vector<7x16xf32>
    %730 = vector.extract_strided_slice %557 {offsets = [34, 0], sizes = [1, 16], strides = [1, 1]} : vector<49x16xf32> to vector<1x16xf32>
    %731 = vector.broadcast %730 : vector<1x16xf32> to vector<7x16xf32>
    %732 = arith.mulf %729, %731 : vector<7x16xf32>
    %733 = arith.addf %728, %732 : vector<7x16xf32>
    %734 = vector.extract_strided_slice %556 {offsets = [25, 0], sizes = [7, 16], strides = [1, 1]} : vector<43x16xf32> to vector<7x16xf32>
    %735 = vector.extract_strided_slice %557 {offsets = [35, 0], sizes = [1, 16], strides = [1, 1]} : vector<49x16xf32> to vector<1x16xf32>
    %736 = vector.broadcast %735 : vector<1x16xf32> to vector<7x16xf32>
    %737 = arith.mulf %734, %736 : vector<7x16xf32>
    %738 = arith.addf %733, %737 : vector<7x16xf32>
    %739 = vector.extract_strided_slice %556 {offsets = [26, 0], sizes = [7, 16], strides = [1, 1]} : vector<43x16xf32> to vector<7x16xf32>
    %740 = vector.extract_strided_slice %557 {offsets = [36, 0], sizes = [1, 16], strides = [1, 1]} : vector<49x16xf32> to vector<1x16xf32>
    %741 = vector.broadcast %740 : vector<1x16xf32> to vector<7x16xf32>
    %742 = arith.mulf %739, %741 : vector<7x16xf32>
    %743 = arith.addf %738, %742 : vector<7x16xf32>
    %744 = vector.extract_strided_slice %556 {offsets = [27, 0], sizes = [7, 16], strides = [1, 1]} : vector<43x16xf32> to vector<7x16xf32>
    %745 = vector.extract_strided_slice %557 {offsets = [37, 0], sizes = [1, 16], strides = [1, 1]} : vector<49x16xf32> to vector<1x16xf32>
    %746 = vector.broadcast %745 : vector<1x16xf32> to vector<7x16xf32>
    %747 = arith.mulf %744, %746 : vector<7x16xf32>
    %748 = arith.addf %743, %747 : vector<7x16xf32>
    %749 = vector.extract_strided_slice %556 {offsets = [28, 0], sizes = [7, 16], strides = [1, 1]} : vector<43x16xf32> to vector<7x16xf32>
    %750 = vector.extract_strided_slice %557 {offsets = [38, 0], sizes = [1, 16], strides = [1, 1]} : vector<49x16xf32> to vector<1x16xf32>
    %751 = vector.broadcast %750 : vector<1x16xf32> to vector<7x16xf32>
    %752 = arith.mulf %749, %751 : vector<7x16xf32>
    %753 = arith.addf %748, %752 : vector<7x16xf32>
    %754 = vector.extract_strided_slice %556 {offsets = [29, 0], sizes = [7, 16], strides = [1, 1]} : vector<43x16xf32> to vector<7x16xf32>
    %755 = vector.extract_strided_slice %557 {offsets = [39, 0], sizes = [1, 16], strides = [1, 1]} : vector<49x16xf32> to vector<1x16xf32>
    %756 = vector.broadcast %755 : vector<1x16xf32> to vector<7x16xf32>
    %757 = arith.mulf %754, %756 : vector<7x16xf32>
    %758 = arith.addf %753, %757 : vector<7x16xf32>
    %759 = vector.extract_strided_slice %556 {offsets = [30, 0], sizes = [7, 16], strides = [1, 1]} : vector<43x16xf32> to vector<7x16xf32>
    %760 = vector.extract_strided_slice %557 {offsets = [40, 0], sizes = [1, 16], strides = [1, 1]} : vector<49x16xf32> to vector<1x16xf32>
    %761 = vector.broadcast %760 : vector<1x16xf32> to vector<7x16xf32>
    %762 = arith.mulf %759, %761 : vector<7x16xf32>
    %763 = arith.addf %758, %762 : vector<7x16xf32>
    %764 = vector.extract_strided_slice %556 {offsets = [31, 0], sizes = [7, 16], strides = [1, 1]} : vector<43x16xf32> to vector<7x16xf32>
    %765 = vector.extract_strided_slice %557 {offsets = [41, 0], sizes = [1, 16], strides = [1, 1]} : vector<49x16xf32> to vector<1x16xf32>
    %766 = vector.broadcast %765 : vector<1x16xf32> to vector<7x16xf32>
    %767 = arith.mulf %764, %766 : vector<7x16xf32>
    %768 = arith.addf %763, %767 : vector<7x16xf32>
    %769 = vector.extract_strided_slice %556 {offsets = [30, 0], sizes = [7, 16], strides = [1, 1]} : vector<43x16xf32> to vector<7x16xf32>
    %770 = vector.extract_strided_slice %557 {offsets = [42, 0], sizes = [1, 16], strides = [1, 1]} : vector<49x16xf32> to vector<1x16xf32>
    %771 = vector.broadcast %770 : vector<1x16xf32> to vector<7x16xf32>
    %772 = arith.mulf %769, %771 : vector<7x16xf32>
    %773 = arith.addf %768, %772 : vector<7x16xf32>
    %774 = vector.extract_strided_slice %556 {offsets = [31, 0], sizes = [7, 16], strides = [1, 1]} : vector<43x16xf32> to vector<7x16xf32>
    %775 = vector.extract_strided_slice %557 {offsets = [43, 0], sizes = [1, 16], strides = [1, 1]} : vector<49x16xf32> to vector<1x16xf32>
    %776 = vector.broadcast %775 : vector<1x16xf32> to vector<7x16xf32>
    %777 = arith.mulf %774, %776 : vector<7x16xf32>
    %778 = arith.addf %773, %777 : vector<7x16xf32>
    %779 = vector.extract_strided_slice %556 {offsets = [32, 0], sizes = [7, 16], strides = [1, 1]} : vector<43x16xf32> to vector<7x16xf32>
    %780 = vector.extract_strided_slice %557 {offsets = [44, 0], sizes = [1, 16], strides = [1, 1]} : vector<49x16xf32> to vector<1x16xf32>
    %781 = vector.broadcast %780 : vector<1x16xf32> to vector<7x16xf32>
    %782 = arith.mulf %779, %781 : vector<7x16xf32>
    %783 = arith.addf %778, %782 : vector<7x16xf32>
    %784 = vector.extract_strided_slice %556 {offsets = [33, 0], sizes = [7, 16], strides = [1, 1]} : vector<43x16xf32> to vector<7x16xf32>
    %785 = vector.extract_strided_slice %557 {offsets = [45, 0], sizes = [1, 16], strides = [1, 1]} : vector<49x16xf32> to vector<1x16xf32>
    %786 = vector.broadcast %785 : vector<1x16xf32> to vector<7x16xf32>
    %787 = arith.mulf %784, %786 : vector<7x16xf32>
    %788 = arith.addf %783, %787 : vector<7x16xf32>
    %789 = vector.extract_strided_slice %556 {offsets = [34, 0], sizes = [7, 16], strides = [1, 1]} : vector<43x16xf32> to vector<7x16xf32>
    %790 = vector.extract_strided_slice %557 {offsets = [46, 0], sizes = [1, 16], strides = [1, 1]} : vector<49x16xf32> to vector<1x16xf32>
    %791 = vector.broadcast %790 : vector<1x16xf32> to vector<7x16xf32>
    %792 = arith.mulf %789, %791 : vector<7x16xf32>
    %793 = arith.addf %788, %792 : vector<7x16xf32>
    %794 = vector.extract_strided_slice %556 {offsets = [35, 0], sizes = [7, 16], strides = [1, 1]} : vector<43x16xf32> to vector<7x16xf32>
    %795 = vector.extract_strided_slice %557 {offsets = [47, 0], sizes = [1, 16], strides = [1, 1]} : vector<49x16xf32> to vector<1x16xf32>
    %796 = vector.broadcast %795 : vector<1x16xf32> to vector<7x16xf32>
    %797 = arith.mulf %794, %796 : vector<7x16xf32>
    %798 = arith.addf %793, %797 : vector<7x16xf32>
    %799 = vector.extract_strided_slice %556 {offsets = [36, 0], sizes = [7, 16], strides = [1, 1]} : vector<43x16xf32> to vector<7x16xf32>
    %800 = vector.extract_strided_slice %557 {offsets = [48, 0], sizes = [1, 16], strides = [1, 1]} : vector<49x16xf32> to vector<1x16xf32>
    %801 = vector.broadcast %800 : vector<1x16xf32> to vector<7x16xf32>
    %802 = arith.mulf %799, %801 : vector<7x16xf32>
    %803 = arith.addf %798, %802 : vector<7x16xf32>
    %804 = vector.extract_strided_slice %803 {offsets = [0, 0], sizes = [7, 8], strides = [1, 1]} : vector<7x16xf32> to vector<7x8xf32>
    %805 = vector.extract_strided_slice %803 {offsets = [0, 8], sizes = [7, 8], strides = [1, 1]} : vector<7x16xf32> to vector<7x8xf32>
    %806 = arith.addf %804, %805 : vector<7x8xf32>
    %c0_215 = arith.constant 0 : index
    %c0_216 = arith.constant 0 : index
    %807 = vector.load %arg19[%c0_215, %c0_216] : memref<1x8xf32, #tpu.memory_space<vmem>>, vector<1x8xf32>
    %808 = vector.broadcast %807 : vector<1x8xf32> to vector<7x8xf32>
    %809 = arith.addf %806, %808 : vector<7x8xf32>
    %cst_217 = arith.constant 0.000000e+00 : f32
    %810 = vector.broadcast %cst_217 : f32 to vector<7x8xf32>
    %811 = arith.maximumf %809, %810 : vector<7x8xf32>
    %c0_218 = arith.constant 0 : index
    %c0_219 = arith.constant 0 : index
    %812 = vector.load %arg20[%c0_218, %c0_219] : memref<1x8xf32, #tpu.memory_space<vmem>>, vector<1x8xf32>
    %813 = vector.broadcast %812 : vector<1x8xf32> to vector<7x8xf32>
    %814 = arith.mulf %811, %813 : vector<7x8xf32>
    %cst_220 = arith.constant dense<0.000000e+00> : vector<7xf32>
    %815 = vector.multi_reduction <add>, %814, %cst_220 [1] : vector<7x8xf32> to vector<7xf32>
    %816 = vector.shape_cast %815 : vector<7xf32> to vector<7x1xf32>
    %c0_221 = arith.constant 0 : index
    %c0_222 = arith.constant 0 : index
    %817 = vector.load %arg21[%c0_221, %c0_222] : memref<1x1xf32, #tpu.memory_space<vmem>>, vector<1x1xf32>
    %818 = vector.broadcast %817 : vector<1x1xf32> to vector<7x1xf32>
    %819 = arith.addf %816, %818 : vector<7x1xf32>
    %820 = arith.negf %819 : vector<7x1xf32>
    %821 = math.exp %820 : vector<7x1xf32>
    %cst_223 = arith.constant 1.000000e+00 : f32
    %822 = vector.broadcast %cst_223 : f32 to vector<7x1xf32>
    %823 = arith.addf %822, %821 : vector<7x1xf32>
    %824 = arith.divf %822, %823 : vector<7x1xf32>
    %825 = arith.mulf %542, %542 : vector<7x128xf32>
    %826 = vector.broadcast %824 : vector<7x1xf32> to vector<7x128xf32>
    %827 = arith.mulf %825, %826 : vector<7x128xf32>
    %828 = arith.truncf %827 : vector<7x128xf32> to vector<7x128xbf16>
    %c18_224 = arith.constant 18 : index
    %c0_225 = arith.constant 0 : index
    %829 = vector.load %arg34[%c18_224, %c0_225] : memref<48x128xbf16, #tpu.memory_space<vmem>>, vector<7x128xbf16>
    tpu.vector_store %arg34[%c18_224, %c0_225], %828 {strides = array<i32>} : memref<48x128xbf16, #tpu.memory_space<vmem>>, vector<7x128xbf16>,
    %cst_226 = arith.constant 0.000000e+00 : f32
    %830 = vector.broadcast %cst_226 : f32 to vector<7x256xf32>
    %c12 = arith.constant 12 : index
    %c0_227 = arith.constant 0 : index
    %831 = vector.load %arg34[%c12, %c0_227] : memref<48x128xbf16, #tpu.memory_space<vmem>>, vector<7x128xbf16>
    %c13 = arith.constant 13 : index
    %c0_228 = arith.constant 0 : index
    %832 = vector.load %arg34[%c13, %c0_228] : memref<48x128xbf16, #tpu.memory_space<vmem>>, vector<7x128xbf16>
    %833 = tpu.concatenate %831, %832 in 1 : vector<7x128xbf16>, vector<7x128xbf16> -> vector<7x256xbf16>
    %c0_229 = arith.constant 0 : index
    %c0_230 = arith.constant 0 : index
    %834 = vector.load %arg22[%c0_229, %c0_230] : memref<1152x256xbf16, #tpu.memory_space<vmem>>, vector<256x256xbf16>
    %cst_231 = arith.constant dense<0.000000e+00> : vector<7x256xf32>
    %835 = tpu.matmul %833, %834, %cst_231 {dimension_numbers = #tpu.dot_dimension_numbers<[1], [0], [0], [1], [0, 0, 1, 1], [], []>} : vector<7x256xbf16>, vector<256x256xbf16>, vector<7x256xf32> -> vector<7x256xf32>
    %836 = arith.addf %830, %835 : vector<7x256xf32>
    %c14 = arith.constant 14 : index
    %c0_232 = arith.constant 0 : index
    %837 = vector.load %arg34[%c14, %c0_232] : memref<48x128xbf16, #tpu.memory_space<vmem>>, vector<7x128xbf16>
    %c17_233 = arith.constant 17 : index
    %c0_234 = arith.constant 0 : index
    %838 = vector.load %arg34[%c17_233, %c0_234] : memref<48x128xbf16, #tpu.memory_space<vmem>>, vector<7x128xbf16>
    %839 = tpu.concatenate %837, %838 in 1 : vector<7x128xbf16>, vector<7x128xbf16> -> vector<7x256xbf16>
    %c256_235 = arith.constant 256 : index
    %c0_236 = arith.constant 0 : index
    %840 = vector.load %arg22[%c256_235, %c0_236] : memref<1152x256xbf16, #tpu.memory_space<vmem>>, vector<256x256xbf16>
    %cst_237 = arith.constant dense<0.000000e+00> : vector<7x256xf32>
    %841 = tpu.matmul %839, %840, %cst_237 {dimension_numbers = #tpu.dot_dimension_numbers<[1], [0], [0], [1], [0, 0, 1, 1], [], []>} : vector<7x256xbf16>, vector<256x256xbf16>, vector<7x256xf32> -> vector<7x256xf32>
    %842 = arith.addf %836, %841 : vector<7x256xf32>
    %c18_238 = arith.constant 18 : index
    %c0_239 = arith.constant 0 : index
    %843 = vector.load %arg34[%c18_238, %c0_239] : memref<48x128xbf16, #tpu.memory_space<vmem>>, vector<7x128xbf16>
    %c19 = arith.constant 19 : index
    %c0_240 = arith.constant 0 : index
    %844 = vector.load %arg34[%c19, %c0_240] : memref<48x128xbf16, #tpu.memory_space<vmem>>, vector<7x128xbf16>
    %845 = tpu.concatenate %843, %844 in 1 : vector<7x128xbf16>, vector<7x128xbf16> -> vector<7x256xbf16>
    %c512_241 = arith.constant 512 : index
    %c0_242 = arith.constant 0 : index
    %846 = vector.load %arg22[%c512_241, %c0_242] : memref<1152x256xbf16, #tpu.memory_space<vmem>>, vector<256x256xbf16>
    %cst_243 = arith.constant dense<0.000000e+00> : vector<7x256xf32>
    %847 = tpu.matmul %845, %846, %cst_243 {dimension_numbers = #tpu.dot_dimension_numbers<[1], [0], [0], [1], [0, 0, 1, 1], [], []>} : vector<7x256xbf16>, vector<256x256xbf16>, vector<7x256xf32> -> vector<7x256xf32>
    %848 = arith.addf %842, %847 : vector<7x256xf32>
    %c22 = arith.constant 22 : index
    %c0_244 = arith.constant 0 : index
    %849 = vector.load %arg34[%c22, %c0_244] : memref<48x128xbf16, #tpu.memory_space<vmem>>, vector<7x128xbf16>
    %c23_245 = arith.constant 23 : index
    %c0_246 = arith.constant 0 : index
    %850 = vector.load %arg34[%c23_245, %c0_246] : memref<48x128xbf16, #tpu.memory_space<vmem>>, vector<7x128xbf16>
    %851 = tpu.concatenate %849, %850 in 1 : vector<7x128xbf16>, vector<7x128xbf16> -> vector<7x256xbf16>
    %c768_247 = arith.constant 768 : index
    %c0_248 = arith.constant 0 : index
    %852 = vector.load %arg22[%c768_247, %c0_248] : memref<1152x256xbf16, #tpu.memory_space<vmem>>, vector<256x256xbf16>
    %cst_249 = arith.constant dense<0.000000e+00> : vector<7x256xf32>
    %853 = tpu.matmul %851, %852, %cst_249 {dimension_numbers = #tpu.dot_dimension_numbers<[1], [0], [0], [1], [0, 0, 1, 1], [], []>} : vector<7x256xbf16>, vector<256x256xbf16>, vector<7x256xf32> -> vector<7x256xf32>
    %854 = arith.addf %848, %853 : vector<7x256xf32>
    %c24_250 = arith.constant 24 : index
    %c0_251 = arith.constant 0 : index
    %855 = vector.load %arg34[%c24_250, %c0_251] : memref<48x128xbf16, #tpu.memory_space<vmem>>, vector<7x128xbf16>
    %c1024_252 = arith.constant 1024 : index
    %c0_253 = arith.constant 0 : index
    %856 = vector.load %arg22[%c1024_252, %c0_253] : memref<1152x256xbf16, #tpu.memory_space<vmem>>, vector<128x256xbf16>
    %cst_254 = arith.constant dense<0.000000e+00> : vector<7x256xf32>
    %857 = tpu.matmul %855, %856, %cst_254 {dimension_numbers = #tpu.dot_dimension_numbers<[1], [0], [0], [1], [0, 0, 1, 1], [], []>} : vector<7x128xbf16>, vector<128x256xbf16>, vector<7x256xf32> -> vector<7x256xf32>
    %858 = arith.addf %854, %857 : vector<7x256xf32>
    %c0_255 = arith.constant 0 : index
    %c0_256 = arith.constant 0 : index
    %859 = vector.load %arg23[%c0_255, %c0_256] : memref<1x256xf32, #tpu.memory_space<vmem>>, vector<1x256xf32>
    %860 = vector.broadcast %859 : vector<1x256xf32> to vector<7x256xf32>
    %861 = arith.addf %858, %860 : vector<7x256xf32>
    %cst_257 = arith.constant 0.000000e+00 : f32
    %862 = vector.broadcast %cst_257 : f32 to vector<7x256xf32>
    %863 = arith.cmpf oge, %861, %862 : vector<7x256xf32>
    %cst_258 = arith.constant 1.000000e-01 : f32
    %864 = vector.broadcast %cst_258 : f32 to vector<7x256xf32>
    %865 = arith.mulf %864, %861 : vector<7x256xf32>
    %866 = arith.select %863, %861, %865 : vector<7x256xi1>, vector<7x256xf32>
    %cst_259 = arith.constant 1.000000e+00 : f32
    %867 = vector.broadcast %cst_259 : f32 to vector<2x1xf32>
    %cst_260 = arith.constant 0.000000e+00 : f32
    %868 = vector.broadcast %cst_260 : f32 to vector<3x1xf32>
    %869 = tpu.concatenate %867, %868 in 0 : vector<2x1xf32>, vector<3x1xf32> -> vector<5x1xf32>
    %870 = tpu.concatenate %869, %869 in 0 : vector<5x1xf32>, vector<5x1xf32> -> vector<10x1xf32>
    %871 = vector.extract_strided_slice %870 {offsets = [0, 0], sizes = [7, 1], strides = [1, 1]} : vector<10x1xf32> to vector<7x1xf32>
    %872 = vector.broadcast %871 : vector<7x1xf32> to vector<7x256xf32>
    %873 = arith.mulf %866, %872 : vector<7x256xf32>
    %cst_261 = arith.constant dense<0.000000e+00> : vector<256xf32>
    %874 = vector.multi_reduction <add>, %873, %cst_261 [0] : vector<7x256xf32> to vector<256xf32>
    %875 = vector.shape_cast %874 : vector<256xf32> to vector<1x256xf32>
    %cst_262 = arith.constant 2.500000e-01 : f32
    %876 = vector.broadcast %cst_262 : f32 to vector<1x256xf32>
    %877 = arith.mulf %875, %876 : vector<1x256xf32>
    %c0_263 = arith.constant 0 : index
    %c0_264 = arith.constant 0 : index
    %878 = vector.load %arg24[%c0_263, %c0_264] : memref<256x128xf32, #tpu.memory_space<vmem>>, vector<256x128xf32>
    %cst_265 = arith.constant dense<0.000000e+00> : vector<1x128xf32>
    %879 = tpu.matmul %877, %878, %cst_265 {dimension_numbers = #tpu.dot_dimension_numbers<[1], [0], [0], [1], [0, 0, 1, 1], [], []>} : vector<1x256xf32>, vector<256x128xf32>, vector<1x128xf32> -> vector<1x128xf32>
    %c0_266 = arith.constant 0 : index
    %c0_267 = arith.constant 0 : index
    %880 = vector.load %arg25[%c0_266, %c0_267] : memref<1x128xf32, #tpu.memory_space<vmem>>, vector<1x128xf32>
    %881 = arith.addf %879, %880 : vector<1x128xf32>
    %882 = arith.negf %881 : vector<1x128xf32>
    %883 = math.exp %882 : vector<1x128xf32>
    %cst_268 = arith.constant 1.000000e+00 : f32
    %884 = vector.broadcast %cst_268 : f32 to vector<1x128xf32>
    %885 = arith.addf %884, %883 : vector<1x128xf32>
    %886 = arith.divf %884, %885 : vector<1x128xf32>
    %887 = arith.mulf %881, %886 : vector<1x128xf32>
    %c0_269 = arith.constant 0 : index
    %c0_270 = arith.constant 0 : index
    %888 = vector.load %arg26[%c0_269, %c0_270] : memref<128x64xf32, #tpu.memory_space<vmem>>, vector<128x64xf32>
    %cst_271 = arith.constant dense<0.000000e+00> : vector<1x64xf32>
    %889 = tpu.matmul %887, %888, %cst_271 {dimension_numbers = #tpu.dot_dimension_numbers<[1], [0], [0], [1], [0, 0, 1, 1], [], []>} : vector<1x128xf32>, vector<128x64xf32>, vector<1x64xf32> -> vector<1x64xf32>
    %c0_272 = arith.constant 0 : index
    %c0_273 = arith.constant 0 : index
    %890 = vector.load %arg27[%c0_272, %c0_273] : memref<1x64xf32, #tpu.memory_space<vmem>>, vector<1x64xf32>
    %891 = arith.addf %889, %890 : vector<1x64xf32>
    %892 = arith.negf %891 : vector<1x64xf32>
    %893 = math.exp %892 : vector<1x64xf32>
    %cst_274 = arith.constant 1.000000e+00 : f32
    %894 = vector.broadcast %cst_274 : f32 to vector<1x64xf32>
    %895 = arith.addf %894, %893 : vector<1x64xf32>
    %896 = arith.divf %894, %895 : vector<1x64xf32>
    %897 = arith.mulf %891, %896 : vector<1x64xf32>
    %c0_275 = arith.constant 0 : index
    %c0_276 = arith.constant 0 : index
    %898 = vector.load %arg28[%c0_275, %c0_276] : memref<64x128xf32, #tpu.memory_space<vmem>>, vector<64x128xf32>
    %cst_277 = arith.constant dense<0.000000e+00> : vector<1x128xf32>
    %899 = tpu.matmul %897, %898, %cst_277 {dimension_numbers = #tpu.dot_dimension_numbers<[1], [0], [0], [1], [0, 0, 1, 1], [], []>} : vector<1x64xf32>, vector<64x128xf32>, vector<1x128xf32> -> vector<1x128xf32>
    %c0_278 = arith.constant 0 : index
    %c0_279 = arith.constant 0 : index
    %900 = vector.load %arg29[%c0_278, %c0_279] : memref<1x128xf32, #tpu.memory_space<vmem>>, vector<1x128xf32>
    %901 = arith.addf %899, %900 : vector<1x128xf32>
    %c0_280 = arith.constant 0 : index
    %c0_281 = arith.constant 0 : index
    %c0_282 = arith.constant 0 : index
    %902 = vector.load %arg30[%c0_280, %c0_281, %c0_282] : memref<1x1x128xf32, #tpu.memory_space<vmem>>, vector<1x1x128xf32>
    %903 = vector.shape_cast %902 : vector<1x1x128xf32> to vector<1x128xf32>
    %904 = vector.shape_cast %901 : vector<1x128xf32> to vector<1x1x128xf32>
    tpu.vector_store %arg30[%c0_280, %c0_281, %c0_282], %904 {strides = array<i32>} : memref<1x1x128xf32, #tpu.memory_space<vmem>>, vector<1x1x128xf32>,
    return
  }
  func.func @transform_0(%arg0: i32) -> (i32, i32, i32) {
    %c0_i32 = arith.constant 0 : i32
    %c0_i32_0 = arith.constant 0 : i32
    %c0_i32_1 = arith.constant 0 : i32
    return %arg0, %c0_i32, %c0_i32_0 : i32, i32, i32
  }
  func.func @transform_1(%arg0: i32) -> (i32, i32) {
    %c0_i32 = arith.constant 0 : i32
    %c0_i32_0 = arith.constant 0 : i32
    %c0_i32_1 = arith.constant 0 : i32
    return %c0_i32, %c0_i32_0 : i32, i32
  }
  func.func @transform_2(%arg0: i32) -> (i32, i32) {
    %c0_i32 = arith.constant 0 : i32
    %c0_i32_0 = arith.constant 0 : i32
    %c0_i32_1 = arith.constant 0 : i32
    return %c0_i32, %c0_i32_0 : i32, i32
  }
  func.func @transform_3(%arg0: i32) -> (i32, i32) {
    %c0_i32 = arith.constant 0 : i32
    %c0_i32_0 = arith.constant 0 : i32
    %c0_i32_1 = arith.constant 0 : i32
    return %c0_i32, %c0_i32_0 : i32, i32
  }
  func.func @transform_4(%arg0: i32) -> (i32, i32) {
    %c0_i32 = arith.constant 0 : i32
    %c0_i32_0 = arith.constant 0 : i32
    %c0_i32_1 = arith.constant 0 : i32
    return %c0_i32, %c0_i32_0 : i32, i32
  }
  func.func @transform_5(%arg0: i32) -> (i32, i32) {
    %c0_i32 = arith.constant 0 : i32
    %c0_i32_0 = arith.constant 0 : i32
    %c0_i32_1 = arith.constant 0 : i32
    return %c0_i32, %c0_i32_0 : i32, i32
  }
  func.func @transform_6(%arg0: i32) -> (i32, i32) {
    %c0_i32 = arith.constant 0 : i32
    %c0_i32_0 = arith.constant 0 : i32
    %c0_i32_1 = arith.constant 0 : i32
    return %c0_i32, %c0_i32_0 : i32, i32
  }
  func.func @transform_7(%arg0: i32) -> (i32, i32) {
    %c0_i32 = arith.constant 0 : i32
    %c0_i32_0 = arith.constant 0 : i32
    %c0_i32_1 = arith.constant 0 : i32
    return %c0_i32, %c0_i32_0 : i32, i32
  }
  func.func @transform_8(%arg0: i32) -> (i32, i32) {
    %c0_i32 = arith.constant 0 : i32
    %c0_i32_0 = arith.constant 0 : i32
    %c0_i32_1 = arith.constant 0 : i32
    return %c0_i32, %c0_i32_0 : i32, i32
  }
  func.func @transform_9(%arg0: i32) -> (i32, i32) {
    %c0_i32 = arith.constant 0 : i32
    %c0_i32_0 = arith.constant 0 : i32
    %c0_i32_1 = arith.constant 0 : i32
    return %c0_i32, %c0_i32_0 : i32, i32
  }
  func.func @transform_10(%arg0: i32) -> (i32, i32) {
    %c0_i32 = arith.constant 0 : i32
    %c0_i32_0 = arith.constant 0 : i32
    %c0_i32_1 = arith.constant 0 : i32
    return %c0_i32, %c0_i32_0 : i32, i32
  }
  func.func @transform_11(%arg0: i32) -> (i32, i32) {
    %c0_i32 = arith.constant 0 : i32
    %c0_i32_0 = arith.constant 0 : i32
    %c0_i32_1 = arith.constant 0 : i32
    return %c0_i32, %c0_i32_0 : i32, i32
  }
  func.func @transform_12(%arg0: i32) -> (i32, i32) {
    %c0_i32 = arith.constant 0 : i32
    %c0_i32_0 = arith.constant 0 : i32
    %c0_i32_1 = arith.constant 0 : i32
    return %c0_i32, %c0_i32_0 : i32, i32
  }
  func.func @transform_13(%arg0: i32) -> (i32, i32) {
    %c0_i32 = arith.constant 0 : i32
    %c0_i32_0 = arith.constant 0 : i32
    %c0_i32_1 = arith.constant 0 : i32
    return %c0_i32, %c0_i32_0 : i32, i32
  }
  func.func @transform_14(%arg0: i32) -> (i32, i32) {
    %c0_i32 = arith.constant 0 : i32
    %c0_i32_0 = arith.constant 0 : i32
    %c0_i32_1 = arith.constant 0 : i32
    return %c0_i32, %c0_i32_0 : i32, i32
  }
  func.func @transform_15(%arg0: i32) -> (i32, i32) {
    %c0_i32 = arith.constant 0 : i32
    %c0_i32_0 = arith.constant 0 : i32
    %c0_i32_1 = arith.constant 0 : i32
    return %c0_i32, %c0_i32_0 : i32, i32
  }
  func.func @transform_16(%arg0: i32) -> (i32, i32) {
    %c0_i32 = arith.constant 0 : i32
    %c0_i32_0 = arith.constant 0 : i32
    %c0_i32_1 = arith.constant 0 : i32
    return %c0_i32, %c0_i32_0 : i32, i32
  }
  func.func @transform_17(%arg0: i32) -> (i32, i32) {
    %c0_i32 = arith.constant 0 : i32
    %c0_i32_0 = arith.constant 0 : i32
    %c0_i32_1 = arith.constant 0 : i32
    return %c0_i32, %c0_i32_0 : i32, i32
  }
  func.func @transform_18(%arg0: i32) -> (i32, i32) {
    %c0_i32 = arith.constant 0 : i32
    %c0_i32_0 = arith.constant 0 : i32
    %c0_i32_1 = arith.constant 0 : i32
    return %c0_i32, %c0_i32_0 : i32, i32
  }
  func.func @transform_19(%arg0: i32) -> (i32, i32) {
    %c0_i32 = arith.constant 0 : i32
    %c0_i32_0 = arith.constant 0 : i32
    %c0_i32_1 = arith.constant 0 : i32
    return %c0_i32, %c0_i32_0 : i32, i32
  }
  func.func @transform_20(%arg0: i32) -> (i32, i32) {
    %c0_i32 = arith.constant 0 : i32
    %c0_i32_0 = arith.constant 0 : i32
    %c0_i32_1 = arith.constant 0 : i32
    return %c0_i32, %c0_i32_0 : i32, i32
  }
  func.func @transform_21(%arg0: i32) -> (i32, i32) {
    %c0_i32 = arith.constant 0 : i32
    %c0_i32_0 = arith.constant 0 : i32
    %c0_i32_1 = arith.constant 0 : i32
    return %c0_i32, %c0_i32_0 : i32, i32
  }
  func.func @transform_22(%arg0: i32) -> (i32, i32) {
    %c0_i32 = arith.constant 0 : i32
    %c0_i32_0 = arith.constant 0 : i32
    %c0_i32_1 = arith.constant 0 : i32
    return %c0_i32, %c0_i32_0 : i32, i32
  }
  func.func @transform_23(%arg0: i32) -> (i32, i32) {
    %c0_i32 = arith.constant 0 : i32
    %c0_i32_0 = arith.constant 0 : i32
    %c0_i32_1 = arith.constant 0 : i32
    return %c0_i32, %c0_i32_0 : i32, i32
  }
  func.func @transform_24(%arg0: i32) -> (i32, i32) {
    %c0_i32 = arith.constant 0 : i32
    %c0_i32_0 = arith.constant 0 : i32
    %c0_i32_1 = arith.constant 0 : i32
    return %c0_i32, %c0_i32_0 : i32, i32
  }
  func.func @transform_25(%arg0: i32) -> (i32, i32) {
    %c0_i32 = arith.constant 0 : i32
    %c0_i32_0 = arith.constant 0 : i32
    %c0_i32_1 = arith.constant 0 : i32
    return %c0_i32, %c0_i32_0 : i32, i32
  }
  func.func @transform_26(%arg0: i32) -> (i32, i32) {
    %c0_i32 = arith.constant 0 : i32
    %c0_i32_0 = arith.constant 0 : i32
    %c0_i32_1 = arith.constant 0 : i32
    return %c0_i32, %c0_i32_0 : i32, i32
  }
  func.func @transform_27(%arg0: i32) -> (i32, i32) {
    %c0_i32 = arith.constant 0 : i32
    %c0_i32_0 = arith.constant 0 : i32
    %c0_i32_1 = arith.constant 0 : i32
    return %c0_i32, %c0_i32_0 : i32, i32
  }
  func.func @transform_28(%arg0: i32) -> (i32, i32) {
    %c0_i32 = arith.constant 0 : i32
    %c0_i32_0 = arith.constant 0 : i32
    %c0_i32_1 = arith.constant 0 : i32
    return %c0_i32, %c0_i32_0 : i32, i32
  }
  func.func @transform_29(%arg0: i32) -> (i32, i32, i32) {
    %c0_i32 = arith.constant 0 : i32
    %c0_i32_0 = arith.constant 0 : i32
    %c0_i32_1 = arith.constant 0 : i32
    return %arg0, %c0_i32, %c0_i32_0 : i32, i32, i32
  }
}

</mosaic_0001>

<llo_original>
// kernel: hyperspectral_cnn_forward.1
$region0: #{hyperspectral_cnn_forward.1}
  #allocation0 [shape = 'u32[]', space=smem, size = 0x4, offset = 0x4, fixed_abs, tag = 'smem constant byte address 0x4 - core index']
  #allocation1 [shape = 'u32[144,128]{1,0:T(1,128)}', space=vmem, size = 0x12000, scoped, tag = 'internal scratch']
  #allocation2 [shape = 'f32[160,128]{1,0:T(8,128)}', space=vmem, size = 0x14000, scoped, tag = 'scratch operand']
  #allocation3 [shape = 'bf16[80,128]{1,0:T(8,128)(2,1)}', space=vmem, size = 0x5000, scoped, tag = 'scratch operand']
  #allocation4 [shape = 'f32[80,128]{1,0:T(8,128)}', space=vmem, size = 0xa000, scoped, tag = 'scratch operand']
  #allocation5 [shape = 'bf16[48,128]{1,0:T(8,128)(2,1)}', space=vmem, size = 0x3000, scoped, tag = 'scratch operand']
  #allocation6 [shape = 'f32[1,1]{1,0:T(1,128)S(1)}', space=vmem, size = 0x200, scoped, tag = 'scoped memory for hyperspectral_cnn_forward.1']
  #allocation7 [shape = 'f32[1,1]{1,0:T(1,128)S(1)}', space=vmem, size = 0x200, scoped, tag = 'scoped memory for hyperspectral_cnn_forward.1']
  %s0 = inlined_call_operand.smem [shape: u32[30], index: -1, kind: input, shape index: {}]
  %s1 = sld [smem:[%s0]]
  %s2 = scalar_lea.smem %s0, 1
  %s3 = sld [smem:[%s2]]
  %s4 = scalar_lea.smem %s0, 2
  %s5 = sld [smem:[%s4]]
  %s6 = scalar_lea.smem %s0, 3
  %s7 = sld [smem:[%s6]]
  %s8 = scalar_lea.smem %s0, 4
  %s9 = sld [smem:[%s8]]
  %s10 = scalar_lea.smem %s0, 5
  %s11 = sld [smem:[%s10]]
  %s12 = scalar_lea.smem %s0, 6
  %s13 = sld [smem:[%s12]]
  %s14 = scalar_lea.smem %s0, 7
  %s15 = sld [smem:[%s14]]
  %s16 = scalar_lea.smem %s0, 8
  %s17 = sld [smem:[%s16]]
  %s18 = scalar_lea.smem %s0, 9
  %s19 = sld [smem:[%s18]]
  %s20 = scalar_lea.smem %s0, 10
  %s21 = sld [smem:[%s20]]
  %s22 = scalar_lea.smem %s0, 11
  %s23 = sld [smem:[%s22]]
  %s24 = scalar_lea.smem %s0, 12
  %s25 = sld [smem:[%s24]]
  %s26 = scalar_lea.smem %s0, 13
  %s27 = sld [smem:[%s26]]
  %s28 = scalar_lea.smem %s0, 14
  %s29 = sld [smem:[%s28]]
  %s30 = scalar_lea.smem %s0, 15
  %s31 = sld [smem:[%s30]]
  %s32 = scalar_lea.smem %s0, 16
  %s33 = sld [smem:[%s32]]
  %s34 = scalar_lea.smem %s0, 17
  %s35 = sld [smem:[%s34]]
  %s36 = scalar_lea.smem %s0, 18
  %s37 = sld [smem:[%s36]]
  %s38 = scalar_lea.smem %s0, 19
  %s39 = sld [smem:[%s38]]
  %s40 = scalar_lea.smem %s0, 20
  %s41 = sld [smem:[%s40]]
  %s42 = scalar_lea.smem %s0, 21
  %s43 = sld [smem:[%s42]]
  %s44 = scalar_lea.smem %s0, 22
  %s45 = sld [smem:[%s44]]
  %s46 = scalar_lea.smem %s0, 23
  %s47 = sld [smem:[%s46]]
  %s48 = scalar_lea.smem %s0, 24
  %s49 = sld [smem:[%s48]]
  %s50 = scalar_lea.smem %s0, 25
  %s51 = sld [smem:[%s50]]
  %s52 = scalar_lea.smem %s0, 26
  %s53 = sld [smem:[%s52]]
  %s54 = scalar_lea.smem %s0, 27
  %s55 = sld [smem:[%s54]]
  %s56 = scalar_lea.smem %s0, 28
  %s57 = sld [smem:[%s56]]
  %s58 = scalar_lea.smem %s0, 29
  %s59 = sld [smem:[%s58]]
  %s60 = sld [smem:[#allocation0]]
  $region161: #{hyperspectral_cnn_forward.1} parent=0
    _
  %s62 = ssub.s32 1, %s60
  %s63 = scalar_select 0, %s62, %s60
  %v64 = vstv %s21
  %65 = vst [vmem:[#allocation6] sm:$0x1] %v64
  %v66 = vstv %s41
  %67 = vst [vmem:[#allocation7] sm:$0x1] %v66
  $region1: #{hyperspectral_cnn_forward.1} parent=0
    #allocation8 [shape = 'u8[294912]{0}', space=vmem, size = 0x48000, scoped, tag = 'input window, operand 11, single buffered']
    #allocation9 [shape = 's32[2]{0}', space=sflag, size = 0x8, scoped, tag = 'scoped memory for hyperspectral_cnn_forward.1']
    #allocation10 [shape = 's32[2]{0}', space=sflag, size = 0x8, scoped, tag = 'scoped memory for hyperspectral_cnn_forward.1']
    #allocation11 [shape = 'u8[131072]{0}', space=vmem, size = 0x20000, scoped, tag = 'input window, operand 23, single buffered']
    #allocation12 [shape = 's32[1]{0}', space=sflag, size = 0x4, scoped, tag = 'scoped memory for hyperspectral_cnn_forward.1']
    #allocation13 [shape = 'u8[32768]{0}', space=vmem, size = 0x8000, scoped, tag = 'input window, operand 27, single buffered']
    #allocation14 [shape = 'u8[1024]{0}', space=vmem, size = 0x400, scoped, tag = 'output window, operand 0']
    %68 = vsyncpa [#allocation9], 0
    %69 = vsyncpa [#allocation12], 0
    %70 = vsyncpa [#allocation10], 0
    %s71 = scalar_lea.sflag [#allocation10], 1
    %72 = vsyncpa %s71, 0
    loop: start=0, step=1, limit=4
    $region2: #{hyperspectral_cnn_forward.1} parent=1 // loop_pre_header
      _
    $region3: #{hyperspectral_cnn_forward.1} parent=1 // loop_header
      %s74 = sphi 0, %s78
      %p75 = scmp.ge.s32.totalorder %s74, 4
      %s84 = sphi 0, %s86
      %s87 = sphi 0, %s84
      %s88 = sphi 0, %s87
      %s104 = sphi 0, %s88
      %s108 = sphi 0, %s108
      %s110 = sphi 0, %s108
      %s111 = sphi 0, %s110
      %s125 = sphi 0, %s111
      %s129 = sphi 0, %s129
      %s131 = sphi 0, %s129
      %s132 = sphi 0, %s131
      %s146 = sphi 0, %s132
      %s150 = sphi 0, %s150
      %s152 = sphi 0, %s150
      %s153 = sphi 0, %s152
      %s167 = sphi 0, %s153
      %s171 = sphi 0, %s171
      %s173 = sphi 0, %s171
      %s174 = sphi 0, %s173
      %s188 = sphi 0, %s174
      %s192 = sphi 0, %s192
      %s194 = sphi 0, %s192
      %s195 = sphi 0, %s194
      %s209 = sphi 0, %s195
      %s213 = sphi 0, %s213
      %s215 = sphi 0, %s213
      %s216 = sphi 0, %s215
      %s230 = sphi 0, %s216
      %s234 = sphi 0, %s234
      %s236 = sphi 0, %s234
      %s237 = sphi 0, %s236
      %s251 = sphi 0, %s237
      %s255 = sphi 0, %s255
      %s257 = sphi 0, %s255
      %s258 = sphi 0, %s257
      %s272 = sphi 0, %s258
      %s276 = sphi 0, %s276
      %s278 = sphi 0, %s276
      %s279 = sphi 0, %s278
      %s293 = sphi 0, %s279
      %s297 = sphi 0, %s297
      %s299 = sphi 0, %s297
      %s300 = sphi 0, %s299
      %s314 = sphi 0, %s300
      %s318 = sphi 0, %s318
      %s320 = sphi 0, %s318
      %s321 = sphi 0, %s320
      %s335 = sphi 0, %s321
      %s339 = sphi 0, %s339
      %s341 = sphi 0, %s339
      %s342 = sphi 0, %s341
      %s356 = sphi 0, %s342
      %s360 = sphi 0, %s360
      %s362 = sphi 0, %s360
      %s363 = sphi 0, %s362
      %s377 = sphi 0, %s363
      %s381 = sphi 0, %s381
      %s383 = sphi 0, %s381
      %s384 = sphi 0, %s383
      %s398 = sphi 0, %s384
      %s402 = sphi 0, %s402
      %s404 = sphi 0, %s402
      %s405 = sphi 0, %s404
      %s419 = sphi 0, %s405
      %s423 = sphi 0, %s423
      %s425 = sphi 0, %s423
      %s426 = sphi 0, %s425
      %s440 = sphi 0, %s426
      %s444 = sphi 0, %s444
      %s446 = sphi 0, %s444
      %s447 = sphi 0, %s446
      %s461 = sphi 0, %s447
      %s465 = sphi 0, %s465
      %s467 = sphi 0, %s465
      %s468 = sphi 0, %s467
      %s482 = sphi 0, %s468
      %s486 = sphi 0, %s486
      %s488 = sphi 0, %s486
      %s489 = sphi 0, %s488
      %s503 = sphi 0, %s489
      %s507 = sphi 0, %s507
      %s509 = sphi 0, %s507
      %s510 = sphi 0, %s509
      %s524 = sphi 0, %s510
      %s528 = sphi 0, %s528
      %s530 = sphi 0, %s528
      %s531 = sphi 0, %s530
      %s545 = sphi 0, %s531
      %s549 = sphi 0, %s549
      %s551 = sphi 0, %s549
      %s552 = sphi 0, %s551
      %s566 = sphi 0, %s552
      %s570 = sphi 0, %s570
      %s572 = sphi 0, %s570
      %s573 = sphi 0, %s572
      %s587 = sphi 0, %s573
      %s591 = sphi 0, %s591
      %s593 = sphi 0, %s591
      %s594 = sphi 0, %s593
      %s608 = sphi 0, %s594
      %s612 = sphi 0, %s612
      %s614 = sphi 0, %s612
      %s615 = sphi 0, %s614
      %s629 = sphi 0, %s615
      %s633 = sphi 0, %s633
      %s635 = sphi 0, %s633
      %s636 = sphi 0, %s635
      %s650 = sphi 0, %s636
      %s654 = sphi 0, %s654
      %s656 = sphi 0, %s654
      %s657 = sphi 0, %s656
      %s671 = sphi 0, %s657
      %s675 = sphi 0, %s675
      %s677 = sphi 0, %s675
      %s678 = sphi 0, %s677
      %s692 = sphi 0, %s678
      %s698 = sphi 0, %s700
      %s701 = sphi 0, %s698
      %s702 = sphi 0, %s701
      %s718 = sphi 0, %s702
    $region4: #{hyperspectral_cnn_forward.1} parent=1 // loop_header_branch
      %77 = sbr.rel (%p75) target = $region8
    $region5: #{hyperspectral_cnn_forward.1} parent=1 // loop_body
      %s79 = ssub.s32 %s74, 1
      %s80 = ssub.s32 %s74, 2
      %s81 = sadd.s32 %s74, 1
      %s82 = ssub.s32 %s74, %s81
      %p83 = scmp.eq.s32.totalorder %s82, 0
      %s85 = sadd.s32 %s84, 1
      %s86 = scalar_select %p83, %s84, %s85
      %p89 = pneg %p83
      %p90 = scmp.eq.s32.totalorder %s74, 1
      %p91 = por %p89, %p90
      %p92 = scmp.ne.s32.totalorder %s84, %s87
      %p93 = scmp.eq.s32.totalorder %s74, 0
      %p94 = por %p92, %p93
      %p95 = scmp.ne.s32.totalorder %s84, %s87
      %p96 = scmp.eq.s32.totalorder %s79, 1
      %p97 = por %p95, %p96
      %p98 = scmp.ne.s32.totalorder %s87, %s88
      %p99 = scmp.eq.s32.totalorder %s79, 0
      %p100 = por %p98, %p99
      %p101 = scmp.ne.s32.totalorder %s87, %s88
      %p102 = scmp.eq.s32.totalorder %s80, 1
      %p103 = por %p101, %p102
      %p105 = scmp.ne.s32.totalorder %s88, %s104
      %p106 = scmp.eq.s32.totalorder %s80, 0
      %p107 = por %p105, %p106
      %s109 = sadd.s32 %s108, 1
      %p112 = scmp.eq.s32.totalorder %s74, 1
      %p113 = scmp.ne.s32.totalorder %s108, %s110
      %p114 = scmp.eq.s32.totalorder %s74, 0
      %p115 = por %p113, %p114
      %p116 = scmp.ne.s32.totalorder %s108, %s110
      %p117 = scmp.eq.s32.totalorder %s79, 1
      %p118 = por %p116, %p117
      %p119 = scmp.ne.s32.totalorder %s110, %s111
      %p120 = scmp.eq.s32.totalorder %s79, 0
      %p121 = por %p119, %p120
      %p122 = scmp.ne.s32.totalorder %s110, %s111
      %p123 = scmp.eq.s32.totalorder %s80, 1
      %p124 = por %p122, %p123
      %p126 = scmp.ne.s32.totalorder %s111, %s125
      %p127 = scmp.eq.s32.totalorder %s80, 0
      %p128 = por %p126, %p127
      %s130 = sadd.s32 %s129, 1
      %p133 = scmp.eq.s32.totalorder %s74, 1
      %p134 = scmp.ne.s32.totalorder %s129, %s131
      %p135 = scmp.eq.s32.totalorder %s74, 0
      %p136 = por %p134, %p135
      %p137 = scmp.ne.s32.totalorder %s129, %s131
      %p138 = scmp.eq.s32.totalorder %s79, 1
      %p139 = por %p137, %p138
      %p140 = scmp.ne.s32.totalorder %s131, %s132
      %p141 = scmp.eq.s32.totalorder %s79, 0
      %p142 = por %p140, %p141
      %p143 = scmp.ne.s32.totalorder %s131, %s132
      %p144 = scmp.eq.s32.totalorder %s80, 1
      %p145 = por %p143, %p144
      %p147 = scmp.ne.s32.totalorder %s132, %s146
      %p148 = scmp.eq.s32.totalorder %s80, 0
      %p149 = por %p147, %p148
      %s151 = sadd.s32 %s150, 1
      %p154 = scmp.eq.s32.totalorder %s74, 1
      %p155 = scmp.ne.s32.totalorder %s150, %s152
      %p156 = scmp.eq.s32.totalorder %s74, 0
      %p157 = por %p155, %p156
      %p158 = scmp.ne.s32.totalorder %s150, %s152
      %p159 = scmp.eq.s32.totalorder %s79, 1
      %p160 = por %p158, %p159
      %p161 = scmp.ne.s32.totalorder %s152, %s153
      %p162 = scmp.eq.s32.totalorder %s79, 0
      %p163 = por %p161, %p162
      %p164 = scmp.ne.s32.totalorder %s152, %s153
      %p165 = scmp.eq.s32.totalorder %s80, 1
      %p166 = por %p164, %p165
      %p168 = scmp.ne.s32.totalorder %s153, %s167
      %p169 = scmp.eq.s32.totalorder %s80, 0
      %p170 = por %p168, %p169
      %s172 = sadd.s32 %s171, 1
      %p175 = scmp.eq.s32.totalorder %s74, 1
      %p176 = scmp.ne.s32.totalorder %s171, %s173
      %p177 = scmp.eq.s32.totalorder %s74, 0
      %p178 = por %p176, %p177
      %p179 = scmp.ne.s32.totalorder %s171, %s173
      %p180 = scmp.eq.s32.totalorder %s79, 1
      %p181 = por %p179, %p180
      %p182 = scmp.ne.s32.totalorder %s173, %s174
      %p183 = scmp.eq.s32.totalorder %s79, 0
      %p184 = por %p182, %p183
      %p185 = scmp.ne.s32.totalorder %s173, %s174
      %p186 = scmp.eq.s32.totalorder %s80, 1
      %p187 = por %p185, %p186
      %p189 = scmp.ne.s32.totalorder %s174, %s188
      %p190 = scmp.eq.s32.totalorder %s80, 0
      %p191 = por %p189, %p190
      %s193 = sadd.s32 %s192, 1
      %p196 = scmp.eq.s32.totalorder %s74, 1
      %p197 = scmp.ne.s32.totalorder %s192, %s194
      %p198 = scmp.eq.s32.totalorder %s74, 0
      %p199 = por %p197, %p198
      %p200 = scmp.ne.s32.totalorder %s192, %s194
      %p201 = scmp.eq.s32.totalorder %s79, 1
      %p202 = por %p200, %p201
      %p203 = scmp.ne.s32.totalorder %s194, %s195
      %p204 = scmp.eq.s32.totalorder %s79, 0
      %p205 = por %p203, %p204
      %p206 = scmp.ne.s32.totalorder %s194, %s195
      %p207 = scmp.eq.s32.totalorder %s80, 1
      %p208 = por %p206, %p207
      %p210 = scmp.ne.s32.totalorder %s195, %s209
      %p211 = scmp.eq.s32.totalorder %s80, 0
      %p212 = por %p210, %p211
      %s214 = sadd.s32 %s213, 1
      %p217 = scmp.eq.s32.totalorder %s74, 1
      %p218 = scmp.ne.s32.totalorder %s213, %s215
      %p219 = scmp.eq.s32.totalorder %s74, 0
      %p220 = por %p218, %p219
      %p221 = scmp.ne.s32.totalorder %s213, %s215
      %p222 = scmp.eq.s32.totalorder %s79, 1
      %p223 = por %p221, %p222
      %p224 = scmp.ne.s32.totalorder %s215, %s216
      %p225 = scmp.eq.s32.totalorder %s79, 0
      %p226 = por %p224, %p225
      %p227 = scmp.ne.s32.totalorder %s215, %s216
      %p228 = scmp.eq.s32.totalorder %s80, 1
      %p229 = por %p227, %p228
      %p231 = scmp.ne.s32.totalorder %s216, %s230
      %p232 = scmp.eq.s32.totalorder %s80, 0
      %p233 = por %p231, %p232
      %s235 = sadd.s32 %s234, 1
      %p238 = scmp.eq.s32.totalorder %s74, 1
      %p239 = scmp.ne.s32.totalorder %s234, %s236
      %p240 = scmp.eq.s32.totalorder %s74, 0
      %p241 = por %p239, %p240
      %p242 = scmp.ne.s32.totalorder %s234, %s236
      %p243 = scmp.eq.s32.totalorder %s79, 1
      %p244 = por %p242, %p243
      %p245 = scmp.ne.s32.totalorder %s236, %s237
      %p246 = scmp.eq.s32.totalorder %s79, 0
      %p247 = por %p245, %p246
      %p248 = scmp.ne.s32.totalorder %s236, %s237
      %p249 = scmp.eq.s32.totalorder %s80, 1
      %p250 = por %p248, %p249
      %p252 = scmp.ne.s32.totalorder %s237, %s251
      %p253 = scmp.eq.s32.totalorder %s80, 0
      %p254 = por %p252, %p253
      %s256 = sadd.s32 %s255, 1
      %p259 = scmp.eq.s32.totalorder %s74, 1
      %p260 = scmp.ne.s32.totalorder %s255, %s257
      %p261 = scmp.eq.s32.totalorder %s74, 0
      %p262 = por %p260, %p261
      %p263 = scmp.ne.s32.totalorder %s255, %s257
      %p264 = scmp.eq.s32.totalorder %s79, 1
      %p265 = por %p263, %p264
      %p266 = scmp.ne.s32.totalorder %s257, %s258
      %p267 = scmp.eq.s32.totalorder %s79, 0
      %p268 = por %p266, %p267
      %p269 = scmp.ne.s32.totalorder %s257, %s258
      %p270 = scmp.eq.s32.totalorder %s80, 1
      %p271 = por %p269, %p270
      %p273 = scmp.ne.s32.totalorder %s258, %s272
      %p274 = scmp.eq.s32.totalorder %s80, 0
      %p275 = por %p273, %p274
      %s277 = sadd.s32 %s276, 1
      %p280 = scmp.eq.s32.totalorder %s74, 1
      %p281 = scmp.ne.s32.totalorder %s276, %s278
      %p282 = scmp.eq.s32.totalorder %s74, 0
      %p283 = por %p281, %p282
      %p284 = scmp.ne.s32.totalorder %s276, %s278
      %p285 = scmp.eq.s32.totalorder %s79, 1
      %p286 = por %p284, %p285
      %p287 = scmp.ne.s32.totalorder %s278, %s279
      %p288 = scmp.eq.s32.totalorder %s79, 0
      %p289 = por %p287, %p288
      %p290 = scmp.ne.s32.totalorder %s278, %s279
      %p291 = scmp.eq.s32.totalorder %s80, 1
      %p292 = por %p290, %p291
      %p294 = scmp.ne.s32.totalorder %s279, %s293
      %p295 = scmp.eq.s32.totalorder %s80, 0
      %p296 = por %p294, %p295
      %s298 = sadd.s32 %s297, 1
      %p301 = scmp.eq.s32.totalorder %s74, 1
      %p302 = scmp.ne.s32.totalorder %s297, %s299
      %p303 = scmp.eq.s32.totalorder %s74, 0
      %p304 = por %p302, %p303
      %p305 = scmp.ne.s32.totalorder %s297, %s299
      %p306 = scmp.eq.s32.totalorder %s79, 1
      %p307 = por %p305, %p306
      %p308 = scmp.ne.s32.totalorder %s299, %s300
      %p309 = scmp.eq.s32.totalorder %s79, 0
      %p310 = por %p308, %p309
      %p311 = scmp.ne.s32.totalorder %s299, %s300
      %p312 = scmp.eq.s32.totalorder %s80, 1
      %p313 = por %p311, %p312
      %p315 = scmp.ne.s32.totalorder %s300, %s314
      %p316 = scmp.eq.s32.totalorder %s80, 0
      %p317 = por %p315, %p316
      %s319 = sadd.s32 %s318, 1
      %p322 = scmp.eq.s32.totalorder %s74, 1
      %p323 = scmp.ne.s32.totalorder %s318, %s320
      %p324 = scmp.eq.s32.totalorder %s74, 0
      %p325 = por %p323, %p324
      %p326 = scmp.ne.s32.totalorder %s318, %s320
      %p327 = scmp.eq.s32.totalorder %s79, 1
      %p328 = por %p326, %p327
      %p329 = scmp.ne.s32.totalorder %s320, %s321
      %p330 = scmp.eq.s32.totalorder %s79, 0
      %p331 = por %p329, %p330
      %p332 = scmp.ne.s32.totalorder %s320, %s321
      %p333 = scmp.eq.s32.totalorder %s80, 1
      %p334 = por %p332, %p333
      %p336 = scmp.ne.s32.totalorder %s321, %s335
      %p337 = scmp.eq.s32.totalorder %s80, 0
      %p338 = por %p336, %p337
      %s340 = sadd.s32 %s339, 1
      %p343 = scmp.eq.s32.totalorder %s74, 1
      %p344 = scmp.ne.s32.totalorder %s339, %s341
      %p345 = scmp.eq.s32.totalorder %s74, 0
      %p346 = por %p344, %p345
      %p347 = scmp.ne.s32.totalorder %s339, %s341
      %p348 = scmp.eq.s32.totalorder %s79, 1
      %p349 = por %p347, %p348
      %p350 = scmp.ne.s32.totalorder %s341, %s342
      %p351 = scmp.eq.s32.totalorder %s79, 0
      %p352 = por %p350, %p351
      %p353 = scmp.ne.s32.totalorder %s341, %s342
      %p354 = scmp.eq.s32.totalorder %s80, 1
      %p355 = por %p353, %p354
      %p357 = scmp.ne.s32.totalorder %s342, %s356
      %p358 = scmp.eq.s32.totalorder %s80, 0
      %p359 = por %p357, %p358
      %s361 = sadd.s32 %s360, 1
      %p364 = scmp.eq.s32.totalorder %s74, 1
      %p365 = scmp.ne.s32.totalorder %s360, %s362
      %p366 = scmp.eq.s32.totalorder %s74, 0
      %p367 = por %p365, %p366
      %p368 = scmp.ne.s32.totalorder %s360, %s362
      %p369 = scmp.eq.s32.totalorder %s79, 1
      %p370 = por %p368, %p369
      %p371 = scmp.ne.s32.totalorder %s362, %s363
      %p372 = scmp.eq.s32.totalorder %s79, 0
      %p373 = por %p371, %p372
      %p374 = scmp.ne.s32.totalorder %s362, %s363
      %p375 = scmp.eq.s32.totalorder %s80, 1
      %p376 = por %p374, %p375
      %p378 = scmp.ne.s32.totalorder %s363, %s377
      %p379 = scmp.eq.s32.totalorder %s80, 0
      %p380 = por %p378, %p379
      %s382 = sadd.s32 %s381, 1
      %p385 = scmp.eq.s32.totalorder %s74, 1
      %p386 = scmp.ne.s32.totalorder %s381, %s383
      %p387 = scmp.eq.s32.totalorder %s74, 0
      %p388 = por %p386, %p387
      %p389 = scmp.ne.s32.totalorder %s381, %s383
      %p390 = scmp.eq.s32.totalorder %s79, 1
      %p391 = por %p389, %p390
      %p392 = scmp.ne.s32.totalorder %s383, %s384
      %p393 = scmp.eq.s32.totalorder %s79, 0
      %p394 = por %p392, %p393
      %p395 = scmp.ne.s32.totalorder %s383, %s384
      %p396 = scmp.eq.s32.totalorder %s80, 1
      %p397 = por %p395, %p396
      %p399 = scmp.ne.s32.totalorder %s384, %s398
      %p400 = scmp.eq.s32.totalorder %s80, 0
      %p401 = por %p399, %p400
      %s403 = sadd.s32 %s402, 1
      %p406 = scmp.eq.s32.totalorder %s74, 1
      %p407 = scmp.ne.s32.totalorder %s402, %s404
      %p408 = scmp.eq.s32.totalorder %s74, 0
      %p409 = por %p407, %p408
      %p410 = scmp.ne.s32.totalorder %s402, %s404
      %p411 = scmp.eq.s32.totalorder %s79, 1
      %p412 = por %p410, %p411
      %p413 = scmp.ne.s32.totalorder %s404, %s405
      %p414 = scmp.eq.s32.totalorder %s79, 0
      %p415 = por %p413, %p414
      %p416 = scmp.ne.s32.totalorder %s404, %s405
      %p417 = scmp.eq.s32.totalorder %s80, 1
      %p418 = por %p416, %p417
      %p420 = scmp.ne.s32.totalorder %s405, %s419
      %p421 = scmp.eq.s32.totalorder %s80, 0
      %p422 = por %p420, %p421
      %s424 = sadd.s32 %s423, 1
      %p427 = scmp.eq.s32.totalorder %s74, 1
      %p428 = scmp.ne.s32.totalorder %s423, %s425
      %p429 = scmp.eq.s32.totalorder %s74, 0
      %p430 = por %p428, %p429
      %p431 = scmp.ne.s32.totalorder %s423, %s425
      %p432 = scmp.eq.s32.totalorder %s79, 1
      %p433 = por %p431, %p432
      %p434 = scmp.ne.s32.totalorder %s425, %s426
      %p435 = scmp.eq.s32.totalorder %s79, 0
      %p436 = por %p434, %p435
      %p437 = scmp.ne.s32.totalorder %s425, %s426
      %p438 = scmp.eq.s32.totalorder %s80, 1
      %p439 = por %p437, %p438
      %p441 = scmp.ne.s32.totalorder %s426, %s440
      %p442 = scmp.eq.s32.totalorder %s80, 0
      %p443 = por %p441, %p442
      %s445 = sadd.s32 %s444, 1
      %p448 = scmp.eq.s32.totalorder %s74, 1
      %p449 = scmp.ne.s32.totalorder %s444, %s446
      %p450 = scmp.eq.s32.totalorder %s74, 0
      %p451 = por %p449, %p450
      %p452 = scmp.ne.s32.totalorder %s444, %s446
      %p453 = scmp.eq.s32.totalorder %s79, 1
      %p454 = por %p452, %p453
      %p455 = scmp.ne.s32.totalorder %s446, %s447
      %p456 = scmp.eq.s32.totalorder %s79, 0
      %p457 = por %p455, %p456
      %p458 = scmp.ne.s32.totalorder %s446, %s447
      %p459 = scmp.eq.s32.totalorder %s80, 1
      %p460 = por %p458, %p459
      %p462 = scmp.ne.s32.totalorder %s447, %s461
      %p463 = scmp.eq.s32.totalorder %s80, 0
      %p464 = por %p462, %p463
      %s466 = sadd.s32 %s465, 1
      %p469 = scmp.eq.s32.totalorder %s74, 1
      %p470 = scmp.ne.s32.totalorder %s465, %s467
      %p471 = scmp.eq.s32.totalorder %s74, 0
      %p472 = por %p470, %p471
      %p473 = scmp.ne.s32.totalorder %s465, %s467
      %p474 = scmp.eq.s32.totalorder %s79, 1
      %p475 = por %p473, %p474
      %p476 = scmp.ne.s32.totalorder %s467, %s468
      %p477 = scmp.eq.s32.totalorder %s79, 0
      %p478 = por %p476, %p477
      %p479 = scmp.ne.s32.totalorder %s467, %s468
      %p480 = scmp.eq.s32.totalorder %s80, 1
      %p481 = por %p479, %p480
      %p483 = scmp.ne.s32.totalorder %s468, %s482
      %p484 = scmp.eq.s32.totalorder %s80, 0
      %p485 = por %p483, %p484
      %s487 = sadd.s32 %s486, 1
      %p490 = scmp.eq.s32.totalorder %s74, 1
      %p491 = scmp.ne.s32.totalorder %s486, %s488
      %p492 = scmp.eq.s32.totalorder %s74, 0
      %p493 = por %p491, %p492
      %p494 = scmp.ne.s32.totalorder %s486, %s488
      %p495 = scmp.eq.s32.totalorder %s79, 1
      %p496 = por %p494, %p495
      %p497 = scmp.ne.s32.totalorder %s488, %s489
      %p498 = scmp.eq.s32.totalorder %s79, 0
      %p499 = por %p497, %p498
      %p500 = scmp.ne.s32.totalorder %s488, %s489
      %p501 = scmp.eq.s32.totalorder %s80, 1
      %p502 = por %p500, %p501
      %p504 = scmp.ne.s32.totalorder %s489, %s503
      %p505 = scmp.eq.s32.totalorder %s80, 0
      %p506 = por %p504, %p505
      %s508 = sadd.s32 %s507, 1
      %p511 = scmp.eq.s32.totalorder %s74, 1
      %p512 = scmp.ne.s32.totalorder %s507, %s509
      %p513 = scmp.eq.s32.totalorder %s74, 0
      %p514 = por %p512, %p513
      %p515 = scmp.ne.s32.totalorder %s507, %s509
      %p516 = scmp.eq.s32.totalorder %s79, 1
      %p517 = por %p515, %p516
      %p518 = scmp.ne.s32.totalorder %s509, %s510
      %p519 = scmp.eq.s32.totalorder %s79, 0
      %p520 = por %p518, %p519
      %p521 = scmp.ne.s32.totalorder %s509, %s510
      %p522 = scmp.eq.s32.totalorder %s80, 1
      %p523 = por %p521, %p522
      %p525 = scmp.ne.s32.totalorder %s510, %s524
      %p526 = scmp.eq.s32.totalorder %s80, 0
      %p527 = por %p525, %p526
      %s529 = sadd.s32 %s528, 1
      %p532 = scmp.eq.s32.totalorder %s74, 1
      %p533 = scmp.ne.s32.totalorder %s528, %s530
      %p534 = scmp.eq.s32.totalorder %s74, 0
      %p535 = por %p533, %p534
      %p536 = scmp.ne.s32.totalorder %s528, %s530
      %p537 = scmp.eq.s32.totalorder %s79, 1
      %p538 = por %p536, %p537
      %p539 = scmp.ne.s32.totalorder %s530, %s531
      %p540 = scmp.eq.s32.totalorder %s79, 0
      %p541 = por %p539, %p540
      %p542 = scmp.ne.s32.totalorder %s530, %s531
      %p543 = scmp.eq.s32.totalorder %s80, 1
      %p544 = por %p542, %p543
      %p546 = scmp.ne.s32.totalorder %s531, %s545
      %p547 = scmp.eq.s32.totalorder %s80, 0
      %p548 = por %p546, %p547
      %s550 = sadd.s32 %s549, 1
      %p553 = scmp.eq.s32.totalorder %s74, 1
      %p554 = scmp.ne.s32.totalorder %s549, %s551
      %p555 = scmp.eq.s32.totalorder %s74, 0
      %p556 = por %p554, %p555
      %p557 = scmp.ne.s32.totalorder %s549, %s551
      %p558 = scmp.eq.s32.totalorder %s79, 1
      %p559 = por %p557, %p558
      %p560 = scmp.ne.s32.totalorder %s551, %s552
      %p561 = scmp.eq.s32.totalorder %s79, 0
      %p562 = por %p560, %p561
      %p563 = scmp.ne.s32.totalorder %s551, %s552
      %p564 = scmp.eq.s32.totalorder %s80, 1
      %p565 = por %p563, %p564
      %p567 = scmp.ne.s32.totalorder %s552, %s566
      %p568 = scmp.eq.s32.totalorder %s80, 0
      %p569 = por %p567, %p568
      %s571 = sadd.s32 %s570, 1
      %p574 = scmp.eq.s32.totalorder %s74, 1
      %p575 = scmp.ne.s32.totalorder %s570, %s572
      %p576 = scmp.eq.s32.totalorder %s74, 0
      %p577 = por %p575, %p576
      %p578 = scmp.ne.s32.totalorder %s570, %s572
      %p579 = scmp.eq.s32.totalorder %s79, 1
      %p580 = por %p578, %p579
      %p581 = scmp.ne.s32.totalorder %s572, %s573
      %p582 = scmp.eq.s32.totalorder %s79, 0
      %p583 = por %p581, %p582
      %p584 = scmp.ne.s32.totalorder %s572, %s573
      %p585 = scmp.eq.s32.totalorder %s80, 1
      %p586 = por %p584, %p585
      %p588 = scmp.ne.s32.totalorder %s573, %s587
      %p589 = scmp.eq.s32.totalorder %s80, 0
      %p590 = por %p588, %p589
      %s592 = sadd.s32 %s591, 1
      %p595 = scmp.eq.s32.totalorder %s74, 1
      %p596 = scmp.ne.s32.totalorder %s591, %s593
      %p597 = scmp.eq.s32.totalorder %s74, 0
      %p598 = por %p596, %p597
      %p599 = scmp.ne.s32.totalorder %s591, %s593
      %p600 = scmp.eq.s32.totalorder %s79, 1
      %p601 = por %p599, %p600
      %p602 = scmp.ne.s32.totalorder %s593, %s594
      %p603 = scmp.eq.s32.totalorder %s79, 0
      %p604 = por %p602, %p603
      %p605 = scmp.ne.s32.totalorder %s593, %s594
      %p606 = scmp.eq.s32.totalorder %s80, 1
      %p607 = por %p605, %p606
      %p609 = scmp.ne.s32.totalorder %s594, %s608
      %p610 = scmp.eq.s32.totalorder %s80, 0
      %p611 = por %p609, %p610
      %s613 = sadd.s32 %s612, 1
      %p616 = scmp.eq.s32.totalorder %s74, 1
      %p617 = scmp.ne.s32.totalorder %s612, %s614
      %p618 = scmp.eq.s32.totalorder %s74, 0
      %p619 = por %p617, %p618
      %p620 = scmp.ne.s32.totalorder %s612, %s614
      %p621 = scmp.eq.s32.totalorder %s79, 1
      %p622 = por %p620, %p621
      %p623 = scmp.ne.s32.totalorder %s614, %s615
      %p624 = scmp.eq.s32.totalorder %s79, 0
      %p625 = por %p623, %p624
      %p626 = scmp.ne.s32.totalorder %s614, %s615
      %p627 = scmp.eq.s32.totalorder %s80, 1
      %p628 = por %p626, %p627
      %p630 = scmp.ne.s32.totalorder %s615, %s629
      %p631 = scmp.eq.s32.totalorder %s80, 0
      %p632 = por %p630, %p631
      %s634 = sadd.s32 %s633, 1
      %p637 = scmp.eq.s32.totalorder %s74, 1
      %p638 = scmp.ne.s32.totalorder %s633, %s635
      %p639 = scmp.eq.s32.totalorder %s74, 0
      %p640 = por %p638, %p639
      %p641 = scmp.ne.s32.totalorder %s633, %s635
      %p642 = scmp.eq.s32.totalorder %s79, 1
      %p643 = por %p641, %p642
      %p644 = scmp.ne.s32.totalorder %s635, %s636
      %p645 = scmp.eq.s32.totalorder %s79, 0
      %p646 = por %p644, %p645
      %p647 = scmp.ne.s32.totalorder %s635, %s636
      %p648 = scmp.eq.s32.totalorder %s80, 1
      %p649 = por %p647, %p648
      %p651 = scmp.ne.s32.totalorder %s636, %s650
      %p652 = scmp.eq.s32.totalorder %s80, 0
      %p653 = por %p651, %p652
      %s655 = sadd.s32 %s654, 1
      %p658 = scmp.eq.s32.totalorder %s74, 1
      %p659 = scmp.ne.s32.totalorder %s654, %s656
      %p660 = scmp.eq.s32.totalorder %s74, 0
      %p661 = por %p659, %p660
      %p662 = scmp.ne.s32.totalorder %s654, %s656
      %p663 = scmp.eq.s32.totalorder %s79, 1
      %p664 = por %p662, %p663
      %p665 = scmp.ne.s32.totalorder %s656, %s657
      %p666 = scmp.eq.s32.totalorder %s79, 0
      %p667 = por %p665, %p666
      %p668 = scmp.ne.s32.totalorder %s656, %s657
      %p669 = scmp.eq.s32.totalorder %s80, 1
      %p670 = por %p668, %p669
      %p672 = scmp.ne.s32.totalorder %s657, %s671
      %p673 = scmp.eq.s32.totalorder %s80, 0
      %p674 = por %p672, %p673
      %s676 = sadd.s32 %s675, 1
      %p679 = scmp.eq.s32.totalorder %s74, 1
      %p680 = scmp.ne.s32.totalorder %s675, %s677
      %p681 = scmp.eq.s32.totalorder %s74, 0
      %p682 = por %p680, %p681
      %p683 = scmp.ne.s32.totalorder %s675, %s677
      %p684 = scmp.eq.s32.totalorder %s79, 1
      %p685 = por %p683, %p684
      %p686 = scmp.ne.s32.totalorder %s677, %s678
      %p687 = scmp.eq.s32.totalorder %s79, 0
      %p688 = por %p686, %p687
      %p689 = scmp.ne.s32.totalorder %s677, %s678
      %p690 = scmp.eq.s32.totalorder %s80, 1
      %p691 = por %p689, %p690
      %p693 = scmp.ne.s32.totalorder %s678, %s692
      %p694 = scmp.eq.s32.totalorder %s80, 0
      %p695 = por %p693, %p694
      %s696 = ssub.s32 %s74, %s81
      %p697 = scmp.eq.s32.totalorder %s696, 0
      %s699 = sadd.s32 %s698, 1
      %s700 = scalar_select %p697, %s698, %s699
      %p703 = pneg %p697
      %p704 = scmp.eq.s32.totalorder %s74, 1
      %p705 = por %p703, %p704
      %p706 = scmp.ne.s32.totalorder %s698, %s701
      %p707 = scmp.eq.s32.totalorder %s74, 0
      %p708 = por %p706, %p707
      %p709 = scmp.ne.s32.totalorder %s698, %s701
      %p710 = scmp.eq.s32.totalorder %s79, 1
      %p711 = por %p709, %p710
      %p712 = scmp.ne.s32.totalorder %s701, %s702
      %p713 = scmp.eq.s32.totalorder %s79, 0
      %p714 = por %p712, %p713
      %p715 = scmp.ne.s32.totalorder %s701, %s702
      %p716 = scmp.eq.s32.totalorder %s80, 1
      %p717 = por %p715, %p716
      %p719 = scmp.ne.s32.totalorder %s702, %s718
      %p720 = scmp.eq.s32.totalorder %s80, 0
      %p721 = por %p719, %p720
      %p722 = scmp.le.s32.totalorder 1, %s74
      %p723 = scmp.lt.s32.totalorder %s74, 3
      %p724 = pnand %p722, %p723
      %p725 = pneg %p724
      // Predicated region
      $region9: #{hyperspectral_cnn_forward.1} parent=5 // pred_check
        _
      $region10: #{hyperspectral_cnn_forward.1} parent=5 // pred_check_branch
        %727 = sbr.rel (%p724) target = $region12
      $region11: #{hyperspectral_cnn_forward.1} parent=5 // pred_region
        %s728 = ssub.s32 %s74, 1
        // Predicated region
        $region13: #{hyperspectral_cnn_forward.1} parent=11 // pred_check
          %p729 = pneg %p121
        $region14: #{hyperspectral_cnn_forward.1} parent=11 // pred_check_branch
          %731 = sbr.rel (%p729) target = $region16
        $region15: #{hyperspectral_cnn_forward.1} parent=11 // pred_region
          _
        $region16: #{hyperspectral_cnn_forward.1} parent=11 // pred_fallthru
          _
        // Predicated region
        $region17: #{hyperspectral_cnn_forward.1} parent=11 // pred_check
          %p732 = pneg %p142
        $region18: #{hyperspectral_cnn_forward.1} parent=11 // pred_check_branch
          %734 = sbr.rel (%p732) target = $region20
        $region19: #{hyperspectral_cnn_forward.1} parent=11 // pred_region
          _
        $region20: #{hyperspectral_cnn_forward.1} parent=11 // pred_fallthru
          _
        // Predicated region
        $region21: #{hyperspectral_cnn_forward.1} parent=11 // pred_check
          %p735 = pneg %p163
        $region22: #{hyperspectral_cnn_forward.1} parent=11 // pred_check_branch
          %737 = sbr.rel (%p735) target = $region24
        $region23: #{hyperspectral_cnn_forward.1} parent=11 // pred_region
          _
        $region24: #{hyperspectral_cnn_forward.1} parent=11 // pred_fallthru
          _
        // Predicated region
        $region25: #{hyperspectral_cnn_forward.1} parent=11 // pred_check
          %p738 = pneg %p184
        $region26: #{hyperspectral_cnn_forward.1} parent=11 // pred_check_branch
          %740 = sbr.rel (%p738) target = $region28
        $region27: #{hyperspectral_cnn_forward.1} parent=11 // pred_region
          _
        $region28: #{hyperspectral_cnn_forward.1} parent=11 // pred_fallthru
          _
        // Predicated region
        $region29: #{hyperspectral_cnn_forward.1} parent=11 // pred_check
          %p741 = pneg %p205
        $region30: #{hyperspectral_cnn_forward.1} parent=11 // pred_check_branch
          %743 = sbr.rel (%p741) target = $region32
        $region31: #{hyperspectral_cnn_forward.1} parent=11 // pred_region
          _
        $region32: #{hyperspectral_cnn_forward.1} parent=11 // pred_fallthru
          _
        // Predicated region
        $region33: #{hyperspectral_cnn_forward.1} parent=11 // pred_check
          %p744 = pneg %p226
        $region34: #{hyperspectral_cnn_forward.1} parent=11 // pred_check_branch
          %746 = sbr.rel (%p744) target = $region36
        $region35: #{hyperspectral_cnn_forward.1} parent=11 // pred_region
          _
        $region36: #{hyperspectral_cnn_forward.1} parent=11 // pred_fallthru
          _
        // Predicated region
        $region37: #{hyperspectral_cnn_forward.1} parent=11 // pred_check
          %p747 = pneg %p247
        $region38: #{hyperspectral_cnn_forward.1} parent=11 // pred_check_branch
          %749 = sbr.rel (%p747) target = $region40
        $region39: #{hyperspectral_cnn_forward.1} parent=11 // pred_region
          _
        $region40: #{hyperspectral_cnn_forward.1} parent=11 // pred_fallthru
          _
        // Predicated region
        $region41: #{hyperspectral_cnn_forward.1} parent=11 // pred_check
          %p750 = pneg %p268
        $region42: #{hyperspectral_cnn_forward.1} parent=11 // pred_check_branch
          %752 = sbr.rel (%p750) target = $region44
        $region43: #{hyperspectral_cnn_forward.1} parent=11 // pred_region
          _
        $region44: #{hyperspectral_cnn_forward.1} parent=11 // pred_fallthru
          _
        // Predicated region
        $region45: #{hyperspectral_cnn_forward.1} parent=11 // pred_check
          %p753 = pneg %p289
        $region46: #{hyperspectral_cnn_forward.1} parent=11 // pred_check_branch
          %755 = sbr.rel (%p753) target = $region48
        $region47: #{hyperspectral_cnn_forward.1} parent=11 // pred_region
          _
        $region48: #{hyperspectral_cnn_forward.1} parent=11 // pred_fallthru
          _
        // Predicated region
        $region49: #{hyperspectral_cnn_forward.1} parent=11 // pred_check
          %p756 = pneg %p310
        $region50: #{hyperspectral_cnn_forward.1} parent=11 // pred_check_branch
          %758 = sbr.rel (%p756) target = $region52
        $region51: #{hyperspectral_cnn_forward.1} parent=11 // pred_region
          _
        $region52: #{hyperspectral_cnn_forward.1} parent=11 // pred_fallthru
          _
        // Predicated region
        $region53: #{hyperspectral_cnn_forward.1} parent=11 // pred_check
          %p759 = pneg %p331
        $region54: #{hyperspectral_cnn_forward.1} parent=11 // pred_check_branch
          %761 = sbr.rel (%p759) target = $region56
        $region55: #{hyperspectral_cnn_forward.1} parent=11 // pred_region
          %s763 = ssub.s32 9216, 9216
          %764 = vsyncadd [#allocation9], %s763
          %s765 = sshll.u32 [#allocation8], 4
          %s766 = int_to_ptr.vmem [resolvable:$true] %s765
          %771 = dma.hbm_to_vmem [thread:$0]  %s23, 9216, %s766, [#allocation9], 64, 64, 4
        $region56: #{hyperspectral_cnn_forward.1} parent=11 // pred_fallthru
          _
        // Predicated region
        $region57: #{hyperspectral_cnn_forward.1} parent=11 // pred_check
          %p772 = pneg %p352
        $region58: #{hyperspectral_cnn_forward.1} parent=11 // pred_check_branch
          %774 = sbr.rel (%p772) target = $region60
        $region59: #{hyperspectral_cnn_forward.1} parent=11 // pred_region
          _
        $region60: #{hyperspectral_cnn_forward.1} parent=11 // pred_fallthru
          _
        // Predicated region
        $region61: #{hyperspectral_cnn_forward.1} parent=11 // pred_check
          %p775 = pneg %p373
        $region62: #{hyperspectral_cnn_forward.1} parent=11 // pred_check_branch
          %777 = sbr.rel (%p775) target = $region64
        $region63: #{hyperspectral_cnn_forward.1} parent=11 // pred_region
          _
        $region64: #{hyperspectral_cnn_forward.1} parent=11 // pred_fallthru
          _
        // Predicated region
        $region65: #{hyperspectral_cnn_forward.1} parent=11 // pred_check
          %p778 = pneg %p394
        $region66: #{hyperspectral_cnn_forward.1} parent=11 // pred_check_branch
          %780 = sbr.rel (%p778) target = $region68
        $region67: #{hyperspectral_cnn_forward.1} parent=11 // pred_region
          _
        $region68: #{hyperspectral_cnn_forward.1} parent=11 // pred_fallthru
          _
        // Predicated region
        $region69: #{hyperspectral_cnn_forward.1} parent=11 // pred_check
          %p781 = pneg %p415
        $region70: #{hyperspectral_cnn_forward.1} parent=11 // pred_check_branch
          %783 = sbr.rel (%p781) target = $region72
        $region71: #{hyperspectral_cnn_forward.1} parent=11 // pred_region
          _
        $region72: #{hyperspectral_cnn_forward.1} parent=11 // pred_fallthru
          _
        // Predicated region
        $region73: #{hyperspectral_cnn_forward.1} parent=11 // pred_check
          %p784 = pneg %p436
        $region74: #{hyperspectral_cnn_forward.1} parent=11 // pred_check_branch
          %786 = sbr.rel (%p784) target = $region76
        $region75: #{hyperspectral_cnn_forward.1} parent=11 // pred_region
          _
        $region76: #{hyperspectral_cnn_forward.1} parent=11 // pred_fallthru
          _
        // Predicated region
        $region77: #{hyperspectral_cnn_forward.1} parent=11 // pred_check
          %p787 = pneg %p457
        $region78: #{hyperspectral_cnn_forward.1} parent=11 // pred_check_branch
          %789 = sbr.rel (%p787) target = $region80
        $region79: #{hyperspectral_cnn_forward.1} parent=11 // pred_region
          _
        $region80: #{hyperspectral_cnn_forward.1} parent=11 // pred_fallthru
          _
        // Predicated region
        $region81: #{hyperspectral_cnn_forward.1} parent=11 // pred_check
          %p790 = pneg %p478
        $region82: #{hyperspectral_cnn_forward.1} parent=11 // pred_check_branch
          %792 = sbr.rel (%p790) target = $region84
        $region83: #{hyperspectral_cnn_forward.1} parent=11 // pred_region
          _
        $region84: #{hyperspectral_cnn_forward.1} parent=11 // pred_fallthru
          _
        // Predicated region
        $region85: #{hyperspectral_cnn_forward.1} parent=11 // pred_check
          %p793 = pneg %p499
        $region86: #{hyperspectral_cnn_forward.1} parent=11 // pred_check_branch
          %795 = sbr.rel (%p793) target = $region88
        $region87: #{hyperspectral_cnn_forward.1} parent=11 // pred_region
          _
        $region88: #{hyperspectral_cnn_forward.1} parent=11 // pred_fallthru
          _
        // Predicated region
        $region89: #{hyperspectral_cnn_forward.1} parent=11 // pred_check
          %p796 = pneg %p520
        $region90: #{hyperspectral_cnn_forward.1} parent=11 // pred_check_branch
          %798 = sbr.rel (%p796) target = $region92
        $region91: #{hyperspectral_cnn_forward.1} parent=11 // pred_region
          _
        $region92: #{hyperspectral_cnn_forward.1} parent=11 // pred_fallthru
          _
        // Predicated region
        $region93: #{hyperspectral_cnn_forward.1} parent=11 // pred_check
          %p799 = pneg %p541
        $region94: #{hyperspectral_cnn_forward.1} parent=11 // pred_check_branch
          %801 = sbr.rel (%p799) target = $region96
        $region95: #{hyperspectral_cnn_forward.1} parent=11 // pred_region
          _
        $region96: #{hyperspectral_cnn_forward.1} parent=11 // pred_fallthru
          _
        // Predicated region
        $region97: #{hyperspectral_cnn_forward.1} parent=11 // pred_check
          %p802 = pneg %p562
        $region98: #{hyperspectral_cnn_forward.1} parent=11 // pred_check_branch
          %804 = sbr.rel (%p802) target = $region100
        $region99: #{hyperspectral_cnn_forward.1} parent=11 // pred_region
          _
        $region100: #{hyperspectral_cnn_forward.1} parent=11 // pred_fallthru
          _
        // Predicated region
        $region101: #{hyperspectral_cnn_forward.1} parent=11 // pred_check
          %p805 = pneg %p583
        $region102: #{hyperspectral_cnn_forward.1} parent=11 // pred_check_branch
          %807 = sbr.rel (%p805) target = $region104
        $region103: #{hyperspectral_cnn_forward.1} parent=11 // pred_region
          %s809 = ssub.s32 4096, 4096
          %810 = vsyncadd [#allocation12], %s809
          %s811 = sshll.u32 [#allocation11], 4
          %s812 = int_to_ptr.vmem [resolvable:$true] %s811
          %817 = dma.hbm_to_vmem [thread:$0]  %s47, 4096, %s812, [#allocation12], 128, 128, 8
        $region104: #{hyperspectral_cnn_forward.1} parent=11 // pred_fallthru
          _
        // Predicated region
        $region105: #{hyperspectral_cnn_forward.1} parent=11 // pred_check
          %p818 = pneg %p604
        $region106: #{hyperspectral_cnn_forward.1} parent=11 // pred_check_branch
          %820 = sbr.rel (%p818) target = $region108
        $region107: #{hyperspectral_cnn_forward.1} parent=11 // pred_region
          _
        $region108: #{hyperspectral_cnn_forward.1} parent=11 // pred_fallthru
          _
        // Predicated region
        $region109: #{hyperspectral_cnn_forward.1} parent=11 // pred_check
          %p821 = pneg %p625
        $region110: #{hyperspectral_cnn_forward.1} parent=11 // pred_check_branch
          %823 = sbr.rel (%p821) target = $region112
        $region111: #{hyperspectral_cnn_forward.1} parent=11 // pred_region
          _
        $region112: #{hyperspectral_cnn_forward.1} parent=11 // pred_fallthru
          _
        // Predicated region
        $region113: #{hyperspectral_cnn_forward.1} parent=11 // pred_check
          %p824 = pneg %p646
        $region114: #{hyperspectral_cnn_forward.1} parent=11 // pred_check_branch
          %826 = sbr.rel (%p824) target = $region116
        $region115: #{hyperspectral_cnn_forward.1} parent=11 // pred_region
          _
        $region116: #{hyperspectral_cnn_forward.1} parent=11 // pred_fallthru
          _
        // Predicated region
        $region117: #{hyperspectral_cnn_forward.1} parent=11 // pred_check
          %p827 = pneg %p667
        $region118: #{hyperspectral_cnn_forward.1} parent=11 // pred_check_branch
          %829 = sbr.rel (%p827) target = $region120
        $region119: #{hyperspectral_cnn_forward.1} parent=11 // pred_region
          %s831 = ssub.s32 1024, 1024
          %832 = vsyncadd [#allocation12], %s831
          %s833 = sshll.u32 [#allocation13], 4
          %s834 = int_to_ptr.vmem [resolvable:$true] %s833
          %839 = dma.hbm_to_vmem [thread:$0]  %s55, 1024, %s834, [#allocation12], 128, 128, 8
        $region120: #{hyperspectral_cnn_forward.1} parent=11 // pred_fallthru
          _
        // Predicated region
        $region121: #{hyperspectral_cnn_forward.1} parent=11 // pred_check
          %p840 = pneg %p688
        $region122: #{hyperspectral_cnn_forward.1} parent=11 // pred_check_branch
          %842 = sbr.rel (%p840) target = $region124
        $region123: #{hyperspectral_cnn_forward.1} parent=11 // pred_region
          _
        $region124: #{hyperspectral_cnn_forward.1} parent=11 // pred_fallthru
          _
      $region12: #{hyperspectral_cnn_forward.1} parent=5 // pred_fallthru
        _
      %p843 = scmp.lt.s32.totalorder %s74, 2
      // Predicated region
      $region125: #{hyperspectral_cnn_forward.1} parent=5 // pred_check
        %p844 = pneg %p843
      $region126: #{hyperspectral_cnn_forward.1} parent=5 // pred_check_branch
        %846 = sbr.rel (%p844) target = $region128
      $region127: #{hyperspectral_cnn_forward.1} parent=5 // pred_region
        // Predicated region
        $region129: #{hyperspectral_cnn_forward.1} parent=127 // pred_check
          %p847 = pneg %p94
        $region130: #{hyperspectral_cnn_forward.1} parent=127 // pred_check_branch
          %849 = sbr.rel (%p847) target = $region132
        $region131: #{hyperspectral_cnn_forward.1} parent=127 // pred_region
          %p850 = scmp.lt.s32.totalorder %s74, 1
          %s851 = scalar_select %p850, %s74, 1
          %s852 = smul.addr %s851, 20
          %s853 = smul.addr %s852, 4
          %s854 = scalar_lea.vmem %s1, %s853
        $region132: #{hyperspectral_cnn_forward.1} parent=127 // pred_fallthru
          _
      $region128: #{hyperspectral_cnn_forward.1} parent=5 // pred_fallthru
        _
      %p855 = scmp.le.s32.totalorder 1, %s74
      %p856 = scmp.lt.s32.totalorder %s74, 3
      %p857 = pnand %p855, %p856
      %p858 = pneg %p857
      // Predicated region
      $region133: #{hyperspectral_cnn_forward.1} parent=5 // pred_check
        _
      $region134: #{hyperspectral_cnn_forward.1} parent=5 // pred_check_branch
        %860 = sbr.rel (%p857) target = $region136
      $region135: #{hyperspectral_cnn_forward.1} parent=5 // pred_region
        %s861 = ssub.s32 %s74, 1
        // Predicated region
        $region137: #{hyperspectral_cnn_forward.1} parent=135 // pred_check
          %p862 = pneg %p331
        $region138: #{hyperspectral_cnn_forward.1} parent=135 // pred_check_branch
          %864 = sbr.rel (%p862) target = $region140
        $region139: #{hyperspectral_cnn_forward.1} parent=135 // pred_region
          %865 = dma.done [#allocation9], 9216
        $region140: #{hyperspectral_cnn_forward.1} parent=135 // pred_fallthru
          _
        // Predicated region
        $region141: #{hyperspectral_cnn_forward.1} parent=135 // pred_check
          %p866 = pneg %p583
        $region142: #{hyperspectral_cnn_forward.1} parent=135 // pred_check_branch
          %868 = sbr.rel (%p866) target = $region144
        $region143: #{hyperspectral_cnn_forward.1} parent=135 // pred_region
          %869 = dma.done [#allocation12], 4096
        $region144: #{hyperspectral_cnn_forward.1} parent=135 // pred_fallthru
          _
        // Predicated region
        $region145: #{hyperspectral_cnn_forward.1} parent=135 // pred_check
          %p870 = pneg %p667
        $region146: #{hyperspectral_cnn_forward.1} parent=135 // pred_check_branch
          %872 = sbr.rel (%p870) target = $region148
        $region147: #{hyperspectral_cnn_forward.1} parent=135 // pred_region
          %873 = dma.done [#allocation12], 1024
        $region148: #{hyperspectral_cnn_forward.1} parent=135 // pred_fallthru
          _
        %p874 = scmp.lt.s32.totalorder %s79, 1
        %s875 = scalar_select %p874, %s79, 1
        %s876 = smul.addr %s875, 20
        %s877 = smul.addr %s876, 4
        %s878 = scalar_lea.vmem %s1, %s877
        %p879 = pneg %p100
        %p880 = pneg %p97
        %p881 = pneg %p121
        %p882 = pneg %p118
        %p883 = pneg %p142
        %p884 = pneg %p139
        %p885 = pneg %p163
        %p886 = pneg %p160
        %p887 = pneg %p184
        %p888 = pneg %p181
        %p889 = pneg %p205
        %p890 = pneg %p202
        %p891 = pneg %p226
        %p892 = pneg %p223
        %p893 = pneg %p247
        %p894 = pneg %p244
        %p895 = pneg %p268
        %p896 = pneg %p265
        %p897 = pneg %p289
        %p898 = pneg %p286
        %p899 = pneg %p310
        %p900 = pneg %p307
        %p901 = pneg %p331
        %p902 = pneg %p328
        %p903 = pneg %p352
        %p904 = pneg %p349
        %p905 = pneg %p373
        %p906 = pneg %p370
        %p907 = pneg %p394
        %p908 = pneg %p391
        %p909 = pneg %p415
        %p910 = pneg %p412
        %p911 = pneg %p436
        %p912 = pneg %p433
        %p913 = pneg %p457
        %p914 = pneg %p454
        %p915 = pneg %p478
        %p916 = pneg %p475
        %p917 = pneg %p499
        %p918 = pneg %p496
        %p919 = pneg %p520
        %p920 = pneg %p517
        %p921 = pneg %p541
        %p922 = pneg %p538
        %p923 = pneg %p562
        %p924 = pneg %p559
        %p925 = pneg %p583
        %p926 = pneg %p580
        %p927 = pneg %p604
        %p928 = pneg %p601
        %p929 = pneg %p625
        %p930 = pneg %p622
        %p931 = pneg %p646
        %p932 = pneg %p643
        %p933 = pneg %p667
        %p934 = pneg %p664
        %p935 = pneg %p688
        %p936 = pneg %p685
        %p937 = pneg %p714
        %p938 = pneg %p711
        %s939 = sand.u32 %s701, 1
        %s940 = scalar_lea.sflag [#allocation10], %s939
        %s941 = sand.u32 %s701, 1
        %s942 = scalar_lea.vmem [#allocation14], %s941
        %p943 = scmp.lt.s32.totalorder %s79, 1
        %s944 = scalar_select %p943, %s79, 1
        %s945 = smul.addr %s944, 20
        %s946 = smul.addr %s945, 4
        %s947 = scalar_lea.vmem %s1, %s946
        %949 = vst [vmem:[#allocation3] sm:$0xf] 0
        %950 = vst [vmem:[#allocation3 + $0x4] sm:$0xf] 0
        %951 = vst [vmem:[#allocation3 + $0x8] sm:$0xf] 0
        %952 = vst [vmem:[#allocation3 + $0xc] sm:$0xf] 0
        %953 = vst [vmem:[#allocation3 + $0x10] sm:$0xf] 0
        %954 = vst [vmem:[#allocation3 + $0x14] sm:$0xf] 0
        %955 = vst [vmem:[#allocation3 + $0x18] sm:$0xf] 0
        %956 = vst [vmem:[#allocation3 + $0x1c] sm:$0xf] 0
        %957 = vst [vmem:[#allocation3 + $0x20] sm:$0xf] 0
        %958 = vst [vmem:[#allocation3 + $0x24] sm:$0xf] 0
        %959 = vst [vmem:[#allocation5] sm:$0xf] 0
        %960 = vst [vmem:[#allocation5 + $0x4] sm:$0xf] 0
        %961 = vst [vmem:[#allocation5 + $0x8] sm:$0xf] 0
        %962 = vst [vmem:[#allocation5 + $0xc] sm:$0xf] 0
        %963 = vst [vmem:[#allocation5 + $0x10] sm:$0xf] 0
        %964 = vst [vmem:[#allocation5 + $0x14] sm:$0xf] 0
        %v965 = vld [vmem:[%s947 + $0xc] sm:$0xf]
        %v966 = vld [vmem:[%s947 + $0x10] sm:$0xf]
        %v967 = vld [vmem:[%s947 + $0x14] sm:$0xf]
        %v968 = vld [vmem:[%s947 + $0x18] sm:$0xf]
        %v969 = vld [vmem:[%s947 + $0x1c] sm:$0xf]
        %v970 = vld [vmem:[%s947 + $0x20] sm:$0xf]
        %v971 = vld [vmem:[%s947 + $0x24] sm:$0xf]
        %v972 = vld [vmem:[%s947 + $0x28] sm:$0xf]
        %v973 = vld [vmem:[%s947 + $0x2c] sm:$0xf]
        %v974 = vld [vmem:[%s947 + $0x30] sm:$0xf]
        %v975 = vld [vmem:[%s947 + $0x34] sm:$0x7]
        %v987 = vunpack.c.l.b16 %v965
        %v988 = vunpack.c.l.b16 %v966
        %v989 = vunpack.c.l.b16 %v967
        %v990 = vunpack.c.l.b16 %v968
        %v991 = vunpack.c.l.b16 %v969
        %v992 = vunpack.c.l.b16 %v970
        %v993 = vunpack.c.l.b16 %v971
        %v994 = vunpack.c.l.b16 %v972
        %v995 = vunpack.c.l.b16 %v973
        %v996 = vunpack.c.l.b16 %v974
        %v997 = vunpack.c.l.b16 %v975
        %v998 = vpack.c.b16 %v988, %v987
        %v999 = vpack.c.b16 %v990, %v989
        %v1000 = vpack.c.b16 %v992, %v991
        %v1001 = vpack.c.b16 %v994, %v993
        %v1002 = vpack.c.b16 %v996, %v995
        %v1003 = vpack.c.b16 %v997, %v997
        %vm1010 = vsmask.f32 7424
        %v1012 = vshrl.u32 %v998, 16
        %v1014 = vshll.u32 %v998, 16
        %v1016 = vrot.slane %v1014, 1
        %v1017 = vor.u32 %v1012, %v1016
        %v1019 = vshll.u32 %v999, 16
        %v1021 = vrot.slane %v1019, 1
        %v1022 = vsel %vm1010, %v1017, %v1021
        %v1023 = vshrl.u32 %v999, 16
        %v1025 = vor.u32 %v1023, %v1021
        %v1027 = vshll.u32 %v1000, 16
        %v1029 = vrot.slane %v1027, 1
        %v1030 = vsel %vm1010, %v1025, %v1029
        %v1031 = vshrl.u32 %v1000, 16
        %v1033 = vor.u32 %v1031, %v1029
        %v1035 = vshll.u32 %v1001, 16
        %v1037 = vrot.slane %v1035, 1
        %v1038 = vsel %vm1010, %v1033, %v1037
        %v1039 = vshrl.u32 %v1001, 16
        %v1041 = vor.u32 %v1039, %v1037
        %v1043 = vshll.u32 %v1002, 16
        %v1045 = vrot.slane %v1043, 1
        %v1046 = vsel %vm1010, %v1041, %v1045
        %v1047 = vshrl.u32 %v1002, 16
        %v1049 = vor.u32 %v1047, %v1045
        %v1051 = vshll.u32 %v1003, 16
        %v1053 = vrot.slane %v1051, 1
        %v1054 = vsel %vm1010, %v1049, %v1053
        %v1055 = vshrl.u32 %v1003, 16
        %v1057 = vor.u32 %v1055, %v1053
        %v1064 = vld [vmem:[%s3] sm:$0xf]
        %v1065 = vld [vmem:[%s3 + $0x4] sm:$0xf]
        %v1066 = vld [vmem:[%s3 + $0x8] sm:$0xf]
        %v1067 = vld [vmem:[%s3 + $0xc] sm:$0xf]
        %v1068 = vld [vmem:[%s3 + $0x10] sm:$0xf]
        %v1069 = vld [vmem:[%s3 + $0x14] sm:$0xf]
        %v1070 = vld [vmem:[%s3 + $0x18] sm:$0xf]
        %v1071 = vld [vmem:[%s3 + $0x1c] sm:$0xf]
        %v1072 = vld [vmem:[%s3 + $0x20] sm:$0xf]
        %v1073 = vld [vmem:[%s3 + $0x24] sm:$0xf]
        %v1074 = vld [vmem:[%s3 + $0x28] sm:$0xf]
        %v1075 = vld [vmem:[%s3 + $0x2c] sm:$0xf]
        %v1076 = vld [vmem:[%s3 + $0x30] sm:$0xf]
        %v1077 = vld [vmem:[%s3 + $0x34] sm:$0xf]
        %v1078 = vld [vmem:[%s3 + $0x38] sm:$0xf]
        %v1079 = vld [vmem:[%s3 + $0x3c] sm:$0xf]
        %v1080 = vld [vmem:[%s3 + $0x40] sm:$0xf]
        %v1081 = vld [vmem:[%s3 + $0x44] sm:$0xf]
        %v1082 = vld [vmem:[%s3 + $0x48] sm:$0xf]
        %v1083 = vld [vmem:[%s3 + $0x4c] sm:$0xf]
        %v1084 = vld [vmem:[%s3 + $0x50] sm:$0xf]
        %v1085 = vld [vmem:[%s3 + $0x54] sm:$0xf]
        %v1086 = vld [vmem:[%s3 + $0x58] sm:$0xf]
        %v1087 = vld [vmem:[%s3 + $0x5c] sm:$0xf]
        %v1088 = vld [vmem:[%s3 + $0x60] sm:$0xf]
        %v1089 = vld [vmem:[%s3 + $0x64] sm:$0xf]
        %v1090 = vld [vmem:[%s3 + $0x68] sm:$0xf]
        %v1091 = vld [vmem:[%s3 + $0x6c] sm:$0xf]
        %v1092 = vld [vmem:[%s3 + $0x70] sm:$0xf]
        %v1093 = vld [vmem:[%s3 + $0x74] sm:$0xf]
        %v1094 = vld [vmem:[%s3 + $0x78] sm:$0xf]
        %v1095 = vld [vmem:[%s3 + $0x7c] sm:$0xf]
        %v1096 = vld [vmem:[%s947 + $0xc] sm:$0xe]
        %v1097 = vld [vmem:[%s947 + $0x34] sm:$0xf]
        %v1098 = vld [vmem:[%s947 + $0x10] sm:$0xe]
        %v1099 = vld [vmem:[%s947 + $0x38] sm:$0xf]
        %v1102 = vunpack.c.l.b16 %v1096
        %v1103 = vunpack.c.l.b16 %v1097
        %v1104 = vpack.c.b16 %v988, %v1102
        %v1105 = vpack.c.b16 %v1103, %v1103
        %v1108 = vunpack.c.l.b16 %v1098
        %v1109 = vunpack.c.l.b16 %v1099
        %v1110 = vpack.c.b16 %v989, %v1108
        %v1111 = vpack.c.b16 %v991, %v990
        %v1112 = vpack.c.b16 %v993, %v992
        %v1113 = vpack.c.b16 %v995, %v994
        %v1114 = vpack.c.b16 %v1103, %v996
        %v1115 = vpack.c.b16 %v1109, %v1109
        %v1117 = vshrl.u32 %v1110, 16
        %v1119 = vshll.u32 %v1110, 16
        %v1121 = vrot.slane %v1119, 1
        %v1122 = vor.u32 %v1117, %v1121
        %v1124 = vshll.u32 %v1111, 16
        %v1126 = vrot.slane %v1124, 1
        %v1127 = vsel %vm1010, %v1122, %v1126
        %v1128 = vshrl.u32 %v1111, 16
        %v1130 = vor.u32 %v1128, %v1126
        %v1132 = vshll.u32 %v1112, 16
        %v1134 = vrot.slane %v1132, 1
        %v1135 = vsel %vm1010, %v1130, %v1134
        %v1136 = vshrl.u32 %v1112, 16
        %v1138 = vor.u32 %v1136, %v1134
        %v1140 = vshll.u32 %v1113, 16
        %v1142 = vrot.slane %v1140, 1
        %v1143 = vsel %vm1010, %v1138, %v1142
        %v1144 = vshrl.u32 %v1113, 16
        %v1146 = vor.u32 %v1144, %v1142
        %v1148 = vshll.u32 %v1114, 16
        %v1150 = vrot.slane %v1148, 1
        %v1151 = vsel %vm1010, %v1146, %v1150
        %v1152 = vshrl.u32 %v1114, 16
        %v1154 = vor.u32 %v1152, %v1150
        %v1156 = vshll.u32 %v1115, 16
        %v1158 = vrot.slane %v1156, 1
        %v1159 = vsel %vm1010, %v1154, %v1158
        %v1160 = vshrl.u32 %v1115, 16
        %v1162 = vor.u32 %v1160, %v1158
        %v1163 = vld [vmem:[%s3 + $0x80] sm:$0xf]
        %v1164 = vld [vmem:[%s3 + $0x84] sm:$0xf]
        %v1165 = vld [vmem:[%s3 + $0x88] sm:$0xf]
        %v1166 = vld [vmem:[%s3 + $0x8c] sm:$0xf]
        %v1167 = vld [vmem:[%s3 + $0x90] sm:$0xf]
        %v1168 = vld [vmem:[%s3 + $0x94] sm:$0xf]
        %v1169 = vld [vmem:[%s3 + $0x98] sm:$0xf]
        %v1170 = vld [vmem:[%s3 + $0x9c] sm:$0xf]
        %v1171 = vld [vmem:[%s3 + $0xa0] sm:$0xf]
        %v1172 = vld [vmem:[%s3 + $0xa4] sm:$0xf]
        %v1173 = vld [vmem:[%s3 + $0xa8] sm:$0xf]
        %v1174 = vld [vmem:[%s3 + $0xac] sm:$0xf]
        %v1175 = vld [vmem:[%s3 + $0xb0] sm:$0xf]
        %v1176 = vld [vmem:[%s3 + $0xb4] sm:$0xf]
        %v1177 = vld [vmem:[%s3 + $0xb8] sm:$0xf]
        %v1178 = vld [vmem:[%s3 + $0xbc] sm:$0xf]
        %v1179 = vld [vmem:[%s3 + $0xc0] sm:$0xf]
        %v1180 = vld [vmem:[%s3 + $0xc4] sm:$0xf]
        %v1181 = vld [vmem:[%s3 + $0xc8] sm:$0xf]
        %v1182 = vld [vmem:[%s3 + $0xcc] sm:$0xf]
        %v1183 = vld [vmem:[%s3 + $0xd0] sm:$0xf]
        %v1184 = vld [vmem:[%s3 + $0xd4] sm:$0xf]
        %v1185 = vld [vmem:[%s3 + $0xd8] sm:$0xf]
        %v1186 = vld [vmem:[%s3 + $0xdc] sm:$0xf]
        %v1187 = vld [vmem:[%s3 + $0xe0] sm:$0xf]
        %v1188 = vld [vmem:[%s3 + $0xe4] sm:$0xf]
        %v1189 = vld [vmem:[%s3 + $0xe8] sm:$0xf]
        %v1190 = vld [vmem:[%s3 + $0xec] sm:$0xf]
        %v1191 = vld [vmem:[%s3 + $0xf0] sm:$0xf]
        %v1192 = vld [vmem:[%s3 + $0xf4] sm:$0xf]
        %v1193 = vld [vmem:[%s3 + $0xf8] sm:$0xf]
        %v1194 = vld [vmem:[%s3 + $0xfc] sm:$0xf]
        %vm1195 = vcmask 1046528
        %v1196 = vrot.slane %v1104, 1
        %v1197 = vrot.slane %v999, 1
        %v1198 = vsel %vm1195, %v1196, %v1197
        %v1199 = vrot.slane %v1127, 1
        %v1200 = vrot.slane %v1135, 1
        %v1201 = vsel %vm1195, %v1199, %v1200
        %v1202 = vrot.slane %v1000, 1
        %v1203 = vsel %vm1195, %v1197, %v1202
        %v1204 = vrot.slane %v1143, 1
        %v1205 = vsel %vm1195, %v1200, %v1204
        %v1206 = vrot.slane %v1001, 1
        %v1207 = vsel %vm1195, %v1202, %v1206
        %v1208 = vrot.slane %v1151, 1
        %v1209 = vsel %vm1195, %v1204, %v1208
        %v1210 = vrot.slane %v1002, 1
        %v1211 = vsel %vm1195, %v1206, %v1210
        %v1212 = vrot.slane %v1159, 1
        %v1213 = vsel %vm1195, %v1208, %v1212
        %v1214 = vrot.slane %v1105, 1
        %v1215 = vsel %vm1195, %v1210, %v1214
        %v1216 = vrot.slane %v1162, 1
        %v1217 = vsel %vm1195, %v1212, %v1216
        %v1262 = vunpack.c.l.b16 %v1163
        %v1263 = vunpack.c.l.b16 %v1164
        %v1264 = vunpack.c.l.b16 %v1165
        %v1265 = vunpack.c.l.b16 %v1166
        %v1266 = vunpack.c.l.b16 %v1167
        %v1267 = vunpack.c.l.b16 %v1168
        %v1268 = vunpack.c.l.b16 %v1169
        %v1269 = vunpack.c.l.b16 %v1170
        %v1270 = vunpack.c.l.b16 %v1171
        %v1271 = vunpack.c.l.b16 %v1172
        %v1272 = vunpack.c.l.b16 %v1173
        %v1273 = vunpack.c.l.b16 %v1174
        %v1274 = vunpack.c.l.b16 %v1175
        %v1275 = vunpack.c.l.b16 %v1176
        %v1276 = vunpack.c.l.b16 %v1177
        %v1277 = vunpack.c.l.b16 %v1178
        %v1278 = vunpack.c.l.b16 %v1179
        %v1279 = vunpack.c.l.b16 %v1180
        %v1280 = vunpack.c.l.b16 %v1181
        %v1281 = vunpack.c.l.b16 %v1182
        %v1282 = vunpack.c.l.b16 %v1183
        %v1283 = vunpack.c.l.b16 %v1184
        %v1284 = vunpack.c.l.b16 %v1185
        %v1285 = vunpack.c.l.b16 %v1186
        %v1286 = vunpack.c.l.b16 %v1187
        %v1287 = vunpack.c.l.b16 %v1188
        %v1288 = vunpack.c.l.b16 %v1189
        %v1289 = vunpack.c.l.b16 %v1190
        %v1290 = vunpack.c.l.b16 %v1191
        %v1291 = vunpack.c.l.b16 %v1192
        %v1292 = vunpack.c.l.b16 %v1193
        %v1293 = vunpack.c.l.b16 %v1194
        %v1294 = vpack.c.b16 %v1263, %v1262
        %v1295 = vpack.c.b16 %v1265, %v1264
        %v1296 = vpack.c.b16 %v1267, %v1266
        %v1297 = vpack.c.b16 %v1269, %v1268
        %v1298 = vpack.c.b16 %v1271, %v1270
        %v1299 = vpack.c.b16 %v1273, %v1272
        %v1300 = vpack.c.b16 %v1275, %v1274
        %v1301 = vpack.c.b16 %v1277, %v1276
        %v1302 = vpack.c.b16 %v1279, %v1278
        %v1303 = vpack.c.b16 %v1281, %v1280
        %v1304 = vpack.c.b16 %v1283, %v1282
        %v1305 = vpack.c.b16 %v1285, %v1284
        %v1306 = vpack.c.b16 %v1287, %v1286
        %v1307 = vpack.c.b16 %v1289, %v1288
        %v1308 = vpack.c.b16 %v1291, %v1290
        %v1309 = vpack.c.b16 %v1293, %v1292
        %1326 = vmatprep.subr.bf16.mxu0 0
        %1327 = vmatpush1.bf16.msra.mxu0 %v1301
        %1328 = vmatprep.subr.bf16.mxu0 0
        %1329 = vmatpush1.bf16.msra.mxu0 %v1300
        %1330 = vmatprep.subr.bf16.mxu0 0
        %1331 = vmatpush1.bf16.msra.mxu0 %v1299
        %1332 = vmatprep.subr.bf16.mxu0 0
        %1333 = vmatpush1.bf16.msra.mxu0 %v1298
        %1334 = vmatprep.subr.bf16.mxu0 0
        %1335 = vmatpush1.bf16.msra.mxu0 %v1297
        %1336 = vmatprep.subr.bf16.mxu0 0
        %1337 = vmatpush1.bf16.msra.mxu0 %v1296
        %1338 = vmatprep.subr.bf16.mxu0 0
        %1339 = vmatpush1.bf16.msra.mxu0 %v1295
        %1340 = vmatprep.subr.bf16.mxu0 0
        %1341 = vmatpush1.bf16.msra.mxu0 %v1294
        %1342 = vmatprep.subr.bf16.mxu0 0
        %1343 = vmatpush2.bf16.msra.mxu0 %v1309
        %1344 = vmatprep.subr.bf16.mxu0 0
        %1345 = vmatpush2.bf16.msra.mxu0 %v1308
        %1346 = vmatprep.subr.bf16.mxu0 0
        %1347 = vmatpush2.bf16.msra.mxu0 %v1307
        %1348 = vmatprep.subr.bf16.mxu0 0
        %1349 = vmatpush2.bf16.msra.mxu0 %v1306
        %1350 = vmatprep.subr.bf16.mxu0 0
        %1351 = vmatpush2.bf16.msra.mxu0 %v1305
        %1352 = vmatprep.subr.bf16.mxu0 0
        %1353 = vmatpush2.bf16.msra.mxu0 %v1304
        %1354 = vmatprep.subr.bf16.mxu0 0
        %1355 = vmatpush2.bf16.msra.mxu0 %v1303
        %1356 = vmatprep.subr.bf16.mxu0 0
        %1357 = vmatpush2.bf16.msra.mxu0 %v1302
        %1358 = vmatprep.mubr.bf16.mxu0 %v1201
        %1359 = vmatmul.mubr.bf16.gmra.mxu0 %v1198
        %v1360 = vpop.f32.mrf.mxu0
        %v1361 = vadd.f32 0.0, %v1360
        %v1362 = vpop.f32.mrf.mxu0
        %v1363 = vpop.f32.mrf.mxu0
        %v1364 = vadd.f32 0.0, %v1363
        %v1365 = vpop.f32.mrf.mxu0
        %1366 = vmatprep.mubr.bf16.mxu0 %v1205
        %1367 = vmatmul.mubr.bf16.gmra.mxu0 %v1203
        %v1368 = vpop.f32.mrf.mxu0
        %v1369 = vadd.f32 0.0, %v1368
        %v1370 = vpop.f32.mrf.mxu0
        %v1371 = vpop.f32.mrf.mxu0
        %v1372 = vadd.f32 0.0, %v1371
        %v1373 = vpop.f32.mrf.mxu0
        %1374 = vmatprep.mubr.bf16.mxu0 %v1209
        %1375 = vmatmul.mubr.bf16.gmra.mxu0 %v1207
        %v1376 = vpop.f32.mrf.mxu0
        %v1377 = vadd.f32 0.0, %v1376
        %v1378 = vpop.f32.mrf.mxu0
        %v1379 = vpop.f32.mrf.mxu0
        %v1380 = vadd.f32 0.0, %v1379
        %v1381 = vpop.f32.mrf.mxu0
        %1382 = vmatprep.mubr.bf16.mxu0 %v1213
        %1383 = vmatmul.mubr.bf16.gmra.mxu0 %v1211
        %v1384 = vpop.f32.mrf.mxu0
        %v1385 = vadd.f32 0.0, %v1384
        %v1386 = vpop.f32.mrf.mxu0
        %v1387 = vpop.f32.mrf.mxu0
        %v1388 = vadd.f32 0.0, %v1387
        %v1389 = vpop.f32.mrf.mxu0
        %1390 = vmatprep.mubr.bf16.mxu0 %v1217
        %1391 = vmatmul.mubr.bf16.gmra.mxu0 %v1215
        %v1392 = vpop.f32.mrf.mxu0
        %v1393 = vadd.f32 0.0, %v1392
        %v1394 = vpop.f32.mrf.mxu0
        %v1395 = vpop.f32.mrf.mxu0
        %v1396 = vadd.f32 0.0, %v1395
        %v1397 = vpop.f32.mrf.mxu0
        %1398 = vmatprep.mubr.bf16.mxu0 %v1216
        %1399 = vmatmul.mubr.bf16.gmra.mxu0 %v1214
        %v1400 = vpop.f32.mrf.mxu0
        %v1401 = vadd.f32 0.0, %v1400
        %v1402 = vpop.f32.mrf.mxu0
        %v1403 = vpop.f32.mrf.mxu0
        %v1404 = vpop.f32.mrf.mxu0
        %1405 = vdwg.mxu0
        %v1438 = vunpack.c.l.b16 %v1064
        %v1439 = vunpack.c.l.b16 %v1065
        %v1440 = vunpack.c.l.b16 %v1066
        %v1441 = vunpack.c.l.b16 %v1067
        %v1442 = vunpack.c.l.b16 %v1068
        %v1443 = vunpack.c.l.b16 %v1069
        %v1444 = vunpack.c.l.b16 %v1070
        %v1445 = vunpack.c.l.b16 %v1071
        %v1446 = vunpack.c.l.b16 %v1072
        %v1447 = vunpack.c.l.b16 %v1073
        %v1448 = vunpack.c.l.b16 %v1074
        %v1449 = vunpack.c.l.b16 %v1075
        %v1450 = vunpack.c.l.b16 %v1076
        %v1451 = vunpack.c.l.b16 %v1077
        %v1452 = vunpack.c.l.b16 %v1078
        %v1453 = vunpack.c.l.b16 %v1079
        %v1454 = vunpack.c.l.b16 %v1080
        %v1455 = vunpack.c.l.b16 %v1081
        %v1456 = vunpack.c.l.b16 %v1082
        %v1457 = vunpack.c.l.b16 %v1083
        %v1458 = vunpack.c.l.b16 %v1084
        %v1459 = vunpack.c.l.b16 %v1085
        %v1460 = vunpack.c.l.b16 %v1086
        %v1461 = vunpack.c.l.b16 %v1087
        %v1462 = vunpack.c.l.b16 %v1088
        %v1463 = vunpack.c.l.b16 %v1089
        %v1464 = vunpack.c.l.b16 %v1090
        %v1465 = vunpack.c.l.b16 %v1091
        %v1466 = vunpack.c.l.b16 %v1092
        %v1467 = vunpack.c.l.b16 %v1093
        %v1468 = vunpack.c.l.b16 %v1094
        %v1469 = vunpack.c.l.b16 %v1095
        %v1470 = vpack.c.b16 %v1439, %v1438
        %v1471 = vpack.c.b16 %v1441, %v1440
        %v1472 = vpack.c.b16 %v1443, %v1442
        %v1473 = vpack.c.b16 %v1445, %v1444
        %v1474 = vpack.c.b16 %v1447, %v1446
        %v1475 = vpack.c.b16 %v1449, %v1448
        %v1476 = vpack.c.b16 %v1451, %v1450
        %v1477 = vpack.c.b16 %v1453, %v1452
        %v1478 = vpack.c.b16 %v1455, %v1454
        %v1479 = vpack.c.b16 %v1457, %v1456
        %v1480 = vpack.c.b16 %v1459, %v1458
        %v1481 = vpack.c.b16 %v1461, %v1460
        %v1482 = vpack.c.b16 %v1463, %v1462
        %v1483 = vpack.c.b16 %v1465, %v1464
        %v1484 = vpack.c.b16 %v1467, %v1466
        %v1485 = vpack.c.b16 %v1469, %v1468
        %1502 = vmatprep.subr.bf16.mxu0 0
        %1503 = vmatpush1.bf16.msra.mxu0 %v1477
        %1504 = vmatprep.subr.bf16.mxu0 0
        %1505 = vmatpush1.bf16.msra.mxu0 %v1476
        %1506 = vmatprep.subr.bf16.mxu0 0
        %1507 = vmatpush1.bf16.msra.mxu0 %v1475
        %1508 = vmatprep.subr.bf16.mxu0 0
        %1509 = vmatpush1.bf16.msra.mxu0 %v1474
        %1510 = vmatprep.subr.bf16.mxu0 0
        %1511 = vmatpush1.bf16.msra.mxu0 %v1473
        %1512 = vmatprep.subr.bf16.mxu0 0
        %1513 = vmatpush1.bf16.msra.mxu0 %v1472
        %1514 = vmatprep.subr.bf16.mxu0 0
        %1515 = vmatpush1.bf16.msra.mxu0 %v1471
        %1516 = vmatprep.subr.bf16.mxu0 0
        %1517 = vmatpush1.bf16.msra.mxu0 %v1470
        %1518 = vmatprep.subr.bf16.mxu0 0
        %1519 = vmatpush2.bf16.msra.mxu0 %v1485
        %1520 = vmatprep.subr.bf16.mxu0 0
        %1521 = vmatpush2.bf16.msra.mxu0 %v1484
        %1522 = vmatprep.subr.bf16.mxu0 0
        %1523 = vmatpush2.bf16.msra.mxu0 %v1483
        %1524 = vmatprep.subr.bf16.mxu0 0
        %1525 = vmatpush2.bf16.msra.mxu0 %v1482
        %1526 = vmatprep.subr.bf16.mxu0 0
        %1527 = vmatpush2.bf16.msra.mxu0 %v1481
        %1528 = vmatprep.subr.bf16.mxu0 0
        %1529 = vmatpush2.bf16.msra.mxu0 %v1480
        %1530 = vmatprep.subr.bf16.mxu0 0
        %1531 = vmatpush2.bf16.msra.mxu0 %v1479
        %1532 = vmatprep.subr.bf16.mxu0 0
        %1533 = vmatpush2.bf16.msra.mxu0 %v1478
        %1534 = vmatprep.mubr.bf16.mxu0 %v1022
        %1535 = vmatmul.mubr.bf16.gmra.mxu0 %v998
        %v1536 = vpop.f32.mrf.mxu0
        %v1537 = vadd.f32 %v1361, %v1536
        %v1538 = vpop.f32.mrf.mxu0
        %v1539 = vpop.f32.mrf.mxu0
        %v1540 = vadd.f32 %v1364, %v1539
        %v1541 = vpop.f32.mrf.mxu0
        %1542 = vmatprep.mubr.bf16.mxu0 %v1030
        %1543 = vmatmul.mubr.bf16.gmra.mxu0 %v999
        %v1544 = vpop.f32.mrf.mxu0
        %v1545 = vadd.f32 %v1369, %v1544
        %v1546 = vpop.f32.mrf.mxu0
        %v1547 = vpop.f32.mrf.mxu0
        %v1548 = vadd.f32 %v1372, %v1547
        %v1549 = vpop.f32.mrf.mxu0
        %1550 = vmatprep.mubr.bf16.mxu0 %v1038
        %1551 = vmatmul.mubr.bf16.gmra.mxu0 %v1000
        %v1552 = vpop.f32.mrf.mxu0
        %v1553 = vadd.f32 %v1377, %v1552
        %v1554 = vpop.f32.mrf.mxu0
        %v1555 = vpop.f32.mrf.mxu0
        %v1556 = vadd.f32 %v1380, %v1555
        %v1557 = vpop.f32.mrf.mxu0
        %1558 = vmatprep.mubr.bf16.mxu0 %v1046
        %1559 = vmatmul.mubr.bf16.gmra.mxu0 %v1001
        %v1560 = vpop.f32.mrf.mxu0
        %v1561 = vadd.f32 %v1385, %v1560
        %v1562 = vpop.f32.mrf.mxu0
        %v1563 = vpop.f32.mrf.mxu0
        %v1564 = vadd.f32 %v1388, %v1563
        %v1565 = vpop.f32.mrf.mxu0
        %1566 = vmatprep.mubr.bf16.mxu0 %v1054
        %1567 = vmatmul.mubr.bf16.gmra.mxu0 %v1002
        %v1568 = vpop.f32.mrf.mxu0
        %v1569 = vadd.f32 %v1393, %v1568
        %v1570 = vpop.f32.mrf.mxu0
        %v1571 = vpop.f32.mrf.mxu0
        %v1572 = vadd.f32 %v1396, %v1571
        %v1573 = vpop.f32.mrf.mxu0
        %1574 = vmatprep.mubr.bf16.mxu0 %v1057
        %1575 = vmatmul.mubr.bf16.gmra.mxu0 %v1003
        %v1576 = vpop.f32.mrf.mxu0
        %v1577 = vadd.f32 %v1401, %v1576
        %v1578 = vpop.f32.mrf.mxu0
        %v1579 = vpop.f32.mrf.mxu0
        %v1580 = vpop.f32.mrf.mxu0
        %1581 = vdwg.mxu0
        %v1582 = vld [vmem:[%s947 + $0x10] sm:$0xc]
        %v1583 = vld [vmem:[%s947 + $0x14] sm:$0xf]
        %v1584 = vld [vmem:[%s947 + $0x18] sm:$0xf]
        %v1585 = vld [vmem:[%s947 + $0x1c] sm:$0xf]
        %v1586 = vld [vmem:[%s947 + $0x20] sm:$0xf]
        %v1587 = vld [vmem:[%s947 + $0x24] sm:$0xf]
        %v1588 = vld [vmem:[%s947 + $0x28] sm:$0xf]
        %v1589 = vld [vmem:[%s947 + $0x2c] sm:$0xf]
        %v1590 = vld [vmem:[%s947 + $0x30] sm:$0xf]
        %v1591 = vld [vmem:[%s947 + $0x34] sm:$0xf]
        %v1592 = vld [vmem:[%s947 + $0x38] sm:$0xf]
        %v1593 = vld [vmem:[%s947 + $0x3c] sm:$0x1]
        %v1606 = vunpack.c.l.b16 %v1582
        %v1607 = vunpack.c.l.b16 %v1583
        %v1608 = vunpack.c.l.b16 %v1584
        %v1609 = vunpack.c.l.b16 %v1585
        %v1610 = vunpack.c.l.b16 %v1586
        %v1611 = vunpack.c.l.b16 %v1587
        %v1612 = vunpack.c.l.b16 %v1588
        %v1613 = vunpack.c.l.b16 %v1589
        %v1614 = vunpack.c.l.b16 %v1590
        %v1615 = vunpack.c.l.b16 %v1591
        %v1616 = vunpack.c.l.b16 %v1592
        %v1617 = vunpack.c.l.b16 %v1593
        %v1618 = vpack.c.b16 %v1607, %v1606
        %v1619 = vpack.c.b16 %v1609, %v1608
        %v1620 = vpack.c.b16 %v1611, %v1610
        %v1621 = vpack.c.b16 %v1613, %v1612
        %v1622 = vpack.c.b16 %v1615, %v1614
        %v1623 = vpack.c.b16 %v1617, %v1616
        %v1625 = vshrl.u32 %v1618, 16
        %v1627 = vshll.u32 %v1618, 16
        %v1629 = vrot.slane %v1627, 1
        %v1630 = vor.u32 %v1625, %v1629
        %v1632 = vshll.u32 %v1619, 16
        %v1634 = vrot.slane %v1632, 1
        %v1635 = vsel %vm1010, %v1630, %v1634
        %v1636 = vshrl.u32 %v1619, 16
        %v1638 = vor.u32 %v1636, %v1634
        %v1640 = vshll.u32 %v1620, 16
        %v1642 = vrot.slane %v1640, 1
        %v1643 = vsel %vm1010, %v1638, %v1642
        %v1644 = vshrl.u32 %v1620, 16
        %v1646 = vor.u32 %v1644, %v1642
        %v1648 = vshll.u32 %v1621, 16
        %v1650 = vrot.slane %v1648, 1
        %v1651 = vsel %vm1010, %v1646, %v1650
        %v1652 = vshrl.u32 %v1621, 16
        %v1654 = vor.u32 %v1652, %v1650
        %v1656 = vshll.u32 %v1622, 16
        %v1658 = vrot.slane %v1656, 1
        %v1659 = vsel %vm1010, %v1654, %v1658
        %v1660 = vshrl.u32 %v1622, 16
        %v1662 = vor.u32 %v1660, %v1658
        %v1664 = vshll.u32 %v1623, 16
        %v1666 = vrot.slane %v1664, 1
        %v1667 = vsel %vm1010, %v1662, %v1666
        %v1668 = vshrl.u32 %v1623, 16
        %v1670 = vor.u32 %v1668, %v1666
        %v1671 = vld [vmem:[%s3 + $0x100] sm:$0xf]
        %v1672 = vld [vmem:[%s3 + $0x104] sm:$0xf]
        %v1673 = vld [vmem:[%s3 + $0x108] sm:$0xf]
        %v1674 = vld [vmem:[%s3 + $0x10c] sm:$0xf]
        %v1675 = vld [vmem:[%s3 + $0x110] sm:$0xf]
        %v1676 = vld [vmem:[%s3 + $0x114] sm:$0xf]
        %v1677 = vld [vmem:[%s3 + $0x118] sm:$0xf]
        %v1678 = vld [vmem:[%s3 + $0x11c] sm:$0xf]
        %v1679 = vld [vmem:[%s3 + $0x120] sm:$0xf]
        %v1680 = vld [vmem:[%s3 + $0x124] sm:$0xf]
        %v1681 = vld [vmem:[%s3 + $0x128] sm:$0xf]
        %v1682 = vld [vmem:[%s3 + $0x12c] sm:$0xf]
        %v1683 = vld [vmem:[%s3 + $0x130] sm:$0xf]
        %v1684 = vld [vmem:[%s3 + $0x134] sm:$0xf]
        %v1685 = vld [vmem:[%s3 + $0x138] sm:$0xf]
        %v1686 = vld [vmem:[%s3 + $0x13c] sm:$0xf]
        %v1687 = vld [vmem:[%s3 + $0x140] sm:$0xf]
        %v1688 = vld [vmem:[%s3 + $0x144] sm:$0xf]
        %v1689 = vld [vmem:[%s3 + $0x148] sm:$0xf]
        %v1690 = vld [vmem:[%s3 + $0x14c] sm:$0xf]
        %v1691 = vld [vmem:[%s3 + $0x150] sm:$0xf]
        %v1692 = vld [vmem:[%s3 + $0x154] sm:$0xf]
        %v1693 = vld [vmem:[%s3 + $0x158] sm:$0xf]
        %v1694 = vld [vmem:[%s3 + $0x15c] sm:$0xf]
        %v1695 = vld [vmem:[%s3 + $0x160] sm:$0xf]
        %v1696 = vld [vmem:[%s3 + $0x164] sm:$0xf]
        %v1697 = vld [vmem:[%s3 + $0x168] sm:$0xf]
        %v1698 = vld [vmem:[%s3 + $0x16c] sm:$0xf]
        %v1699 = vld [vmem:[%s3 + $0x170] sm:$0xf]
        %v1700 = vld [vmem:[%s3 + $0x174] sm:$0xf]
        %v1701 = vld [vmem:[%s3 + $0x178] sm:$0xf]
        %v1702 = vld [vmem:[%s3 + $0x17c] sm:$0xf]
        %vm1703 = vcmask 1045504
        %v1704 = vrot.slane %v1618, 2
        %v1705 = vrot.slane %v1619, 2
        %v1706 = vsel %vm1703, %v1704, %v1705
        %v1707 = vrot.slane %v1635, 2
        %v1708 = vrot.slane %v1643, 2
        %v1709 = vsel %vm1703, %v1707, %v1708
        %v1710 = vrot.slane %v1620, 2
        %v1711 = vsel %vm1703, %v1705, %v1710
        %v1712 = vrot.slane %v1651, 2
        %v1713 = vsel %vm1703, %v1708, %v1712
        %v1714 = vrot.slane %v1621, 2
        %v1715 = vsel %vm1703, %v1710, %v1714
        %v1716 = vrot.slane %v1659, 2
        %v1717 = vsel %vm1703, %v1712, %v1716
        %v1718 = vrot.slane %v1622, 2
        %v1719 = vsel %vm1703, %v1714, %v1718
        %v1720 = vrot.slane %v1667, 2
        %v1721 = vsel %vm1703, %v1716, %v1720
        %v1722 = vrot.slane %v1623, 2
        %v1723 = vsel %vm1703, %v1718, %v1722
        %v1724 = vrot.slane %v1670, 2
        %v1725 = vsel %vm1703, %v1720, %v1724
        %v1770 = vunpack.c.l.b16 %v1671
        %v1771 = vunpack.c.l.b16 %v1672
        %v1772 = vunpack.c.l.b16 %v1673
        %v1773 = vunpack.c.l.b16 %v1674
        %v1774 = vunpack.c.l.b16 %v1675
        %v1775 = vunpack.c.l.b16 %v1676
        %v1776 = vunpack.c.l.b16 %v1677
        %v1777 = vunpack.c.l.b16 %v1678
        %v1778 = vunpack.c.l.b16 %v1679
        %v1779 = vunpack.c.l.b16 %v1680
        %v1780 = vunpack.c.l.b16 %v1681
        %v1781 = vunpack.c.l.b16 %v1682
        %v1782 = vunpack.c.l.b16 %v1683
        %v1783 = vunpack.c.l.b16 %v1684
        %v1784 = vunpack.c.l.b16 %v1685
        %v1785 = vunpack.c.l.b16 %v1686
        %v1786 = vunpack.c.l.b16 %v1687
        %v1787 = vunpack.c.l.b16 %v1688
        %v1788 = vunpack.c.l.b16 %v1689
        %v1789 = vunpack.c.l.b16 %v1690
        %v1790 = vunpack.c.l.b16 %v1691
        %v1791 = vunpack.c.l.b16 %v1692
        %v1792 = vunpack.c.l.b16 %v1693
        %v1793 = vunpack.c.l.b16 %v1694
        %v1794 = vunpack.c.l.b16 %v1695
        %v1795 = vunpack.c.l.b16 %v1696
        %v1796 = vunpack.c.l.b16 %v1697
        %v1797 = vunpack.c.l.b16 %v1698
        %v1798 = vunpack.c.l.b16 %v1699
        %v1799 = vunpack.c.l.b16 %v1700
        %v1800 = vunpack.c.l.b16 %v1701
        %v1801 = vunpack.c.l.b16 %v1702
        %v1802 = vpack.c.b16 %v1771, %v1770
        %v1803 = vpack.c.b16 %v1773, %v1772
        %v1804 = vpack.c.b16 %v1775, %v1774
        %v1805 = vpack.c.b16 %v1777, %v1776
        %v1806 = vpack.c.b16 %v1779, %v1778
        %v1807 = vpack.c.b16 %v1781, %v1780
        %v1808 = vpack.c.b16 %v1783, %v1782
        %v1809 = vpack.c.b16 %v1785, %v1784
        %v1810 = vpack.c.b16 %v1787, %v1786
        %v1811 = vpack.c.b16 %v1789, %v1788
        %v1812 = vpack.c.b16 %v1791, %v1790
        %v1813 = vpack.c.b16 %v1793, %v1792
        %v1814 = vpack.c.b16 %v1795, %v1794
        %v1815 = vpack.c.b16 %v1797, %v1796
        %v1816 = vpack.c.b16 %v1799, %v1798
        %v1817 = vpack.c.b16 %v1801, %v1800
        %1834 = vmatprep.subr.bf16.mxu0 0
        %1835 = vmatpush1.bf16.msra.mxu0 %v1809
        %1836 = vmatprep.subr.bf16.mxu0 0
        %1837 = vmatpush1.bf16.msra.mxu0 %v1808
        %1838 = vmatprep.subr.bf16.mxu0 0
        %1839 = vmatpush1.bf16.msra.mxu0 %v1807
        %1840 = vmatprep.subr.bf16.mxu0 0
        %1841 = vmatpush1.bf16.msra.mxu0 %v1806
        %1842 = vmatprep.subr.bf16.mxu0 0
        %1843 = vmatpush1.bf16.msra.mxu0 %v1805
        %1844 = vmatprep.subr.bf16.mxu0 0
        %1845 = vmatpush1.bf16.msra.mxu0 %v1804
        %1846 = vmatprep.subr.bf16.mxu0 0
        %1847 = vmatpush1.bf16.msra.mxu0 %v1803
        %1848 = vmatprep.subr.bf16.mxu0 0
        %1849 = vmatpush1.bf16.msra.mxu0 %v1802
        %1850 = vmatprep.subr.bf16.mxu0 0
        %1851 = vmatpush2.bf16.msra.mxu0 %v1817
        %1852 = vmatprep.subr.bf16.mxu0 0
        %1853 = vmatpush2.bf16.msra.mxu0 %v1816
        %1854 = vmatprep.subr.bf16.mxu0 0
        %1855 = vmatpush2.bf16.msra.mxu0 %v1815
        %1856 = vmatprep.subr.bf16.mxu0 0
        %1857 = vmatpush2.bf16.msra.mxu0 %v1814
        %1858 = vmatprep.subr.bf16.mxu0 0
        %1859 = vmatpush2.bf16.msra.mxu0 %v1813
        %1860 = vmatprep.subr.bf16.mxu0 0
        %1861 = vmatpush2.bf16.msra.mxu0 %v1812
        %1862 = vmatprep.subr.bf16.mxu0 0
        %1863 = vmatpush2.bf16.msra.mxu0 %v1811
        %1864 = vmatprep.subr.bf16.mxu0 0
        %1865 = vmatpush2.bf16.msra.mxu0 %v1810
        %1866 = vmatprep.mubr.bf16.mxu0 %v1709
        %1867 = vmatmul.mubr.bf16.gmra.mxu0 %v1706
        %v1868 = vpop.f32.mrf.mxu0
        %v1869 = vadd.f32 0.0, %v1868
        %v1870 = vpop.f32.mrf.mxu0
        %v1871 = vpop.f32.mrf.mxu0
        %v1872 = vadd.f32 0.0, %v1871
        %v1873 = vpop.f32.mrf.mxu0
        %1874 = vmatprep.mubr.bf16.mxu0 %v1713
        %1875 = vmatmul.mubr.bf16.gmra.mxu0 %v1711
        %v1876 = vpop.f32.mrf.mxu0
        %v1877 = vadd.f32 0.0, %v1876
        %v1878 = vpop.f32.mrf.mxu0
        %v1879 = vpop.f32.mrf.mxu0
        %v1880 = vadd.f32 0.0, %v1879
        %v1881 = vpop.f32.mrf.mxu0
        %1882 = vmatprep.mubr.bf16.mxu0 %v1717
        %1883 = vmatmul.mubr.bf16.gmra.mxu0 %v1715
        %v1884 = vpop.f32.mrf.mxu0
        %v1885 = vadd.f32 0.0, %v1884
        %v1886 = vpop.f32.mrf.mxu0
        %v1887 = vpop.f32.mrf.mxu0
        %v1888 = vadd.f32 0.0, %v1887
        %v1889 = vpop.f32.mrf.mxu0
        %1890 = vmatprep.mubr.bf16.mxu0 %v1721
        %1891 = vmatmul.mubr.bf16.gmra.mxu0 %v1719
        %v1892 = vpop.f32.mrf.mxu0
        %v1893 = vadd.f32 0.0, %v1892
        %v1894 = vpop.f32.mrf.mxu0
        %v1895 = vpop.f32.mrf.mxu0
        %v1896 = vadd.f32 0.0, %v1895
        %v1897 = vpop.f32.mrf.mxu0
        %1898 = vmatprep.mubr.bf16.mxu0 %v1725
        %1899 = vmatmul.mubr.bf16.gmra.mxu0 %v1723
        %v1900 = vpop.f32.mrf.mxu0
        %v1901 = vadd.f32 0.0, %v1900
        %v1902 = vpop.f32.mrf.mxu0
        %v1903 = vpop.f32.mrf.mxu0
        %v1904 = vadd.f32 0.0, %v1903
        %v1905 = vpop.f32.mrf.mxu0
        %1906 = vmatprep.mubr.bf16.mxu0 %v1724
        %1907 = vmatmul.mubr.bf16.gmra.mxu0 %v1722
        %v1908 = vpop.f32.mrf.mxu0
        %v1909 = vadd.f32 0.0, %v1908
        %v1910 = vpop.f32.mrf.mxu0
        %v1911 = vpop.f32.mrf.mxu0
        %v1912 = vpop.f32.mrf.mxu0
        %1913 = vdwg.mxu0
        %v1914 = vadd.f32 %v1537, %v1869
        %v1915 = vadd.f32 %v1540, %v1872
        %v1916 = vadd.f32 %v1545, %v1877
        %v1917 = vadd.f32 %v1548, %v1880
        %v1918 = vadd.f32 %v1553, %v1885
        %v1919 = vadd.f32 %v1556, %v1888
        %v1920 = vadd.f32 %v1561, %v1893
        %v1921 = vadd.f32 %v1564, %v1896
        %v1922 = vadd.f32 %v1569, %v1901
        %v1923 = vadd.f32 %v1572, %v1904
        %v1924 = vadd.f32 %v1577, %v1909
        %v1925 = vld [vmem:[%s947 + $0x14] sm:$0x8]
        %v1926 = vld [vmem:[%s947 + $0x18] sm:$0xf]
        %v1927 = vld [vmem:[%s947 + $0x1c] sm:$0xf]
        %v1928 = vld [vmem:[%s947 + $0x20] sm:$0xf]
        %v1929 = vld [vmem:[%s947 + $0x24] sm:$0xf]
        %v1930 = vld [vmem:[%s947 + $0x28] sm:$0xf]
        %v1931 = vld [vmem:[%s947 + $0x2c] sm:$0xf]
        %v1932 = vld [vmem:[%s947 + $0x30] sm:$0xf]
        %v1933 = vld [vmem:[%s947 + $0x34] sm:$0xf]
        %v1934 = vld [vmem:[%s947 + $0x38] sm:$0xf]
        %v1935 = vld [vmem:[%s947 + $0x3c] sm:$0xf]
        %v1936 = vld [vmem:[%s947 + $0x40] sm:$0x3]
        %v1949 = vunpack.c.l.b16 %v1925
        %v1950 = vunpack.c.l.b16 %v1926
        %v1951 = vunpack.c.l.b16 %v1927
        %v1952 = vunpack.c.l.b16 %v1928
        %v1953 = vunpack.c.l.b16 %v1929
        %v1954 = vunpack.c.l.b16 %v1930
        %v1955 = vunpack.c.l.b16 %v1931
        %v1956 = vunpack.c.l.b16 %v1932
        %v1957 = vunpack.c.l.b16 %v1933
        %v1958 = vunpack.c.l.b16 %v1934
        %v1959 = vunpack.c.l.b16 %v1935
        %v1960 = vunpack.c.l.b16 %v1936
        %v1961 = vpack.c.b16 %v1950, %v1949
        %v1962 = vpack.c.b16 %v1952, %v1951
        %v1963 = vpack.c.b16 %v1954, %v1953
        %v1964 = vpack.c.b16 %v1956, %v1955
        %v1965 = vpack.c.b16 %v1958, %v1957
        %v1966 = vpack.c.b16 %v1960, %v1959
        %v1968 = vshrl.u32 %v1961, 16
        %v1970 = vshll.u32 %v1961, 16
        %v1972 = vrot.slane %v1970, 1
        %v1973 = vor.u32 %v1968, %v1972
        %v1975 = vshll.u32 %v1962, 16
        %v1977 = vrot.slane %v1975, 1
        %v1978 = vsel %vm1010, %v1973, %v1977
        %v1979 = vshrl.u32 %v1962, 16
        %v1981 = vor.u32 %v1979, %v1977
        %v1983 = vshll.u32 %v1963, 16
        %v1985 = vrot.slane %v1983, 1
        %v1986 = vsel %vm1010, %v1981, %v1985
        %v1987 = vshrl.u32 %v1963, 16
        %v1989 = vor.u32 %v1987, %v1985
        %v1991 = vshll.u32 %v1964, 16
        %v1993 = vrot.slane %v1991, 1
        %v1994 = vsel %vm1010, %v1989, %v1993
        %v1995 = vshrl.u32 %v1964, 16
        %v1997 = vor.u32 %v1995, %v1993
        %v1999 = vshll.u32 %v1965, 16
        %v2001 = vrot.slane %v1999, 1
        %v2002 = vsel %vm1010, %v1997, %v2001
        %v2003 = vshrl.u32 %v1965, 16
        %v2005 = vor.u32 %v2003, %v2001
        %v2007 = vshll.u32 %v1966, 16
        %v2009 = vrot.slane %v2007, 1
        %v2010 = vsel %vm1010, %v2005, %v2009
        %v2011 = vshrl.u32 %v1966, 16
        %v2013 = vor.u32 %v2011, %v2009
        %v2014 = vld [vmem:[%s3 + $0x180] sm:$0xf]
        %v2015 = vld [vmem:[%s3 + $0x184] sm:$0xf]
        %v2016 = vld [vmem:[%s3 + $0x188] sm:$0xf]
        %v2017 = vld [vmem:[%s3 + $0x18c] sm:$0xf]
        %v2018 = vld [vmem:[%s3 + $0x190] sm:$0xf]
        %v2019 = vld [vmem:[%s3 + $0x194] sm:$0xf]
        %v2020 = vld [vmem:[%s3 + $0x198] sm:$0xf]
        %v2021 = vld [vmem:[%s3 + $0x19c] sm:$0xf]
        %v2022 = vld [vmem:[%s3 + $0x1a0] sm:$0xf]
        %v2023 = vld [vmem:[%s3 + $0x1a4] sm:$0xf]
        %v2024 = vld [vmem:[%s3 + $0x1a8] sm:$0xf]
        %v2025 = vld [vmem:[%s3 + $0x1ac] sm:$0xf]
        %v2026 = vld [vmem:[%s3 + $0x1b0] sm:$0xf]
        %v2027 = vld [vmem:[%s3 + $0x1b4] sm:$0xf]
        %v2028 = vld [vmem:[%s3 + $0x1b8] sm:$0xf]
        %v2029 = vld [vmem:[%s3 + $0x1bc] sm:$0xf]
        %v2030 = vld [vmem:[%s3 + $0x1c0] sm:$0xf]
        %v2031 = vld [vmem:[%s3 + $0x1c4] sm:$0xf]
        %v2032 = vld [vmem:[%s3 + $0x1c8] sm:$0xf]
        %v2033 = vld [vmem:[%s3 + $0x1cc] sm:$0xf]
        %v2034 = vld [vmem:[%s3 + $0x1d0] sm:$0xf]
        %v2035 = vld [vmem:[%s3 + $0x1d4] sm:$0xf]
        %v2036 = vld [vmem:[%s3 + $0x1d8] sm:$0xf]
        %v2037 = vld [vmem:[%s3 + $0x1dc] sm:$0xf]
        %v2038 = vld [vmem:[%s3 + $0x1e0] sm:$0xf]
        %v2039 = vld [vmem:[%s3 + $0x1e4] sm:$0xf]
        %v2040 = vld [vmem:[%s3 + $0x1e8] sm:$0xf]
        %v2041 = vld [vmem:[%s3 + $0x1ec] sm:$0xf]
        %v2042 = vld [vmem:[%s3 + $0x1f0] sm:$0xf]
        %v2043 = vld [vmem:[%s3 + $0x1f4] sm:$0xf]
        %v2044 = vld [vmem:[%s3 + $0x1f8] sm:$0xf]
        %v2045 = vld [vmem:[%s3 + $0x1fc] sm:$0xf]
        %vm2046 = vcmask 1044480
        %v2047 = vrot.slane %v1961, 3
        %v2048 = vrot.slane %v1962, 3
        %v2049 = vsel %vm2046, %v2047, %v2048
        %v2050 = vrot.slane %v1978, 3
        %v2051 = vrot.slane %v1986, 3
        %v2052 = vsel %vm2046, %v2050, %v2051
        %v2053 = vrot.slane %v1963, 3
        %v2054 = vsel %vm2046, %v2048, %v2053
        %v2055 = vrot.slane %v1994, 3
        %v2056 = vsel %vm2046, %v2051, %v2055
        %v2057 = vrot.slane %v1964, 3
        %v2058 = vsel %vm2046, %v2053, %v2057
        %v2059 = vrot.slane %v2002, 3
        %v2060 = vsel %vm2046, %v2055, %v2059
        %v2061 = vrot.slane %v1965, 3
        %v2062 = vsel %vm2046, %v2057, %v2061
        %v2063 = vrot.slane %v2010, 3
        %v2064 = vsel %vm2046, %v2059, %v2063
        %v2065 = vrot.slane %v1966, 3
        %v2066 = vsel %vm2046, %v2061, %v2065
        %v2067 = vrot.slane %v2013, 3
        %v2068 = vsel %vm2046, %v2063, %v2067
        %v2113 = vunpack.c.l.b16 %v2014
        %v2114 = vunpack.c.l.b16 %v2015
        %v2115 = vunpack.c.l.b16 %v2016
        %v2116 = vunpack.c.l.b16 %v2017
        %v2117 = vunpack.c.l.b16 %v2018
        %v2118 = vunpack.c.l.b16 %v2019
        %v2119 = vunpack.c.l.b16 %v2020
        %v2120 = vunpack.c.l.b16 %v2021
        %v2121 = vunpack.c.l.b16 %v2022
        %v2122 = vunpack.c.l.b16 %v2023
        %v2123 = vunpack.c.l.b16 %v2024
        %v2124 = vunpack.c.l.b16 %v2025
        %v2125 = vunpack.c.l.b16 %v2026
        %v2126 = vunpack.c.l.b16 %v2027
        %v2127 = vunpack.c.l.b16 %v2028
        %v2128 = vunpack.c.l.b16 %v2029
        %v2129 = vunpack.c.l.b16 %v2030
        %v2130 = vunpack.c.l.b16 %v2031
        %v2131 = vunpack.c.l.b16 %v2032
        %v2132 = vunpack.c.l.b16 %v2033
        %v2133 = vunpack.c.l.b16 %v2034
        %v2134 = vunpack.c.l.b16 %v2035
        %v2135 = vunpack.c.l.b16 %v2036
        %v2136 = vunpack.c.l.b16 %v2037
        %v2137 = vunpack.c.l.b16 %v2038
        %v2138 = vunpack.c.l.b16 %v2039
        %v2139 = vunpack.c.l.b16 %v2040
        %v2140 = vunpack.c.l.b16 %v2041
        %v2141 = vunpack.c.l.b16 %v2042
        %v2142 = vunpack.c.l.b16 %v2043
        %v2143 = vunpack.c.l.b16 %v2044
        %v2144 = vunpack.c.l.b16 %v2045
        %v2145 = vpack.c.b16 %v2114, %v2113
        %v2146 = vpack.c.b16 %v2116, %v2115
        %v2147 = vpack.c.b16 %v2118, %v2117
        %v2148 = vpack.c.b16 %v2120, %v2119
        %v2149 = vpack.c.b16 %v2122, %v2121
        %v2150 = vpack.c.b16 %v2124, %v2123
        %v2151 = vpack.c.b16 %v2126, %v2125
        %v2152 = vpack.c.b16 %v2128, %v2127
        %v2153 = vpack.c.b16 %v2130, %v2129
        %v2154 = vpack.c.b16 %v2132, %v2131
        %v2155 = vpack.c.b16 %v2134, %v2133
        %v2156 = vpack.c.b16 %v2136, %v2135
        %v2157 = vpack.c.b16 %v2138, %v2137
        %v2158 = vpack.c.b16 %v2140, %v2139
        %v2159 = vpack.c.b16 %v2142, %v2141
        %v2160 = vpack.c.b16 %v2144, %v2143
        %2177 = vmatprep.subr.bf16.mxu0 0
        %2178 = vmatpush1.bf16.msra.mxu0 %v2152
        %2179 = vmatprep.subr.bf16.mxu0 0
        %2180 = vmatpush1.bf16.msra.mxu0 %v2151
        %2181 = vmatprep.subr.bf16.mxu0 0
        %2182 = vmatpush1.bf16.msra.mxu0 %v2150
        %2183 = vmatprep.subr.bf16.mxu0 0
        %2184 = vmatpush1.bf16.msra.mxu0 %v2149
        %2185 = vmatprep.subr.bf16.mxu0 0
        %2186 = vmatpush1.bf16.msra.mxu0 %v2148
        %2187 = vmatprep.subr.bf16.mxu0 0
        %2188 = vmatpush1.bf16.msra.mxu0 %v2147
        %2189 = vmatprep.subr.bf16.mxu0 0
        %2190 = vmatpush1.bf16.msra.mxu0 %v2146
        %2191 = vmatprep.subr.bf16.mxu0 0
        %2192 = vmatpush1.bf16.msra.mxu0 %v2145
        %2193 = vmatprep.subr.bf16.mxu0 0
        %2194 = vmatpush2.bf16.msra.mxu0 %v2160
        %2195 = vmatprep.subr.bf16.mxu0 0
        %2196 = vmatpush2.bf16.msra.mxu0 %v2159
        %2197 = vmatprep.subr.bf16.mxu0 0
        %2198 = vmatpush2.bf16.msra.mxu0 %v2158
        %2199 = vmatprep.subr.bf16.mxu0 0
        %2200 = vmatpush2.bf16.msra.mxu0 %v2157
        %2201 = vmatprep.subr.bf16.mxu0 0
        %2202 = vmatpush2.bf16.msra.mxu0 %v2156
        %2203 = vmatprep.subr.bf16.mxu0 0
        %2204 = vmatpush2.bf16.msra.mxu0 %v2155
        %2205 = vmatprep.subr.bf16.mxu0 0
        %2206 = vmatpush2.bf16.msra.mxu0 %v2154
        %2207 = vmatprep.subr.bf16.mxu0 0
        %2208 = vmatpush2.bf16.msra.mxu0 %v2153
        %2209 = vmatprep.mubr.bf16.mxu0 %v2052
        %2210 = vmatmul.mubr.bf16.gmra.mxu0 %v2049
        %v2211 = vpop.f32.mrf.mxu0
        %v2212 = vadd.f32 0.0, %v2211
        %v2213 = vpop.f32.mrf.mxu0
        %v2214 = vpop.f32.mrf.mxu0
        %v2215 = vadd.f32 0.0, %v2214
        %v2216 = vpop.f32.mrf.mxu0
        %2217 = vmatprep.mubr.bf16.mxu0 %v2056
        %2218 = vmatmul.mubr.bf16.gmra.mxu0 %v2054
        %v2219 = vpop.f32.mrf.mxu0
        %v2220 = vadd.f32 0.0, %v2219
        %v2221 = vpop.f32.mrf.mxu0
        %v2222 = vpop.f32.mrf.mxu0
        %v2223 = vadd.f32 0.0, %v2222
        %v2224 = vpop.f32.mrf.mxu0
        %2225 = vmatprep.mubr.bf16.mxu0 %v2060
        %2226 = vmatmul.mubr.bf16.gmra.mxu0 %v2058
        %v2227 = vpop.f32.mrf.mxu0
        %v2228 = vadd.f32 0.0, %v2227
        %v2229 = vpop.f32.mrf.mxu0
        %v2230 = vpop.f32.mrf.mxu0
        %v2231 = vadd.f32 0.0, %v2230
        %v2232 = vpop.f32.mrf.mxu0
        %2233 = vmatprep.mubr.bf16.mxu0 %v2064
        %2234 = vmatmul.mubr.bf16.gmra.mxu0 %v2062
        %v2235 = vpop.f32.mrf.mxu0
        %v2236 = vadd.f32 0.0, %v2235
        %v2237 = vpop.f32.mrf.mxu0
        %v2238 = vpop.f32.mrf.mxu0
        %v2239 = vadd.f32 0.0, %v2238
        %v2240 = vpop.f32.mrf.mxu0
        %2241 = vmatprep.mubr.bf16.mxu0 %v2068
        %2242 = vmatmul.mubr.bf16.gmra.mxu0 %v2066
        %v2243 = vpop.f32.mrf.mxu0
        %v2244 = vadd.f32 0.0, %v2243
        %v2245 = vpop.f32.mrf.mxu0
        %v2246 = vpop.f32.mrf.mxu0
        %v2247 = vadd.f32 0.0, %v2246
        %v2248 = vpop.f32.mrf.mxu0
        %2249 = vmatprep.mubr.bf16.mxu0 %v2067
        %2250 = vmatmul.mubr.bf16.gmra.mxu0 %v2065
        %v2251 = vpop.f32.mrf.mxu0
        %v2252 = vadd.f32 0.0, %v2251
        %v2253 = vpop.f32.mrf.mxu0
        %v2254 = vpop.f32.mrf.mxu0
        %v2255 = vpop.f32.mrf.mxu0
        %2256 = vdwg.mxu0
        %v2257 = vadd.f32 %v1914, %v2212
        %v2258 = vadd.f32 %v1915, %v2215
        %v2259 = vadd.f32 %v1916, %v2220
        %v2260 = vadd.f32 %v1917, %v2223
        %v2261 = vadd.f32 %v1918, %v2228
        %v2262 = vadd.f32 %v1919, %v2231
        %v2263 = vadd.f32 %v1920, %v2236
        %v2264 = vadd.f32 %v1921, %v2239
        %v2265 = vadd.f32 %v1922, %v2244
        %v2266 = vadd.f32 %v1923, %v2247
        %v2267 = vadd.f32 %v1924, %v2252
        %v2268 = vld [vmem:[%s947 + $0x40] sm:$0x7]
        %v2269 = vld [vmem:[%s3 + $0x200] sm:$0xf]
        %v2270 = vld [vmem:[%s3 + $0x204] sm:$0xf]
        %v2271 = vld [vmem:[%s3 + $0x208] sm:$0xf]
        %v2272 = vld [vmem:[%s3 + $0x20c] sm:$0xf]
        %v2273 = vld [vmem:[%s3 + $0x210] sm:$0xf]
        %v2274 = vld [vmem:[%s3 + $0x214] sm:$0xf]
        %v2275 = vld [vmem:[%s3 + $0x218] sm:$0xf]
        %v2276 = vld [vmem:[%s3 + $0x21c] sm:$0xf]
        %v2277 = vld [vmem:[%s3 + $0x220] sm:$0xf]
        %v2278 = vld [vmem:[%s3 + $0x224] sm:$0xf]
        %v2279 = vld [vmem:[%s3 + $0x228] sm:$0xf]
        %v2280 = vld [vmem:[%s3 + $0x22c] sm:$0xf]
        %v2281 = vld [vmem:[%s3 + $0x230] sm:$0xf]
        %v2282 = vld [vmem:[%s3 + $0x234] sm:$0xf]
        %v2283 = vld [vmem:[%s3 + $0x238] sm:$0xf]
        %v2284 = vld [vmem:[%s3 + $0x23c] sm:$0xf]
        %v2286 = vunpack.c.l.b16 %v2268
        %v2287 = vpack.c.b16 %v1951, %v1950
        %v2288 = vpack.c.b16 %v1953, %v1952
        %v2289 = vpack.c.b16 %v1955, %v1954
        %v2290 = vpack.c.b16 %v1957, %v1956
        %v2291 = vpack.c.b16 %v1959, %v1958
        %v2292 = vpack.c.b16 %v2286, %v2286
        %v2315 = vunpack.c.l.b16 %v2269
        %v2316 = vunpack.c.l.b16 %v2270
        %v2317 = vunpack.c.l.b16 %v2271
        %v2318 = vunpack.c.l.b16 %v2272
        %v2319 = vunpack.c.l.b16 %v2273
        %v2320 = vunpack.c.l.b16 %v2274
        %v2321 = vunpack.c.l.b16 %v2275
        %v2322 = vunpack.c.l.b16 %v2276
        %v2323 = vunpack.c.l.b16 %v2277
        %v2324 = vunpack.c.l.b16 %v2278
        %v2325 = vunpack.c.l.b16 %v2279
        %v2326 = vunpack.c.l.b16 %v2280
        %v2327 = vunpack.c.l.b16 %v2281
        %v2328 = vunpack.c.l.b16 %v2282
        %v2329 = vunpack.c.l.b16 %v2283
        %v2330 = vunpack.c.l.b16 %v2284
        %v2331 = vpack.c.b16 %v2316, %v2315
        %v2332 = vpack.c.b16 %v2318, %v2317
        %v2333 = vpack.c.b16 %v2320, %v2319
        %v2334 = vpack.c.b16 %v2322, %v2321
        %v2335 = vpack.c.b16 %v2324, %v2323
        %v2336 = vpack.c.b16 %v2326, %v2325
        %v2337 = vpack.c.b16 %v2328, %v2327
        %v2338 = vpack.c.b16 %v2330, %v2329
        %2347 = vmatprep.subr.bf16.mxu0 0
        %2348 = vmatpush1.bf16.msra.mxu0 %v2338
        %2349 = vmatprep.subr.bf16.mxu0 0
        %2350 = vmatpush1.bf16.msra.mxu0 %v2337
        %2351 = vmatprep.subr.bf16.mxu0 0
        %2352 = vmatpush1.bf16.msra.mxu0 %v2336
        %2353 = vmatprep.subr.bf16.mxu0 0
        %2354 = vmatpush1.bf16.msra.mxu0 %v2335
        %2355 = vmatprep.subr.bf16.mxu0 0
        %2356 = vmatpush1.bf16.msra.mxu0 %v2334
        %2357 = vmatprep.subr.bf16.mxu0 0
        %2358 = vmatpush1.bf16.msra.mxu0 %v2333
        %2359 = vmatprep.subr.bf16.mxu0 0
        %2360 = vmatpush1.bf16.msra.mxu0 %v2332
        %2361 = vmatprep.subr.bf16.mxu0 0
        %2362 = vmatpush1.bf16.msra.mxu0 %v2331
        %2363 = vmatprep.subr.bf16.mxu0 0
        %2364 = vmatpush2.bf16.msra.mxu0 0
        %2365 = vmatprep.subr.bf16.mxu0 0
        %2366 = vmatpush2.bf16.msra.mxu0 0
        %2367 = vmatprep.subr.bf16.mxu0 0
        %2368 = vmatpush2.bf16.msra.mxu0 0
        %2369 = vmatprep.subr.bf16.mxu0 0
        %2370 = vmatpush2.bf16.msra.mxu0 0
        %2371 = vmatprep.subr.bf16.mxu0 0
        %2372 = vmatpush2.bf16.msra.mxu0 0
        %2373 = vmatprep.subr.bf16.mxu0 0
        %2374 = vmatpush2.bf16.msra.mxu0 0
        %2375 = vmatprep.subr.bf16.mxu0 0
        %2376 = vmatpush2.bf16.msra.mxu0 0
        %2377 = vmatprep.subr.bf16.mxu0 0
        %2378 = vmatpush2.bf16.msra.mxu0 0
        %2379 = vmatprep.mubr.bf16.mxu0 0
        %2380 = vmatmul.mubr.bf16.gmra.mxu0 %v2287
        %v2381 = vpop.f32.mrf.mxu0
        %v2382 = vadd.f32 0.0, %v2381
        %v2383 = vpop.f32.mrf.mxu0
        %v2384 = vpop.f32.mrf.mxu0
        %v2385 = vadd.f32 0.0, %v2384
        %v2386 = vpop.f32.mrf.mxu0
        %2387 = vmatprep.mubr.bf16.mxu0 0
        %2388 = vmatmul.mubr.bf16.gmra.mxu0 %v2288
        %v2389 = vpop.f32.mrf.mxu0
        %v2390 = vadd.f32 0.0, %v2389
        %v2391 = vpop.f32.mrf.mxu0
        %v2392 = vpop.f32.mrf.mxu0
        %v2393 = vadd.f32 0.0, %v2392
        %v2394 = vpop.f32.mrf.mxu0
        %2395 = vmatprep.mubr.bf16.mxu0 0
        %2396 = vmatmul.mubr.bf16.gmra.mxu0 %v2289
        %v2397 = vpop.f32.mrf.mxu0
        %v2398 = vadd.f32 0.0, %v2397
        %v2399 = vpop.f32.mrf.mxu0
        %v2400 = vpop.f32.mrf.mxu0
        %v2401 = vadd.f32 0.0, %v2400
        %v2402 = vpop.f32.mrf.mxu0
        %2403 = vmatprep.mubr.bf16.mxu0 0
        %2404 = vmatmul.mubr.bf16.gmra.mxu0 %v2290
        %v2405 = vpop.f32.mrf.mxu0
        %v2406 = vadd.f32 0.0, %v2405
        %v2407 = vpop.f32.mrf.mxu0
        %v2408 = vpop.f32.mrf.mxu0
        %v2409 = vadd.f32 0.0, %v2408
        %v2410 = vpop.f32.mrf.mxu0
        %2411 = vmatprep.mubr.bf16.mxu0 0
        %2412 = vmatmul.mubr.bf16.gmra.mxu0 %v2291
        %v2413 = vpop.f32.mrf.mxu0
        %v2414 = vadd.f32 0.0, %v2413
        %v2415 = vpop.f32.mrf.mxu0
        %v2416 = vpop.f32.mrf.mxu0
        %v2417 = vadd.f32 0.0, %v2416
        %v2418 = vpop.f32.mrf.mxu0
        %2419 = vmatprep.mubr.bf16.mxu0 0
        %2420 = vmatmul.mubr.bf16.gmra.mxu0 %v2292
        %v2421 = vpop.f32.mrf.mxu0
        %v2422 = vadd.f32 0.0, %v2421
        %v2423 = vpop.f32.mrf.mxu0
        %v2424 = vpop.f32.mrf.mxu0
        %v2425 = vpop.f32.mrf.mxu0
        %2426 = vdwg.mxu0
        %v2427 = vadd.f32 %v2257, %v2382
        %v2428 = vadd.f32 %v2258, %v2385
        %v2429 = vadd.f32 %v2259, %v2390
        %v2430 = vadd.f32 %v2260, %v2393
        %v2431 = vadd.f32 %v2261, %v2398
        %v2432 = vadd.f32 %v2262, %v2401
        %v2433 = vadd.f32 %v2263, %v2406
        %v2434 = vadd.f32 %v2264, %v2409
        %v2435 = vadd.f32 %v2265, %v2414
        %v2436 = vadd.f32 %v2266, %v2417
        %v2437 = vadd.f32 %v2267, %v2422
        %v2438 = vld [vmem:[%s5] sm:$0x1]
        %v2440 = vlaneseq
        %v2441 = vshrl.u32 %v2440, 7
        %v2442 = vsub.s32 0, %v2441
        %v2443 = vrot.slane %v2438, %v2442
        %v2445 = vadd.f32 %v2427, %v2443
        %v2446 = vadd.f32 %v2428, %v2443
        %v2447 = vadd.f32 %v2429, %v2443
        %v2448 = vadd.f32 %v2430, %v2443
        %v2449 = vadd.f32 %v2431, %v2443
        %v2450 = vadd.f32 %v2432, %v2443
        %v2451 = vadd.f32 %v2433, %v2443
        %v2452 = vadd.f32 %v2434, %v2443
        %v2453 = vadd.f32 %v2435, %v2443
        %v2454 = vadd.f32 %v2436, %v2443
        %v2455 = vadd.f32 %v2437, %v2443
        %vm2456 = vcmp.ge.f32.partialorder %v2445, 0.0
        %vm2457 = vcmp.ge.f32.partialorder %v2446, 0.0
        %vm2458 = vcmp.ge.f32.partialorder %v2447, 0.0
        %vm2459 = vcmp.ge.f32.partialorder %v2448, 0.0
        %vm2460 = vcmp.ge.f32.partialorder %v2449, 0.0
        %vm2461 = vcmp.ge.f32.partialorder %v2450, 0.0
        %vm2462 = vcmp.ge.f32.partialorder %v2451, 0.0
        %vm2463 = vcmp.ge.f32.partialorder %v2452, 0.0
        %vm2464 = vcmp.ge.f32.partialorder %v2453, 0.0
        %vm2465 = vcmp.ge.f32.partialorder %v2454, 0.0
        %vm2466 = vcmp.ge.f32.partialorder %v2455, 0.0
        %v2467 = vmul.f32 %v2445, 0.1
        %v2468 = vmul.f32 %v2446, 0.1
        %v2469 = vmul.f32 %v2447, 0.1
        %v2470 = vmul.f32 %v2448, 0.1
        %v2471 = vmul.f32 %v2449, 0.1
        %v2472 = vmul.f32 %v2450, 0.1
        %v2473 = vmul.f32 %v2451, 0.1
        %v2474 = vmul.f32 %v2452, 0.1
        %v2475 = vmul.f32 %v2453, 0.1
        %v2476 = vmul.f32 %v2454, 0.1
        %v2477 = vmul.f32 %v2455, 0.1
        %v2478 = vsel %vm2456, %v2445, %v2467
        %v2479 = vsel %vm2457, %v2446, %v2468
        %v2480 = vsel %vm2458, %v2447, %v2469
        %v2481 = vsel %vm2459, %v2448, %v2470
        %v2482 = vsel %vm2460, %v2449, %v2471
        %v2483 = vsel %vm2461, %v2450, %v2472
        %v2484 = vsel %vm2462, %v2451, %v2473
        %v2485 = vsel %vm2463, %v2452, %v2474
        %v2486 = vsel %vm2464, %v2453, %v2475
        %v2487 = vsel %vm2465, %v2454, %v2476
        %v2488 = vsel %vm2466, %v2455, %v2477
        %2489 = vst [vmem:[#allocation2 + $0x24] sm:$0xff] %v2478
        %2490 = vst [vmem:[#allocation2 + $0x2c] sm:$0xff] %v2479
        %2491 = vst [vmem:[#allocation2 + $0x34] sm:$0xff] %v2480
        %2492 = vst [vmem:[#allocation2 + $0x3c] sm:$0xff] %v2481
        %2493 = vst [vmem:[#allocation2 + $0x44] sm:$0xff] %v2482
        %2494 = vst [vmem:[#allocation2 + $0x4c] sm:$0xff] %v2483
        %2495 = vst [vmem:[#allocation2 + $0x54] sm:$0xff] %v2484
        %2496 = vst [vmem:[#allocation2 + $0x5c] sm:$0xff] %v2485
        %2497 = vst [vmem:[#allocation2 + $0x64] sm:$0xff] %v2486
        %2498 = vst [vmem:[#allocation2 + $0x6c] sm:$0xff] %v2487
        %2499 = vst [vmem:[#allocation2 + $0x74] sm:$0x1f] %v2488
        %s2500 = scalar_lea.vmem [#allocation2], 36
        %v2501 = vld [vmem:[%s2500] ss:$2 sm:$0xf]
        %s2502 = scalar_lea.vmem [#allocation2], 37
        %v2503 = vld [vmem:[%s2502] ss:$2 sm:$0xf]
        %s2504 = scalar_lea.vmem [#allocation2], 47
        %v2505 = vld [vmem:[%s2504] ss:$2 sm:$0xf]
        %s2506 = scalar_lea.vmem [#allocation2], 48
        %v2507 = vld [vmem:[%s2506] ss:$2 sm:$0xf]
        %v2508 = vmax.f32 %v2501, %v2503
        %v2509 = vmax.f32 %v2505, %v2507
        %v2510 = vmax.f32 %v2508, %v2509
        %v2511 = vpack.c.bf16 %v2510, %v2510
        %2512 = vst [vmem:[#allocation3 + $0xc] sm:$0x3] %v2511
        %s2513 = scalar_lea.vmem [#allocation2], 58
        %v2514 = vld [vmem:[%s2513] ss:$2 sm:$0xf]
        %s2515 = scalar_lea.vmem [#allocation2], 59
        %v2516 = vld [vmem:[%s2515] ss:$2 sm:$0xf]
        %s2517 = scalar_lea.vmem [#allocation2], 69
        %v2518 = vld [vmem:[%s2517] ss:$2 sm:$0xf]
        %s2519 = scalar_lea.vmem [#allocation2], 70
        %v2520 = vld [vmem:[%s2519] ss:$2 sm:$0xf]
        %v2521 = vmax.f32 %v2514, %v2516
        %v2522 = vmax.f32 %v2518, %v2520
        %v2523 = vmax.f32 %v2521, %v2522
        %v2524 = vpack.c.bf16 %v2523, %v2523
        %v2526 = vunpack.c.l.b16 %v2524
        %v2527 = vpack.c.b16 %v2526, %v2526
        %v2529 = vshll.u32 %v2527, 16
        %v2531 = vrot.slane %v2529, 5
        %v2532 = vshrl.u32 %v2527, 16
        %v2534 = vrot.slane %v2532, 4
        %v2535 = vor.u32 %v2534, %v2531
        %v2536 = vrot.slane %v2535, 4
        %vm2539 = vcmask 1043459
        %vm2540 = vsmask.f32 7950
        %vm2541 = vmand %vm2539, %vm2540
        %v2542 = vld [vmem:[#allocation3 + $0xc] sm:$0x8]
        %v2543 = vsel %vm2541, %v2531, %v2542
        %2544 = vst [vmem:[#allocation3 + $0xc] sm:$0x8] %v2543
        %vm2545 = vcmask 1041408
        %vm2546 = vsmask.f32 1280
        %vm2547 = vmand %vm2545, %vm2546
        %v2548 = vld [vmem:[#allocation3 + $0x10] sm:$0x3]
        %v2549 = vsel %vm2547, %v2536, %v2548
        %2550 = vst [vmem:[#allocation3 + $0x10] sm:$0x3] %v2549
        %s2551 = scalar_lea.vmem [#allocation2], 80
        %v2552 = vld [vmem:[%s2551] ss:$2 sm:$0xf]
        %s2553 = scalar_lea.vmem [#allocation2], 81
        %v2554 = vld [vmem:[%s2553] ss:$2 sm:$0xf]
        %s2555 = scalar_lea.vmem [#allocation2], 91
        %v2556 = vld [vmem:[%s2555] ss:$2 sm:$0xf]
        %s2557 = scalar_lea.vmem [#allocation2], 92
        %v2558 = vld [vmem:[%s2557] ss:$2 sm:$0xf]
        %v2559 = vmax.f32 %v2552, %v2554
        %v2560 = vmax.f32 %v2556, %v2558
        %v2561 = vmax.f32 %v2559, %v2560
        %v2562 = vpack.c.bf16 %v2561, %v2561
        %v2564 = vunpack.c.l.b16 %v2562
        %v2565 = vpack.c.b16 %v2564, %v2564
        %v2566 = vrot.slane %v2565, 5
        %v2567 = vrot.slane %v2566, 4
        %2570 = vst [vmem:[#allocation3 + $0x10] sm:$0x8] %v2566
        %2571 = vst [vmem:[#allocation3 + $0x14] sm:$0x1] %v2567
        %s2572 = scalar_lea.vmem [#allocation2], 102
        %v2573 = vld [vmem:[%s2572] ss:$2 sm:$0xf]
        %s2574 = scalar_lea.vmem [#allocation2], 103
        %v2575 = vld [vmem:[%s2574] ss:$2 sm:$0xf]
        %s2576 = scalar_lea.vmem [#allocation2], 113
        %v2577 = vld [vmem:[%s2576] ss:$2 sm:$0xf]
        %s2578 = scalar_lea.vmem [#allocation2], 114
        %v2579 = vld [vmem:[%s2578] ss:$2 sm:$0xf]
        %v2580 = vmax.f32 %v2573, %v2575
        %v2581 = vmax.f32 %v2577, %v2579
        %v2582 = vmax.f32 %v2580, %v2581
        %v2583 = vpack.c.bf16 %v2582, %v2582
        %v2585 = vunpack.c.l.b16 %v2583
        %v2586 = vpack.c.b16 %v2585, %v2585
        %v2588 = vshrl.u32 %v2586, 16
        %v2590 = vrot.slane %v2588, 5
        %v2591 = vshll.u32 %v2586, 16
        %v2593 = vrot.slane %v2591, 6
        %v2594 = vor.u32 %v2590, %v2593
        %v2595 = vrot.slane %v2590, 4
        %vm2598 = vcmask 1043458
        %vm2599 = vsmask.f32 7946
        %vm2600 = vmand %vm2598, %vm2599
        %v2601 = vld [vmem:[#allocation3 + $0x14] sm:$0xc]
        %v2602 = vsel %vm2600, %v2594, %v2601
        %2603 = vst [vmem:[#allocation3 + $0x14] sm:$0xc] %v2602
        %vm2604 = vcmask 1040384
        %vm2605 = vsmask.f32 256
        %vm2606 = vmand %vm2604, %vm2605
        %v2607 = vld [vmem:[#allocation3 + $0x18] sm:$0x1]
        %v2608 = vsel %vm2606, %v2595, %v2607
        %2609 = vst [vmem:[#allocation3 + $0x18] sm:$0x1] %v2608
        %v2610 = vld [vmem:[#allocation3 + $0xc] sm:$0xf]
        %v2611 = vld [vmem:[#allocation3 + $0x10] sm:$0xf]
        %v2612 = vld [vmem:[#allocation3 + $0x14] sm:$0xf]
        %v2613 = vld [vmem:[#allocation3 + $0x18] sm:$0x1]
        %v2614 = vunpack.c.l.bf16 %v2610
        %v2615 = vunpack.c.l.bf16 %v2611
        %v2616 = vunpack.c.l.bf16 %v2612
        %v2617 = vunpack.c.l.bf16 %v2613
        %vm2618 = vcmask 1043456
        %v2619 = vsel %vm2618, 1.0, 0.0
        %v2621 = vrot.slane %v2619, 1
        %v2623 = vrot.slane %v2619, 2
        %v2625 = vrot.slane %v2619, 3
        %vm2627 = vcmask 1046528
        %v2628 = vsel %vm2627, %v2619, %v2621
        %vm2629 = vcmask 1045504
        %v2630 = vsel %vm2629, %v2621, %v2623
        %vm2631 = vcmask 1044480
        %v2632 = vsel %vm2631, %v2623, %v2625
        %v2633 = vadd.f32 %v2614, %v2615
        %v2634 = vadd.f32 %v2633, %v2616
        %vm2635 = vcmask 1040384
        %v2636 = vsel %vm2635, %v2617, 0.0
        %v2637 = vadd.f32 %v2634, %v2636
        %v2638 = vrot.slane %v2637, 4
        %v2639 = vadd.f32 %v2637, %v2638
        %v2640 = vrot.slane %v2639, 2
        %v2641 = vadd.f32 %v2639, %v2640
        %v2642 = vrot.slane %v2641, 1
        %v2643 = vadd.f32 %v2641, %v2642
        %v2644 = vmul.f32 %v2643, 0.0625
        %vm2645 = vcmp.gt.f32.partialorder %v2628, 0.0
        %vm2646 = vcmp.gt.f32.partialorder %v2630, 0.0
        %vm2647 = vcmp.gt.f32.partialorder %v2632, 0.0
        %vm2648 = vcmp.gt.f32.partialorder %v2625, 0.0
        %v2649 = vsel %vm2645, 1, 0
        %v2650 = vsel %vm2646, 1, 0
        %v2651 = vsel %vm2647, 1, 0
        %v2652 = vsel %vm2648, 1, 0
        %2653 = vset.pattern.permute.xlu0 0
        %2654 = vperm.xlu0 %2653, %v2649
        %v2655 = vpop.permute.xlu0 %2654
        %2656 = vset.pattern.permute.xlu0 0
        %2657 = vperm.xlu0 %2656, %v2650
        %v2658 = vpop.permute.xlu0 %2657
        %2659 = vset.pattern.permute.xlu0 0
        %2660 = vperm.xlu0 %2659, %v2651
        %v2661 = vpop.permute.xlu0 %2660
        %2662 = vset.pattern.permute.xlu0 0
        %2663 = vperm.xlu0 %2662, %v2652
        %v2664 = vpop.permute.xlu0 %2663
        %vm2665 = vcmp.eq.s32.totalorder %v2655, 1
        %vm2666 = vcmp.eq.s32.totalorder %v2658, 1
        %vm2667 = vcmp.eq.s32.totalorder %v2661, 1
        %vm2668 = vcmp.eq.s32.totalorder %v2664, 1
        %v2669 = vsel %vm2665, %v2614, -3e+38
        %v2670 = vsel %vm2666, %v2615, -3e+38
        %v2671 = vsel %vm2667, %v2616, -3e+38
        %v2672 = vsel %vm2668, %v2617, -3e+38
        %v2673 = vsel %vm2635, %v2672, -inf
        %v2674 = vmax.f32 %v2669, %v2670
        %v2675 = vmax.f32 %v2671, %v2673
        %v2676 = vmax.f32 %v2674, %v2675
        %v2677 = vrot.slane %v2676, 4
        %v2678 = vmax.f32 %v2676, %v2677
        %v2679 = vrot.slane %v2678, 2
        %v2680 = vmax.f32 %v2678, %v2679
        %v2681 = vrot.slane %v2680, 1
        %v2682 = vmax.f32 %v2680, %v2681
        %v2683 = vld [vmem:[%s7] sm:$0xff]
        %v2684 = vld [vmem:[%s7 + $0x8] sm:$0xff]
        %v2685 = vld [vmem:[%s7 + $0x10] sm:$0xff]
        %v2686 = vld [vmem:[%s7 + $0x18] sm:$0xff]
        %v2687 = vld [vmem:[%s7 + $0x20] sm:$0xff]
        %v2688 = vld [vmem:[%s7 + $0x28] sm:$0xff]
        %v2689 = vld [vmem:[%s7 + $0x30] sm:$0xff]
        %v2690 = vld [vmem:[%s7 + $0x38] sm:$0xff]
        %v2691 = vld [vmem:[%s7 + $0x40] sm:$0xff]
        %v2692 = vld [vmem:[%s7 + $0x48] sm:$0xff]
        %v2693 = vld [vmem:[%s7 + $0x50] sm:$0xff]
        %v2694 = vld [vmem:[%s7 + $0x58] sm:$0xff]
        %v2695 = vld [vmem:[%s7 + $0x60] sm:$0xff]
        %v2696 = vld [vmem:[%s7 + $0x68] sm:$0xff]
        %v2697 = vld [vmem:[%s7 + $0x70] sm:$0xff]
        %v2698 = vld [vmem:[%s7 + $0x78] sm:$0xff]
        %v2699 = vld [vmem:[%s9] sm:$0x1]
        %2700 = vmatprep.subr.mxu0 0.0
        %2701 = vmatpush1.msra.mxu0 %v2698
        %2702 = vmatprep.subr.mxu0 0.0
        %2703 = vmatpush1.msra.mxu0 %v2697
        %2704 = vmatprep.subr.mxu0 0.0
        %2705 = vmatpush1.msra.mxu0 %v2696
        %2706 = vmatprep.subr.mxu0 0.0
        %2707 = vmatpush1.msra.mxu0 %v2695
        %2708 = vmatprep.subr.mxu0 0.0
        %2709 = vmatpush1.msra.mxu0 %v2694
        %2710 = vmatprep.subr.mxu0 0.0
        %2711 = vmatpush1.msra.mxu0 %v2693
        %2712 = vmatprep.subr.mxu0 0.0
        %2713 = vmatpush1.msra.mxu0 %v2692
        %2714 = vmatprep.subr.mxu0 0.0
        %2715 = vmatpush1.msra.mxu0 %v2691
        %2716 = vmatprep.subr.mxu0 0.0
        %2717 = vmatpush1.msra.mxu0 %v2690
        %2718 = vmatprep.subr.mxu0 0.0
        %2719 = vmatpush1.msra.mxu0 %v2689
        %2720 = vmatprep.subr.mxu0 0.0
        %2721 = vmatpush1.msra.mxu0 %v2688
        %2722 = vmatprep.subr.mxu0 0.0
        %2723 = vmatpush1.msra.mxu0 %v2687
        %2724 = vmatprep.subr.mxu0 0.0
        %2725 = vmatpush1.msra.mxu0 %v2686
        %2726 = vmatprep.subr.mxu0 0.0
        %2727 = vmatpush1.msra.mxu0 %v2685
        %2728 = vmatprep.subr.mxu0 0.0
        %2729 = vmatpush1.msra.mxu0 %v2684
        %2730 = vmatprep.subr.mxu0 0.0
        %2731 = vmatpush1.msra.mxu0 %v2683
        %2732 = vmatprep.subr.mxu0 0.0
        %2733 = vmatpush2.msra.mxu0 0.0
        %2734 = vmatprep.subr.mxu0 0.0
        %2735 = vmatpush2.msra.mxu0 0.0
        %2736 = vmatprep.subr.mxu0 0.0
        %2737 = vmatpush2.msra.mxu0 0.0
        %2738 = vmatprep.subr.mxu0 0.0
        %2739 = vmatpush2.msra.mxu0 0.0
        %2740 = vmatprep.subr.mxu0 0.0
        %2741 = vmatpush2.msra.mxu0 0.0
        %2742 = vmatprep.subr.mxu0 0.0
        %2743 = vmatpush2.msra.mxu0 0.0
        %2744 = vmatprep.subr.mxu0 0.0
        %2745 = vmatpush2.msra.mxu0 0.0
        %2746 = vmatprep.subr.mxu0 0.0
        %2747 = vmatpush2.msra.mxu0 0.0
        %2748 = vmatprep.subr.mxu0 0.0
        %2749 = vmatpush2.msra.mxu0 0.0
        %2750 = vmatprep.subr.mxu0 0.0
        %2751 = vmatpush2.msra.mxu0 0.0
        %2752 = vmatprep.subr.mxu0 0.0
        %2753 = vmatpush2.msra.mxu0 0.0
        %2754 = vmatprep.subr.mxu0 0.0
        %2755 = vmatpush2.msra.mxu0 0.0
        %2756 = vmatprep.subr.mxu0 0.0
        %2757 = vmatpush2.msra.mxu0 0.0
        %2758 = vmatprep.subr.mxu0 0.0
        %2759 = vmatpush2.msra.mxu0 0.0
        %2760 = vmatprep.subr.mxu0 0.0
        %2761 = vmatpush2.msra.mxu0 0.0
        %2762 = vmatprep.subr.mxu0 0.0
        %2763 = vmatpush2.msra.mxu0 0.0
        %2764 = vmatprep.mubr.f32.mxu0 0.0
        %2765 = vmatmul.mubr.f32.gmra.mxu0 %v2644
        %v2766 = vpop.f32.mrf.mxu0
        %v2767 = vadd.f32 %v2699, %v2766
        %v2768 = vpop.f32.mrf.mxu0
        %2769 = vdwg.mxu0
        %v2770 = vmax.f32 %v2767, 0.0
        %v2771 = vld [vmem:[%s11] sm:$0xf]
        %v2772 = vld [vmem:[%s13] sm:$0x1]
        %vm2773 = vcmask 31744
        %v2775 = vsel %vm2773, %v2770, 0
        %v2778 = vsel %vm2618, %v2771, 0
        %2780 = vmatprep.subr.mxu0 0.0
        %2781 = vmatpush1.msra.mxu0 0.0
        %2782 = vmatprep.subr.mxu0 0.0
        %2783 = vmatpush1.msra.mxu0 0.0
        %2784 = vmatprep.subr.mxu0 0.0
        %2785 = vmatpush1.msra.mxu0 0.0
        %2786 = vmatprep.subr.mxu0 0.0
        %2787 = vmatpush1.msra.mxu0 0.0
        %2788 = vmatprep.subr.mxu0 0.0
        %2789 = vmatpush1.msra.mxu0 0.0
        %2790 = vmatprep.subr.mxu0 0.0
        %2791 = vmatpush1.msra.mxu0 0.0
        %2792 = vmatprep.subr.mxu0 0.0
        %2793 = vmatpush1.msra.mxu0 0.0
        %2794 = vmatprep.subr.mxu0 0.0
        %2795 = vmatpush1.msra.mxu0 0.0
        %2796 = vmatprep.subr.mxu0 0.0
        %2797 = vmatpush1.msra.mxu0 0.0
        %2798 = vmatprep.subr.mxu0 0.0
        %2799 = vmatpush1.msra.mxu0 0.0
        %2800 = vmatprep.subr.mxu0 0.0
        %2801 = vmatpush1.msra.mxu0 0.0
        %2802 = vmatprep.subr.mxu0 0.0
        %2803 = vmatpush1.msra.mxu0 0.0
        %2804 = vmatprep.subr.mxu0 0.0
        %2805 = vmatpush1.msra.mxu0 0.0
        %2806 = vmatprep.subr.mxu0 0.0
        %2807 = vmatpush1.msra.mxu0 0.0
        %2808 = vmatprep.subr.mxu0 0.0
        %2809 = vmatpush1.msra.mxu0 0.0
        %2810 = vmatprep.subr.mxu0 0.0
        %2811 = vmatpush1.msra.mxu0 %v2778
        %2812 = vmatprep.subr.mxu0 0.0
        %2813 = vmatpush2.msra.mxu0 0.0
        %2814 = vmatprep.subr.mxu0 0.0
        %2815 = vmatpush2.msra.mxu0 0.0
        %2816 = vmatprep.subr.mxu0 0.0
        %2817 = vmatpush2.msra.mxu0 0.0
        %2818 = vmatprep.subr.mxu0 0.0
        %2819 = vmatpush2.msra.mxu0 0.0
        %2820 = vmatprep.subr.mxu0 0.0
        %2821 = vmatpush2.msra.mxu0 0.0
        %2822 = vmatprep.subr.mxu0 0.0
        %2823 = vmatpush2.msra.mxu0 0.0
        %2824 = vmatprep.subr.mxu0 0.0
        %2825 = vmatpush2.msra.mxu0 0.0
        %2826 = vmatprep.subr.mxu0 0.0
        %2827 = vmatpush2.msra.mxu0 0.0
        %2828 = vmatprep.subr.mxu0 0.0
        %2829 = vmatpush2.msra.mxu0 0.0
        %2830 = vmatprep.subr.mxu0 0.0
        %2831 = vmatpush2.msra.mxu0 0.0
        %2832 = vmatprep.subr.mxu0 0.0
        %2833 = vmatpush2.msra.mxu0 0.0
        %2834 = vmatprep.subr.mxu0 0.0
        %2835 = vmatpush2.msra.mxu0 0.0
        %2836 = vmatprep.subr.mxu0 0.0
        %2837 = vmatpush2.msra.mxu0 0.0
        %2838 = vmatprep.subr.mxu0 0.0
        %2839 = vmatpush2.msra.mxu0 0.0
        %2840 = vmatprep.subr.mxu0 0.0
        %2841 = vmatpush2.msra.mxu0 0.0
        %2842 = vmatprep.subr.mxu0 0.0
        %2843 = vmatpush2.msra.mxu0 0.0
        %2844 = vmatprep.mubr.f32.mxu0 0.0
        %2845 = vmatmul.mubr.f32.gmra.mxu0 %v2775
        %v2846 = vpop.f32.mrf.mxu0
        %v2847 = vadd.f32 %v2772, %v2846
        %v2848 = vpop.f32.mrf.mxu0
        %2849 = vdwg.mxu0
        %v2850 = vxor.u32 %v2847, 2147483648
        %v2851 = vmul.f32 %v2850, 1.442695
        %v2852 = vpow.pop %v2851
        %v2853 = vadd.f32 %v2852, 1.0
        %v2854 = vrcp.pop %v2853
        %v2855 = vmul.f32 1.0, %v2854
        %2856 = vmatprep.subr.mxu0 0.0
        %2857 = vmatpush1.msra.mxu0 %v2698
        %2858 = vmatprep.subr.mxu0 0.0
        %2859 = vmatpush1.msra.mxu0 %v2697
        %2860 = vmatprep.subr.mxu0 0.0
        %2861 = vmatpush1.msra.mxu0 %v2696
        %2862 = vmatprep.subr.mxu0 0.0
        %2863 = vmatpush1.msra.mxu0 %v2695
        %2864 = vmatprep.subr.mxu0 0.0
        %2865 = vmatpush1.msra.mxu0 %v2694
        %2866 = vmatprep.subr.mxu0 0.0
        %2867 = vmatpush1.msra.mxu0 %v2693
        %2868 = vmatprep.subr.mxu0 0.0
        %2869 = vmatpush1.msra.mxu0 %v2692
        %2870 = vmatprep.subr.mxu0 0.0
        %2871 = vmatpush1.msra.mxu0 %v2691
        %2872 = vmatprep.subr.mxu0 0.0
        %2873 = vmatpush1.msra.mxu0 %v2690
        %2874 = vmatprep.subr.mxu0 0.0
        %2875 = vmatpush1.msra.mxu0 %v2689
        %2876 = vmatprep.subr.mxu0 0.0
        %2877 = vmatpush1.msra.mxu0 %v2688
        %2878 = vmatprep.subr.mxu0 0.0
        %2879 = vmatpush1.msra.mxu0 %v2687
        %2880 = vmatprep.subr.mxu0 0.0
        %2881 = vmatpush1.msra.mxu0 %v2686
        %2882 = vmatprep.subr.mxu0 0.0
        %2883 = vmatpush1.msra.mxu0 %v2685
        %2884 = vmatprep.subr.mxu0 0.0
        %2885 = vmatpush1.msra.mxu0 %v2684
        %2886 = vmatprep.subr.mxu0 0.0
        %2887 = vmatpush1.msra.mxu0 %v2683
        %2888 = vmatprep.subr.mxu0 0.0
        %2889 = vmatpush2.msra.mxu0 0.0
        %2890 = vmatprep.subr.mxu0 0.0
        %2891 = vmatpush2.msra.mxu0 0.0
        %2892 = vmatprep.subr.mxu0 0.0
        %2893 = vmatpush2.msra.mxu0 0.0
        %2894 = vmatprep.subr.mxu0 0.0
        %2895 = vmatpush2.msra.mxu0 0.0
        %2896 = vmatprep.subr.mxu0 0.0
        %2897 = vmatpush2.msra.mxu0 0.0
        %2898 = vmatprep.subr.mxu0 0.0
        %2899 = vmatpush2.msra.mxu0 0.0
        %2900 = vmatprep.subr.mxu0 0.0
        %2901 = vmatpush2.msra.mxu0 0.0
        %2902 = vmatprep.subr.mxu0 0.0
        %2903 = vmatpush2.msra.mxu0 0.0
        %2904 = vmatprep.subr.mxu0 0.0
        %2905 = vmatpush2.msra.mxu0 0.0
        %2906 = vmatprep.subr.mxu0 0.0
        %2907 = vmatpush2.msra.mxu0 0.0
        %2908 = vmatprep.subr.mxu0 0.0
        %2909 = vmatpush2.msra.mxu0 0.0
        %2910 = vmatprep.subr.mxu0 0.0
        %2911 = vmatpush2.msra.mxu0 0.0
        %2912 = vmatprep.subr.mxu0 0.0
        %2913 = vmatpush2.msra.mxu0 0.0
        %2914 = vmatprep.subr.mxu0 0.0
        %2915 = vmatpush2.msra.mxu0 0.0
        %2916 = vmatprep.subr.mxu0 0.0
        %2917 = vmatpush2.msra.mxu0 0.0
        %2918 = vmatprep.subr.mxu0 0.0
        %2919 = vmatpush2.msra.mxu0 0.0
        %2920 = vmatprep.mubr.f32.mxu0 0.0
        %2921 = vmatmul.mubr.f32.gmra.mxu0 %v2682
        %v2922 = vpop.f32.mrf.mxu0
        %v2923 = vadd.f32 %v2699, %v2922
        %v2924 = vpop.f32.mrf.mxu0
        %2925 = vdwg.mxu0
        %v2926 = vmax.f32 %v2923, 0.0
        %v2928 = vsel %vm2773, %v2926, 0
        %2930 = vmatprep.subr.mxu0 0.0
        %2931 = vmatpush1.msra.mxu0 0.0
        %2932 = vmatprep.subr.mxu0 0.0
        %2933 = vmatpush1.msra.mxu0 0.0
        %2934 = vmatprep.subr.mxu0 0.0
        %2935 = vmatpush1.msra.mxu0 0.0
        %2936 = vmatprep.subr.mxu0 0.0
        %2937 = vmatpush1.msra.mxu0 0.0
        %2938 = vmatprep.subr.mxu0 0.0
        %2939 = vmatpush1.msra.mxu0 0.0
        %2940 = vmatprep.subr.mxu0 0.0
        %2941 = vmatpush1.msra.mxu0 0.0
        %2942 = vmatprep.subr.mxu0 0.0
        %2943 = vmatpush1.msra.mxu0 0.0
        %2944 = vmatprep.subr.mxu0 0.0
        %2945 = vmatpush1.msra.mxu0 0.0
        %2946 = vmatprep.subr.mxu0 0.0
        %2947 = vmatpush1.msra.mxu0 0.0
        %2948 = vmatprep.subr.mxu0 0.0
        %2949 = vmatpush1.msra.mxu0 0.0
        %2950 = vmatprep.subr.mxu0 0.0
        %2951 = vmatpush1.msra.mxu0 0.0
        %2952 = vmatprep.subr.mxu0 0.0
        %2953 = vmatpush1.msra.mxu0 0.0
        %2954 = vmatprep.subr.mxu0 0.0
        %2955 = vmatpush1.msra.mxu0 0.0
        %2956 = vmatprep.subr.mxu0 0.0
        %2957 = vmatpush1.msra.mxu0 0.0
        %2958 = vmatprep.subr.mxu0 0.0
        %2959 = vmatpush1.msra.mxu0 0.0
        %2960 = vmatprep.subr.mxu0 0.0
        %2961 = vmatpush1.msra.mxu0 %v2778
        %2962 = vmatprep.subr.mxu0 0.0
        %2963 = vmatpush2.msra.mxu0 0.0
        %2964 = vmatprep.subr.mxu0 0.0
        %2965 = vmatpush2.msra.mxu0 0.0
        %2966 = vmatprep.subr.mxu0 0.0
        %2967 = vmatpush2.msra.mxu0 0.0
        %2968 = vmatprep.subr.mxu0 0.0
        %2969 = vmatpush2.msra.mxu0 0.0
        %2970 = vmatprep.subr.mxu0 0.0
        %2971 = vmatpush2.msra.mxu0 0.0
        %2972 = vmatprep.subr.mxu0 0.0
        %2973 = vmatpush2.msra.mxu0 0.0
        %2974 = vmatprep.subr.mxu0 0.0
        %2975 = vmatpush2.msra.mxu0 0.0
        %2976 = vmatprep.subr.mxu0 0.0
        %2977 = vmatpush2.msra.mxu0 0.0
        %2978 = vmatprep.subr.mxu0 0.0
        %2979 = vmatpush2.msra.mxu0 0.0
        %2980 = vmatprep.subr.mxu0 0.0
        %2981 = vmatpush2.msra.mxu0 0.0
        %2982 = vmatprep.subr.mxu0 0.0
        %2983 = vmatpush2.msra.mxu0 0.0
        %2984 = vmatprep.subr.mxu0 0.0
        %2985 = vmatpush2.msra.mxu0 0.0
        %2986 = vmatprep.subr.mxu0 0.0
        %2987 = vmatpush2.msra.mxu0 0.0
        %2988 = vmatprep.subr.mxu0 0.0
        %2989 = vmatpush2.msra.mxu0 0.0
        %2990 = vmatprep.subr.mxu0 0.0
        %2991 = vmatpush2.msra.mxu0 0.0
        %2992 = vmatprep.subr.mxu0 0.0
        %2993 = vmatpush2.msra.mxu0 0.0
        %2994 = vmatprep.mubr.f32.mxu0 0.0
        %2995 = vmatmul.mubr.f32.gmra.mxu0 %v2928
        %v2996 = vpop.f32.mrf.mxu0
        %v2997 = vadd.f32 %v2772, %v2996
        %v2998 = vpop.f32.mrf.mxu0
        %2999 = vdwg.mxu0
        %v3000 = vxor.u32 %v2997, 2147483648
        %v3001 = vmul.f32 %v3000, 1.442695
        %v3002 = vpow.pop %v3001
        %v3003 = vadd.f32 %v3002, 1.0
        %v3004 = vrcp.pop %v3003
        %v3005 = vmul.f32 1.0, %v3004
        %v3006 = vadd.f32 %v2855, %v3005
        %v3007 = vlaneseq
        %v3008 = vshrl.u32 %v3007, 7
        %v3009 = vsub.s32 0, %v3008
        %v3010 = vrot.slane %v3006, %v3009
        %v3011 = vmul.f32 %v2614, %v3010
        %v3012 = vmul.f32 %v2615, %v3010
        %v3013 = vmul.f32 %v2616, %v3010
        %v3014 = vmul.f32 %v2617, %v3010
        %3015 = vadd.xlane.f32.xlu0 %v3011
        %v3016 = vpop.xlane.xlu0 %3015
        %3017 = vadd.xlane.f32.xlu0 %v3012
        %v3018 = vpop.xlane.xlu0 %3017
        %3019 = vadd.xlane.f32.xlu0 %v3013
        %v3020 = vpop.xlane.xlu0 %3019
        %v3021 = vsel %vm2635, %v3014, 0.0
        %3022 = vadd.xlane.f32.xlu0 %v3021
        %v3023 = vpop.xlane.xlu0 %3022
        %v3024 = vmul.f32 %v3016, 0.015625
        %v3025 = vmul.f32 %v3018, 0.015625
        %v3026 = vmul.f32 %v3020, 0.015625
        %v3027 = vmul.f32 %v3023, 0.015625
        %vm3028 = vcmask 523264
        %v3029 = vsel %vm3028, 1.0, 0.0
        %vm3030 = vcmp.gt.f32.partialorder %v3029, 0.0
        %v3031 = vsel %vm3030, 1, 0
        %v3032 = vlaneseq
        %v3033 = vshrl.u32 %v3032, 7
        %v3034 = vsub.s32 0, %v3033
        %v3035 = vrot.slane %v3031, %v3034
        %vm3036 = vcmp.eq.s32.totalorder %v3035, 1
        %v3037 = vsel %vm3036, %v3011, -3e+38
        %v3038 = vsel %vm3036, %v3012, -3e+38
        %v3039 = vsel %vm3036, %v3013, -3e+38
        %v3040 = vsel %vm3036, %v3014, -3e+38
        %3041 = vmax.xlane.f32.xlu0 %v3037
        %v3042 = vpop.xlane.xlu0 %3041
        %3043 = vmax.xlane.f32.xlu0 %v3038
        %v3044 = vpop.xlane.xlu0 %3043
        %3045 = vmax.xlane.f32.xlu0 %v3039
        %v3046 = vpop.xlane.xlu0 %3045
        %v3047 = vsel %vm2635, %v3040, -inf
        %3048 = vmax.xlane.f32.xlu0 %v3047
        %v3049 = vpop.xlane.xlu0 %3048
        %vm3050 = vcmask 64512
        %v3051 = vsel %vm3050, %v3024, %v3042
        %v3052 = vsel %vm3050, %v3025, %v3044
        %v3053 = vsel %vm3050, %v3026, %v3046
        %v3054 = vsel %vm3050, %v3027, %v3049
        %v3055 = vsel %vm2635, %v3054, 0.0
        %v3056 = vld [vmem:[%s15] sm:$0xff]
        %v3057 = vld [vmem:[%s15 + $0x8] sm:$0xff]
        %v3058 = vld [vmem:[%s15 + $0x10] sm:$0xff]
        %v3059 = vld [vmem:[%s15 + $0x18] sm:$0xff]
        %v3060 = vld [vmem:[%s15 + $0x20] sm:$0xff]
        %v3061 = vld [vmem:[%s15 + $0x28] sm:$0xff]
        %v3062 = vld [vmem:[%s15 + $0x30] sm:$0x1]
        %v3063 = vlaneseq
        %v3064 = vshrl.u32 %v3063, 7
        %v3065 = vsub.s32 0, %v3064
        %v3066 = vrot.slane %v3056, %v3065
        %v3067 = vmul.f32 %v3066, 0.0
        %v3068 = vmul.f32 %v3051, %v3066
        %v3069 = vadd.f32 %v3067, 0.0
        %v3070 = vadd.f32 %v3068, 0.0
        %v3071 = vlaneseq
        %v3072 = vshrl.u32 %v3071, 7
        %v3073 = vsub.s32 1, %v3072
        %v3074 = vrot.slane %v3056, %v3073
        %v3075 = vmul.f32 %v3074, 0.0
        %v3076 = vmul.f32 %v3051, %v3074
        %v3079 = vrot.slane %v3075, 1
        %v3080 = vsel %vm2627, %v3079, %v3079
        %v3081 = vrot.slane %v3076, 1
        %v3082 = vsel %vm2627, %v3079, %v3081
        %v3086 = vadd.f32 %v3069, %v3080
        %v3087 = vadd.f32 %v3069, %v3082
        %v3088 = vadd.f32 %v3070, %v3081
        %v3089 = vlaneseq
        %v3090 = vshrl.u32 %v3089, 7
        %v3091 = vsub.s32 2, %v3090
        %v3092 = vrot.slane %v3056, %v3091
        %v3093 = vmul.f32 %v3092, 0.0
        %v3094 = vmul.f32 %v3051, %v3092
        %v3097 = vrot.slane %v3093, 2
        %v3098 = vsel %vm2629, %v3097, %v3097
        %v3099 = vrot.slane %v3094, 2
        %v3100 = vsel %vm2629, %v3097, %v3099
        %v3104 = vadd.f32 %v3086, %v3098
        %v3105 = vadd.f32 %v3087, %v3100
        %v3106 = vadd.f32 %v3088, %v3099
        %v3107 = vlaneseq
        %v3108 = vshrl.u32 %v3107, 7
        %v3109 = vsub.s32 3, %v3108
        %v3110 = vrot.slane %v3056, %v3109
        %v3111 = vmul.f32 %v3110, 0.0
        %v3112 = vmul.f32 %v3051, %v3110
        %v3115 = vrot.slane %v3111, 3
        %v3116 = vsel %vm2631, %v3115, %v3115
        %v3117 = vrot.slane %v3112, 3
        %v3118 = vsel %vm2631, %v3115, %v3117
        %v3122 = vadd.f32 %v3104, %v3116
        %v3123 = vadd.f32 %v3105, %v3118
        %v3124 = vadd.f32 %v3106, %v3117
        %v3125 = vlaneseq
        %v3126 = vshrl.u32 %v3125, 7
        %v3127 = vsub.s32 4, %v3126
        %v3128 = vrot.slane %v3056, %v3127
        %v3129 = vmul.f32 %v3128, 0.0
        %v3130 = vmul.f32 %v3051, %v3128
        %v3133 = vrot.slane %v3129, 4
        %v3134 = vsel %vm2618, %v3133, %v3133
        %v3135 = vrot.slane %v3130, 4
        %v3136 = vsel %vm2618, %v3133, %v3135
        %v3140 = vadd.f32 %v3122, %v3134
        %v3141 = vadd.f32 %v3123, %v3136
        %v3142 = vadd.f32 %v3124, %v3135
        %v3143 = vlaneseq
        %v3144 = vshrl.u32 %v3143, 7
        %v3145 = vsub.s32 5, %v3144
        %v3146 = vrot.slane %v3056, %v3145
        %v3147 = vmul.f32 %v3146, 0.0
        %v3148 = vmul.f32 %v3051, %v3146
        %vm3151 = vcmask 1042432
        %v3152 = vrot.slane %v3147, 5
        %v3153 = vsel %vm3151, %v3152, %v3152
        %v3154 = vrot.slane %v3148, 5
        %v3155 = vsel %vm3151, %v3152, %v3154
        %v3159 = vadd.f32 %v3140, %v3153
        %v3160 = vadd.f32 %v3141, %v3155
        %v3161 = vadd.f32 %v3142, %v3154
        %v3162 = vlaneseq
        %v3163 = vshrl.u32 %v3162, 7
        %v3164 = vsub.s32 6, %v3163
        %v3165 = vrot.slane %v3056, %v3164
        %v3166 = vmul.f32 %v3165, 0.0
        %v3167 = vmul.f32 %v3051, %v3165
        %vm3170 = vcmask 1041408
        %v3171 = vrot.slane %v3166, 6
        %v3172 = vsel %vm3170, %v3171, %v3171
        %v3173 = vrot.slane %v3167, 6
        %v3174 = vsel %vm3170, %v3171, %v3173
        %v3178 = vadd.f32 %v3159, %v3172
        %v3179 = vadd.f32 %v3160, %v3174
        %v3180 = vadd.f32 %v3161, %v3173
        %v3181 = vlaneseq
        %v3182 = vshrl.u32 %v3181, 7
        %v3183 = vsub.s32 7, %v3182
        %v3184 = vrot.slane %v3056, %v3183
        %v3185 = vmul.f32 %v3184, 0.0
        %v3186 = vmul.f32 %v3051, %v3184
        %v3189 = vrot.slane %v3185, 7
        %v3190 = vsel %vm2635, %v3189, %v3189
        %v3191 = vrot.slane %v3186, 7
        %v3192 = vsel %vm2635, %v3189, %v3191
        %v3196 = vadd.f32 %v3178, %v3190
        %v3197 = vadd.f32 %v3179, %v3192
        %v3198 = vadd.f32 %v3180, %v3191
        %v3199 = vlaneseq
        %v3200 = vshrl.u32 %v3199, 7
        %v3201 = vsub.s32 0, %v3200
        %v3202 = vrot.slane %v3057, %v3201
        %v3203 = vmul.f32 %v3202, 0.0
        %v3204 = vmul.f32 %v3051, %v3202
        %v3205 = vmul.f32 %v3052, %v3202
        %v3206 = vadd.f32 %v3196, %v3203
        %v3207 = vadd.f32 %v3197, %v3204
        %v3208 = vadd.f32 %v3198, %v3205
        %v3209 = vlaneseq
        %v3210 = vshrl.u32 %v3209, 7
        %v3211 = vsub.s32 1, %v3210
        %v3212 = vrot.slane %v3057, %v3211
        %v3213 = vmul.f32 %v3212, 0.0
        %v3214 = vmul.f32 %v3051, %v3212
        %v3215 = vmul.f32 %v3052, %v3212
        %v3219 = vrot.slane %v3213, 1
        %v3220 = vsel %vm2627, %v3219, %v3219
        %v3221 = vrot.slane %v3214, 1
        %v3222 = vsel %vm2627, %v3219, %v3221
        %v3223 = vrot.slane %v3215, 1
        %v3224 = vsel %vm2627, %v3221, %v3223
        %v3229 = vadd.f32 %v3206, %v3220
        %v3230 = vadd.f32 %v3206, %v3222
        %v3231 = vadd.f32 %v3207, %v3224
        %v3232 = vadd.f32 %v3208, %v3223
        %v3233 = vlaneseq
        %v3234 = vshrl.u32 %v3233, 7
        %v3235 = vsub.s32 2, %v3234
        %v3236 = vrot.slane %v3057, %v3235
        %v3237 = vmul.f32 %v3236, 0.0
        %v3238 = vmul.f32 %v3051, %v3236
        %v3239 = vmul.f32 %v3052, %v3236
        %v3243 = vrot.slane %v3237, 2
        %v3244 = vsel %vm2629, %v3243, %v3243
        %v3245 = vrot.slane %v3238, 2
        %v3246 = vsel %vm2629, %v3243, %v3245
        %v3247 = vrot.slane %v3239, 2
        %v3248 = vsel %vm2629, %v3245, %v3247
        %v3253 = vadd.f32 %v3229, %v3244
        %v3254 = vadd.f32 %v3230, %v3246
        %v3255 = vadd.f32 %v3231, %v3248
        %v3256 = vadd.f32 %v3232, %v3247
        %v3257 = vlaneseq
        %v3258 = vshrl.u32 %v3257, 7
        %v3259 = vsub.s32 3, %v3258
        %v3260 = vrot.slane %v3057, %v3259
        %v3261 = vmul.f32 %v3260, 0.0
        %v3262 = vmul.f32 %v3051, %v3260
        %v3263 = vmul.f32 %v3052, %v3260
        %v3267 = vrot.slane %v3261, 3
        %v3268 = vsel %vm2631, %v3267, %v3267
        %v3269 = vrot.slane %v3262, 3
        %v3270 = vsel %vm2631, %v3267, %v3269
        %v3271 = vrot.slane %v3263, 3
        %v3272 = vsel %vm2631, %v3269, %v3271
        %v3277 = vadd.f32 %v3253, %v3268
        %v3278 = vadd.f32 %v3254, %v3270
        %v3279 = vadd.f32 %v3255, %v3272
        %v3280 = vadd.f32 %v3256, %v3271
        %v3281 = vlaneseq
        %v3282 = vshrl.u32 %v3281, 7
        %v3283 = vsub.s32 4, %v3282
        %v3284 = vrot.slane %v3057, %v3283
        %v3285 = vmul.f32 %v3284, 0.0
        %v3286 = vmul.f32 %v3051, %v3284
        %v3287 = vmul.f32 %v3052, %v3284
        %v3291 = vrot.slane %v3285, 4
        %v3292 = vsel %vm2618, %v3291, %v3291
        %v3293 = vrot.slane %v3286, 4
        %v3294 = vsel %vm2618, %v3291, %v3293
        %v3295 = vrot.slane %v3287, 4
        %v3296 = vsel %vm2618, %v3293, %v3295
        %v3301 = vadd.f32 %v3277, %v3292
        %v3302 = vadd.f32 %v3278, %v3294
        %v3303 = vadd.f32 %v3279, %v3296
        %v3304 = vadd.f32 %v3280, %v3295
        %v3305 = vlaneseq
        %v3306 = vshrl.u32 %v3305, 7
        %v3307 = vsub.s32 5, %v3306
        %v3308 = vrot.slane %v3057, %v3307
        %v3309 = vmul.f32 %v3308, 0.0
        %v3310 = vmul.f32 %v3051, %v3308
        %v3311 = vmul.f32 %v3052, %v3308
        %v3315 = vrot.slane %v3309, 5
        %v3316 = vsel %vm3151, %v3315, %v3315
        %v3317 = vrot.slane %v3310, 5
        %v3318 = vsel %vm3151, %v3315, %v3317
        %v3319 = vrot.slane %v3311, 5
        %v3320 = vsel %vm3151, %v3317, %v3319
        %v3325 = vadd.f32 %v3301, %v3316
        %v3326 = vadd.f32 %v3302, %v3318
        %v3327 = vadd.f32 %v3303, %v3320
        %v3328 = vadd.f32 %v3304, %v3319
        %v3329 = vlaneseq
        %v3330 = vshrl.u32 %v3329, 7
        %v3331 = vsub.s32 6, %v3330
        %v3332 = vrot.slane %v3057, %v3331
        %v3333 = vmul.f32 %v3332, 0.0
        %v3334 = vmul.f32 %v3051, %v3332
        %v3335 = vmul.f32 %v3052, %v3332
        %v3339 = vrot.slane %v3333, 6
        %v3340 = vsel %vm3170, %v3339, %v3339
        %v3341 = vrot.slane %v3334, 6
        %v3342 = vsel %vm3170, %v3339, %v3341
        %v3343 = vrot.slane %v3335, 6
        %v3344 = vsel %vm3170, %v3341, %v3343
        %v3349 = vadd.f32 %v3325, %v3340
        %v3350 = vadd.f32 %v3326, %v3342
        %v3351 = vadd.f32 %v3327, %v3344
        %v3352 = vadd.f32 %v3328, %v3343
        %v3353 = vlaneseq
        %v3354 = vshrl.u32 %v3353, 7
        %v3355 = vsub.s32 7, %v3354
        %v3356 = vrot.slane %v3057, %v3355
        %v3357 = vmul.f32 %v3356, 0.0
        %v3358 = vmul.f32 %v3051, %v3356
        %v3359 = vmul.f32 %v3052, %v3356
        %v3363 = vrot.slane %v3357, 7
        %v3364 = vsel %vm2635, %v3363, %v3363
        %v3365 = vrot.slane %v3358, 7
        %v3366 = vsel %vm2635, %v3363, %v3365
        %v3367 = vrot.slane %v3359, 7
        %v3368 = vsel %vm2635, %v3365, %v3367
        %v3373 = vadd.f32 %v3349, %v3364
        %v3374 = vadd.f32 %v3350, %v3366
        %v3375 = vadd.f32 %v3351, %v3368
        %v3376 = vadd.f32 %v3352, %v3367
        %v3377 = vlaneseq
        %v3378 = vshrl.u32 %v3377, 7
        %v3379 = vsub.s32 0, %v3378
        %v3380 = vrot.slane %v3058, %v3379
        %v3381 = vmul.f32 %v3380, 0.0
        %v3382 = vmul.f32 %v3051, %v3380
        %v3383 = vmul.f32 %v3052, %v3380
        %v3384 = vmul.f32 %v3053, %v3380
        %v3385 = vadd.f32 %v3373, %v3381
        %v3386 = vadd.f32 %v3374, %v3382
        %v3387 = vadd.f32 %v3375, %v3383
        %v3388 = vadd.f32 %v3376, %v3384
        %v3389 = vlaneseq
        %v3390 = vshrl.u32 %v3389, 7
        %v3391 = vsub.s32 1, %v3390
        %v3392 = vrot.slane %v3058, %v3391
        %v3393 = vmul.f32 %v3392, 0.0
        %v3394 = vmul.f32 %v3051, %v3392
        %v3395 = vmul.f32 %v3052, %v3392
        %v3396 = vmul.f32 %v3053, %v3392
        %v3401 = vrot.slane %v3393, 1
        %v3402 = vrot.slane %v3394, 1
        %v3403 = vsel %vm2627, %v3401, %v3402
        %v3404 = vrot.slane %v3395, 1
        %v3405 = vsel %vm2627, %v3402, %v3404
        %v3406 = vrot.slane %v3396, 1
        %v3407 = vsel %vm2627, %v3404, %v3406
        %v3412 = vadd.f32 %v3385, %v3403
        %v3413 = vadd.f32 %v3386, %v3405
        %v3414 = vadd.f32 %v3387, %v3407
        %v3415 = vadd.f32 %v3388, %v3406
        %v3416 = vlaneseq
        %v3417 = vshrl.u32 %v3416, 7
        %v3418 = vsub.s32 2, %v3417
        %v3419 = vrot.slane %v3058, %v3418
        %v3420 = vmul.f32 %v3419, 0.0
        %v3421 = vmul.f32 %v3051, %v3419
        %v3422 = vmul.f32 %v3052, %v3419
        %v3423 = vmul.f32 %v3053, %v3419
        %v3428 = vrot.slane %v3420, 2
        %v3429 = vrot.slane %v3421, 2
        %v3430 = vsel %vm2629, %v3428, %v3429
        %v3431 = vrot.slane %v3422, 2
        %v3432 = vsel %vm2629, %v3429, %v3431
        %v3433 = vrot.slane %v3423, 2
        %v3434 = vsel %vm2629, %v3431, %v3433
        %v3439 = vadd.f32 %v3412, %v3430
        %v3440 = vadd.f32 %v3413, %v3432
        %v3441 = vadd.f32 %v3414, %v3434
        %v3442 = vadd.f32 %v3415, %v3433
        %v3443 = vlaneseq
        %v3444 = vshrl.u32 %v3443, 7
        %v3445 = vsub.s32 3, %v3444
        %v3446 = vrot.slane %v3058, %v3445
        %v3447 = vmul.f32 %v3446, 0.0
        %v3448 = vmul.f32 %v3051, %v3446
        %v3449 = vmul.f32 %v3052, %v3446
        %v3450 = vmul.f32 %v3053, %v3446
        %v3455 = vrot.slane %v3447, 3
        %v3456 = vrot.slane %v3448, 3
        %v3457 = vsel %vm2631, %v3455, %v3456
        %v3458 = vrot.slane %v3449, 3
        %v3459 = vsel %vm2631, %v3456, %v3458
        %v3460 = vrot.slane %v3450, 3
        %v3461 = vsel %vm2631, %v3458, %v3460
        %v3466 = vadd.f32 %v3439, %v3457
        %v3467 = vadd.f32 %v3440, %v3459
        %v3468 = vadd.f32 %v3441, %v3461
        %v3469 = vadd.f32 %v3442, %v3460
        %v3470 = vlaneseq
        %v3471 = vshrl.u32 %v3470, 7
        %v3472 = vsub.s32 4, %v3471
        %v3473 = vrot.slane %v3058, %v3472
        %v3474 = vmul.f32 %v3473, 0.0
        %v3475 = vmul.f32 %v3051, %v3473
        %v3476 = vmul.f32 %v3052, %v3473
        %v3477 = vmul.f32 %v3053, %v3473
        %v3482 = vrot.slane %v3474, 4
        %v3483 = vrot.slane %v3475, 4
        %v3484 = vsel %vm2618, %v3482, %v3483
        %v3485 = vrot.slane %v3476, 4
        %v3486 = vsel %vm2618, %v3483, %v3485
        %v3487 = vrot.slane %v3477, 4
        %v3488 = vsel %vm2618, %v3485, %v3487
        %v3493 = vadd.f32 %v3466, %v3484
        %v3494 = vadd.f32 %v3467, %v3486
        %v3495 = vadd.f32 %v3468, %v3488
        %v3496 = vadd.f32 %v3469, %v3487
        %v3497 = vlaneseq
        %v3498 = vshrl.u32 %v3497, 7
        %v3499 = vsub.s32 5, %v3498
        %v3500 = vrot.slane %v3058, %v3499
        %v3501 = vmul.f32 %v3500, 0.0
        %v3502 = vmul.f32 %v3051, %v3500
        %v3503 = vmul.f32 %v3052, %v3500
        %v3504 = vmul.f32 %v3053, %v3500
        %v3509 = vrot.slane %v3501, 5
        %v3510 = vrot.slane %v3502, 5
        %v3511 = vsel %vm3151, %v3509, %v3510
        %v3512 = vrot.slane %v3503, 5
        %v3513 = vsel %vm3151, %v3510, %v3512
        %v3514 = vrot.slane %v3504, 5
        %v3515 = vsel %vm3151, %v3512, %v3514
        %v3520 = vadd.f32 %v3493, %v3511
        %v3521 = vadd.f32 %v3494, %v3513
        %v3522 = vadd.f32 %v3495, %v3515
        %v3523 = vadd.f32 %v3496, %v3514
        %v3524 = vlaneseq
        %v3525 = vshrl.u32 %v3524, 7
        %v3526 = vsub.s32 6, %v3525
        %v3527 = vrot.slane %v3058, %v3526
        %v3528 = vmul.f32 %v3527, 0.0
        %v3529 = vmul.f32 %v3051, %v3527
        %v3530 = vmul.f32 %v3052, %v3527
        %v3531 = vmul.f32 %v3053, %v3527
        %v3536 = vrot.slane %v3528, 6
        %v3537 = vrot.slane %v3529, 6
        %v3538 = vsel %vm3170, %v3536, %v3537
        %v3539 = vrot.slane %v3530, 6
        %v3540 = vsel %vm3170, %v3537, %v3539
        %v3541 = vrot.slane %v3531, 6
        %v3542 = vsel %vm3170, %v3539, %v3541
        %v3547 = vadd.f32 %v3520, %v3538
        %v3548 = vadd.f32 %v3521, %v3540
        %v3549 = vadd.f32 %v3522, %v3542
        %v3550 = vadd.f32 %v3523, %v3541
        %v3551 = vlaneseq
        %v3552 = vshrl.u32 %v3551, 7
        %v3553 = vsub.s32 7, %v3552
        %v3554 = vrot.slane %v3058, %v3553
        %v3555 = vmul.f32 %v3554, 0.0
        %v3556 = vmul.f32 %v3051, %v3554
        %v3557 = vmul.f32 %v3052, %v3554
        %v3558 = vmul.f32 %v3053, %v3554
        %v3563 = vrot.slane %v3555, 7
        %v3564 = vrot.slane %v3556, 7
        %v3565 = vsel %vm2635, %v3563, %v3564
        %v3566 = vrot.slane %v3557, 7
        %v3567 = vsel %vm2635, %v3564, %v3566
        %v3568 = vrot.slane %v3558, 7
        %v3569 = vsel %vm2635, %v3566, %v3568
        %v3574 = vadd.f32 %v3547, %v3565
        %v3575 = vadd.f32 %v3548, %v3567
        %v3576 = vadd.f32 %v3549, %v3569
        %v3577 = vadd.f32 %v3550, %v3568
        %v3578 = vlaneseq
        %v3579 = vshrl.u32 %v3578, 7
        %v3580 = vsub.s32 0, %v3579
        %v3581 = vrot.slane %v3059, %v3580
        %v3582 = vmul.f32 %v3051, %v3581
        %v3583 = vmul.f32 %v3052, %v3581
        %v3584 = vmul.f32 %v3053, %v3581
        %v3585 = vmul.f32 %v3055, %v3581
        %v3586 = vadd.f32 %v3574, %v3582
        %v3587 = vadd.f32 %v3575, %v3583
        %v3588 = vadd.f32 %v3576, %v3584
        %v3589 = vadd.f32 %v3577, %v3585
        %v3590 = vlaneseq
        %v3591 = vshrl.u32 %v3590, 7
        %v3592 = vsub.s32 1, %v3591
        %v3593 = vrot.slane %v3059, %v3592
        %v3594 = vmul.f32 %v3051, %v3593
        %v3595 = vmul.f32 %v3052, %v3593
        %v3596 = vmul.f32 %v3053, %v3593
        %v3597 = vmul.f32 %v3055, %v3593
        %v3602 = vrot.slane %v3594, 1
        %v3603 = vrot.slane %v3595, 1
        %v3604 = vsel %vm2627, %v3602, %v3603
        %v3605 = vrot.slane %v3596, 1
        %v3606 = vsel %vm2627, %v3603, %v3605
        %v3607 = vrot.slane %v3597, 1
        %v3608 = vsel %vm2627, %v3605, %v3607
        %v3613 = vadd.f32 %v3586, %v3604
        %v3614 = vadd.f32 %v3587, %v3606
        %v3615 = vadd.f32 %v3588, %v3608
        %v3616 = vadd.f32 %v3589, %v3607
        %v3617 = vlaneseq
        %v3618 = vshrl.u32 %v3617, 7
        %v3619 = vsub.s32 2, %v3618
        %v3620 = vrot.slane %v3059, %v3619
        %v3621 = vmul.f32 %v3051, %v3620
        %v3622 = vmul.f32 %v3052, %v3620
        %v3623 = vmul.f32 %v3053, %v3620
        %v3624 = vmul.f32 %v3055, %v3620
        %v3629 = vrot.slane %v3621, 2
        %v3630 = vrot.slane %v3622, 2
        %v3631 = vsel %vm2629, %v3629, %v3630
        %v3632 = vrot.slane %v3623, 2
        %v3633 = vsel %vm2629, %v3630, %v3632
        %v3634 = vrot.slane %v3624, 2
        %v3635 = vsel %vm2629, %v3632, %v3634
        %v3640 = vadd.f32 %v3613, %v3631
        %v3641 = vadd.f32 %v3614, %v3633
        %v3642 = vadd.f32 %v3615, %v3635
        %v3643 = vadd.f32 %v3616, %v3634
        %v3644 = vlaneseq
        %v3645 = vshrl.u32 %v3644, 7
        %v3646 = vsub.s32 3, %v3645
        %v3647 = vrot.slane %v3059, %v3646
        %v3648 = vmul.f32 %v3051, %v3647
        %v3649 = vmul.f32 %v3052, %v3647
        %v3650 = vmul.f32 %v3053, %v3647
        %v3651 = vmul.f32 %v3055, %v3647
        %v3656 = vrot.slane %v3648, 3
        %v3657 = vrot.slane %v3649, 3
        %v3658 = vsel %vm2631, %v3656, %v3657
        %v3659 = vrot.slane %v3650, 3
        %v3660 = vsel %vm2631, %v3657, %v3659
        %v3661 = vrot.slane %v3651, 3
        %v3662 = vsel %vm2631, %v3659, %v3661
        %v3667 = vadd.f32 %v3640, %v3658
        %v3668 = vadd.f32 %v3641, %v3660
        %v3669 = vadd.f32 %v3642, %v3662
        %v3670 = vadd.f32 %v3643, %v3661
        %v3671 = vlaneseq
        %v3672 = vshrl.u32 %v3671, 7
        %v3673 = vsub.s32 4, %v3672
        %v3674 = vrot.slane %v3059, %v3673
        %v3675 = vmul.f32 %v3051, %v3674
        %v3676 = vmul.f32 %v3052, %v3674
        %v3677 = vmul.f32 %v3053, %v3674
        %v3678 = vmul.f32 %v3055, %v3674
        %v3683 = vrot.slane %v3675, 4
        %v3684 = vrot.slane %v3676, 4
        %v3685 = vsel %vm2618, %v3683, %v3684
        %v3686 = vrot.slane %v3677, 4
        %v3687 = vsel %vm2618, %v3684, %v3686
        %v3688 = vrot.slane %v3678, 4
        %v3689 = vsel %vm2618, %v3686, %v3688
        %v3694 = vadd.f32 %v3667, %v3685
        %v3695 = vadd.f32 %v3668, %v3687
        %v3696 = vadd.f32 %v3669, %v3689
        %v3697 = vadd.f32 %v3670, %v3688
        %v3698 = vlaneseq
        %v3699 = vshrl.u32 %v3698, 7
        %v3700 = vsub.s32 5, %v3699
        %v3701 = vrot.slane %v3059, %v3700
        %v3702 = vmul.f32 %v3051, %v3701
        %v3703 = vmul.f32 %v3052, %v3701
        %v3704 = vmul.f32 %v3053, %v3701
        %v3705 = vmul.f32 %v3055, %v3701
        %v3710 = vrot.slane %v3702, 5
        %v3711 = vrot.slane %v3703, 5
        %v3712 = vsel %vm3151, %v3710, %v3711
        %v3713 = vrot.slane %v3704, 5
        %v3714 = vsel %vm3151, %v3711, %v3713
        %v3715 = vrot.slane %v3705, 5
        %v3716 = vsel %vm3151, %v3713, %v3715
        %v3721 = vadd.f32 %v3694, %v3712
        %v3722 = vadd.f32 %v3695, %v3714
        %v3723 = vadd.f32 %v3696, %v3716
        %v3724 = vadd.f32 %v3697, %v3715
        %v3725 = vlaneseq
        %v3726 = vshrl.u32 %v3725, 7
        %v3727 = vsub.s32 6, %v3726
        %v3728 = vrot.slane %v3059, %v3727
        %v3729 = vmul.f32 %v3051, %v3728
        %v3730 = vmul.f32 %v3052, %v3728
        %v3731 = vmul.f32 %v3053, %v3728
        %v3732 = vmul.f32 %v3055, %v3728
        %v3737 = vrot.slane %v3729, 6
        %v3738 = vrot.slane %v3730, 6
        %v3739 = vsel %vm3170, %v3737, %v3738
        %v3740 = vrot.slane %v3731, 6
        %v3741 = vsel %vm3170, %v3738, %v3740
        %v3742 = vrot.slane %v3732, 6
        %v3743 = vsel %vm3170, %v3740, %v3742
        %v3748 = vadd.f32 %v3721, %v3739
        %v3749 = vadd.f32 %v3722, %v3741
        %v3750 = vadd.f32 %v3723, %v3743
        %v3751 = vadd.f32 %v3724, %v3742
        %v3752 = vlaneseq
        %v3753 = vshrl.u32 %v3752, 7
        %v3754 = vsub.s32 7, %v3753
        %v3755 = vrot.slane %v3059, %v3754
        %v3756 = vmul.f32 %v3051, %v3755
        %v3757 = vmul.f32 %v3052, %v3755
        %v3758 = vmul.f32 %v3053, %v3755
        %v3759 = vmul.f32 %v3055, %v3755
        %v3764 = vrot.slane %v3756, 7
        %v3765 = vrot.slane %v3757, 7
        %v3766 = vsel %vm2635, %v3764, %v3765
        %v3767 = vrot.slane %v3758, 7
        %v3768 = vsel %vm2635, %v3765, %v3767
        %v3769 = vrot.slane %v3759, 7
        %v3770 = vsel %vm2635, %v3767, %v3769
        %v3775 = vadd.f32 %v3748, %v3766
        %v3776 = vadd.f32 %v3749, %v3768
        %v3777 = vadd.f32 %v3750, %v3770
        %v3778 = vadd.f32 %v3751, %v3769
        %v3779 = vlaneseq
        %v3780 = vshrl.u32 %v3779, 7
        %v3781 = vsub.s32 0, %v3780
        %v3782 = vrot.slane %v3060, %v3781
        %v3783 = vmul.f32 %v3052, %v3782
        %v3784 = vmul.f32 %v3053, %v3782
        %v3785 = vmul.f32 %v3055, %v3782
        %v3786 = vmul.f32 %v3782, 0.0
        %v3787 = vadd.f32 %v3775, %v3783
        %v3788 = vadd.f32 %v3776, %v3784
        %v3789 = vadd.f32 %v3777, %v3785
        %v3790 = vadd.f32 %v3778, %v3786
        %v3791 = vlaneseq
        %v3792 = vshrl.u32 %v3791, 7
        %v3793 = vsub.s32 1, %v3792
        %v3794 = vrot.slane %v3060, %v3793
        %v3795 = vmul.f32 %v3052, %v3794
        %v3796 = vmul.f32 %v3053, %v3794
        %v3797 = vmul.f32 %v3055, %v3794
        %v3798 = vmul.f32 %v3794, 0.0
        %v3803 = vrot.slane %v3795, 1
        %v3804 = vrot.slane %v3796, 1
        %v3805 = vsel %vm2627, %v3803, %v3804
        %v3806 = vrot.slane %v3797, 1
        %v3807 = vsel %vm2627, %v3804, %v3806
        %v3808 = vrot.slane %v3798, 1
        %v3809 = vsel %vm2627, %v3806, %v3808
        %v3814 = vadd.f32 %v3787, %v3805
        %v3815 = vadd.f32 %v3788, %v3807
        %v3816 = vadd.f32 %v3789, %v3809
        %v3817 = vadd.f32 %v3790, %v3808
        %v3818 = vlaneseq
        %v3819 = vshrl.u32 %v3818, 7
        %v3820 = vsub.s32 2, %v3819
        %v3821 = vrot.slane %v3060, %v3820
        %v3822 = vmul.f32 %v3052, %v3821
        %v3823 = vmul.f32 %v3053, %v3821
        %v3824 = vmul.f32 %v3055, %v3821
        %v3825 = vmul.f32 %v3821, 0.0
        %v3830 = vrot.slane %v3822, 2
        %v3831 = vrot.slane %v3823, 2
        %v3832 = vsel %vm2629, %v3830, %v3831
        %v3833 = vrot.slane %v3824, 2
        %v3834 = vsel %vm2629, %v3831, %v3833
        %v3835 = vrot.slane %v3825, 2
        %v3836 = vsel %vm2629, %v3833, %v3835
        %v3841 = vadd.f32 %v3814, %v3832
        %v3842 = vadd.f32 %v3815, %v3834
        %v3843 = vadd.f32 %v3816, %v3836
        %v3844 = vadd.f32 %v3817, %v3835
        %v3845 = vlaneseq
        %v3846 = vshrl.u32 %v3845, 7
        %v3847 = vsub.s32 3, %v3846
        %v3848 = vrot.slane %v3060, %v3847
        %v3849 = vmul.f32 %v3052, %v3848
        %v3850 = vmul.f32 %v3053, %v3848
        %v3851 = vmul.f32 %v3055, %v3848
        %v3852 = vmul.f32 %v3848, 0.0
        %v3857 = vrot.slane %v3849, 3
        %v3858 = vrot.slane %v3850, 3
        %v3859 = vsel %vm2631, %v3857, %v3858
        %v3860 = vrot.slane %v3851, 3
        %v3861 = vsel %vm2631, %v3858, %v3860
        %v3862 = vrot.slane %v3852, 3
        %v3863 = vsel %vm2631, %v3860, %v3862
        %v3868 = vadd.f32 %v3841, %v3859
        %v3869 = vadd.f32 %v3842, %v3861
        %v3870 = vadd.f32 %v3843, %v3863
        %v3871 = vadd.f32 %v3844, %v3862
        %v3872 = vlaneseq
        %v3873 = vshrl.u32 %v3872, 7
        %v3874 = vsub.s32 4, %v3873
        %v3875 = vrot.slane %v3060, %v3874
        %v3876 = vmul.f32 %v3052, %v3875
        %v3877 = vmul.f32 %v3053, %v3875
        %v3878 = vmul.f32 %v3055, %v3875
        %v3879 = vmul.f32 %v3875, 0.0
        %v3884 = vrot.slane %v3876, 4
        %v3885 = vrot.slane %v3877, 4
        %v3886 = vsel %vm2618, %v3884, %v3885
        %v3887 = vrot.slane %v3878, 4
        %v3888 = vsel %vm2618, %v3885, %v3887
        %v3889 = vrot.slane %v3879, 4
        %v3890 = vsel %vm2618, %v3887, %v3889
        %v3895 = vadd.f32 %v3868, %v3886
        %v3896 = vadd.f32 %v3869, %v3888
        %v3897 = vadd.f32 %v3870, %v3890
        %v3898 = vadd.f32 %v3871, %v3889
        %v3899 = vlaneseq
        %v3900 = vshrl.u32 %v3899, 7
        %v3901 = vsub.s32 5, %v3900
        %v3902 = vrot.slane %v3060, %v3901
        %v3903 = vmul.f32 %v3052, %v3902
        %v3904 = vmul.f32 %v3053, %v3902
        %v3905 = vmul.f32 %v3055, %v3902
        %v3906 = vmul.f32 %v3902, 0.0
        %v3911 = vrot.slane %v3903, 5
        %v3912 = vrot.slane %v3904, 5
        %v3913 = vsel %vm3151, %v3911, %v3912
        %v3914 = vrot.slane %v3905, 5
        %v3915 = vsel %vm3151, %v3912, %v3914
        %v3916 = vrot.slane %v3906, 5
        %v3917 = vsel %vm3151, %v3914, %v3916
        %v3922 = vadd.f32 %v3895, %v3913
        %v3923 = vadd.f32 %v3896, %v3915
        %v3924 = vadd.f32 %v3897, %v3917
        %v3925 = vadd.f32 %v3898, %v3916
        %v3926 = vlaneseq
        %v3927 = vshrl.u32 %v3926, 7
        %v3928 = vsub.s32 6, %v3927
        %v3929 = vrot.slane %v3060, %v3928
        %v3930 = vmul.f32 %v3052, %v3929
        %v3931 = vmul.f32 %v3053, %v3929
        %v3932 = vmul.f32 %v3055, %v3929
        %v3933 = vmul.f32 %v3929, 0.0
        %v3938 = vrot.slane %v3930, 6
        %v3939 = vrot.slane %v3931, 6
        %v3940 = vsel %vm3170, %v3938, %v3939
        %v3941 = vrot.slane %v3932, 6
        %v3942 = vsel %vm3170, %v3939, %v3941
        %v3943 = vrot.slane %v3933, 6
        %v3944 = vsel %vm3170, %v3941, %v3943
        %v3949 = vadd.f32 %v3922, %v3940
        %v3950 = vadd.f32 %v3923, %v3942
        %v3951 = vadd.f32 %v3924, %v3944
        %v3952 = vadd.f32 %v3925, %v3943
        %v3953 = vlaneseq
        %v3954 = vshrl.u32 %v3953, 7
        %v3955 = vsub.s32 7, %v3954
        %v3956 = vrot.slane %v3060, %v3955
        %v3957 = vmul.f32 %v3052, %v3956
        %v3958 = vmul.f32 %v3053, %v3956
        %v3959 = vmul.f32 %v3055, %v3956
        %v3960 = vmul.f32 %v3956, 0.0
        %v3965 = vrot.slane %v3957, 7
        %v3966 = vrot.slane %v3958, 7
        %v3967 = vsel %vm2635, %v3965, %v3966
        %v3968 = vrot.slane %v3959, 7
        %v3969 = vsel %vm2635, %v3966, %v3968
        %v3970 = vrot.slane %v3960, 7
        %v3971 = vsel %vm2635, %v3968, %v3970
        %v3976 = vadd.f32 %v3949, %v3967
        %v3977 = vadd.f32 %v3950, %v3969
        %v3978 = vadd.f32 %v3951, %v3971
        %v3979 = vadd.f32 %v3952, %v3970
        %v3980 = vlaneseq
        %v3981 = vshrl.u32 %v3980, 7
        %v3982 = vsub.s32 0, %v3981
        %v3983 = vrot.slane %v3061, %v3982
        %v3984 = vmul.f32 %v3053, %v3983
        %v3985 = vmul.f32 %v3055, %v3983
        %v3986 = vmul.f32 %v3983, 0.0
        %v3987 = vadd.f32 %v3976, %v3984
        %v3988 = vadd.f32 %v3977, %v3985
        %v3989 = vadd.f32 %v3978, %v3986
        %v3990 = vadd.f32 %v3979, %v3986
        %v3991 = vlaneseq
        %v3992 = vshrl.u32 %v3991, 7
        %v3993 = vsub.s32 1, %v3992
        %v3994 = vrot.slane %v3061, %v3993
        %v3995 = vmul.f32 %v3053, %v3994
        %v3996 = vmul.f32 %v3055, %v3994
        %v3997 = vmul.f32 %v3994, 0.0
        %v4001 = vrot.slane %v3995, 1
        %v4002 = vrot.slane %v3996, 1
        %v4003 = vsel %vm2627, %v4001, %v4002
        %v4004 = vrot.slane %v3997, 1
        %v4005 = vsel %vm2627, %v4002, %v4004
        %v4006 = vsel %vm2627, %v4004, %v4004
        %v4011 = vadd.f32 %v3987, %v4003
        %v4012 = vadd.f32 %v3988, %v4005
        %v4013 = vadd.f32 %v3989, %v4006
        %v4014 = vadd.f32 %v3990, %v4004
        %v4015 = vlaneseq
        %v4016 = vshrl.u32 %v4015, 7
        %v4017 = vsub.s32 2, %v4016
        %v4018 = vrot.slane %v3061, %v4017
        %v4019 = vmul.f32 %v3053, %v4018
        %v4020 = vmul.f32 %v3055, %v4018
        %v4021 = vmul.f32 %v4018, 0.0
        %v4025 = vrot.slane %v4019, 2
        %v4026 = vrot.slane %v4020, 2
        %v4027 = vsel %vm2629, %v4025, %v4026
        %v4028 = vrot.slane %v4021, 2
        %v4029 = vsel %vm2629, %v4026, %v4028
        %v4030 = vsel %vm2629, %v4028, %v4028
        %v4035 = vadd.f32 %v4011, %v4027
        %v4036 = vadd.f32 %v4012, %v4029
        %v4037 = vadd.f32 %v4013, %v4030
        %v4038 = vadd.f32 %v4014, %v4028
        %v4039 = vlaneseq
        %v4040 = vshrl.u32 %v4039, 7
        %v4041 = vsub.s32 3, %v4040
        %v4042 = vrot.slane %v3061, %v4041
        %v4043 = vmul.f32 %v3053, %v4042
        %v4044 = vmul.f32 %v3055, %v4042
        %v4045 = vmul.f32 %v4042, 0.0
        %v4049 = vrot.slane %v4043, 3
        %v4050 = vrot.slane %v4044, 3
        %v4051 = vsel %vm2631, %v4049, %v4050
        %v4052 = vrot.slane %v4045, 3
        %v4053 = vsel %vm2631, %v4050, %v4052
        %v4054 = vsel %vm2631, %v4052, %v4052
        %v4059 = vadd.f32 %v4035, %v4051
        %v4060 = vadd.f32 %v4036, %v4053
        %v4061 = vadd.f32 %v4037, %v4054
        %v4062 = vadd.f32 %v4038, %v4052
        %v4063 = vlaneseq
        %v4064 = vshrl.u32 %v4063, 7
        %v4065 = vsub.s32 4, %v4064
        %v4066 = vrot.slane %v3061, %v4065
        %v4067 = vmul.f32 %v3053, %v4066
        %v4068 = vmul.f32 %v3055, %v4066
        %v4069 = vmul.f32 %v4066, 0.0
        %v4073 = vrot.slane %v4067, 4
        %v4074 = vrot.slane %v4068, 4
        %v4075 = vsel %vm2618, %v4073, %v4074
        %v4076 = vrot.slane %v4069, 4
        %v4077 = vsel %vm2618, %v4074, %v4076
        %v4078 = vsel %vm2618, %v4076, %v4076
        %v4083 = vadd.f32 %v4059, %v4075
        %v4084 = vadd.f32 %v4060, %v4077
        %v4085 = vadd.f32 %v4061, %v4078
        %v4086 = vadd.f32 %v4062, %v4076
        %v4087 = vlaneseq
        %v4088 = vshrl.u32 %v4087, 7
        %v4089 = vsub.s32 5, %v4088
        %v4090 = vrot.slane %v3061, %v4089
        %v4091 = vmul.f32 %v3053, %v4090
        %v4092 = vmul.f32 %v3055, %v4090
        %v4093 = vmul.f32 %v4090, 0.0
        %v4097 = vrot.slane %v4091, 5
        %v4098 = vrot.slane %v4092, 5
        %v4099 = vsel %vm3151, %v4097, %v4098
        %v4100 = vrot.slane %v4093, 5
        %v4101 = vsel %vm3151, %v4098, %v4100
        %v4102 = vsel %vm3151, %v4100, %v4100
        %v4107 = vadd.f32 %v4083, %v4099
        %v4108 = vadd.f32 %v4084, %v4101
        %v4109 = vadd.f32 %v4085, %v4102
        %v4110 = vadd.f32 %v4086, %v4100
        %v4111 = vlaneseq
        %v4112 = vshrl.u32 %v4111, 7
        %v4113 = vsub.s32 6, %v4112
        %v4114 = vrot.slane %v3061, %v4113
        %v4115 = vmul.f32 %v3053, %v4114
        %v4116 = vmul.f32 %v3055, %v4114
        %v4117 = vmul.f32 %v4114, 0.0
        %v4121 = vrot.slane %v4115, 6
        %v4122 = vrot.slane %v4116, 6
        %v4123 = vsel %vm3170, %v4121, %v4122
        %v4124 = vrot.slane %v4117, 6
        %v4125 = vsel %vm3170, %v4122, %v4124
        %v4126 = vsel %vm3170, %v4124, %v4124
        %v4131 = vadd.f32 %v4107, %v4123
        %v4132 = vadd.f32 %v4108, %v4125
        %v4133 = vadd.f32 %v4109, %v4126
        %v4134 = vadd.f32 %v4110, %v4124
        %v4135 = vlaneseq
        %v4136 = vshrl.u32 %v4135, 7
        %v4137 = vsub.s32 7, %v4136
        %v4138 = vrot.slane %v3061, %v4137
        %v4139 = vmul.f32 %v3053, %v4138
        %v4140 = vmul.f32 %v3055, %v4138
        %v4141 = vmul.f32 %v4138, 0.0
        %v4145 = vrot.slane %v4139, 7
        %v4146 = vrot.slane %v4140, 7
        %v4147 = vsel %vm2635, %v4145, %v4146
        %v4148 = vrot.slane %v4141, 7
        %v4149 = vsel %vm2635, %v4146, %v4148
        %v4150 = vsel %vm2635, %v4148, %v4148
        %v4155 = vadd.f32 %v4131, %v4147
        %v4156 = vadd.f32 %v4132, %v4149
        %v4157 = vadd.f32 %v4133, %v4150
        %v4158 = vadd.f32 %v4134, %v4148
        %v4159 = vlaneseq
        %v4160 = vshrl.u32 %v4159, 7
        %v4161 = vsub.s32 0, %v4160
        %v4162 = vrot.slane %v3062, %v4161
        %v4163 = vmul.f32 %v3055, %v4162
        %v4164 = vmul.f32 %v4162, 0.0
        %v4165 = vadd.f32 %v4155, %v4163
        %v4166 = vadd.f32 %v4156, %v4164
        %v4167 = vadd.f32 %v4157, %v4164
        %v4168 = vadd.f32 %v4158, %v4164
        %4173 = vrot.lane.b32.xlu0 %v4165, 120
        %v4174 = vpop.permute.xlu0 %4173
        %4175 = vrot.lane.b32.xlu0 %v4166, 120
        %v4176 = vpop.permute.xlu0 %4175
        %4177 = vrot.lane.b32.xlu0 %v4167, 120
        %v4178 = vpop.permute.xlu0 %4177
        %4179 = vrot.lane.b32.xlu0 %v4168, 120
        %v4180 = vpop.permute.xlu0 %4179
        %v4185 = vadd.f32 %v4165, %v4174
        %v4186 = vadd.f32 %v4166, %v4176
        %v4187 = vadd.f32 %v4167, %v4178
        %v4188 = vadd.f32 %v4168, %v4180
        %v4189 = vld [vmem:[%s17] sm:$0x1]
        %v4191 = vlaneseq
        %v4192 = vshrl.u32 %v4191, 7
        %v4193 = vsub.s32 0, %v4192
        %v4194 = vrot.slane %v4189, %v4193
        %v4196 = vadd.f32 %v4185, %v4194
        %v4197 = vadd.f32 %v4186, %v4194
        %v4198 = vadd.f32 %v4187, %v4194
        %v4199 = vadd.f32 %v4188, %v4194
        %v4200 = vmax.f32 %v4196, 0.0
        %v4201 = vmax.f32 %v4197, 0.0
        %v4202 = vmax.f32 %v4198, 0.0
        %v4203 = vmax.f32 %v4199, 0.0
        %v4204 = vld [vmem:[%s19] sm:$0x1]
        %v4206 = vlaneseq
        %v4207 = vshrl.u32 %v4206, 7
        %v4208 = vsub.s32 0, %v4207
        %v4209 = vrot.slane %v4204, %v4208
        %v4211 = vmul.f32 %v4200, %v4209
        %v4212 = vmul.f32 %v4201, %v4209
        %v4213 = vmul.f32 %v4202, %v4209
        %v4214 = vmul.f32 %v4203, %v4209
        %v4215 = vsel %vm3050, %v4211, 0.0
        %4216 = vadd.xlane.f32.xlu0 %v4215
        %v4217 = vpop.xlane.xlu0 %4216
        %v4218 = vsel %vm3050, %v4212, 0.0
        %4219 = vadd.xlane.f32.xlu0 %v4218
        %v4220 = vpop.xlane.xlu0 %4219
        %v4221 = vsel %vm3050, %v4213, 0.0
        %4222 = vadd.xlane.f32.xlu0 %v4221
        %v4223 = vpop.xlane.xlu0 %4222
        %vm4224 = vcmask 57344
        %v4225 = vsel %vm4224, %v4214, 0.0
        %4226 = vadd.xlane.f32.xlu0 %v4225
        %v4227 = vpop.xlane.xlu0 %4226
        %v4228 = vld [vmem:[#allocation6] sm:$0x1]
        %v4230 = vlaneseq
        %v4231 = vshrl.u32 %v4230, 7
        %v4232 = vsub.s32 0, %v4231
        %v4233 = vrot.slane %v4228, %v4232
        %v4235 = vadd.f32 %v4217, %v4233
        %v4236 = vadd.f32 %v4220, %v4233
        %v4237 = vadd.f32 %v4223, %v4233
        %v4238 = vadd.f32 %v4227, %v4233
        %v4239 = vxor.u32 %v4235, 2147483648
        %v4240 = vxor.u32 %v4236, 2147483648
        %v4241 = vxor.u32 %v4237, 2147483648
        %v4242 = vxor.u32 %v4238, 2147483648
        %v4243 = vmul.f32 %v4239, 1.442695
        %v4244 = vpow.pop %v4243
        %v4245 = vmul.f32 %v4240, 1.442695
        %v4246 = vpow.pop %v4245
        %v4247 = vmul.f32 %v4241, 1.442695
        %v4248 = vpow.pop %v4247
        %v4249 = vmul.f32 %v4242, 1.442695
        %v4250 = vpow.pop %v4249
        %v4251 = vadd.f32 %v4244, 1.0
        %v4252 = vadd.f32 %v4246, 1.0
        %v4253 = vadd.f32 %v4248, 1.0
        %v4254 = vadd.f32 %v4250, 1.0
        %v4255 = vrcp.pop %v4251
        %v4256 = vmul.f32 1.0, %v4255
        %v4257 = vrcp.pop %v4252
        %v4258 = vmul.f32 1.0, %v4257
        %v4259 = vrcp.pop %v4253
        %v4260 = vmul.f32 1.0, %v4259
        %v4261 = vrcp.pop %v4254
        %v4262 = vmul.f32 1.0, %v4261
        %v4263 = vmul.f32 %v3011, %v3011
        %v4264 = vmul.f32 %v3012, %v3012
        %v4265 = vmul.f32 %v3013, %v3013
        %v4266 = vmul.f32 %v3014, %v3014
        %4268 = vset.pattern.permute.xlu0 0
        %4269 = vperm.xlu0 %4268, %v4256
        %v4270 = vpop.permute.xlu0 %4269
        %4273 = vset.pattern.permute.xlu0 0
        %4274 = vperm.xlu0 %4273, %v4258
        %v4275 = vpop.permute.xlu0 %4274
        %4278 = vset.pattern.permute.xlu0 0
        %4279 = vperm.xlu0 %4278, %v4260
        %v4280 = vpop.permute.xlu0 %4279
        %4283 = vset.pattern.permute.xlu0 0
        %4284 = vperm.xlu0 %4283, %v4262
        %v4285 = vpop.permute.xlu0 %4284
        %v4287 = vmul.f32 %v4263, %v4270
        %v4288 = vmul.f32 %v4264, %v4275
        %v4289 = vmul.f32 %v4265, %v4280
        %v4290 = vmul.f32 %v4266, %v4285
        %v4291 = vpack.c.bf16 %v4288, %v4287
        %v4292 = vpack.c.bf16 %v4290, %v4289
        %v4295 = vunpack.c.l.b16 %v4291
        %v4296 = vunpack.c.h.b16 %v4291
        %v4297 = vunpack.c.l.b16 %v4292
        %v4298 = vunpack.c.h.b16 %v4292
        %v4299 = vpack.c.b16 %v4295, %v4295
        %v4300 = vpack.c.b16 %v4296, %v4296
        %v4301 = vpack.c.b16 %v4297, %v4297
        %v4302 = vpack.c.b16 %v4298, %v4298
        %4307 = vst [vmem:[#allocation3 + $0xc] sm:$0xf] %v4299
        %4308 = vst [vmem:[#allocation3 + $0x10] sm:$0xf] %v4300
        %4309 = vst [vmem:[#allocation3 + $0x14] sm:$0xf] %v4301
        %v4310 = vld [vmem:[#allocation3 + $0x18] sm:$0x1]
        %v4311 = vsel %vm2606, %v4302, %v4310
        %4312 = vst [vmem:[#allocation3 + $0x18] sm:$0x1] %v4311
        %v4313 = vld [vmem:[#allocation3 + $0x8] sm:$0xf]
        %v4314 = vld [vmem:[#allocation3 + $0xc] sm:$0xf]
        %v4315 = vld [vmem:[#allocation3 + $0x10] sm:$0xf]
        %v4316 = vld [vmem:[#allocation3 + $0x14] sm:$0x1]
        %v4321 = vunpack.c.l.b16 %v4313
        %v4322 = vunpack.c.l.b16 %v4314
        %v4323 = vunpack.c.l.b16 %v4315
        %v4324 = vunpack.c.l.b16 %v4316
        %v4325 = vpack.c.b16 %v4322, %v4321
        %v4326 = vpack.c.b16 %v4324, %v4323
        %v4330 = vshrl.u32 %v4325, 16
        %v4332 = vshll.u32 %v4325, 16
        %v4334 = vrot.slane %v4332, 1
        %v4335 = vor.u32 %v4330, %v4334
        %v4337 = vshll.u32 %v4326, 16
        %v4339 = vrot.slane %v4337, 1
        %v4340 = vsel %vm1010, %v4335, %v4339
        %v4341 = vshrl.u32 %v4326, 16
        %v4343 = vor.u32 %v4341, %v4339
        %v4346 = vld [vmem:[#allocation8] sm:$0xf]
        %v4347 = vld [vmem:[#allocation8 + $0x4] sm:$0xf]
        %v4348 = vld [vmem:[#allocation8 + $0x8] sm:$0xf]
        %v4349 = vld [vmem:[#allocation8 + $0xc] sm:$0xf]
        %v4350 = vld [vmem:[#allocation8 + $0x10] sm:$0xf]
        %v4351 = vld [vmem:[#allocation8 + $0x14] sm:$0xf]
        %v4352 = vld [vmem:[#allocation8 + $0x18] sm:$0xf]
        %v4353 = vld [vmem:[#allocation8 + $0x1c] sm:$0xf]
        %v4354 = vld [vmem:[#allocation8 + $0x20] sm:$0xf]
        %v4355 = vld [vmem:[#allocation8 + $0x24] sm:$0xf]
        %v4356 = vld [vmem:[#allocation8 + $0x28] sm:$0xf]
        %v4357 = vld [vmem:[#allocation8 + $0x2c] sm:$0xf]
        %v4358 = vld [vmem:[#allocation8 + $0x30] sm:$0xf]
        %v4359 = vld [vmem:[#allocation8 + $0x34] sm:$0xf]
        %v4360 = vld [vmem:[#allocation8 + $0x38] sm:$0xf]
        %v4361 = vld [vmem:[#allocation8 + $0x3c] sm:$0xf]
        %v4362 = vld [vmem:[#allocation8 + $0x40] sm:$0xf]
        %v4363 = vld [vmem:[#allocation8 + $0x44] sm:$0xf]
        %v4364 = vld [vmem:[#allocation8 + $0x48] sm:$0xf]
        %v4365 = vld [vmem:[#allocation8 + $0x4c] sm:$0xf]
        %v4366 = vld [vmem:[#allocation8 + $0x50] sm:$0xf]
        %v4367 = vld [vmem:[#allocation8 + $0x54] sm:$0xf]
        %v4368 = vld [vmem:[#allocation8 + $0x58] sm:$0xf]
        %v4369 = vld [vmem:[#allocation8 + $0x5c] sm:$0xf]
        %v4370 = vld [vmem:[#allocation8 + $0x60] sm:$0xf]
        %v4371 = vld [vmem:[#allocation8 + $0x64] sm:$0xf]
        %v4372 = vld [vmem:[#allocation8 + $0x68] sm:$0xf]
        %v4373 = vld [vmem:[#allocation8 + $0x6c] sm:$0xf]
        %v4374 = vld [vmem:[#allocation8 + $0x70] sm:$0xf]
        %v4375 = vld [vmem:[#allocation8 + $0x74] sm:$0xf]
        %v4376 = vld [vmem:[#allocation8 + $0x78] sm:$0xf]
        %v4377 = vld [vmem:[#allocation8 + $0x7c] sm:$0xf]
        %v4378 = vld [vmem:[#allocation3 + $0x8] sm:$0xe]
        %v4379 = vld [vmem:[#allocation3 + $0x14] sm:$0x3]
        %v4380 = vld [vmem:[#allocation3 + $0x8] sm:$0x8]
        %v4381 = vld [vmem:[#allocation3 + $0x14] sm:$0xf]
        %v4384 = vunpack.c.l.b16 %v4378
        %v4385 = vunpack.c.l.b16 %v4379
        %v4386 = vpack.c.b16 %v4322, %v4384
        %v4387 = vpack.c.b16 %v4385, %v4323
        %v4390 = vunpack.c.l.b16 %v4380
        %v4391 = vunpack.c.l.b16 %v4381
        %v4392 = vpack.c.b16 %v4322, %v4390
        %v4393 = vpack.c.b16 %v4391, %v4323
        %vm4394 = vsmask.f32 5376
        %v4396 = vshrl.u32 %v4392, 16
        %v4398 = vrot.slane %v4396, 2
        %v4399 = vshll.u32 %v4392, 16
        %v4401 = vrot.slane %v4399, 3
        %v4402 = vor.u32 %v4398, %v4401
        %v4404 = vshrl.u32 %v4393, 16
        %v4406 = vrot.slane %v4404, 2
        %v4407 = vshll.u32 %v4393, 16
        %v4409 = vrot.slane %v4407, 3
        %v4410 = vor.u32 %v4406, %v4409
        %v4411 = vsel %vm4394, %v4402, %v4410
        %v4412 = vld [vmem:[#allocation8 + $0x80] sm:$0xf]
        %v4413 = vld [vmem:[#allocation8 + $0x84] sm:$0xf]
        %v4414 = vld [vmem:[#allocation8 + $0x88] sm:$0xf]
        %v4415 = vld [vmem:[#allocation8 + $0x8c] sm:$0xf]
        %v4416 = vld [vmem:[#allocation8 + $0x90] sm:$0xf]
        %v4417 = vld [vmem:[#allocation8 + $0x94] sm:$0xf]
        %v4418 = vld [vmem:[#allocation8 + $0x98] sm:$0xf]
        %v4419 = vld [vmem:[#allocation8 + $0x9c] sm:$0xf]
        %v4420 = vld [vmem:[#allocation8 + $0xa0] sm:$0xf]
        %v4421 = vld [vmem:[#allocation8 + $0xa4] sm:$0xf]
        %v4422 = vld [vmem:[#allocation8 + $0xa8] sm:$0xf]
        %v4423 = vld [vmem:[#allocation8 + $0xac] sm:$0xf]
        %v4424 = vld [vmem:[#allocation8 + $0xb0] sm:$0xf]
        %v4425 = vld [vmem:[#allocation8 + $0xb4] sm:$0xf]
        %v4426 = vld [vmem:[#allocation8 + $0xb8] sm:$0xf]
        %v4427 = vld [vmem:[#allocation8 + $0xbc] sm:$0xf]
        %v4428 = vld [vmem:[#allocation8 + $0xc0] sm:$0xf]
        %v4429 = vld [vmem:[#allocation8 + $0xc4] sm:$0xf]
        %v4430 = vld [vmem:[#allocation8 + $0xc8] sm:$0xf]
        %v4431 = vld [vmem:[#allocation8 + $0xcc] sm:$0xf]
        %v4432 = vld [vmem:[#allocation8 + $0xd0] sm:$0xf]
        %v4433 = vld [vmem:[#allocation8 + $0xd4] sm:$0xf]
        %v4434 = vld [vmem:[#allocation8 + $0xd8] sm:$0xf]
        %v4435 = vld [vmem:[#allocation8 + $0xdc] sm:$0xf]
        %v4436 = vld [vmem:[#allocation8 + $0xe0] sm:$0xf]
        %v4437 = vld [vmem:[#allocation8 + $0xe4] sm:$0xf]
        %v4438 = vld [vmem:[#allocation8 + $0xe8] sm:$0xf]
        %v4439 = vld [vmem:[#allocation8 + $0xec] sm:$0xf]
        %v4440 = vld [vmem:[#allocation8 + $0xf0] sm:$0xf]
        %v4441 = vld [vmem:[#allocation8 + $0xf4] sm:$0xf]
        %v4442 = vld [vmem:[#allocation8 + $0xf8] sm:$0xf]
        %v4443 = vld [vmem:[#allocation8 + $0xfc] sm:$0xf]
        %v4444 = vrot.slane %v4386, 1
        %v4445 = vrot.slane %v4387, 1
        %v4446 = vsel %vm1195, %v4444, %v4445
        %v4447 = vrot.slane %v4411, 1
        %v4448 = vrot.slane %v4410, 1
        %v4449 = vsel %vm1195, %v4447, %v4448
        %v4486 = vunpack.c.l.b16 %v4412
        %v4487 = vunpack.c.l.b16 %v4413
        %v4488 = vunpack.c.l.b16 %v4414
        %v4489 = vunpack.c.l.b16 %v4415
        %v4490 = vunpack.c.l.b16 %v4416
        %v4491 = vunpack.c.l.b16 %v4417
        %v4492 = vunpack.c.l.b16 %v4418
        %v4493 = vunpack.c.l.b16 %v4419
        %v4494 = vunpack.c.l.b16 %v4420
        %v4495 = vunpack.c.l.b16 %v4421
        %v4496 = vunpack.c.l.b16 %v4422
        %v4497 = vunpack.c.l.b16 %v4423
        %v4498 = vunpack.c.l.b16 %v4424
        %v4499 = vunpack.c.l.b16 %v4425
        %v4500 = vunpack.c.l.b16 %v4426
        %v4501 = vunpack.c.l.b16 %v4427
        %v4502 = vunpack.c.l.b16 %v4428
        %v4503 = vunpack.c.l.b16 %v4429
        %v4504 = vunpack.c.l.b16 %v4430
        %v4505 = vunpack.c.l.b16 %v4431
        %v4506 = vunpack.c.l.b16 %v4432
        %v4507 = vunpack.c.l.b16 %v4433
        %v4508 = vunpack.c.l.b16 %v4434
        %v4509 = vunpack.c.l.b16 %v4435
        %v4510 = vunpack.c.l.b16 %v4436
        %v4511 = vunpack.c.l.b16 %v4437
        %v4512 = vunpack.c.l.b16 %v4438
        %v4513 = vunpack.c.l.b16 %v4439
        %v4514 = vunpack.c.l.b16 %v4440
        %v4515 = vunpack.c.l.b16 %v4441
        %v4516 = vunpack.c.l.b16 %v4442
        %v4517 = vunpack.c.l.b16 %v4443
        %v4518 = vpack.c.b16 %v4487, %v4486
        %v4519 = vpack.c.b16 %v4489, %v4488
        %v4520 = vpack.c.b16 %v4491, %v4490
        %v4521 = vpack.c.b16 %v4493, %v4492
        %v4522 = vpack.c.b16 %v4495, %v4494
        %v4523 = vpack.c.b16 %v4497, %v4496
        %v4524 = vpack.c.b16 %v4499, %v4498
        %v4525 = vpack.c.b16 %v4501, %v4500
        %v4526 = vpack.c.b16 %v4503, %v4502
        %v4527 = vpack.c.b16 %v4505, %v4504
        %v4528 = vpack.c.b16 %v4507, %v4506
        %v4529 = vpack.c.b16 %v4509, %v4508
        %v4530 = vpack.c.b16 %v4511, %v4510
        %v4531 = vpack.c.b16 %v4513, %v4512
        %v4532 = vpack.c.b16 %v4515, %v4514
        %v4533 = vpack.c.b16 %v4517, %v4516
        %4550 = vmatprep.subr.bf16.mxu0 0
        %4551 = vmatpush1.bf16.msra.mxu0 %v4525
        %4552 = vmatprep.subr.bf16.mxu0 0
        %4553 = vmatpush1.bf16.msra.mxu0 %v4524
        %4554 = vmatprep.subr.bf16.mxu0 0
        %4555 = vmatpush1.bf16.msra.mxu0 %v4523
        %4556 = vmatprep.subr.bf16.mxu0 0
        %4557 = vmatpush1.bf16.msra.mxu0 %v4522
        %4558 = vmatprep.subr.bf16.mxu0 0
        %4559 = vmatpush1.bf16.msra.mxu0 %v4521
        %4560 = vmatprep.subr.bf16.mxu0 0
        %4561 = vmatpush1.bf16.msra.mxu0 %v4520
        %4562 = vmatprep.subr.bf16.mxu0 0
        %4563 = vmatpush1.bf16.msra.mxu0 %v4519
        %4564 = vmatprep.subr.bf16.mxu0 0
        %4565 = vmatpush1.bf16.msra.mxu0 %v4518
        %4566 = vmatprep.subr.bf16.mxu0 0
        %4567 = vmatpush2.bf16.msra.mxu0 %v4533
        %4568 = vmatprep.subr.bf16.mxu0 0
        %4569 = vmatpush2.bf16.msra.mxu0 %v4532
        %4570 = vmatprep.subr.bf16.mxu0 0
        %4571 = vmatpush2.bf16.msra.mxu0 %v4531
        %4572 = vmatprep.subr.bf16.mxu0 0
        %4573 = vmatpush2.bf16.msra.mxu0 %v4530
        %4574 = vmatprep.subr.bf16.mxu0 0
        %4575 = vmatpush2.bf16.msra.mxu0 %v4529
        %4576 = vmatprep.subr.bf16.mxu0 0
        %4577 = vmatpush2.bf16.msra.mxu0 %v4528
        %4578 = vmatprep.subr.bf16.mxu0 0
        %4579 = vmatpush2.bf16.msra.mxu0 %v4527
        %4580 = vmatprep.subr.bf16.mxu0 0
        %4581 = vmatpush2.bf16.msra.mxu0 %v4526
        %4582 = vmatprep.mubr.bf16.mxu0 %v4449
        %4583 = vmatmul.mubr.bf16.gmra.mxu0 %v4446
        %v4584 = vpop.f32.mrf.mxu0
        %v4585 = vadd.f32 0.0, %v4584
        %v4586 = vpop.f32.mrf.mxu0
        %v4587 = vpop.f32.mrf.mxu0
        %v4588 = vadd.f32 0.0, %v4587
        %v4589 = vpop.f32.mrf.mxu0
        %4590 = vmatprep.mubr.bf16.mxu0 %v4448
        %4591 = vmatmul.mubr.bf16.gmra.mxu0 %v4445
        %v4592 = vpop.f32.mrf.mxu0
        %v4593 = vadd.f32 0.0, %v4592
        %v4594 = vpop.f32.mrf.mxu0
        %v4595 = vpop.f32.mrf.mxu0
        %v4596 = vadd.f32 0.0, %v4595
        %v4597 = vpop.f32.mrf.mxu0
        %4598 = vdwg.mxu0
        %v4631 = vunpack.c.l.b16 %v4346
        %v4632 = vunpack.c.l.b16 %v4347
        %v4633 = vunpack.c.l.b16 %v4348
        %v4634 = vunpack.c.l.b16 %v4349
        %v4635 = vunpack.c.l.b16 %v4350
        %v4636 = vunpack.c.l.b16 %v4351
        %v4637 = vunpack.c.l.b16 %v4352
        %v4638 = vunpack.c.l.b16 %v4353
        %v4639 = vunpack.c.l.b16 %v4354
        %v4640 = vunpack.c.l.b16 %v4355
        %v4641 = vunpack.c.l.b16 %v4356
        %v4642 = vunpack.c.l.b16 %v4357
        %v4643 = vunpack.c.l.b16 %v4358
        %v4644 = vunpack.c.l.b16 %v4359
        %v4645 = vunpack.c.l.b16 %v4360
        %v4646 = vunpack.c.l.b16 %v4361
        %v4647 = vunpack.c.l.b16 %v4362
        %v4648 = vunpack.c.l.b16 %v4363
        %v4649 = vunpack.c.l.b16 %v4364
        %v4650 = vunpack.c.l.b16 %v4365
        %v4651 = vunpack.c.l.b16 %v4366
        %v4652 = vunpack.c.l.b16 %v4367
        %v4653 = vunpack.c.l.b16 %v4368
        %v4654 = vunpack.c.l.b16 %v4369
        %v4655 = vunpack.c.l.b16 %v4370
        %v4656 = vunpack.c.l.b16 %v4371
        %v4657 = vunpack.c.l.b16 %v4372
        %v4658 = vunpack.c.l.b16 %v4373
        %v4659 = vunpack.c.l.b16 %v4374
        %v4660 = vunpack.c.l.b16 %v4375
        %v4661 = vunpack.c.l.b16 %v4376
        %v4662 = vunpack.c.l.b16 %v4377
        %v4663 = vpack.c.b16 %v4632, %v4631
        %v4664 = vpack.c.b16 %v4634, %v4633
        %v4665 = vpack.c.b16 %v4636, %v4635
        %v4666 = vpack.c.b16 %v4638, %v4637
        %v4667 = vpack.c.b16 %v4640, %v4639
        %v4668 = vpack.c.b16 %v4642, %v4641
        %v4669 = vpack.c.b16 %v4644, %v4643
        %v4670 = vpack.c.b16 %v4646, %v4645
        %v4671 = vpack.c.b16 %v4648, %v4647
        %v4672 = vpack.c.b16 %v4650, %v4649
        %v4673 = vpack.c.b16 %v4652, %v4651
        %v4674 = vpack.c.b16 %v4654, %v4653
        %v4675 = vpack.c.b16 %v4656, %v4655
        %v4676 = vpack.c.b16 %v4658, %v4657
        %v4677 = vpack.c.b16 %v4660, %v4659
        %v4678 = vpack.c.b16 %v4662, %v4661
        %4695 = vmatprep.subr.bf16.mxu0 0
        %4696 = vmatpush1.bf16.msra.mxu0 %v4670
        %4697 = vmatprep.subr.bf16.mxu0 0
        %4698 = vmatpush1.bf16.msra.mxu0 %v4669
        %4699 = vmatprep.subr.bf16.mxu0 0
        %4700 = vmatpush1.bf16.msra.mxu0 %v4668
        %4701 = vmatprep.subr.bf16.mxu0 0
        %4702 = vmatpush1.bf16.msra.mxu0 %v4667
        %4703 = vmatprep.subr.bf16.mxu0 0
        %4704 = vmatpush1.bf16.msra.mxu0 %v4666
        %4705 = vmatprep.subr.bf16.mxu0 0
        %4706 = vmatpush1.bf16.msra.mxu0 %v4665
        %4707 = vmatprep.subr.bf16.mxu0 0
        %4708 = vmatpush1.bf16.msra.mxu0 %v4664
        %4709 = vmatprep.subr.bf16.mxu0 0
        %4710 = vmatpush1.bf16.msra.mxu0 %v4663
        %4711 = vmatprep.subr.bf16.mxu0 0
        %4712 = vmatpush2.bf16.msra.mxu0 %v4678
        %4713 = vmatprep.subr.bf16.mxu0 0
        %4714 = vmatpush2.bf16.msra.mxu0 %v4677
        %4715 = vmatprep.subr.bf16.mxu0 0
        %4716 = vmatpush2.bf16.msra.mxu0 %v4676
        %4717 = vmatprep.subr.bf16.mxu0 0
        %4718 = vmatpush2.bf16.msra.mxu0 %v4675
        %4719 = vmatprep.subr.bf16.mxu0 0
        %4720 = vmatpush2.bf16.msra.mxu0 %v4674
        %4721 = vmatprep.subr.bf16.mxu0 0
        %4722 = vmatpush2.bf16.msra.mxu0 %v4673
        %4723 = vmatprep.subr.bf16.mxu0 0
        %4724 = vmatpush2.bf16.msra.mxu0 %v4672
        %4725 = vmatprep.subr.bf16.mxu0 0
        %4726 = vmatpush2.bf16.msra.mxu0 %v4671
        %4727 = vmatprep.mubr.bf16.mxu0 %v4340
        %4728 = vmatmul.mubr.bf16.gmra.mxu0 %v4325
        %v4729 = vpop.f32.mrf.mxu0
        %v4730 = vadd.f32 %v4585, %v4729
        %v4731 = vpop.f32.mrf.mxu0
        %v4732 = vpop.f32.mrf.mxu0
        %v4733 = vadd.f32 %v4588, %v4732
        %v4734 = vpop.f32.mrf.mxu0
        %4735 = vmatprep.mubr.bf16.mxu0 %v4343
        %4736 = vmatmul.mubr.bf16.gmra.mxu0 %v4326
        %v4737 = vpop.f32.mrf.mxu0
        %v4738 = vadd.f32 %v4593, %v4737
        %v4739 = vpop.f32.mrf.mxu0
        %v4740 = vpop.f32.mrf.mxu0
        %v4741 = vadd.f32 %v4596, %v4740
        %v4742 = vpop.f32.mrf.mxu0
        %4743 = vdwg.mxu0
        %v4744 = vld [vmem:[#allocation3 + $0xc] sm:$0xf]
        %v4745 = vld [vmem:[#allocation3 + $0x10] sm:$0xf]
        %v4746 = vld [vmem:[#allocation3 + $0x14] sm:$0xf]
        %v4747 = vld [vmem:[#allocation3 + $0x18] sm:$0x1]
        %v4752 = vunpack.c.l.b16 %v4744
        %v4753 = vunpack.c.l.b16 %v4745
        %v4754 = vunpack.c.l.b16 %v4746
        %v4755 = vunpack.c.l.b16 %v4747
        %v4756 = vpack.c.b16 %v4753, %v4752
        %v4757 = vpack.c.b16 %v4755, %v4754
        %v4761 = vshrl.u32 %v4756, 16
        %v4763 = vshll.u32 %v4756, 16
        %v4765 = vrot.slane %v4763, 1
        %v4766 = vor.u32 %v4761, %v4765
        %v4768 = vshll.u32 %v4757, 16
        %v4770 = vrot.slane %v4768, 1
        %v4771 = vsel %vm1010, %v4766, %v4770
        %v4772 = vshrl.u32 %v4757, 16
        %v4774 = vor.u32 %v4772, %v4770
        %v4777 = vld [vmem:[#allocation8 + $0x100] sm:$0xf]
        %v4778 = vld [vmem:[#allocation8 + $0x104] sm:$0xf]
        %v4779 = vld [vmem:[#allocation8 + $0x108] sm:$0xf]
        %v4780 = vld [vmem:[#allocation8 + $0x10c] sm:$0xf]
        %v4781 = vld [vmem:[#allocation8 + $0x110] sm:$0xf]
        %v4782 = vld [vmem:[#allocation8 + $0x114] sm:$0xf]
        %v4783 = vld [vmem:[#allocation8 + $0x118] sm:$0xf]
        %v4784 = vld [vmem:[#allocation8 + $0x11c] sm:$0xf]
        %v4785 = vld [vmem:[#allocation8 + $0x120] sm:$0xf]
        %v4786 = vld [vmem:[#allocation8 + $0x124] sm:$0xf]
        %v4787 = vld [vmem:[#allocation8 + $0x128] sm:$0xf]
        %v4788 = vld [vmem:[#allocation8 + $0x12c] sm:$0xf]
        %v4789 = vld [vmem:[#allocation8 + $0x130] sm:$0xf]
        %v4790 = vld [vmem:[#allocation8 + $0x134] sm:$0xf]
        %v4791 = vld [vmem:[#allocation8 + $0x138] sm:$0xf]
        %v4792 = vld [vmem:[#allocation8 + $0x13c] sm:$0xf]
        %v4793 = vld [vmem:[#allocation8 + $0x140] sm:$0xf]
        %v4794 = vld [vmem:[#allocation8 + $0x144] sm:$0xf]
        %v4795 = vld [vmem:[#allocation8 + $0x148] sm:$0xf]
        %v4796 = vld [vmem:[#allocation8 + $0x14c] sm:$0xf]
        %v4797 = vld [vmem:[#allocation8 + $0x150] sm:$0xf]
        %v4798 = vld [vmem:[#allocation8 + $0x154] sm:$0xf]
        %v4799 = vld [vmem:[#allocation8 + $0x158] sm:$0xf]
        %v4800 = vld [vmem:[#allocation8 + $0x15c] sm:$0xf]
        %v4801 = vld [vmem:[#allocation8 + $0x160] sm:$0xf]
        %v4802 = vld [vmem:[#allocation8 + $0x164] sm:$0xf]
        %v4803 = vld [vmem:[#allocation8 + $0x168] sm:$0xf]
        %v4804 = vld [vmem:[#allocation8 + $0x16c] sm:$0xf]
        %v4805 = vld [vmem:[#allocation8 + $0x170] sm:$0xf]
        %v4806 = vld [vmem:[#allocation8 + $0x174] sm:$0xf]
        %v4807 = vld [vmem:[#allocation8 + $0x178] sm:$0xf]
        %v4808 = vld [vmem:[#allocation8 + $0x17c] sm:$0xf]
        %v4841 = vunpack.c.l.b16 %v4777
        %v4842 = vunpack.c.l.b16 %v4778
        %v4843 = vunpack.c.l.b16 %v4779
        %v4844 = vunpack.c.l.b16 %v4780
        %v4845 = vunpack.c.l.b16 %v4781
        %v4846 = vunpack.c.l.b16 %v4782
        %v4847 = vunpack.c.l.b16 %v4783
        %v4848 = vunpack.c.l.b16 %v4784
        %v4849 = vunpack.c.l.b16 %v4785
        %v4850 = vunpack.c.l.b16 %v4786
        %v4851 = vunpack.c.l.b16 %v4787
        %v4852 = vunpack.c.l.b16 %v4788
        %v4853 = vunpack.c.l.b16 %v4789
        %v4854 = vunpack.c.l.b16 %v4790
        %v4855 = vunpack.c.l.b16 %v4791
        %v4856 = vunpack.c.l.b16 %v4792
        %v4857 = vunpack.c.l.b16 %v4793
        %v4858 = vunpack.c.l.b16 %v4794
        %v4859 = vunpack.c.l.b16 %v4795
        %v4860 = vunpack.c.l.b16 %v4796
        %v4861 = vunpack.c.l.b16 %v4797
        %v4862 = vunpack.c.l.b16 %v4798
        %v4863 = vunpack.c.l.b16 %v4799
        %v4864 = vunpack.c.l.b16 %v4800
        %v4865 = vunpack.c.l.b16 %v4801
        %v4866 = vunpack.c.l.b16 %v4802
        %v4867 = vunpack.c.l.b16 %v4803
        %v4868 = vunpack.c.l.b16 %v4804
        %v4869 = vunpack.c.l.b16 %v4805
        %v4870 = vunpack.c.l.b16 %v4806
        %v4871 = vunpack.c.l.b16 %v4807
        %v4872 = vunpack.c.l.b16 %v4808
        %v4873 = vpack.c.b16 %v4842, %v4841
        %v4874 = vpack.c.b16 %v4844, %v4843
        %v4875 = vpack.c.b16 %v4846, %v4845
        %v4876 = vpack.c.b16 %v4848, %v4847
        %v4877 = vpack.c.b16 %v4850, %v4849
        %v4878 = vpack.c.b16 %v4852, %v4851
        %v4879 = vpack.c.b16 %v4854, %v4853
        %v4880 = vpack.c.b16 %v4856, %v4855
        %v4881 = vpack.c.b16 %v4858, %v4857
        %v4882 = vpack.c.b16 %v4860, %v4859
        %v4883 = vpack.c.b16 %v4862, %v4861
        %v4884 = vpack.c.b16 %v4864, %v4863
        %v4885 = vpack.c.b16 %v4866, %v4865
        %v4886 = vpack.c.b16 %v4868, %v4867
        %v4887 = vpack.c.b16 %v4870, %v4869
        %v4888 = vpack.c.b16 %v4872, %v4871
        %4905 = vmatprep.subr.bf16.mxu0 0
        %4906 = vmatpush1.bf16.msra.mxu0 %v4880
        %4907 = vmatprep.subr.bf16.mxu0 0
        %4908 = vmatpush1.bf16.msra.mxu0 %v4879
        %4909 = vmatprep.subr.bf16.mxu0 0
        %4910 = vmatpush1.bf16.msra.mxu0 %v4878
        %4911 = vmatprep.subr.bf16.mxu0 0
        %4912 = vmatpush1.bf16.msra.mxu0 %v4877
        %4913 = vmatprep.subr.bf16.mxu0 0
        %4914 = vmatpush1.bf16.msra.mxu0 %v4876
        %4915 = vmatprep.subr.bf16.mxu0 0
        %4916 = vmatpush1.bf16.msra.mxu0 %v4875
        %4917 = vmatprep.subr.bf16.mxu0 0
        %4918 = vmatpush1.bf16.msra.mxu0 %v4874
        %4919 = vmatprep.subr.bf16.mxu0 0
        %4920 = vmatpush1.bf16.msra.mxu0 %v4873
        %4921 = vmatprep.subr.bf16.mxu0 0
        %4922 = vmatpush2.bf16.msra.mxu0 %v4888
        %4923 = vmatprep.subr.bf16.mxu0 0
        %4924 = vmatpush2.bf16.msra.mxu0 %v4887
        %4925 = vmatprep.subr.bf16.mxu0 0
        %4926 = vmatpush2.bf16.msra.mxu0 %v4886
        %4927 = vmatprep.subr.bf16.mxu0 0
        %4928 = vmatpush2.bf16.msra.mxu0 %v4885
        %4929 = vmatprep.subr.bf16.mxu0 0
        %4930 = vmatpush2.bf16.msra.mxu0 %v4884
        %4931 = vmatprep.subr.bf16.mxu0 0
        %4932 = vmatpush2.bf16.msra.mxu0 %v4883
        %4933 = vmatprep.subr.bf16.mxu0 0
        %4934 = vmatpush2.bf16.msra.mxu0 %v4882
        %4935 = vmatprep.subr.bf16.mxu0 0
        %4936 = vmatpush2.bf16.msra.mxu0 %v4881
        %4937 = vmatprep.mubr.bf16.mxu0 %v4771
        %4938 = vmatmul.mubr.bf16.gmra.mxu0 %v4756
        %v4939 = vpop.f32.mrf.mxu0
        %v4940 = vadd.f32 0.0, %v4939
        %v4941 = vpop.f32.mrf.mxu0
        %v4942 = vpop.f32.mrf.mxu0
        %v4943 = vadd.f32 0.0, %v4942
        %v4944 = vpop.f32.mrf.mxu0
        %4945 = vmatprep.mubr.bf16.mxu0 %v4774
        %4946 = vmatmul.mubr.bf16.gmra.mxu0 %v4757
        %v4947 = vpop.f32.mrf.mxu0
        %v4948 = vadd.f32 0.0, %v4947
        %v4949 = vpop.f32.mrf.mxu0
        %v4950 = vpop.f32.mrf.mxu0
        %v4951 = vadd.f32 0.0, %v4950
        %v4952 = vpop.f32.mrf.mxu0
        %4953 = vdwg.mxu0
        %v4954 = vadd.f32 %v4730, %v4940
        %v4955 = vadd.f32 %v4733, %v4943
        %v4956 = vadd.f32 %v4738, %v4948
        %v4957 = vadd.f32 %v4741, %v4951
        %v4958 = vld [vmem:[#allocation3 + $0xc] sm:$0x8]
        %v4959 = vld [vmem:[#allocation3 + $0x18] sm:$0xf]
        %v4962 = vunpack.c.l.b16 %v4958
        %v4963 = vunpack.c.l.b16 %v4959
        %v4964 = vpack.c.b16 %v4753, %v4962
        %v4965 = vpack.c.b16 %v4963, %v4754
        %v4967 = vshrl.u32 %v4964, 16
        %v4969 = vshll.u32 %v4964, 16
        %v4971 = vrot.slane %v4969, 1
        %v4972 = vor.u32 %v4967, %v4971
        %v4974 = vshll.u32 %v4965, 16
        %v4976 = vrot.slane %v4974, 1
        %v4977 = vsel %vm1010, %v4972, %v4976
        %v4978 = vshrl.u32 %v4965, 16
        %v4980 = vor.u32 %v4978, %v4976
        %v4981 = vld [vmem:[#allocation8 + $0x180] sm:$0xf]
        %v4982 = vld [vmem:[#allocation8 + $0x184] sm:$0xf]
        %v4983 = vld [vmem:[#allocation8 + $0x188] sm:$0xf]
        %v4984 = vld [vmem:[#allocation8 + $0x18c] sm:$0xf]
        %v4985 = vld [vmem:[#allocation8 + $0x190] sm:$0xf]
        %v4986 = vld [vmem:[#allocation8 + $0x194] sm:$0xf]
        %v4987 = vld [vmem:[#allocation8 + $0x198] sm:$0xf]
        %v4988 = vld [vmem:[#allocation8 + $0x19c] sm:$0xf]
        %v4989 = vld [vmem:[#allocation8 + $0x1a0] sm:$0xf]
        %v4990 = vld [vmem:[#allocation8 + $0x1a4] sm:$0xf]
        %v4991 = vld [vmem:[#allocation8 + $0x1a8] sm:$0xf]
        %v4992 = vld [vmem:[#allocation8 + $0x1ac] sm:$0xf]
        %v4993 = vld [vmem:[#allocation8 + $0x1b0] sm:$0xf]
        %v4994 = vld [vmem:[#allocation8 + $0x1b4] sm:$0xf]
        %v4995 = vld [vmem:[#allocation8 + $0x1b8] sm:$0xf]
        %v4996 = vld [vmem:[#allocation8 + $0x1bc] sm:$0xf]
        %v4997 = vld [vmem:[#allocation8 + $0x1c0] sm:$0xf]
        %v4998 = vld [vmem:[#allocation8 + $0x1c4] sm:$0xf]
        %v4999 = vld [vmem:[#allocation8 + $0x1c8] sm:$0xf]
        %v5000 = vld [vmem:[#allocation8 + $0x1cc] sm:$0xf]
        %v5001 = vld [vmem:[#allocation8 + $0x1d0] sm:$0xf]
        %v5002 = vld [vmem:[#allocation8 + $0x1d4] sm:$0xf]
        %v5003 = vld [vmem:[#allocation8 + $0x1d8] sm:$0xf]
        %v5004 = vld [vmem:[#allocation8 + $0x1dc] sm:$0xf]
        %v5005 = vld [vmem:[#allocation8 + $0x1e0] sm:$0xf]
        %v5006 = vld [vmem:[#allocation8 + $0x1e4] sm:$0xf]
        %v5007 = vld [vmem:[#allocation8 + $0x1e8] sm:$0xf]
        %v5008 = vld [vmem:[#allocation8 + $0x1ec] sm:$0xf]
        %v5009 = vld [vmem:[#allocation8 + $0x1f0] sm:$0xf]
        %v5010 = vld [vmem:[#allocation8 + $0x1f4] sm:$0xf]
        %v5011 = vld [vmem:[#allocation8 + $0x1f8] sm:$0xf]
        %v5012 = vld [vmem:[#allocation8 + $0x1fc] sm:$0xf]
        %v5013 = vrot.slane %v4964, 3
        %v5014 = vrot.slane %v4965, 3
        %v5015 = vsel %vm2046, %v5013, %v5014
        %v5016 = vrot.slane %v4977, 3
        %v5017 = vrot.slane %v4980, 3
        %v5018 = vsel %vm2046, %v5016, %v5017
        %v5055 = vunpack.c.l.b16 %v4981
        %v5056 = vunpack.c.l.b16 %v4982
        %v5057 = vunpack.c.l.b16 %v4983
        %v5058 = vunpack.c.l.b16 %v4984
        %v5059 = vunpack.c.l.b16 %v4985
        %v5060 = vunpack.c.l.b16 %v4986
        %v5061 = vunpack.c.l.b16 %v4987
        %v5062 = vunpack.c.l.b16 %v4988
        %v5063 = vunpack.c.l.b16 %v4989
        %v5064 = vunpack.c.l.b16 %v4990
        %v5065 = vunpack.c.l.b16 %v4991
        %v5066 = vunpack.c.l.b16 %v4992
        %v5067 = vunpack.c.l.b16 %v4993
        %v5068 = vunpack.c.l.b16 %v4994
        %v5069 = vunpack.c.l.b16 %v4995
        %v5070 = vunpack.c.l.b16 %v4996
        %v5071 = vunpack.c.l.b16 %v4997
        %v5072 = vunpack.c.l.b16 %v4998
        %v5073 = vunpack.c.l.b16 %v4999
        %v5074 = vunpack.c.l.b16 %v5000
        %v5075 = vunpack.c.l.b16 %v5001
        %v5076 = vunpack.c.l.b16 %v5002
        %v5077 = vunpack.c.l.b16 %v5003
        %v5078 = vunpack.c.l.b16 %v5004
        %v5079 = vunpack.c.l.b16 %v5005
        %v5080 = vunpack.c.l.b16 %v5006
        %v5081 = vunpack.c.l.b16 %v5007
        %v5082 = vunpack.c.l.b16 %v5008
        %v5083 = vunpack.c.l.b16 %v5009
        %v5084 = vunpack.c.l.b16 %v5010
        %v5085 = vunpack.c.l.b16 %v5011
        %v5086 = vunpack.c.l.b16 %v5012
        %v5087 = vpack.c.b16 %v5056, %v5055
        %v5088 = vpack.c.b16 %v5058, %v5057
        %v5089 = vpack.c.b16 %v5060, %v5059
        %v5090 = vpack.c.b16 %v5062, %v5061
        %v5091 = vpack.c.b16 %v5064, %v5063
        %v5092 = vpack.c.b16 %v5066, %v5065
        %v5093 = vpack.c.b16 %v5068, %v5067
        %v5094 = vpack.c.b16 %v5070, %v5069
        %v5095 = vpack.c.b16 %v5072, %v5071
        %v5096 = vpack.c.b16 %v5074, %v5073
        %v5097 = vpack.c.b16 %v5076, %v5075
        %v5098 = vpack.c.b16 %v5078, %v5077
        %v5099 = vpack.c.b16 %v5080, %v5079
        %v5100 = vpack.c.b16 %v5082, %v5081
        %v5101 = vpack.c.b16 %v5084, %v5083
        %v5102 = vpack.c.b16 %v5086, %v5085
        %5119 = vmatprep.subr.bf16.mxu0 0
        %5120 = vmatpush1.bf16.msra.mxu0 %v5094
        %5121 = vmatprep.subr.bf16.mxu0 0
        %5122 = vmatpush1.bf16.msra.mxu0 %v5093
        %5123 = vmatprep.subr.bf16.mxu0 0
        %5124 = vmatpush1.bf16.msra.mxu0 %v5092
        %5125 = vmatprep.subr.bf16.mxu0 0
        %5126 = vmatpush1.bf16.msra.mxu0 %v5091
        %5127 = vmatprep.subr.bf16.mxu0 0
        %5128 = vmatpush1.bf16.msra.mxu0 %v5090
        %5129 = vmatprep.subr.bf16.mxu0 0
        %5130 = vmatpush1.bf16.msra.mxu0 %v5089
        %5131 = vmatprep.subr.bf16.mxu0 0
        %5132 = vmatpush1.bf16.msra.mxu0 %v5088
        %5133 = vmatprep.subr.bf16.mxu0 0
        %5134 = vmatpush1.bf16.msra.mxu0 %v5087
        %5135 = vmatprep.subr.bf16.mxu0 0
        %5136 = vmatpush2.bf16.msra.mxu0 %v5102
        %5137 = vmatprep.subr.bf16.mxu0 0
        %5138 = vmatpush2.bf16.msra.mxu0 %v5101
        %5139 = vmatprep.subr.bf16.mxu0 0
        %5140 = vmatpush2.bf16.msra.mxu0 %v5100
        %5141 = vmatprep.subr.bf16.mxu0 0
        %5142 = vmatpush2.bf16.msra.mxu0 %v5099
        %5143 = vmatprep.subr.bf16.mxu0 0
        %5144 = vmatpush2.bf16.msra.mxu0 %v5098
        %5145 = vmatprep.subr.bf16.mxu0 0
        %5146 = vmatpush2.bf16.msra.mxu0 %v5097
        %5147 = vmatprep.subr.bf16.mxu0 0
        %5148 = vmatpush2.bf16.msra.mxu0 %v5096
        %5149 = vmatprep.subr.bf16.mxu0 0
        %5150 = vmatpush2.bf16.msra.mxu0 %v5095
        %5151 = vmatprep.mubr.bf16.mxu0 %v5018
        %5152 = vmatmul.mubr.bf16.gmra.mxu0 %v5015
        %v5153 = vpop.f32.mrf.mxu0
        %v5154 = vadd.f32 0.0, %v5153
        %v5155 = vpop.f32.mrf.mxu0
        %v5156 = vpop.f32.mrf.mxu0
        %v5157 = vadd.f32 0.0, %v5156
        %v5158 = vpop.f32.mrf.mxu0
        %5159 = vmatprep.mubr.bf16.mxu0 %v5017
        %5160 = vmatmul.mubr.bf16.gmra.mxu0 %v5014
        %v5161 = vpop.f32.mrf.mxu0
        %v5162 = vadd.f32 0.0, %v5161
        %v5163 = vpop.f32.mrf.mxu0
        %v5164 = vpop.f32.mrf.mxu0
        %v5165 = vadd.f32 0.0, %v5164
        %v5166 = vpop.f32.mrf.mxu0
        %5167 = vdwg.mxu0
        %v5168 = vadd.f32 %v4954, %v5154
        %v5169 = vadd.f32 %v4955, %v5157
        %v5170 = vadd.f32 %v4956, %v5162
        %v5171 = vadd.f32 %v4957, %v5165
        %v5172 = vld [vmem:[#allocation3 + $0x10] sm:$0xf]
        %v5173 = vld [vmem:[#allocation3 + $0x14] sm:$0xf]
        %v5174 = vld [vmem:[#allocation3 + $0x18] sm:$0xf]
        %v5175 = vld [vmem:[#allocation3 + $0x1c] sm:$0x1]
        %v5176 = vld [vmem:[#allocation8 + $0x200] sm:$0xf]
        %v5177 = vld [vmem:[#allocation8 + $0x204] sm:$0xf]
        %v5178 = vld [vmem:[#allocation8 + $0x208] sm:$0xf]
        %v5179 = vld [vmem:[#allocation8 + $0x20c] sm:$0xf]
        %v5180 = vld [vmem:[#allocation8 + $0x210] sm:$0xf]
        %v5181 = vld [vmem:[#allocation8 + $0x214] sm:$0xf]
        %v5182 = vld [vmem:[#allocation8 + $0x218] sm:$0xf]
        %v5183 = vld [vmem:[#allocation8 + $0x21c] sm:$0xf]
        %v5184 = vld [vmem:[#allocation8 + $0x220] sm:$0xf]
        %v5185 = vld [vmem:[#allocation8 + $0x224] sm:$0xf]
        %v5186 = vld [vmem:[#allocation8 + $0x228] sm:$0xf]
        %v5187 = vld [vmem:[#allocation8 + $0x22c] sm:$0xf]
        %v5188 = vld [vmem:[#allocation8 + $0x230] sm:$0xf]
        %v5189 = vld [vmem:[#allocation8 + $0x234] sm:$0xf]
        %v5190 = vld [vmem:[#allocation8 + $0x238] sm:$0xf]
        %v5191 = vld [vmem:[#allocation8 + $0x23c] sm:$0xf]
        %v5196 = vunpack.c.l.b16 %v5172
        %v5197 = vunpack.c.l.b16 %v5173
        %v5198 = vunpack.c.l.b16 %v5174
        %v5199 = vunpack.c.l.b16 %v5175
        %v5200 = vpack.c.b16 %v5197, %v5196
        %v5201 = vpack.c.b16 %v5199, %v5198
        %v5220 = vunpack.c.l.b16 %v5176
        %v5221 = vunpack.c.l.b16 %v5177
        %v5222 = vunpack.c.l.b16 %v5178
        %v5223 = vunpack.c.l.b16 %v5179
        %v5224 = vunpack.c.l.b16 %v5180
        %v5225 = vunpack.c.l.b16 %v5181
        %v5226 = vunpack.c.l.b16 %v5182
        %v5227 = vunpack.c.l.b16 %v5183
        %v5228 = vunpack.c.l.b16 %v5184
        %v5229 = vunpack.c.l.b16 %v5185
        %v5230 = vunpack.c.l.b16 %v5186
        %v5231 = vunpack.c.l.b16 %v5187
        %v5232 = vunpack.c.l.b16 %v5188
        %v5233 = vunpack.c.l.b16 %v5189
        %v5234 = vunpack.c.l.b16 %v5190
        %v5235 = vunpack.c.l.b16 %v5191
        %v5236 = vpack.c.b16 %v5221, %v5220
        %v5237 = vpack.c.b16 %v5223, %v5222
        %v5238 = vpack.c.b16 %v5225, %v5224
        %v5239 = vpack.c.b16 %v5227, %v5226
        %v5240 = vpack.c.b16 %v5229, %v5228
        %v5241 = vpack.c.b16 %v5231, %v5230
        %v5242 = vpack.c.b16 %v5233, %v5232
        %v5243 = vpack.c.b16 %v5235, %v5234
        %5252 = vmatprep.subr.bf16.mxu0 0
        %5253 = vmatpush1.bf16.msra.mxu0 %v5243
        %5254 = vmatprep.subr.bf16.mxu0 0
        %5255 = vmatpush1.bf16.msra.mxu0 %v5242
        %5256 = vmatprep.subr.bf16.mxu0 0
        %5257 = vmatpush1.bf16.msra.mxu0 %v5241
        %5258 = vmatprep.subr.bf16.mxu0 0
        %5259 = vmatpush1.bf16.msra.mxu0 %v5240
        %5260 = vmatprep.subr.bf16.mxu0 0
        %5261 = vmatpush1.bf16.msra.mxu0 %v5239
        %5262 = vmatprep.subr.bf16.mxu0 0
        %5263 = vmatpush1.bf16.msra.mxu0 %v5238
        %5264 = vmatprep.subr.bf16.mxu0 0
        %5265 = vmatpush1.bf16.msra.mxu0 %v5237
        %5266 = vmatprep.subr.bf16.mxu0 0
        %5267 = vmatpush1.bf16.msra.mxu0 %v5236
        %5268 = vmatprep.subr.bf16.mxu0 0
        %5269 = vmatpush2.bf16.msra.mxu0 0
        %5270 = vmatprep.subr.bf16.mxu0 0
        %5271 = vmatpush2.bf16.msra.mxu0 0
        %5272 = vmatprep.subr.bf16.mxu0 0
        %5273 = vmatpush2.bf16.msra.mxu0 0
        %5274 = vmatprep.subr.bf16.mxu0 0
        %5275 = vmatpush2.bf16.msra.mxu0 0
        %5276 = vmatprep.subr.bf16.mxu0 0
        %5277 = vmatpush2.bf16.msra.mxu0 0
        %5278 = vmatprep.subr.bf16.mxu0 0
        %5279 = vmatpush2.bf16.msra.mxu0 0
        %5280 = vmatprep.subr.bf16.mxu0 0
        %5281 = vmatpush2.bf16.msra.mxu0 0
        %5282 = vmatprep.subr.bf16.mxu0 0
        %5283 = vmatpush2.bf16.msra.mxu0 0
        %5284 = vmatprep.mubr.bf16.mxu0 0
        %5285 = vmatmul.mubr.bf16.gmra.mxu0 %v5200
        %v5286 = vpop.f32.mrf.mxu0
        %v5287 = vadd.f32 0.0, %v5286
        %v5288 = vpop.f32.mrf.mxu0
        %v5289 = vpop.f32.mrf.mxu0
        %v5290 = vadd.f32 0.0, %v5289
        %v5291 = vpop.f32.mrf.mxu0
        %5292 = vmatprep.mubr.bf16.mxu0 0
        %5293 = vmatmul.mubr.bf16.gmra.mxu0 %v5201
        %v5294 = vpop.f32.mrf.mxu0
        %v5295 = vadd.f32 0.0, %v5294
        %v5296 = vpop.f32.mrf.mxu0
        %v5297 = vpop.f32.mrf.mxu0
        %v5298 = vadd.f32 0.0, %v5297
        %v5299 = vpop.f32.mrf.mxu0
        %5300 = vdwg.mxu0
        %v5301 = vadd.f32 %v5168, %v5287
        %v5302 = vadd.f32 %v5169, %v5290
        %v5303 = vadd.f32 %v5170, %v5295
        %v5304 = vadd.f32 %v5171, %v5298
        %v5305 = vld [vmem:[%s25] sm:$0x1]
        %v5307 = vlaneseq
        %v5308 = vshrl.u32 %v5307, 7
        %v5309 = vsub.s32 0, %v5308
        %v5310 = vrot.slane %v5305, %v5309
        %v5312 = vadd.f32 %v5301, %v5310
        %v5313 = vadd.f32 %v5302, %v5310
        %v5314 = vadd.f32 %v5303, %v5310
        %v5315 = vadd.f32 %v5304, %v5310
        %vm5316 = vcmp.ge.f32.partialorder %v5312, 0.0
        %vm5317 = vcmp.ge.f32.partialorder %v5313, 0.0
        %vm5318 = vcmp.ge.f32.partialorder %v5314, 0.0
        %vm5319 = vcmp.ge.f32.partialorder %v5315, 0.0
        %v5320 = vmul.f32 %v5312, 0.1
        %v5321 = vmul.f32 %v5313, 0.1
        %v5322 = vmul.f32 %v5314, 0.1
        %v5323 = vmul.f32 %v5315, 0.1
        %v5324 = vsel %vm5316, %v5312, %v5320
        %v5325 = vsel %vm5317, %v5313, %v5321
        %v5326 = vsel %vm5318, %v5314, %v5322
        %v5327 = vsel %vm5319, %v5315, %v5323
        %5328 = vst [vmem:[#allocation4 + $0x18] sm:$0xff] %v5324
        %5329 = vst [vmem:[#allocation4 + $0x20] sm:$0xff] %v5325
        %5330 = vst [vmem:[#allocation4 + $0x28] sm:$0xff] %v5326
        %5331 = vst [vmem:[#allocation4 + $0x30] sm:$0x1] %v5327
        %s5332 = scalar_lea.vmem [#allocation4], 24
        %v5333 = vld [vmem:[%s5332] ss:$2 sm:$0x3]
        %s5334 = scalar_lea.vmem [#allocation4], 25
        %v5335 = vld [vmem:[%s5334] ss:$2 sm:$0x3]
        %s5336 = scalar_lea.vmem [#allocation4], 31
        %v5337 = vld [vmem:[%s5336] ss:$2 sm:$0x3]
        %s5338 = scalar_lea.vmem [#allocation4], 32
        %v5339 = vld [vmem:[%s5338] ss:$2 sm:$0x3]
        %v5340 = vmax.f32 %v5333, %v5335
        %v5341 = vmax.f32 %v5337, %v5339
        %v5342 = vmax.f32 %v5340, %v5341
        %v5343 = vpack.c.bf16 %v5342, %v5342
        %v5345 = vunpack.c.l.b16 %v5343
        %v5346 = vpack.c.b16 %v5345, %v5345
        %v5347 = vrot.slane %v5346, 7
        %5349 = vst [vmem:[#allocation5 + $0x8] sm:$0x2] %v5347
        %s5350 = scalar_lea.vmem [#allocation4], 38
        %v5351 = vld [vmem:[%s5350] ss:$2 sm:$0x3]
        %s5352 = scalar_lea.vmem [#allocation4], 39
        %v5353 = vld [vmem:[%s5352] ss:$2 sm:$0x3]
        %s5354 = scalar_lea.vmem [#allocation4], 45
        %v5355 = vld [vmem:[%s5354] ss:$2 sm:$0x3]
        %s5356 = scalar_lea.vmem [#allocation4], 46
        %v5357 = vld [vmem:[%s5356] ss:$2 sm:$0x3]
        %v5358 = vmax.f32 %v5351, %v5353
        %v5359 = vmax.f32 %v5355, %v5357
        %v5360 = vmax.f32 %v5358, %v5359
        %v5361 = vpack.c.bf16 %v5360, %v5360
        %v5363 = vunpack.c.l.b16 %v5361
        %v5364 = vpack.c.b16 %v5363, %v5363
        %v5366 = vshll.u32 %v5364, 16
        %v5368 = vrot.slane %v5366, 5
        %v5369 = vshrl.u32 %v5364, 16
        %v5371 = vrot.slane %v5369, 4
        %v5372 = vrot.slane %v5371, 4
        %v5375 = vld [vmem:[#allocation5 + $0x8] sm:$0x8]
        %v5376 = vsel %vm2541, %v5368, %v5375
        %5377 = vst [vmem:[#allocation5 + $0x8] sm:$0x8] %v5376
        %v5378 = vld [vmem:[#allocation5 + $0xc] sm:$0x1]
        %v5379 = vsel %vm2606, %v5372, %v5378
        %5380 = vst [vmem:[#allocation5 + $0xc] sm:$0x1] %v5379
        %v5381 = vld [vmem:[#allocation5 + $0x8] sm:$0xe]
        %v5382 = vld [vmem:[#allocation5 + $0xc] sm:$0x1]
        %v5383 = vunpack.c.l.bf16 %v5381
        %v5384 = vunpack.c.l.bf16 %v5382
        %v5385 = vsel %vm3170, 1.0, 0.0
        %v5387 = vrot.slane %v5385, 3
        %v5389 = vsel %vm2631, %v5385, %v5387
        %v5392 = vrot.slane %v5383, 2
        %v5393 = vrot.slane %v5384, 2
        %v5394 = vsel %vm2629, %v5392, %v5393
        %v5396 = vsel %vm2627, %v5394, 0.0
        %v5397 = vrot.slane %v5396, 4
        %v5398 = vadd.f32 %v5396, %v5397
        %v5399 = vrot.slane %v5398, 2
        %v5400 = vadd.f32 %v5398, %v5399
        %v5401 = vrot.slane %v5400, 1
        %v5402 = vadd.f32 %v5400, %v5401
        %v5403 = vmul.f32 %v5402, 0.25
        %vm5404 = vcmp.gt.f32.partialorder %v5389, 0.0
        %v5405 = vsel %vm5404, 1, 0
        %5406 = vset.pattern.permute.xlu0 0
        %5407 = vperm.xlu0 %5406, %v5405
        %v5408 = vpop.permute.xlu0 %5407
        %vm5409 = vcmp.eq.s32.totalorder %v5408, 1
        %v5410 = vsel %vm5409, %v5394, -3e+38
        %v5411 = vsel %vm2627, %v5410, -inf
        %v5412 = vrot.slane %v5411, 4
        %v5413 = vmax.f32 %v5411, %v5412
        %v5414 = vrot.slane %v5413, 2
        %v5415 = vmax.f32 %v5413, %v5414
        %v5416 = vrot.slane %v5415, 1
        %v5417 = vmax.f32 %v5415, %v5416
        %v5418 = vld [vmem:[%s27] sm:$0xff]
        %v5419 = vld [vmem:[%s27 + $0x8] sm:$0xff]
        %v5420 = vld [vmem:[%s27 + $0x10] sm:$0xff]
        %v5421 = vld [vmem:[%s27 + $0x18] sm:$0xff]
        %v5422 = vld [vmem:[%s27 + $0x20] sm:$0xff]
        %v5423 = vld [vmem:[%s27 + $0x28] sm:$0xff]
        %v5424 = vld [vmem:[%s27 + $0x30] sm:$0xff]
        %v5425 = vld [vmem:[%s27 + $0x38] sm:$0xff]
        %v5426 = vld [vmem:[%s27 + $0x40] sm:$0xff]
        %v5427 = vld [vmem:[%s27 + $0x48] sm:$0xff]
        %v5428 = vld [vmem:[%s27 + $0x50] sm:$0xff]
        %v5429 = vld [vmem:[%s27 + $0x58] sm:$0xff]
        %v5430 = vld [vmem:[%s27 + $0x60] sm:$0xff]
        %v5431 = vld [vmem:[%s27 + $0x68] sm:$0xff]
        %v5432 = vld [vmem:[%s27 + $0x70] sm:$0xff]
        %v5433 = vld [vmem:[%s27 + $0x78] sm:$0xff]
        %v5434 = vld [vmem:[%s29] sm:$0x1]
        %5435 = vmatprep.subr.mxu0 0.0
        %5436 = vmatpush1.msra.mxu0 %v5433
        %5437 = vmatprep.subr.mxu0 0.0
        %5438 = vmatpush1.msra.mxu0 %v5432
        %5439 = vmatprep.subr.mxu0 0.0
        %5440 = vmatpush1.msra.mxu0 %v5431
        %5441 = vmatprep.subr.mxu0 0.0
        %5442 = vmatpush1.msra.mxu0 %v5430
        %5443 = vmatprep.subr.mxu0 0.0
        %5444 = vmatpush1.msra.mxu0 %v5429
        %5445 = vmatprep.subr.mxu0 0.0
        %5446 = vmatpush1.msra.mxu0 %v5428
        %5447 = vmatprep.subr.mxu0 0.0
        %5448 = vmatpush1.msra.mxu0 %v5427
        %5449 = vmatprep.subr.mxu0 0.0
        %5450 = vmatpush1.msra.mxu0 %v5426
        %5451 = vmatprep.subr.mxu0 0.0
        %5452 = vmatpush1.msra.mxu0 %v5425
        %5453 = vmatprep.subr.mxu0 0.0
        %5454 = vmatpush1.msra.mxu0 %v5424
        %5455 = vmatprep.subr.mxu0 0.0
        %5456 = vmatpush1.msra.mxu0 %v5423
        %5457 = vmatprep.subr.mxu0 0.0
        %5458 = vmatpush1.msra.mxu0 %v5422
        %5459 = vmatprep.subr.mxu0 0.0
        %5460 = vmatpush1.msra.mxu0 %v5421
        %5461 = vmatprep.subr.mxu0 0.0
        %5462 = vmatpush1.msra.mxu0 %v5420
        %5463 = vmatprep.subr.mxu0 0.0
        %5464 = vmatpush1.msra.mxu0 %v5419
        %5465 = vmatprep.subr.mxu0 0.0
        %5466 = vmatpush1.msra.mxu0 %v5418
        %5467 = vmatprep.subr.mxu0 0.0
        %5468 = vmatpush2.msra.mxu0 0.0
        %5469 = vmatprep.subr.mxu0 0.0
        %5470 = vmatpush2.msra.mxu0 0.0
        %5471 = vmatprep.subr.mxu0 0.0
        %5472 = vmatpush2.msra.mxu0 0.0
        %5473 = vmatprep.subr.mxu0 0.0
        %5474 = vmatpush2.msra.mxu0 0.0
        %5475 = vmatprep.subr.mxu0 0.0
        %5476 = vmatpush2.msra.mxu0 0.0
        %5477 = vmatprep.subr.mxu0 0.0
        %5478 = vmatpush2.msra.mxu0 0.0
        %5479 = vmatprep.subr.mxu0 0.0
        %5480 = vmatpush2.msra.mxu0 0.0
        %5481 = vmatprep.subr.mxu0 0.0
        %5482 = vmatpush2.msra.mxu0 0.0
        %5483 = vmatprep.subr.mxu0 0.0
        %5484 = vmatpush2.msra.mxu0 0.0
        %5485 = vmatprep.subr.mxu0 0.0
        %5486 = vmatpush2.msra.mxu0 0.0
        %5487 = vmatprep.subr.mxu0 0.0
        %5488 = vmatpush2.msra.mxu0 0.0
        %5489 = vmatprep.subr.mxu0 0.0
        %5490 = vmatpush2.msra.mxu0 0.0
        %5491 = vmatprep.subr.mxu0 0.0
        %5492 = vmatpush2.msra.mxu0 0.0
        %5493 = vmatprep.subr.mxu0 0.0
        %5494 = vmatpush2.msra.mxu0 0.0
        %5495 = vmatprep.subr.mxu0 0.0
        %5496 = vmatpush2.msra.mxu0 0.0
        %5497 = vmatprep.subr.mxu0 0.0
        %5498 = vmatpush2.msra.mxu0 0.0
        %5499 = vmatprep.mubr.f32.mxu0 0.0
        %5500 = vmatmul.mubr.f32.gmra.mxu0 %v5403
        %v5501 = vpop.f32.mrf.mxu0
        %v5502 = vadd.f32 %v5434, %v5501
        %v5503 = vpop.f32.mrf.mxu0
        %5504 = vdwg.mxu0
        %v5505 = vmax.f32 %v5502, 0.0
        %v5506 = vld [vmem:[%s31] sm:$0xff]
        %v5507 = vld [vmem:[%s33] sm:$0x1]
        %v5509 = vsel %vm3050, %v5505, 0
        %5511 = vmatprep.subr.mxu0 0.0
        %5512 = vmatpush1.msra.mxu0 0.0
        %5513 = vmatprep.subr.mxu0 0.0
        %5514 = vmatpush1.msra.mxu0 0.0
        %5515 = vmatprep.subr.mxu0 0.0
        %5516 = vmatpush1.msra.mxu0 0.0
        %5517 = vmatprep.subr.mxu0 0.0
        %5518 = vmatpush1.msra.mxu0 0.0
        %5519 = vmatprep.subr.mxu0 0.0
        %5520 = vmatpush1.msra.mxu0 0.0
        %5521 = vmatprep.subr.mxu0 0.0
        %5522 = vmatpush1.msra.mxu0 0.0
        %5523 = vmatprep.subr.mxu0 0.0
        %5524 = vmatpush1.msra.mxu0 0.0
        %5525 = vmatprep.subr.mxu0 0.0
        %5526 = vmatpush1.msra.mxu0 0.0
        %5527 = vmatprep.subr.mxu0 0.0
        %5528 = vmatpush1.msra.mxu0 0.0
        %5529 = vmatprep.subr.mxu0 0.0
        %5530 = vmatpush1.msra.mxu0 0.0
        %5531 = vmatprep.subr.mxu0 0.0
        %5532 = vmatpush1.msra.mxu0 0.0
        %5533 = vmatprep.subr.mxu0 0.0
        %5534 = vmatpush1.msra.mxu0 0.0
        %5535 = vmatprep.subr.mxu0 0.0
        %5536 = vmatpush1.msra.mxu0 0.0
        %5537 = vmatprep.subr.mxu0 0.0
        %5538 = vmatpush1.msra.mxu0 0.0
        %5539 = vmatprep.subr.mxu0 0.0
        %5540 = vmatpush1.msra.mxu0 0.0
        %5541 = vmatprep.subr.mxu0 0.0
        %5542 = vmatpush1.msra.mxu0 %v5506
        %5543 = vmatprep.subr.mxu0 0.0
        %5544 = vmatpush2.msra.mxu0 0.0
        %5545 = vmatprep.subr.mxu0 0.0
        %5546 = vmatpush2.msra.mxu0 0.0
        %5547 = vmatprep.subr.mxu0 0.0
        %5548 = vmatpush2.msra.mxu0 0.0
        %5549 = vmatprep.subr.mxu0 0.0
        %5550 = vmatpush2.msra.mxu0 0.0
        %5551 = vmatprep.subr.mxu0 0.0
        %5552 = vmatpush2.msra.mxu0 0.0
        %5553 = vmatprep.subr.mxu0 0.0
        %5554 = vmatpush2.msra.mxu0 0.0
        %5555 = vmatprep.subr.mxu0 0.0
        %5556 = vmatpush2.msra.mxu0 0.0
        %5557 = vmatprep.subr.mxu0 0.0
        %5558 = vmatpush2.msra.mxu0 0.0
        %5559 = vmatprep.subr.mxu0 0.0
        %5560 = vmatpush2.msra.mxu0 0.0
        %5561 = vmatprep.subr.mxu0 0.0
        %5562 = vmatpush2.msra.mxu0 0.0
        %5563 = vmatprep.subr.mxu0 0.0
        %5564 = vmatpush2.msra.mxu0 0.0
        %5565 = vmatprep.subr.mxu0 0.0
        %5566 = vmatpush2.msra.mxu0 0.0
        %5567 = vmatprep.subr.mxu0 0.0
        %5568 = vmatpush2.msra.mxu0 0.0
        %5569 = vmatprep.subr.mxu0 0.0
        %5570 = vmatpush2.msra.mxu0 0.0
        %5571 = vmatprep.subr.mxu0 0.0
        %5572 = vmatpush2.msra.mxu0 0.0
        %5573 = vmatprep.subr.mxu0 0.0
        %5574 = vmatpush2.msra.mxu0 0.0
        %5575 = vmatprep.mubr.f32.mxu0 0.0
        %5576 = vmatmul.mubr.f32.gmra.mxu0 %v5509
        %v5577 = vpop.f32.mrf.mxu0
        %v5578 = vadd.f32 %v5507, %v5577
        %v5579 = vpop.f32.mrf.mxu0
        %5580 = vdwg.mxu0
        %v5581 = vxor.u32 %v5578, 2147483648
        %v5582 = vmul.f32 %v5581, 1.442695
        %v5583 = vpow.pop %v5582
        %v5584 = vadd.f32 %v5583, 1.0
        %v5585 = vrcp.pop %v5584
        %v5586 = vmul.f32 1.0, %v5585
        %5587 = vmatprep.subr.mxu0 0.0
        %5588 = vmatpush1.msra.mxu0 %v5433
        %5589 = vmatprep.subr.mxu0 0.0
        %5590 = vmatpush1.msra.mxu0 %v5432
        %5591 = vmatprep.subr.mxu0 0.0
        %5592 = vmatpush1.msra.mxu0 %v5431
        %5593 = vmatprep.subr.mxu0 0.0
        %5594 = vmatpush1.msra.mxu0 %v5430
        %5595 = vmatprep.subr.mxu0 0.0
        %5596 = vmatpush1.msra.mxu0 %v5429
        %5597 = vmatprep.subr.mxu0 0.0
        %5598 = vmatpush1.msra.mxu0 %v5428
        %5599 = vmatprep.subr.mxu0 0.0
        %5600 = vmatpush1.msra.mxu0 %v5427
        %5601 = vmatprep.subr.mxu0 0.0
        %5602 = vmatpush1.msra.mxu0 %v5426
        %5603 = vmatprep.subr.mxu0 0.0
        %5604 = vmatpush1.msra.mxu0 %v5425
        %5605 = vmatprep.subr.mxu0 0.0
        %5606 = vmatpush1.msra.mxu0 %v5424
        %5607 = vmatprep.subr.mxu0 0.0
        %5608 = vmatpush1.msra.mxu0 %v5423
        %5609 = vmatprep.subr.mxu0 0.0
        %5610 = vmatpush1.msra.mxu0 %v5422
        %5611 = vmatprep.subr.mxu0 0.0
        %5612 = vmatpush1.msra.mxu0 %v5421
        %5613 = vmatprep.subr.mxu0 0.0
        %5614 = vmatpush1.msra.mxu0 %v5420
        %5615 = vmatprep.subr.mxu0 0.0
        %5616 = vmatpush1.msra.mxu0 %v5419
        %5617 = vmatprep.subr.mxu0 0.0
        %5618 = vmatpush1.msra.mxu0 %v5418
        %5619 = vmatprep.subr.mxu0 0.0
        %5620 = vmatpush2.msra.mxu0 0.0
        %5621 = vmatprep.subr.mxu0 0.0
        %5622 = vmatpush2.msra.mxu0 0.0
        %5623 = vmatprep.subr.mxu0 0.0
        %5624 = vmatpush2.msra.mxu0 0.0
        %5625 = vmatprep.subr.mxu0 0.0
        %5626 = vmatpush2.msra.mxu0 0.0
        %5627 = vmatprep.subr.mxu0 0.0
        %5628 = vmatpush2.msra.mxu0 0.0
        %5629 = vmatprep.subr.mxu0 0.0
        %5630 = vmatpush2.msra.mxu0 0.0
        %5631 = vmatprep.subr.mxu0 0.0
        %5632 = vmatpush2.msra.mxu0 0.0
        %5633 = vmatprep.subr.mxu0 0.0
        %5634 = vmatpush2.msra.mxu0 0.0
        %5635 = vmatprep.subr.mxu0 0.0
        %5636 = vmatpush2.msra.mxu0 0.0
        %5637 = vmatprep.subr.mxu0 0.0
        %5638 = vmatpush2.msra.mxu0 0.0
        %5639 = vmatprep.subr.mxu0 0.0
        %5640 = vmatpush2.msra.mxu0 0.0
        %5641 = vmatprep.subr.mxu0 0.0
        %5642 = vmatpush2.msra.mxu0 0.0
        %5643 = vmatprep.subr.mxu0 0.0
        %5644 = vmatpush2.msra.mxu0 0.0
        %5645 = vmatprep.subr.mxu0 0.0
        %5646 = vmatpush2.msra.mxu0 0.0
        %5647 = vmatprep.subr.mxu0 0.0
        %5648 = vmatpush2.msra.mxu0 0.0
        %5649 = vmatprep.subr.mxu0 0.0
        %5650 = vmatpush2.msra.mxu0 0.0
        %5651 = vmatprep.mubr.f32.mxu0 0.0
        %5652 = vmatmul.mubr.f32.gmra.mxu0 %v5417
        %v5653 = vpop.f32.mrf.mxu0
        %v5654 = vadd.f32 %v5434, %v5653
        %v5655 = vpop.f32.mrf.mxu0
        %5656 = vdwg.mxu0
        %v5657 = vmax.f32 %v5654, 0.0
        %v5659 = vsel %vm3050, %v5657, 0
        %5661 = vmatprep.subr.mxu0 0.0
        %5662 = vmatpush1.msra.mxu0 0.0
        %5663 = vmatprep.subr.mxu0 0.0
        %5664 = vmatpush1.msra.mxu0 0.0
        %5665 = vmatprep.subr.mxu0 0.0
        %5666 = vmatpush1.msra.mxu0 0.0
        %5667 = vmatprep.subr.mxu0 0.0
        %5668 = vmatpush1.msra.mxu0 0.0
        %5669 = vmatprep.subr.mxu0 0.0
        %5670 = vmatpush1.msra.mxu0 0.0
        %5671 = vmatprep.subr.mxu0 0.0
        %5672 = vmatpush1.msra.mxu0 0.0
        %5673 = vmatprep.subr.mxu0 0.0
        %5674 = vmatpush1.msra.mxu0 0.0
        %5675 = vmatprep.subr.mxu0 0.0
        %5676 = vmatpush1.msra.mxu0 0.0
        %5677 = vmatprep.subr.mxu0 0.0
        %5678 = vmatpush1.msra.mxu0 0.0
        %5679 = vmatprep.subr.mxu0 0.0
        %5680 = vmatpush1.msra.mxu0 0.0
        %5681 = vmatprep.subr.mxu0 0.0
        %5682 = vmatpush1.msra.mxu0 0.0
        %5683 = vmatprep.subr.mxu0 0.0
        %5684 = vmatpush1.msra.mxu0 0.0
        %5685 = vmatprep.subr.mxu0 0.0
        %5686 = vmatpush1.msra.mxu0 0.0
        %5687 = vmatprep.subr.mxu0 0.0
        %5688 = vmatpush1.msra.mxu0 0.0
        %5689 = vmatprep.subr.mxu0 0.0
        %5690 = vmatpush1.msra.mxu0 0.0
        %5691 = vmatprep.subr.mxu0 0.0
        %5692 = vmatpush1.msra.mxu0 %v5506
        %5693 = vmatprep.subr.mxu0 0.0
        %5694 = vmatpush2.msra.mxu0 0.0
        %5695 = vmatprep.subr.mxu0 0.0
        %5696 = vmatpush2.msra.mxu0 0.0
        %5697 = vmatprep.subr.mxu0 0.0
        %5698 = vmatpush2.msra.mxu0 0.0
        %5699 = vmatprep.subr.mxu0 0.0
        %5700 = vmatpush2.msra.mxu0 0.0
        %5701 = vmatprep.subr.mxu0 0.0
        %5702 = vmatpush2.msra.mxu0 0.0
        %5703 = vmatprep.subr.mxu0 0.0
        %5704 = vmatpush2.msra.mxu0 0.0
        %5705 = vmatprep.subr.mxu0 0.0
        %5706 = vmatpush2.msra.mxu0 0.0
        %5707 = vmatprep.subr.mxu0 0.0
        %5708 = vmatpush2.msra.mxu0 0.0
        %5709 = vmatprep.subr.mxu0 0.0
        %5710 = vmatpush2.msra.mxu0 0.0
        %5711 = vmatprep.subr.mxu0 0.0
        %5712 = vmatpush2.msra.mxu0 0.0
        %5713 = vmatprep.subr.mxu0 0.0
        %5714 = vmatpush2.msra.mxu0 0.0
        %5715 = vmatprep.subr.mxu0 0.0
        %5716 = vmatpush2.msra.mxu0 0.0
        %5717 = vmatprep.subr.mxu0 0.0
        %5718 = vmatpush2.msra.mxu0 0.0
        %5719 = vmatprep.subr.mxu0 0.0
        %5720 = vmatpush2.msra.mxu0 0.0
        %5721 = vmatprep.subr.mxu0 0.0
        %5722 = vmatpush2.msra.mxu0 0.0
        %5723 = vmatprep.subr.mxu0 0.0
        %5724 = vmatpush2.msra.mxu0 0.0
        %5725 = vmatprep.mubr.f32.mxu0 0.0
        %5726 = vmatmul.mubr.f32.gmra.mxu0 %v5659
        %v5727 = vpop.f32.mrf.mxu0
        %v5728 = vadd.f32 %v5507, %v5727
        %v5729 = vpop.f32.mrf.mxu0
        %5730 = vdwg.mxu0
        %v5731 = vxor.u32 %v5728, 2147483648
        %v5732 = vmul.f32 %v5731, 1.442695
        %v5733 = vpow.pop %v5732
        %v5734 = vadd.f32 %v5733, 1.0
        %v5735 = vrcp.pop %v5734
        %v5736 = vmul.f32 1.0, %v5735
        %v5737 = vadd.f32 %v5586, %v5736
        %v5738 = vlaneseq
        %v5739 = vshrl.u32 %v5738, 7
        %v5740 = vsub.s32 0, %v5739
        %v5741 = vrot.slane %v5737, %v5740
        %v5742 = vmul.f32 %v5383, %v5741
        %v5743 = vmul.f32 %v5384, %v5741
        %vm5744 = vcmask 1047554
        %v5745 = vsel %vm5744, %v5742, 0.0
        %5746 = vadd.xlane.f32.xlu0 %v5745
        %v5747 = vpop.xlane.xlu0 %5746
        %v5748 = vsel %vm2635, %v5743, 0.0
        %5749 = vadd.xlane.f32.xlu0 %v5748
        %v5750 = vpop.xlane.xlu0 %5749
        %v5751 = vmul.f32 %v5747, 0.0078125
        %v5752 = vmul.f32 %v5750, 0.0078125
        %v5753 = vsel %vm5744, %v5742, -inf
        %5754 = vmax.xlane.f32.xlu0 %v5753
        %v5755 = vpop.xlane.xlu0 %5754
        %v5756 = vsel %vm2635, %v5743, -inf
        %5757 = vmax.xlane.f32.xlu0 %v5756
        %v5758 = vpop.xlane.xlu0 %5757
        %v5759 = vsel %vm3050, %v5751, %v5755
        %v5760 = vsel %vm3050, %v5752, %v5758
        %v5761 = vsel %vm3170, 0.0, %v5759
        %v5762 = vsel %vm2635, %v5760, 0.0
        %v5763 = vld [vmem:[%s35] sm:$0xff]
        %v5764 = vld [vmem:[%s35 + $0x8] sm:$0xff]
        %v5765 = vld [vmem:[%s35 + $0x10] sm:$0xff]
        %v5766 = vld [vmem:[%s35 + $0x18] sm:$0xff]
        %v5767 = vld [vmem:[%s35 + $0x20] sm:$0xff]
        %v5768 = vld [vmem:[%s35 + $0x28] sm:$0xff]
        %v5769 = vld [vmem:[%s35 + $0x30] sm:$0x1]
        %v5770 = vlaneseq
        %v5771 = vshrl.u32 %v5770, 7
        %v5772 = vsub.s32 0, %v5771
        %v5773 = vrot.slane %v5763, %v5772
        %v5774 = vmul.f32 %v5773, 0.0
        %v5775 = vadd.f32 %v5774, 0.0
        %v5776 = vlaneseq
        %v5777 = vshrl.u32 %v5776, 7
        %v5778 = vsub.s32 1, %v5777
        %v5779 = vrot.slane %v5763, %v5778
        %v5780 = vmul.f32 %v5779, 0.0
        %v5782 = vrot.slane %v5780, 1
        %v5784 = vadd.f32 %v5775, %v5782
        %v5785 = vlaneseq
        %v5786 = vshrl.u32 %v5785, 7
        %v5787 = vsub.s32 2, %v5786
        %v5788 = vrot.slane %v5763, %v5787
        %v5789 = vmul.f32 %v5788, 0.0
        %v5791 = vrot.slane %v5789, 2
        %v5792 = vsel %vm2629, %v5791, %v5791
        %v5794 = vadd.f32 %v5784, %v5792
        %v5795 = vlaneseq
        %v5796 = vshrl.u32 %v5795, 7
        %v5797 = vsub.s32 3, %v5796
        %v5798 = vrot.slane %v5763, %v5797
        %v5799 = vmul.f32 %v5798, 0.0
        %v5801 = vrot.slane %v5799, 3
        %v5802 = vsel %vm2631, %v5801, %v5801
        %v5804 = vadd.f32 %v5794, %v5802
        %v5805 = vlaneseq
        %v5806 = vshrl.u32 %v5805, 7
        %v5807 = vsub.s32 4, %v5806
        %v5808 = vrot.slane %v5763, %v5807
        %v5809 = vmul.f32 %v5808, 0.0
        %v5811 = vrot.slane %v5809, 4
        %v5812 = vsel %vm2618, %v5811, %v5811
        %v5814 = vadd.f32 %v5804, %v5812
        %v5815 = vlaneseq
        %v5816 = vshrl.u32 %v5815, 7
        %v5817 = vsub.s32 5, %v5816
        %v5818 = vrot.slane %v5763, %v5817
        %v5819 = vmul.f32 %v5818, 0.0
        %v5821 = vrot.slane %v5819, 5
        %v5822 = vsel %vm3151, %v5821, %v5821
        %v5824 = vadd.f32 %v5814, %v5822
        %v5825 = vlaneseq
        %v5826 = vshrl.u32 %v5825, 7
        %v5827 = vsub.s32 6, %v5826
        %v5828 = vrot.slane %v5763, %v5827
        %v5829 = vmul.f32 %v5828, 0.0
        %v5831 = vrot.slane %v5829, 6
        %v5832 = vsel %vm3170, %v5831, %v5831
        %v5834 = vadd.f32 %v5824, %v5832
        %v5835 = vlaneseq
        %v5836 = vshrl.u32 %v5835, 7
        %v5837 = vsub.s32 7, %v5836
        %v5838 = vrot.slane %v5763, %v5837
        %v5839 = vmul.f32 %v5838, 0.0
        %v5841 = vrot.slane %v5839, 5
        %v5842 = vsel %vm3151, %v5841, %v5841
        %v5844 = vadd.f32 %v5834, %v5842
        %v5845 = vlaneseq
        %v5846 = vshrl.u32 %v5845, 7
        %v5847 = vsub.s32 0, %v5846
        %v5848 = vrot.slane %v5764, %v5847
        %v5849 = vmul.f32 %v5848, 0.0
        %v5851 = vrot.slane %v5849, 6
        %v5852 = vsel %vm3170, %v5851, %v5851
        %v5854 = vadd.f32 %v5844, %v5852
        %v5855 = vlaneseq
        %v5856 = vshrl.u32 %v5855, 7
        %v5857 = vsub.s32 1, %v5856
        %v5858 = vrot.slane %v5764, %v5857
        %v5859 = vmul.f32 %v5858, 0.0
        %v5861 = vrot.slane %v5859, 7
        %v5862 = vsel %vm2635, %v5861, %v5861
        %v5864 = vadd.f32 %v5854, %v5862
        %v5865 = vlaneseq
        %v5866 = vshrl.u32 %v5865, 7
        %v5867 = vsub.s32 2, %v5866
        %v5868 = vrot.slane %v5764, %v5867
        %v5869 = vmul.f32 %v5868, 0.0
        %v5870 = vadd.f32 %v5864, %v5869
        %v5871 = vlaneseq
        %v5872 = vshrl.u32 %v5871, 7
        %v5873 = vsub.s32 3, %v5872
        %v5874 = vrot.slane %v5764, %v5873
        %v5875 = vmul.f32 %v5874, 0.0
        %v5877 = vrot.slane %v5875, 1
        %v5879 = vadd.f32 %v5870, %v5877
        %v5880 = vlaneseq
        %v5881 = vshrl.u32 %v5880, 7
        %v5882 = vsub.s32 4, %v5881
        %v5883 = vrot.slane %v5764, %v5882
        %v5884 = vmul.f32 %v5883, 0.0
        %v5885 = vmul.f32 %v5761, %v5883
        %v5888 = vrot.slane %v5884, 2
        %v5889 = vrot.slane %v5885, 2
        %v5890 = vsel %vm2629, %v5888, %v5889
        %v5892 = vadd.f32 %v5879, %v5890
        %v5893 = vlaneseq
        %v5894 = vshrl.u32 %v5893, 7
        %v5895 = vsub.s32 5, %v5894
        %v5896 = vrot.slane %v5764, %v5895
        %v5897 = vmul.f32 %v5896, 0.0
        %v5898 = vmul.f32 %v5761, %v5896
        %v5901 = vrot.slane %v5897, 3
        %v5902 = vrot.slane %v5898, 3
        %v5903 = vsel %vm2631, %v5901, %v5902
        %v5905 = vadd.f32 %v5892, %v5903
        %v5906 = vlaneseq
        %v5907 = vshrl.u32 %v5906, 7
        %v5908 = vsub.s32 6, %v5907
        %v5909 = vrot.slane %v5764, %v5908
        %v5910 = vmul.f32 %v5909, 0.0
        %v5911 = vmul.f32 %v5761, %v5909
        %v5914 = vrot.slane %v5910, 2
        %v5915 = vrot.slane %v5911, 2
        %v5916 = vsel %vm2629, %v5914, %v5915
        %v5918 = vadd.f32 %v5905, %v5916
        %v5919 = vlaneseq
        %v5920 = vshrl.u32 %v5919, 7
        %v5921 = vsub.s32 7, %v5920
        %v5922 = vrot.slane %v5764, %v5921
        %v5923 = vmul.f32 %v5922, 0.0
        %v5924 = vmul.f32 %v5761, %v5922
        %v5927 = vrot.slane %v5923, 3
        %v5928 = vrot.slane %v5924, 3
        %v5929 = vsel %vm2631, %v5927, %v5928
        %v5931 = vadd.f32 %v5918, %v5929
        %v5932 = vlaneseq
        %v5933 = vshrl.u32 %v5932, 7
        %v5934 = vsub.s32 0, %v5933
        %v5935 = vrot.slane %v5765, %v5934
        %v5936 = vmul.f32 %v5935, 0.0
        %v5937 = vmul.f32 %v5761, %v5935
        %v5940 = vrot.slane %v5936, 4
        %v5941 = vrot.slane %v5937, 4
        %v5942 = vsel %vm2618, %v5940, %v5941
        %v5944 = vadd.f32 %v5931, %v5942
        %v5945 = vlaneseq
        %v5946 = vshrl.u32 %v5945, 7
        %v5947 = vsub.s32 1, %v5946
        %v5948 = vrot.slane %v5765, %v5947
        %v5949 = vmul.f32 %v5948, 0.0
        %v5950 = vmul.f32 %v5761, %v5948
        %v5953 = vrot.slane %v5949, 5
        %v5954 = vrot.slane %v5950, 5
        %v5955 = vsel %vm3151, %v5953, %v5954
        %v5957 = vadd.f32 %v5944, %v5955
        %v5958 = vlaneseq
        %v5959 = vshrl.u32 %v5958, 7
        %v5960 = vsub.s32 2, %v5959
        %v5961 = vrot.slane %v5765, %v5960
        %v5962 = vmul.f32 %v5961, 0.0
        %v5963 = vmul.f32 %v5761, %v5961
        %v5966 = vrot.slane %v5962, 6
        %v5967 = vrot.slane %v5963, 6
        %v5968 = vsel %vm3170, %v5966, %v5967
        %v5970 = vadd.f32 %v5957, %v5968
        %v5971 = vlaneseq
        %v5972 = vshrl.u32 %v5971, 7
        %v5973 = vsub.s32 3, %v5972
        %v5974 = vrot.slane %v5765, %v5973
        %v5975 = vmul.f32 %v5974, 0.0
        %v5976 = vmul.f32 %v5761, %v5974
        %v5979 = vrot.slane %v5975, 7
        %v5980 = vrot.slane %v5976, 7
        %v5981 = vsel %vm2635, %v5979, %v5980
        %v5983 = vadd.f32 %v5970, %v5981
        %v5984 = vlaneseq
        %v5985 = vshrl.u32 %v5984, 7
        %v5986 = vsub.s32 4, %v5985
        %v5987 = vrot.slane %v5765, %v5986
        %v5988 = vmul.f32 %v5761, %v5987
        %v5989 = vadd.f32 %v5983, %v5988
        %v5990 = vlaneseq
        %v5991 = vshrl.u32 %v5990, 7
        %v5992 = vsub.s32 5, %v5991
        %v5993 = vrot.slane %v5765, %v5992
        %v5994 = vmul.f32 %v5993, 0.0
        %v5995 = vmul.f32 %v5761, %v5993
        %v5998 = vrot.slane %v5994, 7
        %v5999 = vrot.slane %v5995, 7
        %v6000 = vsel %vm2635, %v5998, %v5999
        %v6002 = vadd.f32 %v5989, %v6000
        %v6003 = vlaneseq
        %v6004 = vshrl.u32 %v6003, 7
        %v6005 = vsub.s32 6, %v6004
        %v6006 = vrot.slane %v5765, %v6005
        %v6007 = vmul.f32 %v5761, %v6006
        %v6008 = vadd.f32 %v6002, %v6007
        %v6009 = vlaneseq
        %v6010 = vshrl.u32 %v6009, 7
        %v6011 = vsub.s32 7, %v6010
        %v6012 = vrot.slane %v5765, %v6011
        %v6013 = vmul.f32 %v5761, %v6012
        %v6015 = vrot.slane %v6013, 1
        %v6017 = vadd.f32 %v6008, %v6015
        %v6018 = vlaneseq
        %v6019 = vshrl.u32 %v6018, 7
        %v6020 = vsub.s32 0, %v6019
        %v6021 = vrot.slane %v5766, %v6020
        %v6022 = vmul.f32 %v5761, %v6021
        %v6023 = vmul.f32 %v5762, %v6021
        %v6026 = vrot.slane %v6022, 2
        %v6027 = vrot.slane %v6023, 2
        %v6028 = vsel %vm2629, %v6026, %v6027
        %v6030 = vadd.f32 %v6017, %v6028
        %v6031 = vlaneseq
        %v6032 = vshrl.u32 %v6031, 7
        %v6033 = vsub.s32 1, %v6032
        %v6034 = vrot.slane %v5766, %v6033
        %v6035 = vmul.f32 %v5761, %v6034
        %v6036 = vmul.f32 %v5762, %v6034
        %v6039 = vrot.slane %v6035, 3
        %v6040 = vrot.slane %v6036, 3
        %v6041 = vsel %vm2631, %v6039, %v6040
        %v6043 = vadd.f32 %v6030, %v6041
        %v6044 = vlaneseq
        %v6045 = vshrl.u32 %v6044, 7
        %v6046 = vsub.s32 2, %v6045
        %v6047 = vrot.slane %v5766, %v6046
        %v6048 = vmul.f32 %v5761, %v6047
        %v6049 = vmul.f32 %v5762, %v6047
        %v6052 = vrot.slane %v6048, 4
        %v6053 = vrot.slane %v6049, 4
        %v6054 = vsel %vm2618, %v6052, %v6053
        %v6056 = vadd.f32 %v6043, %v6054
        %v6057 = vlaneseq
        %v6058 = vshrl.u32 %v6057, 7
        %v6059 = vsub.s32 3, %v6058
        %v6060 = vrot.slane %v5766, %v6059
        %v6061 = vmul.f32 %v5761, %v6060
        %v6062 = vmul.f32 %v5762, %v6060
        %v6065 = vrot.slane %v6061, 5
        %v6066 = vrot.slane %v6062, 5
        %v6067 = vsel %vm3151, %v6065, %v6066
        %v6069 = vadd.f32 %v6056, %v6067
        %v6070 = vlaneseq
        %v6071 = vshrl.u32 %v6070, 7
        %v6072 = vsub.s32 4, %v6071
        %v6073 = vrot.slane %v5766, %v6072
        %v6074 = vmul.f32 %v5761, %v6073
        %v6075 = vmul.f32 %v5762, %v6073
        %v6078 = vrot.slane %v6074, 4
        %v6079 = vrot.slane %v6075, 4
        %v6080 = vsel %vm2618, %v6078, %v6079
        %v6082 = vadd.f32 %v6069, %v6080
        %v6083 = vlaneseq
        %v6084 = vshrl.u32 %v6083, 7
        %v6085 = vsub.s32 5, %v6084
        %v6086 = vrot.slane %v5766, %v6085
        %v6087 = vmul.f32 %v5761, %v6086
        %v6088 = vmul.f32 %v5762, %v6086
        %v6091 = vrot.slane %v6087, 5
        %v6092 = vrot.slane %v6088, 5
        %v6093 = vsel %vm3151, %v6091, %v6092
        %v6095 = vadd.f32 %v6082, %v6093
        %v6096 = vlaneseq
        %v6097 = vshrl.u32 %v6096, 7
        %v6098 = vsub.s32 6, %v6097
        %v6099 = vrot.slane %v5766, %v6098
        %v6100 = vmul.f32 %v5761, %v6099
        %v6101 = vmul.f32 %v5762, %v6099
        %v6104 = vrot.slane %v6100, 6
        %v6105 = vrot.slane %v6101, 6
        %v6106 = vsel %vm3170, %v6104, %v6105
        %v6108 = vadd.f32 %v6095, %v6106
        %v6109 = vlaneseq
        %v6110 = vshrl.u32 %v6109, 7
        %v6111 = vsub.s32 7, %v6110
        %v6112 = vrot.slane %v5766, %v6111
        %v6113 = vmul.f32 %v5761, %v6112
        %v6114 = vmul.f32 %v5762, %v6112
        %v6117 = vrot.slane %v6113, 7
        %v6118 = vrot.slane %v6114, 7
        %v6119 = vsel %vm2635, %v6117, %v6118
        %v6121 = vadd.f32 %v6108, %v6119
        %v6122 = vlaneseq
        %v6123 = vshrl.u32 %v6122, 7
        %v6124 = vsub.s32 0, %v6123
        %v6125 = vrot.slane %v5767, %v6124
        %v6126 = vmul.f32 %v5762, %v6125
        %v6127 = vadd.f32 %v6121, %v6126
        %v6128 = vlaneseq
        %v6129 = vshrl.u32 %v6128, 7
        %v6130 = vsub.s32 1, %v6129
        %v6131 = vrot.slane %v5767, %v6130
        %v6132 = vmul.f32 %v5762, %v6131
        %v6134 = vrot.slane %v6132, 1
        %v6136 = vadd.f32 %v6127, %v6134
        %v6137 = vlaneseq
        %v6138 = vshrl.u32 %v6137, 7
        %v6139 = vsub.s32 2, %v6138
        %v6140 = vrot.slane %v5767, %v6139
        %v6141 = vmul.f32 %v5762, %v6140
        %v6142 = vmul.f32 %v6140, 0.0
        %v6145 = vrot.slane %v6141, 2
        %v6146 = vrot.slane %v6142, 2
        %v6147 = vsel %vm2629, %v6145, %v6146
        %v6149 = vadd.f32 %v6136, %v6147
        %v6150 = vlaneseq
        %v6151 = vshrl.u32 %v6150, 7
        %v6152 = vsub.s32 3, %v6151
        %v6153 = vrot.slane %v5767, %v6152
        %v6154 = vmul.f32 %v5762, %v6153
        %v6156 = vrot.slane %v6154, 1
        %v6158 = vadd.f32 %v6149, %v6156
        %v6159 = vlaneseq
        %v6160 = vshrl.u32 %v6159, 7
        %v6161 = vsub.s32 4, %v6160
        %v6162 = vrot.slane %v5767, %v6161
        %v6163 = vmul.f32 %v5762, %v6162
        %v6164 = vmul.f32 %v6162, 0.0
        %v6167 = vrot.slane %v6163, 2
        %v6168 = vrot.slane %v6164, 2
        %v6169 = vsel %vm2629, %v6167, %v6168
        %v6171 = vadd.f32 %v6158, %v6169
        %v6172 = vlaneseq
        %v6173 = vshrl.u32 %v6172, 7
        %v6174 = vsub.s32 5, %v6173
        %v6175 = vrot.slane %v5767, %v6174
        %v6176 = vmul.f32 %v5762, %v6175
        %v6177 = vmul.f32 %v6175, 0.0
        %v6180 = vrot.slane %v6176, 3
        %v6181 = vrot.slane %v6177, 3
        %v6182 = vsel %vm2631, %v6180, %v6181
        %v6184 = vadd.f32 %v6171, %v6182
        %v6185 = vlaneseq
        %v6186 = vshrl.u32 %v6185, 7
        %v6187 = vsub.s32 6, %v6186
        %v6188 = vrot.slane %v5767, %v6187
        %v6189 = vmul.f32 %v5762, %v6188
        %v6190 = vmul.f32 %v6188, 0.0
        %v6193 = vrot.slane %v6189, 4
        %v6194 = vrot.slane %v6190, 4
        %v6195 = vsel %vm2618, %v6193, %v6194
        %v6197 = vadd.f32 %v6184, %v6195
        %v6198 = vlaneseq
        %v6199 = vshrl.u32 %v6198, 7
        %v6200 = vsub.s32 7, %v6199
        %v6201 = vrot.slane %v5767, %v6200
        %v6202 = vmul.f32 %v5762, %v6201
        %v6203 = vmul.f32 %v6201, 0.0
        %v6206 = vrot.slane %v6202, 5
        %v6207 = vrot.slane %v6203, 5
        %v6208 = vsel %vm3151, %v6206, %v6207
        %v6210 = vadd.f32 %v6197, %v6208
        %v6211 = vlaneseq
        %v6212 = vshrl.u32 %v6211, 7
        %v6213 = vsub.s32 0, %v6212
        %v6214 = vrot.slane %v5768, %v6213
        %v6215 = vmul.f32 %v5762, %v6214
        %v6216 = vmul.f32 %v6214, 0.0
        %v6219 = vrot.slane %v6215, 6
        %v6220 = vrot.slane %v6216, 6
        %v6221 = vsel %vm3170, %v6219, %v6220
        %v6223 = vadd.f32 %v6210, %v6221
        %v6224 = vlaneseq
        %v6225 = vshrl.u32 %v6224, 7
        %v6226 = vsub.s32 1, %v6225
        %v6227 = vrot.slane %v5768, %v6226
        %v6228 = vmul.f32 %v5762, %v6227
        %v6229 = vmul.f32 %v6227, 0.0
        %v6232 = vrot.slane %v6228, 7
        %v6233 = vrot.slane %v6229, 7
        %v6234 = vsel %vm2635, %v6232, %v6233
        %v6236 = vadd.f32 %v6223, %v6234
        %v6237 = vlaneseq
        %v6238 = vshrl.u32 %v6237, 7
        %v6239 = vsub.s32 2, %v6238
        %v6240 = vrot.slane %v5768, %v6239
        %v6241 = vmul.f32 %v5762, %v6240
        %v6242 = vmul.f32 %v6240, 0.0
        %v6245 = vrot.slane %v6241, 6
        %v6246 = vrot.slane %v6242, 6
        %v6247 = vsel %vm3170, %v6245, %v6246
        %v6249 = vadd.f32 %v6236, %v6247
        %v6250 = vlaneseq
        %v6251 = vshrl.u32 %v6250, 7
        %v6252 = vsub.s32 3, %v6251
        %v6253 = vrot.slane %v5768, %v6252
        %v6254 = vmul.f32 %v5762, %v6253
        %v6255 = vmul.f32 %v6253, 0.0
        %v6258 = vrot.slane %v6254, 7
        %v6259 = vrot.slane %v6255, 7
        %v6260 = vsel %vm2635, %v6258, %v6259
        %v6262 = vadd.f32 %v6249, %v6260
        %v6263 = vlaneseq
        %v6264 = vshrl.u32 %v6263, 7
        %v6265 = vsub.s32 4, %v6264
        %v6266 = vrot.slane %v5768, %v6265
        %v6267 = vmul.f32 %v6266, 0.0
        %v6268 = vadd.f32 %v6262, %v6267
        %v6269 = vlaneseq
        %v6270 = vshrl.u32 %v6269, 7
        %v6271 = vsub.s32 5, %v6270
        %v6272 = vrot.slane %v5768, %v6271
        %v6273 = vmul.f32 %v6272, 0.0
        %v6275 = vrot.slane %v6273, 1
        %v6277 = vadd.f32 %v6268, %v6275
        %v6278 = vlaneseq
        %v6279 = vshrl.u32 %v6278, 7
        %v6280 = vsub.s32 6, %v6279
        %v6281 = vrot.slane %v5768, %v6280
        %v6282 = vmul.f32 %v6281, 0.0
        %v6284 = vrot.slane %v6282, 2
        %v6285 = vsel %vm2629, %v6284, %v6284
        %v6287 = vadd.f32 %v6277, %v6285
        %v6288 = vlaneseq
        %v6289 = vshrl.u32 %v6288, 7
        %v6290 = vsub.s32 7, %v6289
        %v6291 = vrot.slane %v5768, %v6290
        %v6292 = vmul.f32 %v6291, 0.0
        %v6294 = vrot.slane %v6292, 3
        %v6295 = vsel %vm2631, %v6294, %v6294
        %v6297 = vadd.f32 %v6287, %v6295
        %v6298 = vlaneseq
        %v6299 = vshrl.u32 %v6298, 7
        %v6300 = vsub.s32 0, %v6299
        %v6301 = vrot.slane %v5769, %v6300
        %v6302 = vmul.f32 %v6301, 0.0
        %v6304 = vrot.slane %v6302, 4
        %v6305 = vsel %vm2618, %v6304, %v6304
        %v6307 = vadd.f32 %v6297, %v6305
        %6309 = vrot.lane.b32.xlu0 %v6307, 120
        %v6310 = vpop.permute.xlu0 %6309
        %v6312 = vadd.f32 %v6307, %v6310
        %v6313 = vld [vmem:[%s37] sm:$0x1]
        %v6315 = vlaneseq
        %v6316 = vshrl.u32 %v6315, 7
        %v6317 = vsub.s32 0, %v6316
        %v6318 = vrot.slane %v6313, %v6317
        %v6320 = vadd.f32 %v6312, %v6318
        %v6321 = vmax.f32 %v6320, 0.0
        %v6322 = vld [vmem:[%s39] sm:$0x1]
        %v6324 = vlaneseq
        %v6325 = vshrl.u32 %v6324, 7
        %v6326 = vsub.s32 0, %v6325
        %v6327 = vrot.slane %v6322, %v6326
        %v6329 = vmul.f32 %v6321, %v6327
        %vm6330 = vcmask 63488
        %v6331 = vsel %vm6330, %v6329, 0.0
        %6332 = vadd.xlane.f32.xlu0 %v6331
        %v6333 = vpop.xlane.xlu0 %6332
        %v6334 = vld [vmem:[#allocation7] sm:$0x1]
        %v6336 = vlaneseq
        %v6337 = vshrl.u32 %v6336, 7
        %v6338 = vsub.s32 0, %v6337
        %v6339 = vrot.slane %v6334, %v6338
        %v6341 = vadd.f32 %v6333, %v6339
        %v6342 = vxor.u32 %v6341, 2147483648
        %v6343 = vmul.f32 %v6342, 1.442695
        %v6344 = vpow.pop %v6343
        %v6345 = vadd.f32 %v6344, 1.0
        %v6346 = vrcp.pop %v6345
        %v6347 = vmul.f32 1.0, %v6346
        %v6348 = vmul.f32 %v5742, %v5742
        %v6349 = vmul.f32 %v5743, %v5743
        %6351 = vset.pattern.permute.xlu0 0
        %6352 = vperm.xlu0 %6351, %v6347
        %v6353 = vpop.permute.xlu0 %6352
        %v6354 = vrot.slane %v6353, 6
        %v6356 = vmul.f32 %v6348, %v6354
        %v6357 = vmul.f32 %v6349, %v6354
        %v6358 = vpack.c.bf16 %v6357, %v6356
        %v6360 = vunpack.c.l.b16 %v6358
        %v6361 = vunpack.c.h.b16 %v6358
        %v6362 = vpack.c.b16 %v6360, %v6360
        %v6363 = vpack.c.b16 %v6361, %v6361
        %6366 = vst [vmem:[#allocation5 + $0x8] sm:$0xe] %v6362
        %v6367 = vld [vmem:[#allocation5 + $0xc] sm:$0x1]
        %v6368 = vsel %vm2606, %v6363, %v6367
        %6369 = vst [vmem:[#allocation5 + $0xc] sm:$0x1] %v6368
        %v6370 = vld [vmem:[#allocation5 + $0x4] sm:$0xc]
        %v6371 = vld [vmem:[#allocation5 + $0x8] sm:$0x3]
        %v6374 = vunpack.c.l.b16 %v6370
        %v6375 = vunpack.c.l.b16 %v6371
        %v6376 = vpack.c.b16 %v6375, %v6374
        %v6378 = vshrl.u32 %v6376, 16
        %v6380 = vshll.u32 %v6376, 16
        %v6382 = vrot.slane %v6380, 1
        %v6383 = vor.u32 %v6378, %v6382
        %v6384 = vld [vmem:[%s43] sm:$0xff]
        %v6385 = vld [vmem:[%s43 + $0x8] sm:$0xff]
        %v6386 = vld [vmem:[%s43 + $0x10] sm:$0xff]
        %v6387 = vld [vmem:[%s43 + $0x18] sm:$0xff]
        %v6388 = vld [vmem:[%s43 + $0x20] sm:$0xff]
        %v6389 = vld [vmem:[%s43 + $0x28] sm:$0xff]
        %v6390 = vld [vmem:[%s43 + $0x30] sm:$0xff]
        %v6391 = vld [vmem:[%s43 + $0x38] sm:$0xff]
        %v6392 = vld [vmem:[%s43 + $0x40] sm:$0xff]
        %v6393 = vld [vmem:[%s43 + $0x48] sm:$0xff]
        %v6394 = vld [vmem:[%s43 + $0x50] sm:$0xff]
        %v6395 = vld [vmem:[%s43 + $0x58] sm:$0xff]
        %v6396 = vld [vmem:[%s43 + $0x60] sm:$0xff]
        %v6397 = vld [vmem:[%s43 + $0x68] sm:$0xff]
        %v6398 = vld [vmem:[%s43 + $0x70] sm:$0xff]
        %v6399 = vld [vmem:[%s43 + $0x78] sm:$0xff]
        %v6400 = vld [vmem:[%s43 + $0x80] sm:$0xff]
        %v6401 = vld [vmem:[%s43 + $0x88] sm:$0xff]
        %v6402 = vld [vmem:[%s43 + $0x90] sm:$0xff]
        %v6403 = vld [vmem:[%s43 + $0x98] sm:$0xff]
        %v6404 = vld [vmem:[%s43 + $0xa0] sm:$0xff]
        %v6405 = vld [vmem:[%s43 + $0xa8] sm:$0xff]
        %v6406 = vld [vmem:[%s43 + $0xb0] sm:$0xff]
        %v6407 = vld [vmem:[%s43 + $0xb8] sm:$0xff]
        %v6408 = vld [vmem:[%s43 + $0xc0] sm:$0xff]
        %v6409 = vld [vmem:[%s43 + $0xc8] sm:$0xff]
        %v6410 = vld [vmem:[%s43 + $0xd0] sm:$0xff]
        %v6411 = vld [vmem:[%s43 + $0xd8] sm:$0xff]
        %v6412 = vld [vmem:[%s43 + $0xe0] sm:$0xff]
        %v6413 = vld [vmem:[%s43 + $0xe8] sm:$0xff]
        %v6414 = vld [vmem:[%s43 + $0xf0] sm:$0xff]
        %v6415 = vld [vmem:[%s43 + $0xf8] sm:$0xff]
        %v6416 = vld [vmem:[#allocation5 + $0x4] sm:$0x8]
        %v6417 = vld [vmem:[#allocation5 + $0x8] sm:$0x7]
        %v6418 = vld [vmem:[#allocation5 + $0x8] sm:$0xf]
        %v6421 = vunpack.c.l.b16 %v6416
        %v6422 = vunpack.c.l.b16 %v6417
        %v6423 = vpack.c.b16 %v6422, %v6421
        %v6425 = vunpack.c.l.b16 %v6418
        %v6426 = vpack.c.b16 %v6425, %v6425
        %v6428 = vshrl.u32 %v6426, 16
        %v6430 = vrot.slane %v6428, 5
        %v6431 = vshll.u32 %v6426, 16
        %v6433 = vrot.slane %v6431, 6
        %v6434 = vor.u32 %v6430, %v6433
        %v6435 = vld [vmem:[%s43 + $0x100] sm:$0xff]
        %v6436 = vld [vmem:[%s43 + $0x108] sm:$0xff]
        %v6437 = vld [vmem:[%s43 + $0x110] sm:$0xff]
        %v6438 = vld [vmem:[%s43 + $0x118] sm:$0xff]
        %v6439 = vld [vmem:[%s43 + $0x120] sm:$0xff]
        %v6440 = vld [vmem:[%s43 + $0x128] sm:$0xff]
        %v6441 = vld [vmem:[%s43 + $0x130] sm:$0xff]
        %v6442 = vld [vmem:[%s43 + $0x138] sm:$0xff]
        %v6443 = vld [vmem:[%s43 + $0x140] sm:$0xff]
        %v6444 = vld [vmem:[%s43 + $0x148] sm:$0xff]
        %v6445 = vld [vmem:[%s43 + $0x150] sm:$0xff]
        %v6446 = vld [vmem:[%s43 + $0x158] sm:$0xff]
        %v6447 = vld [vmem:[%s43 + $0x160] sm:$0xff]
        %v6448 = vld [vmem:[%s43 + $0x168] sm:$0xff]
        %v6449 = vld [vmem:[%s43 + $0x170] sm:$0xff]
        %v6450 = vld [vmem:[%s43 + $0x178] sm:$0xff]
        %v6451 = vld [vmem:[%s43 + $0x180] sm:$0xff]
        %v6452 = vld [vmem:[%s43 + $0x188] sm:$0xff]
        %v6453 = vld [vmem:[%s43 + $0x190] sm:$0xff]
        %v6454 = vld [vmem:[%s43 + $0x198] sm:$0xff]
        %v6455 = vld [vmem:[%s43 + $0x1a0] sm:$0xff]
        %v6456 = vld [vmem:[%s43 + $0x1a8] sm:$0xff]
        %v6457 = vld [vmem:[%s43 + $0x1b0] sm:$0xff]
        %v6458 = vld [vmem:[%s43 + $0x1b8] sm:$0xff]
        %v6459 = vld [vmem:[%s43 + $0x1c0] sm:$0xff]
        %v6460 = vld [vmem:[%s43 + $0x1c8] sm:$0xff]
        %v6461 = vld [vmem:[%s43 + $0x1d0] sm:$0xff]
        %v6462 = vld [vmem:[%s43 + $0x1d8] sm:$0xff]
        %v6463 = vld [vmem:[%s43 + $0x1e0] sm:$0xff]
        %v6464 = vld [vmem:[%s43 + $0x1e8] sm:$0xff]
        %v6465 = vld [vmem:[%s43 + $0x1f0] sm:$0xff]
        %v6466 = vld [vmem:[%s43 + $0x1f8] sm:$0xff]
        %v6467 = vrot.slane %v6423, 3
        %v6468 = vrot.slane %v6434, 3
        %v6503 = vunpack.c.l.b16 %v6435
        %v6504 = vunpack.c.h.b16 %v6435
        %v6505 = vunpack.c.l.b16 %v6436
        %v6506 = vunpack.c.h.b16 %v6436
        %v6507 = vunpack.c.l.b16 %v6437
        %v6508 = vunpack.c.h.b16 %v6437
        %v6509 = vunpack.c.l.b16 %v6438
        %v6510 = vunpack.c.h.b16 %v6438
        %v6511 = vunpack.c.l.b16 %v6439
        %v6512 = vunpack.c.h.b16 %v6439
        %v6513 = vunpack.c.l.b16 %v6440
        %v6514 = vunpack.c.h.b16 %v6440
        %v6515 = vunpack.c.l.b16 %v6441
        %v6516 = vunpack.c.h.b16 %v6441
        %v6517 = vunpack.c.l.b16 %v6442
        %v6518 = vunpack.c.h.b16 %v6442
        %v6519 = vunpack.c.l.b16 %v6443
        %v6520 = vunpack.c.h.b16 %v6443
        %v6521 = vunpack.c.l.b16 %v6444
        %v6522 = vunpack.c.h.b16 %v6444
        %v6523 = vunpack.c.l.b16 %v6445
        %v6524 = vunpack.c.h.b16 %v6445
        %v6525 = vunpack.c.l.b16 %v6446
        %v6526 = vunpack.c.h.b16 %v6446
        %v6527 = vunpack.c.l.b16 %v6447
        %v6528 = vunpack.c.h.b16 %v6447
        %v6529 = vunpack.c.l.b16 %v6448
        %v6530 = vunpack.c.h.b16 %v6448
        %v6531 = vunpack.c.l.b16 %v6449
        %v6532 = vunpack.c.h.b16 %v6449
        %v6533 = vunpack.c.l.b16 %v6450
        %v6534 = vunpack.c.h.b16 %v6450
        %v6535 = vunpack.c.l.b16 %v6451
        %v6536 = vunpack.c.h.b16 %v6451
        %v6537 = vunpack.c.l.b16 %v6452
        %v6538 = vunpack.c.h.b16 %v6452
        %v6539 = vunpack.c.l.b16 %v6453
        %v6540 = vunpack.c.h.b16 %v6453
        %v6541 = vunpack.c.l.b16 %v6454
        %v6542 = vunpack.c.h.b16 %v6454
        %v6543 = vunpack.c.l.b16 %v6455
        %v6544 = vunpack.c.h.b16 %v6455
        %v6545 = vunpack.c.l.b16 %v6456
        %v6546 = vunpack.c.h.b16 %v6456
        %v6547 = vunpack.c.l.b16 %v6457
        %v6548 = vunpack.c.h.b16 %v6457
        %v6549 = vunpack.c.l.b16 %v6458
        %v6550 = vunpack.c.h.b16 %v6458
        %v6551 = vunpack.c.l.b16 %v6459
        %v6552 = vunpack.c.h.b16 %v6459
        %v6553 = vunpack.c.l.b16 %v6460
        %v6554 = vunpack.c.h.b16 %v6460
        %v6555 = vunpack.c.l.b16 %v6461
        %v6556 = vunpack.c.h.b16 %v6461
        %v6557 = vunpack.c.l.b16 %v6462
        %v6558 = vunpack.c.h.b16 %v6462
        %v6559 = vunpack.c.l.b16 %v6463
        %v6560 = vunpack.c.h.b16 %v6463
        %v6561 = vunpack.c.l.b16 %v6464
        %v6562 = vunpack.c.h.b16 %v6464
        %v6563 = vunpack.c.l.b16 %v6465
        %v6564 = vunpack.c.h.b16 %v6465
        %v6565 = vunpack.c.l.b16 %v6466
        %v6566 = vunpack.c.h.b16 %v6466
        %v6567 = vpack.c.b16 %v6505, %v6503
        %v6568 = vpack.c.b16 %v6506, %v6504
        %v6569 = vpack.c.b16 %v6509, %v6507
        %v6570 = vpack.c.b16 %v6510, %v6508
        %v6571 = vpack.c.b16 %v6513, %v6511
        %v6572 = vpack.c.b16 %v6514, %v6512
        %v6573 = vpack.c.b16 %v6517, %v6515
        %v6574 = vpack.c.b16 %v6518, %v6516
        %v6575 = vpack.c.b16 %v6521, %v6519
        %v6576 = vpack.c.b16 %v6522, %v6520
        %v6577 = vpack.c.b16 %v6525, %v6523
        %v6578 = vpack.c.b16 %v6526, %v6524
        %v6579 = vpack.c.b16 %v6529, %v6527
        %v6580 = vpack.c.b16 %v6530, %v6528
        %v6581 = vpack.c.b16 %v6533, %v6531
        %v6582 = vpack.c.b16 %v6534, %v6532
        %v6583 = vpack.c.b16 %v6537, %v6535
        %v6584 = vpack.c.b16 %v6538, %v6536
        %v6585 = vpack.c.b16 %v6541, %v6539
        %v6586 = vpack.c.b16 %v6542, %v6540
        %v6587 = vpack.c.b16 %v6545, %v6543
        %v6588 = vpack.c.b16 %v6546, %v6544
        %v6589 = vpack.c.b16 %v6549, %v6547
        %v6590 = vpack.c.b16 %v6550, %v6548
        %v6591 = vpack.c.b16 %v6553, %v6551
        %v6592 = vpack.c.b16 %v6554, %v6552
        %v6593 = vpack.c.b16 %v6557, %v6555
        %v6594 = vpack.c.b16 %v6558, %v6556
        %v6595 = vpack.c.b16 %v6561, %v6559
        %v6596 = vpack.c.b16 %v6562, %v6560
        %v6597 = vpack.c.b16 %v6565, %v6563
        %v6598 = vpack.c.b16 %v6566, %v6564
        %6631 = vmatprep.subr.bf16.mxu0 %v6582
        %6632 = vmatpush1.bf16.msra.mxu0 %v6581
        %6633 = vmatprep.subr.bf16.mxu0 %v6580
        %6634 = vmatpush1.bf16.msra.mxu0 %v6579
        %6635 = vmatprep.subr.bf16.mxu0 %v6578
        %6636 = vmatpush1.bf16.msra.mxu0 %v6577
        %6637 = vmatprep.subr.bf16.mxu0 %v6576
        %6638 = vmatpush1.bf16.msra.mxu0 %v6575
        %6639 = vmatprep.subr.bf16.mxu0 %v6574
        %6640 = vmatpush1.bf16.msra.mxu0 %v6573
        %6641 = vmatprep.subr.bf16.mxu0 %v6572
        %6642 = vmatpush1.bf16.msra.mxu0 %v6571
        %6643 = vmatprep.subr.bf16.mxu0 %v6570
        %6644 = vmatpush1.bf16.msra.mxu0 %v6569
        %6645 = vmatprep.subr.bf16.mxu0 %v6568
        %6646 = vmatpush1.bf16.msra.mxu0 %v6567
        %6647 = vmatprep.subr.bf16.mxu0 %v6598
        %6648 = vmatpush2.bf16.msra.mxu0 %v6597
        %6649 = vmatprep.subr.bf16.mxu0 %v6596
        %6650 = vmatpush2.bf16.msra.mxu0 %v6595
        %6651 = vmatprep.subr.bf16.mxu0 %v6594
        %6652 = vmatpush2.bf16.msra.mxu0 %v6593
        %6653 = vmatprep.subr.bf16.mxu0 %v6592
        %6654 = vmatpush2.bf16.msra.mxu0 %v6591
        %6655 = vmatprep.subr.bf16.mxu0 %v6590
        %6656 = vmatpush2.bf16.msra.mxu0 %v6589
        %6657 = vmatprep.subr.bf16.mxu0 %v6588
        %6658 = vmatpush2.bf16.msra.mxu0 %v6587
        %6659 = vmatprep.subr.bf16.mxu0 %v6586
        %6660 = vmatpush2.bf16.msra.mxu0 %v6585
        %6661 = vmatprep.subr.bf16.mxu0 %v6584
        %6662 = vmatpush2.bf16.msra.mxu0 %v6583
        %6663 = vmatprep.mubr.bf16.mxu0 %v6468
        %6664 = vmatmul.mubr.bf16.gmra.mxu0 %v6467
        %v6665 = vpop.f32.mrf.mxu0
        %v6666 = vadd.f32 0.0, %v6665
        %v6667 = vpop.f32.mrf.mxu0
        %v6668 = vadd.f32 0.0, %v6667
        %v6669 = vpop.f32.mrf.mxu0
        %v6670 = vpop.f32.mrf.mxu0
        %6671 = vdwg.mxu0
        %v6672 = vrot.slane %v6376, 2
        %v6673 = vrot.slane %v6383, 2
        %v6708 = vunpack.c.l.b16 %v6384
        %v6709 = vunpack.c.h.b16 %v6384
        %v6710 = vunpack.c.l.b16 %v6385
        %v6711 = vunpack.c.h.b16 %v6385
        %v6712 = vunpack.c.l.b16 %v6386
        %v6713 = vunpack.c.h.b16 %v6386
        %v6714 = vunpack.c.l.b16 %v6387
        %v6715 = vunpack.c.h.b16 %v6387
        %v6716 = vunpack.c.l.b16 %v6388
        %v6717 = vunpack.c.h.b16 %v6388
        %v6718 = vunpack.c.l.b16 %v6389
        %v6719 = vunpack.c.h.b16 %v6389
        %v6720 = vunpack.c.l.b16 %v6390
        %v6721 = vunpack.c.h.b16 %v6390
        %v6722 = vunpack.c.l.b16 %v6391
        %v6723 = vunpack.c.h.b16 %v6391
        %v6724 = vunpack.c.l.b16 %v6392
        %v6725 = vunpack.c.h.b16 %v6392
        %v6726 = vunpack.c.l.b16 %v6393
        %v6727 = vunpack.c.h.b16 %v6393
        %v6728 = vunpack.c.l.b16 %v6394
        %v6729 = vunpack.c.h.b16 %v6394
        %v6730 = vunpack.c.l.b16 %v6395
        %v6731 = vunpack.c.h.b16 %v6395
        %v6732 = vunpack.c.l.b16 %v6396
        %v6733 = vunpack.c.h.b16 %v6396
        %v6734 = vunpack.c.l.b16 %v6397
        %v6735 = vunpack.c.h.b16 %v6397
        %v6736 = vunpack.c.l.b16 %v6398
        %v6737 = vunpack.c.h.b16 %v6398
        %v6738 = vunpack.c.l.b16 %v6399
        %v6739 = vunpack.c.h.b16 %v6399
        %v6740 = vunpack.c.l.b16 %v6400
        %v6741 = vunpack.c.h.b16 %v6400
        %v6742 = vunpack.c.l.b16 %v6401
        %v6743 = vunpack.c.h.b16 %v6401
        %v6744 = vunpack.c.l.b16 %v6402
        %v6745 = vunpack.c.h.b16 %v6402
        %v6746 = vunpack.c.l.b16 %v6403
        %v6747 = vunpack.c.h.b16 %v6403
        %v6748 = vunpack.c.l.b16 %v6404
        %v6749 = vunpack.c.h.b16 %v6404
        %v6750 = vunpack.c.l.b16 %v6405
        %v6751 = vunpack.c.h.b16 %v6405
        %v6752 = vunpack.c.l.b16 %v6406
        %v6753 = vunpack.c.h.b16 %v6406
        %v6754 = vunpack.c.l.b16 %v6407
        %v6755 = vunpack.c.h.b16 %v6407
        %v6756 = vunpack.c.l.b16 %v6408
        %v6757 = vunpack.c.h.b16 %v6408
        %v6758 = vunpack.c.l.b16 %v6409
        %v6759 = vunpack.c.h.b16 %v6409
        %v6760 = vunpack.c.l.b16 %v6410
        %v6761 = vunpack.c.h.b16 %v6410
        %v6762 = vunpack.c.l.b16 %v6411
        %v6763 = vunpack.c.h.b16 %v6411
        %v6764 = vunpack.c.l.b16 %v6412
        %v6765 = vunpack.c.h.b16 %v6412
        %v6766 = vunpack.c.l.b16 %v6413
        %v6767 = vunpack.c.h.b16 %v6413
        %v6768 = vunpack.c.l.b16 %v6414
        %v6769 = vunpack.c.h.b16 %v6414
        %v6770 = vunpack.c.l.b16 %v6415
        %v6771 = vunpack.c.h.b16 %v6415
        %v6772 = vpack.c.b16 %v6710, %v6708
        %v6773 = vpack.c.b16 %v6711, %v6709
        %v6774 = vpack.c.b16 %v6714, %v6712
        %v6775 = vpack.c.b16 %v6715, %v6713
        %v6776 = vpack.c.b16 %v6718, %v6716
        %v6777 = vpack.c.b16 %v6719, %v6717
        %v6778 = vpack.c.b16 %v6722, %v6720
        %v6779 = vpack.c.b16 %v6723, %v6721
        %v6780 = vpack.c.b16 %v6726, %v6724
        %v6781 = vpack.c.b16 %v6727, %v6725
        %v6782 = vpack.c.b16 %v6730, %v6728
        %v6783 = vpack.c.b16 %v6731, %v6729
        %v6784 = vpack.c.b16 %v6734, %v6732
        %v6785 = vpack.c.b16 %v6735, %v6733
        %v6786 = vpack.c.b16 %v6738, %v6736
        %v6787 = vpack.c.b16 %v6739, %v6737
        %v6788 = vpack.c.b16 %v6742, %v6740
        %v6789 = vpack.c.b16 %v6743, %v6741
        %v6790 = vpack.c.b16 %v6746, %v6744
        %v6791 = vpack.c.b16 %v6747, %v6745
        %v6792 = vpack.c.b16 %v6750, %v6748
        %v6793 = vpack.c.b16 %v6751, %v6749
        %v6794 = vpack.c.b16 %v6754, %v6752
        %v6795 = vpack.c.b16 %v6755, %v6753
        %v6796 = vpack.c.b16 %v6758, %v6756
        %v6797 = vpack.c.b16 %v6759, %v6757
        %v6798 = vpack.c.b16 %v6762, %v6760
        %v6799 = vpack.c.b16 %v6763, %v6761
        %v6800 = vpack.c.b16 %v6766, %v6764
        %v6801 = vpack.c.b16 %v6767, %v6765
        %v6802 = vpack.c.b16 %v6770, %v6768
        %v6803 = vpack.c.b16 %v6771, %v6769
        %6836 = vmatprep.subr.bf16.mxu0 %v6787
        %6837 = vmatpush1.bf16.msra.mxu0 %v6786
        %6838 = vmatprep.subr.bf16.mxu0 %v6785
        %6839 = vmatpush1.bf16.msra.mxu0 %v6784
        %6840 = vmatprep.subr.bf16.mxu0 %v6783
        %6841 = vmatpush1.bf16.msra.mxu0 %v6782
        %6842 = vmatprep.subr.bf16.mxu0 %v6781
        %6843 = vmatpush1.bf16.msra.mxu0 %v6780
        %6844 = vmatprep.subr.bf16.mxu0 %v6779
        %6845 = vmatpush1.bf16.msra.mxu0 %v6778
        %6846 = vmatprep.subr.bf16.mxu0 %v6777
        %6847 = vmatpush1.bf16.msra.mxu0 %v6776
        %6848 = vmatprep.subr.bf16.mxu0 %v6775
        %6849 = vmatpush1.bf16.msra.mxu0 %v6774
        %6850 = vmatprep.subr.bf16.mxu0 %v6773
        %6851 = vmatpush1.bf16.msra.mxu0 %v6772
        %6852 = vmatprep.subr.bf16.mxu0 %v6803
        %6853 = vmatpush2.bf16.msra.mxu0 %v6802
        %6854 = vmatprep.subr.bf16.mxu0 %v6801
        %6855 = vmatpush2.bf16.msra.mxu0 %v6800
        %6856 = vmatprep.subr.bf16.mxu0 %v6799
        %6857 = vmatpush2.bf16.msra.mxu0 %v6798
        %6858 = vmatprep.subr.bf16.mxu0 %v6797
        %6859 = vmatpush2.bf16.msra.mxu0 %v6796
        %6860 = vmatprep.subr.bf16.mxu0 %v6795
        %6861 = vmatpush2.bf16.msra.mxu0 %v6794
        %6862 = vmatprep.subr.bf16.mxu0 %v6793
        %6863 = vmatpush2.bf16.msra.mxu0 %v6792
        %6864 = vmatprep.subr.bf16.mxu0 %v6791
        %6865 = vmatpush2.bf16.msra.mxu0 %v6790
        %6866 = vmatprep.subr.bf16.mxu0 %v6789
        %6867 = vmatpush2.bf16.msra.mxu0 %v6788
        %6868 = vmatprep.mubr.bf16.mxu0 %v6673
        %6869 = vmatmul.mubr.bf16.gmra.mxu0 %v6672
        %v6870 = vpop.f32.mrf.mxu0
        %v6871 = vadd.f32 %v6666, %v6870
        %v6872 = vpop.f32.mrf.mxu0
        %v6873 = vadd.f32 %v6668, %v6872
        %v6874 = vpop.f32.mrf.mxu0
        %v6875 = vpop.f32.mrf.mxu0
        %6876 = vdwg.mxu0
        %v6877 = vld [vmem:[#allocation5 + $0x8] sm:$0xe]
        %v6878 = vld [vmem:[#allocation5 + $0xc] sm:$0x1]
        %v6881 = vunpack.c.l.b16 %v6877
        %v6882 = vunpack.c.l.b16 %v6878
        %v6883 = vpack.c.b16 %v6882, %v6881
        %v6885 = vshrl.u32 %v6883, 16
        %v6887 = vshll.u32 %v6883, 16
        %v6889 = vrot.slane %v6887, 1
        %v6890 = vor.u32 %v6885, %v6889
        %v6891 = vld [vmem:[%s43 + $0x200] sm:$0xff]
        %v6892 = vld [vmem:[%s43 + $0x208] sm:$0xff]
        %v6893 = vld [vmem:[%s43 + $0x210] sm:$0xff]
        %v6894 = vld [vmem:[%s43 + $0x218] sm:$0xff]
        %v6895 = vld [vmem:[%s43 + $0x220] sm:$0xff]
        %v6896 = vld [vmem:[%s43 + $0x228] sm:$0xff]
        %v6897 = vld [vmem:[%s43 + $0x230] sm:$0xff]
        %v6898 = vld [vmem:[%s43 + $0x238] sm:$0xff]
        %v6899 = vld [vmem:[%s43 + $0x240] sm:$0xff]
        %v6900 = vld [vmem:[%s43 + $0x248] sm:$0xff]
        %v6901 = vld [vmem:[%s43 + $0x250] sm:$0xff]
        %v6902 = vld [vmem:[%s43 + $0x258] sm:$0xff]
        %v6903 = vld [vmem:[%s43 + $0x260] sm:$0xff]
        %v6904 = vld [vmem:[%s43 + $0x268] sm:$0xff]
        %v6905 = vld [vmem:[%s43 + $0x270] sm:$0xff]
        %v6906 = vld [vmem:[%s43 + $0x278] sm:$0xff]
        %v6907 = vld [vmem:[%s43 + $0x280] sm:$0xff]
        %v6908 = vld [vmem:[%s43 + $0x288] sm:$0xff]
        %v6909 = vld [vmem:[%s43 + $0x290] sm:$0xff]
        %v6910 = vld [vmem:[%s43 + $0x298] sm:$0xff]
        %v6911 = vld [vmem:[%s43 + $0x2a0] sm:$0xff]
        %v6912 = vld [vmem:[%s43 + $0x2a8] sm:$0xff]
        %v6913 = vld [vmem:[%s43 + $0x2b0] sm:$0xff]
        %v6914 = vld [vmem:[%s43 + $0x2b8] sm:$0xff]
        %v6915 = vld [vmem:[%s43 + $0x2c0] sm:$0xff]
        %v6916 = vld [vmem:[%s43 + $0x2c8] sm:$0xff]
        %v6917 = vld [vmem:[%s43 + $0x2d0] sm:$0xff]
        %v6918 = vld [vmem:[%s43 + $0x2d8] sm:$0xff]
        %v6919 = vld [vmem:[%s43 + $0x2e0] sm:$0xff]
        %v6920 = vld [vmem:[%s43 + $0x2e8] sm:$0xff]
        %v6921 = vld [vmem:[%s43 + $0x2f0] sm:$0xff]
        %v6922 = vld [vmem:[%s43 + $0x2f8] sm:$0xff]
        %v6923 = vrot.slane %v6883, 1
        %v6924 = vrot.slane %v6890, 1
        %v6959 = vunpack.c.l.b16 %v6891
        %v6960 = vunpack.c.h.b16 %v6891
        %v6961 = vunpack.c.l.b16 %v6892
        %v6962 = vunpack.c.h.b16 %v6892
        %v6963 = vunpack.c.l.b16 %v6893
        %v6964 = vunpack.c.h.b16 %v6893
        %v6965 = vunpack.c.l.b16 %v6894
        %v6966 = vunpack.c.h.b16 %v6894
        %v6967 = vunpack.c.l.b16 %v6895
        %v6968 = vunpack.c.h.b16 %v6895
        %v6969 = vunpack.c.l.b16 %v6896
        %v6970 = vunpack.c.h.b16 %v6896
        %v6971 = vunpack.c.l.b16 %v6897
        %v6972 = vunpack.c.h.b16 %v6897
        %v6973 = vunpack.c.l.b16 %v6898
        %v6974 = vunpack.c.h.b16 %v6898
        %v6975 = vunpack.c.l.b16 %v6899
        %v6976 = vunpack.c.h.b16 %v6899
        %v6977 = vunpack.c.l.b16 %v6900
        %v6978 = vunpack.c.h.b16 %v6900
        %v6979 = vunpack.c.l.b16 %v6901
        %v6980 = vunpack.c.h.b16 %v6901
        %v6981 = vunpack.c.l.b16 %v6902
        %v6982 = vunpack.c.h.b16 %v6902
        %v6983 = vunpack.c.l.b16 %v6903
        %v6984 = vunpack.c.h.b16 %v6903
        %v6985 = vunpack.c.l.b16 %v6904
        %v6986 = vunpack.c.h.b16 %v6904
        %v6987 = vunpack.c.l.b16 %v6905
        %v6988 = vunpack.c.h.b16 %v6905
        %v6989 = vunpack.c.l.b16 %v6906
        %v6990 = vunpack.c.h.b16 %v6906
        %v6991 = vunpack.c.l.b16 %v6907
        %v6992 = vunpack.c.h.b16 %v6907
        %v6993 = vunpack.c.l.b16 %v6908
        %v6994 = vunpack.c.h.b16 %v6908
        %v6995 = vunpack.c.l.b16 %v6909
        %v6996 = vunpack.c.h.b16 %v6909
        %v6997 = vunpack.c.l.b16 %v6910
        %v6998 = vunpack.c.h.b16 %v6910
        %v6999 = vunpack.c.l.b16 %v6911
        %v7000 = vunpack.c.h.b16 %v6911
        %v7001 = vunpack.c.l.b16 %v6912
        %v7002 = vunpack.c.h.b16 %v6912
        %v7003 = vunpack.c.l.b16 %v6913
        %v7004 = vunpack.c.h.b16 %v6913
        %v7005 = vunpack.c.l.b16 %v6914
        %v7006 = vunpack.c.h.b16 %v6914
        %v7007 = vunpack.c.l.b16 %v6915
        %v7008 = vunpack.c.h.b16 %v6915
        %v7009 = vunpack.c.l.b16 %v6916
        %v7010 = vunpack.c.h.b16 %v6916
        %v7011 = vunpack.c.l.b16 %v6917
        %v7012 = vunpack.c.h.b16 %v6917
        %v7013 = vunpack.c.l.b16 %v6918
        %v7014 = vunpack.c.h.b16 %v6918
        %v7015 = vunpack.c.l.b16 %v6919
        %v7016 = vunpack.c.h.b16 %v6919
        %v7017 = vunpack.c.l.b16 %v6920
        %v7018 = vunpack.c.h.b16 %v6920
        %v7019 = vunpack.c.l.b16 %v6921
        %v7020 = vunpack.c.h.b16 %v6921
        %v7021 = vunpack.c.l.b16 %v6922
        %v7022 = vunpack.c.h.b16 %v6922
        %v7023 = vpack.c.b16 %v6961, %v6959
        %v7024 = vpack.c.b16 %v6962, %v6960
        %v7025 = vpack.c.b16 %v6965, %v6963
        %v7026 = vpack.c.b16 %v6966, %v6964
        %v7027 = vpack.c.b16 %v6969, %v6967
        %v7028 = vpack.c.b16 %v6970, %v6968
        %v7029 = vpack.c.b16 %v6973, %v6971
        %v7030 = vpack.c.b16 %v6974, %v6972
        %v7031 = vpack.c.b16 %v6977, %v6975
        %v7032 = vpack.c.b16 %v6978, %v6976
        %v7033 = vpack.c.b16 %v6981, %v6979
        %v7034 = vpack.c.b16 %v6982, %v6980
        %v7035 = vpack.c.b16 %v6985, %v6983
        %v7036 = vpack.c.b16 %v6986, %v6984
        %v7037 = vpack.c.b16 %v6989, %v6987
        %v7038 = vpack.c.b16 %v6990, %v6988
        %v7039 = vpack.c.b16 %v6993, %v6991
        %v7040 = vpack.c.b16 %v6994, %v6992
        %v7041 = vpack.c.b16 %v6997, %v6995
        %v7042 = vpack.c.b16 %v6998, %v6996
        %v7043 = vpack.c.b16 %v7001, %v6999
        %v7044 = vpack.c.b16 %v7002, %v7000
        %v7045 = vpack.c.b16 %v7005, %v7003
        %v7046 = vpack.c.b16 %v7006, %v7004
        %v7047 = vpack.c.b16 %v7009, %v7007
        %v7048 = vpack.c.b16 %v7010, %v7008
        %v7049 = vpack.c.b16 %v7013, %v7011
        %v7050 = vpack.c.b16 %v7014, %v7012
        %v7051 = vpack.c.b16 %v7017, %v7015
        %v7052 = vpack.c.b16 %v7018, %v7016
        %v7053 = vpack.c.b16 %v7021, %v7019
        %v7054 = vpack.c.b16 %v7022, %v7020
        %7087 = vmatprep.subr.bf16.mxu0 %v7038
        %7088 = vmatpush1.bf16.msra.mxu0 %v7037
        %7089 = vmatprep.subr.bf16.mxu0 %v7036
        %7090 = vmatpush1.bf16.msra.mxu0 %v7035
        %7091 = vmatprep.subr.bf16.mxu0 %v7034
        %7092 = vmatpush1.bf16.msra.mxu0 %v7033
        %7093 = vmatprep.subr.bf16.mxu0 %v7032
        %7094 = vmatpush1.bf16.msra.mxu0 %v7031
        %7095 = vmatprep.subr.bf16.mxu0 %v7030
        %7096 = vmatpush1.bf16.msra.mxu0 %v7029
        %7097 = vmatprep.subr.bf16.mxu0 %v7028
        %7098 = vmatpush1.bf16.msra.mxu0 %v7027
        %7099 = vmatprep.subr.bf16.mxu0 %v7026
        %7100 = vmatpush1.bf16.msra.mxu0 %v7025
        %7101 = vmatprep.subr.bf16.mxu0 %v7024
        %7102 = vmatpush1.bf16.msra.mxu0 %v7023
        %7103 = vmatprep.subr.bf16.mxu0 %v7054
        %7104 = vmatpush2.bf16.msra.mxu0 %v7053
        %7105 = vmatprep.subr.bf16.mxu0 %v7052
        %7106 = vmatpush2.bf16.msra.mxu0 %v7051
        %7107 = vmatprep.subr.bf16.mxu0 %v7050
        %7108 = vmatpush2.bf16.msra.mxu0 %v7049
        %7109 = vmatprep.subr.bf16.mxu0 %v7048
        %7110 = vmatpush2.bf16.msra.mxu0 %v7047
        %7111 = vmatprep.subr.bf16.mxu0 %v7046
        %7112 = vmatpush2.bf16.msra.mxu0 %v7045
        %7113 = vmatprep.subr.bf16.mxu0 %v7044
        %7114 = vmatpush2.bf16.msra.mxu0 %v7043
        %7115 = vmatprep.subr.bf16.mxu0 %v7042
        %7116 = vmatpush2.bf16.msra.mxu0 %v7041
        %7117 = vmatprep.subr.bf16.mxu0 %v7040
        %7118 = vmatpush2.bf16.msra.mxu0 %v7039
        %7119 = vmatprep.mubr.bf16.mxu0 %v6924
        %7120 = vmatmul.mubr.bf16.gmra.mxu0 %v6923
        %v7121 = vpop.f32.mrf.mxu0
        %v7122 = vadd.f32 0.0, %v7121
        %v7123 = vpop.f32.mrf.mxu0
        %v7124 = vadd.f32 0.0, %v7123
        %v7125 = vpop.f32.mrf.mxu0
        %v7126 = vpop.f32.mrf.mxu0
        %7127 = vdwg.mxu0
        %v7128 = vadd.f32 %v6871, %v7122
        %v7129 = vadd.f32 %v6873, %v7124
        %v7130 = vld [vmem:[#allocation5 + $0x8] sm:$0x8]
        %v7131 = vld [vmem:[#allocation5 + $0xc] sm:$0x7]
        %v7134 = vunpack.c.l.b16 %v7130
        %v7135 = vunpack.c.l.b16 %v7131
        %v7136 = vpack.c.b16 %v7135, %v7134
        %v7138 = vshrl.u32 %v7136, 16
        %v7140 = vshll.u32 %v7136, 16
        %v7142 = vrot.slane %v7140, 1
        %v7143 = vor.u32 %v7138, %v7142
        %v7144 = vld [vmem:[%s43 + $0x300] sm:$0xff]
        %v7145 = vld [vmem:[%s43 + $0x308] sm:$0xff]
        %v7146 = vld [vmem:[%s43 + $0x310] sm:$0xff]
        %v7147 = vld [vmem:[%s43 + $0x318] sm:$0xff]
        %v7148 = vld [vmem:[%s43 + $0x320] sm:$0xff]
        %v7149 = vld [vmem:[%s43 + $0x328] sm:$0xff]
        %v7150 = vld [vmem:[%s43 + $0x330] sm:$0xff]
        %v7151 = vld [vmem:[%s43 + $0x338] sm:$0xff]
        %v7152 = vld [vmem:[%s43 + $0x340] sm:$0xff]
        %v7153 = vld [vmem:[%s43 + $0x348] sm:$0xff]
        %v7154 = vld [vmem:[%s43 + $0x350] sm:$0xff]
        %v7155 = vld [vmem:[%s43 + $0x358] sm:$0xff]
        %v7156 = vld [vmem:[%s43 + $0x360] sm:$0xff]
        %v7157 = vld [vmem:[%s43 + $0x368] sm:$0xff]
        %v7158 = vld [vmem:[%s43 + $0x370] sm:$0xff]
        %v7159 = vld [vmem:[%s43 + $0x378] sm:$0xff]
        %v7160 = vld [vmem:[%s43 + $0x380] sm:$0xff]
        %v7161 = vld [vmem:[%s43 + $0x388] sm:$0xff]
        %v7162 = vld [vmem:[%s43 + $0x390] sm:$0xff]
        %v7163 = vld [vmem:[%s43 + $0x398] sm:$0xff]
        %v7164 = vld [vmem:[%s43 + $0x3a0] sm:$0xff]
        %v7165 = vld [vmem:[%s43 + $0x3a8] sm:$0xff]
        %v7166 = vld [vmem:[%s43 + $0x3b0] sm:$0xff]
        %v7167 = vld [vmem:[%s43 + $0x3b8] sm:$0xff]
        %v7168 = vld [vmem:[%s43 + $0x3c0] sm:$0xff]
        %v7169 = vld [vmem:[%s43 + $0x3c8] sm:$0xff]
        %v7170 = vld [vmem:[%s43 + $0x3d0] sm:$0xff]
        %v7171 = vld [vmem:[%s43 + $0x3d8] sm:$0xff]
        %v7172 = vld [vmem:[%s43 + $0x3e0] sm:$0xff]
        %v7173 = vld [vmem:[%s43 + $0x3e8] sm:$0xff]
        %v7174 = vld [vmem:[%s43 + $0x3f0] sm:$0xff]
        %v7175 = vld [vmem:[%s43 + $0x3f8] sm:$0xff]
        %v7176 = vrot.slane %v7136, 3
        %v7177 = vrot.slane %v7143, 3
        %v7212 = vunpack.c.l.b16 %v7144
        %v7213 = vunpack.c.h.b16 %v7144
        %v7214 = vunpack.c.l.b16 %v7145
        %v7215 = vunpack.c.h.b16 %v7145
        %v7216 = vunpack.c.l.b16 %v7146
        %v7217 = vunpack.c.h.b16 %v7146
        %v7218 = vunpack.c.l.b16 %v7147
        %v7219 = vunpack.c.h.b16 %v7147
        %v7220 = vunpack.c.l.b16 %v7148
        %v7221 = vunpack.c.h.b16 %v7148
        %v7222 = vunpack.c.l.b16 %v7149
        %v7223 = vunpack.c.h.b16 %v7149
        %v7224 = vunpack.c.l.b16 %v7150
        %v7225 = vunpack.c.h.b16 %v7150
        %v7226 = vunpack.c.l.b16 %v7151
        %v7227 = vunpack.c.h.b16 %v7151
        %v7228 = vunpack.c.l.b16 %v7152
        %v7229 = vunpack.c.h.b16 %v7152
        %v7230 = vunpack.c.l.b16 %v7153
        %v7231 = vunpack.c.h.b16 %v7153
        %v7232 = vunpack.c.l.b16 %v7154
        %v7233 = vunpack.c.h.b16 %v7154
        %v7234 = vunpack.c.l.b16 %v7155
        %v7235 = vunpack.c.h.b16 %v7155
        %v7236 = vunpack.c.l.b16 %v7156
        %v7237 = vunpack.c.h.b16 %v7156
        %v7238 = vunpack.c.l.b16 %v7157
        %v7239 = vunpack.c.h.b16 %v7157
        %v7240 = vunpack.c.l.b16 %v7158
        %v7241 = vunpack.c.h.b16 %v7158
        %v7242 = vunpack.c.l.b16 %v7159
        %v7243 = vunpack.c.h.b16 %v7159
        %v7244 = vunpack.c.l.b16 %v7160
        %v7245 = vunpack.c.h.b16 %v7160
        %v7246 = vunpack.c.l.b16 %v7161
        %v7247 = vunpack.c.h.b16 %v7161
        %v7248 = vunpack.c.l.b16 %v7162
        %v7249 = vunpack.c.h.b16 %v7162
        %v7250 = vunpack.c.l.b16 %v7163
        %v7251 = vunpack.c.h.b16 %v7163
        %v7252 = vunpack.c.l.b16 %v7164
        %v7253 = vunpack.c.h.b16 %v7164
        %v7254 = vunpack.c.l.b16 %v7165
        %v7255 = vunpack.c.h.b16 %v7165
        %v7256 = vunpack.c.l.b16 %v7166
        %v7257 = vunpack.c.h.b16 %v7166
        %v7258 = vunpack.c.l.b16 %v7167
        %v7259 = vunpack.c.h.b16 %v7167
        %v7260 = vunpack.c.l.b16 %v7168
        %v7261 = vunpack.c.h.b16 %v7168
        %v7262 = vunpack.c.l.b16 %v7169
        %v7263 = vunpack.c.h.b16 %v7169
        %v7264 = vunpack.c.l.b16 %v7170
        %v7265 = vunpack.c.h.b16 %v7170
        %v7266 = vunpack.c.l.b16 %v7171
        %v7267 = vunpack.c.h.b16 %v7171
        %v7268 = vunpack.c.l.b16 %v7172
        %v7269 = vunpack.c.h.b16 %v7172
        %v7270 = vunpack.c.l.b16 %v7173
        %v7271 = vunpack.c.h.b16 %v7173
        %v7272 = vunpack.c.l.b16 %v7174
        %v7273 = vunpack.c.h.b16 %v7174
        %v7274 = vunpack.c.l.b16 %v7175
        %v7275 = vunpack.c.h.b16 %v7175
        %v7276 = vpack.c.b16 %v7214, %v7212
        %v7277 = vpack.c.b16 %v7215, %v7213
        %v7278 = vpack.c.b16 %v7218, %v7216
        %v7279 = vpack.c.b16 %v7219, %v7217
        %v7280 = vpack.c.b16 %v7222, %v7220
        %v7281 = vpack.c.b16 %v7223, %v7221
        %v7282 = vpack.c.b16 %v7226, %v7224
        %v7283 = vpack.c.b16 %v7227, %v7225
        %v7284 = vpack.c.b16 %v7230, %v7228
        %v7285 = vpack.c.b16 %v7231, %v7229
        %v7286 = vpack.c.b16 %v7234, %v7232
        %v7287 = vpack.c.b16 %v7235, %v7233
        %v7288 = vpack.c.b16 %v7238, %v7236
        %v7289 = vpack.c.b16 %v7239, %v7237
        %v7290 = vpack.c.b16 %v7242, %v7240
        %v7291 = vpack.c.b16 %v7243, %v7241
        %v7292 = vpack.c.b16 %v7246, %v7244
        %v7293 = vpack.c.b16 %v7247, %v7245
        %v7294 = vpack.c.b16 %v7250, %v7248
        %v7295 = vpack.c.b16 %v7251, %v7249
        %v7296 = vpack.c.b16 %v7254, %v7252
        %v7297 = vpack.c.b16 %v7255, %v7253
        %v7298 = vpack.c.b16 %v7258, %v7256
        %v7299 = vpack.c.b16 %v7259, %v7257
        %v7300 = vpack.c.b16 %v7262, %v7260
        %v7301 = vpack.c.b16 %v7263, %v7261
        %v7302 = vpack.c.b16 %v7266, %v7264
        %v7303 = vpack.c.b16 %v7267, %v7265
        %v7304 = vpack.c.b16 %v7270, %v7268
        %v7305 = vpack.c.b16 %v7271, %v7269
        %v7306 = vpack.c.b16 %v7274, %v7272
        %v7307 = vpack.c.b16 %v7275, %v7273
        %7340 = vmatprep.subr.bf16.mxu0 %v7291
        %7341 = vmatpush1.bf16.msra.mxu0 %v7290
        %7342 = vmatprep.subr.bf16.mxu0 %v7289
        %7343 = vmatpush1.bf16.msra.mxu0 %v7288
        %7344 = vmatprep.subr.bf16.mxu0 %v7287
        %7345 = vmatpush1.bf16.msra.mxu0 %v7286
        %7346 = vmatprep.subr.bf16.mxu0 %v7285
        %7347 = vmatpush1.bf16.msra.mxu0 %v7284
        %7348 = vmatprep.subr.bf16.mxu0 %v7283
        %7349 = vmatpush1.bf16.msra.mxu0 %v7282
        %7350 = vmatprep.subr.bf16.mxu0 %v7281
        %7351 = vmatpush1.bf16.msra.mxu0 %v7280
        %7352 = vmatprep.subr.bf16.mxu0 %v7279
        %7353 = vmatpush1.bf16.msra.mxu0 %v7278
        %7354 = vmatprep.subr.bf16.mxu0 %v7277
        %7355 = vmatpush1.bf16.msra.mxu0 %v7276
        %7356 = vmatprep.subr.bf16.mxu0 %v7307
        %7357 = vmatpush2.bf16.msra.mxu0 %v7306
        %7358 = vmatprep.subr.bf16.mxu0 %v7305
        %7359 = vmatpush2.bf16.msra.mxu0 %v7304
        %7360 = vmatprep.subr.bf16.mxu0 %v7303
        %7361 = vmatpush2.bf16.msra.mxu0 %v7302
        %7362 = vmatprep.subr.bf16.mxu0 %v7301
        %7363 = vmatpush2.bf16.msra.mxu0 %v7300
        %7364 = vmatprep.subr.bf16.mxu0 %v7299
        %7365 = vmatpush2.bf16.msra.mxu0 %v7298
        %7366 = vmatprep.subr.bf16.mxu0 %v7297
        %7367 = vmatpush2.bf16.msra.mxu0 %v7296
        %7368 = vmatprep.subr.bf16.mxu0 %v7295
        %7369 = vmatpush2.bf16.msra.mxu0 %v7294
        %7370 = vmatprep.subr.bf16.mxu0 %v7293
        %7371 = vmatpush2.bf16.msra.mxu0 %v7292
        %7372 = vmatprep.mubr.bf16.mxu0 %v7177
        %7373 = vmatmul.mubr.bf16.gmra.mxu0 %v7176
        %v7374 = vpop.f32.mrf.mxu0
        %v7375 = vadd.f32 0.0, %v7374
        %v7376 = vpop.f32.mrf.mxu0
        %v7377 = vadd.f32 0.0, %v7376
        %v7378 = vpop.f32.mrf.mxu0
        %v7379 = vpop.f32.mrf.mxu0
        %7380 = vdwg.mxu0
        %v7381 = vadd.f32 %v7128, %v7375
        %v7382 = vadd.f32 %v7129, %v7377
        %v7383 = vld [vmem:[#allocation5 + $0xc] sm:$0xf]
        %v7384 = vld [vmem:[%s43 + $0x400] sm:$0xff]
        %v7385 = vld [vmem:[%s43 + $0x408] sm:$0xff]
        %v7386 = vld [vmem:[%s43 + $0x410] sm:$0xff]
        %v7387 = vld [vmem:[%s43 + $0x418] sm:$0xff]
        %v7388 = vld [vmem:[%s43 + $0x420] sm:$0xff]
        %v7389 = vld [vmem:[%s43 + $0x428] sm:$0xff]
        %v7390 = vld [vmem:[%s43 + $0x430] sm:$0xff]
        %v7391 = vld [vmem:[%s43 + $0x438] sm:$0xff]
        %v7392 = vld [vmem:[%s43 + $0x440] sm:$0xff]
        %v7393 = vld [vmem:[%s43 + $0x448] sm:$0xff]
        %v7394 = vld [vmem:[%s43 + $0x450] sm:$0xff]
        %v7395 = vld [vmem:[%s43 + $0x458] sm:$0xff]
        %v7396 = vld [vmem:[%s43 + $0x460] sm:$0xff]
        %v7397 = vld [vmem:[%s43 + $0x468] sm:$0xff]
        %v7398 = vld [vmem:[%s43 + $0x470] sm:$0xff]
        %v7399 = vld [vmem:[%s43 + $0x478] sm:$0xff]
        %v7416 = vunpack.c.l.b16 %v7384
        %v7417 = vunpack.c.h.b16 %v7384
        %v7418 = vunpack.c.l.b16 %v7385
        %v7419 = vunpack.c.h.b16 %v7385
        %v7420 = vunpack.c.l.b16 %v7386
        %v7421 = vunpack.c.h.b16 %v7386
        %v7422 = vunpack.c.l.b16 %v7387
        %v7423 = vunpack.c.h.b16 %v7387
        %v7424 = vunpack.c.l.b16 %v7388
        %v7425 = vunpack.c.h.b16 %v7388
        %v7426 = vunpack.c.l.b16 %v7389
        %v7427 = vunpack.c.h.b16 %v7389
        %v7428 = vunpack.c.l.b16 %v7390
        %v7429 = vunpack.c.h.b16 %v7390
        %v7430 = vunpack.c.l.b16 %v7391
        %v7431 = vunpack.c.h.b16 %v7391
        %v7432 = vunpack.c.l.b16 %v7392
        %v7433 = vunpack.c.h.b16 %v7392
        %v7434 = vunpack.c.l.b16 %v7393
        %v7435 = vunpack.c.h.b16 %v7393
        %v7436 = vunpack.c.l.b16 %v7394
        %v7437 = vunpack.c.h.b16 %v7394
        %v7438 = vunpack.c.l.b16 %v7395
        %v7439 = vunpack.c.h.b16 %v7395
        %v7440 = vunpack.c.l.b16 %v7396
        %v7441 = vunpack.c.h.b16 %v7396
        %v7442 = vunpack.c.l.b16 %v7397
        %v7443 = vunpack.c.h.b16 %v7397
        %v7444 = vunpack.c.l.b16 %v7398
        %v7445 = vunpack.c.h.b16 %v7398
        %v7446 = vunpack.c.l.b16 %v7399
        %v7447 = vunpack.c.h.b16 %v7399
        %v7448 = vpack.c.b16 %v7418, %v7416
        %v7449 = vpack.c.b16 %v7419, %v7417
        %v7450 = vpack.c.b16 %v7422, %v7420
        %v7451 = vpack.c.b16 %v7423, %v7421
        %v7452 = vpack.c.b16 %v7426, %v7424
        %v7453 = vpack.c.b16 %v7427, %v7425
        %v7454 = vpack.c.b16 %v7430, %v7428
        %v7455 = vpack.c.b16 %v7431, %v7429
        %v7456 = vpack.c.b16 %v7434, %v7432
        %v7457 = vpack.c.b16 %v7435, %v7433
        %v7458 = vpack.c.b16 %v7438, %v7436
        %v7459 = vpack.c.b16 %v7439, %v7437
        %v7460 = vpack.c.b16 %v7442, %v7440
        %v7461 = vpack.c.b16 %v7443, %v7441
        %v7462 = vpack.c.b16 %v7446, %v7444
        %v7463 = vpack.c.b16 %v7447, %v7445
        %7480 = vmatprep.subr.bf16.mxu0 %v7463
        %7481 = vmatpush1.bf16.msra.mxu0 %v7462
        %7482 = vmatprep.subr.bf16.mxu0 %v7461
        %7483 = vmatpush1.bf16.msra.mxu0 %v7460
        %7484 = vmatprep.subr.bf16.mxu0 %v7459
        %7485 = vmatpush1.bf16.msra.mxu0 %v7458
        %7486 = vmatprep.subr.bf16.mxu0 %v7457
        %7487 = vmatpush1.bf16.msra.mxu0 %v7456
        %7488 = vmatprep.subr.bf16.mxu0 %v7455
        %7489 = vmatpush1.bf16.msra.mxu0 %v7454
        %7490 = vmatprep.subr.bf16.mxu0 %v7453
        %7491 = vmatpush1.bf16.msra.mxu0 %v7452
        %7492 = vmatprep.subr.bf16.mxu0 %v7451
        %7493 = vmatpush1.bf16.msra.mxu0 %v7450
        %7494 = vmatprep.subr.bf16.mxu0 %v7449
        %7495 = vmatpush1.bf16.msra.mxu0 %v7448
        %7496 = vmatprep.subr.bf16.mxu0 0
        %7497 = vmatpush2.bf16.msra.mxu0 0
        %7498 = vmatprep.subr.bf16.mxu0 0
        %7499 = vmatpush2.bf16.msra.mxu0 0
        %7500 = vmatprep.subr.bf16.mxu0 0
        %7501 = vmatpush2.bf16.msra.mxu0 0
        %7502 = vmatprep.subr.bf16.mxu0 0
        %7503 = vmatpush2.bf16.msra.mxu0 0
        %7504 = vmatprep.subr.bf16.mxu0 0
        %7505 = vmatpush2.bf16.msra.mxu0 0
        %7506 = vmatprep.subr.bf16.mxu0 0
        %7507 = vmatpush2.bf16.msra.mxu0 0
        %7508 = vmatprep.subr.bf16.mxu0 0
        %7509 = vmatpush2.bf16.msra.mxu0 0
        %7510 = vmatprep.subr.bf16.mxu0 0
        %7511 = vmatpush2.bf16.msra.mxu0 0
        %7512 = vmatprep.mubr.bf16.mxu0 0
        %7513 = vmatmul.mubr.bf16.gmra.mxu0 %v7383
        %v7514 = vpop.f32.mrf.mxu0
        %v7515 = vadd.f32 0.0, %v7514
        %v7516 = vpop.f32.mrf.mxu0
        %v7517 = vadd.f32 0.0, %v7516
        %v7518 = vpop.f32.mrf.mxu0
        %v7519 = vpop.f32.mrf.mxu0
        %7520 = vdwg.mxu0
        %v7521 = vadd.f32 %v7381, %v7515
        %v7522 = vadd.f32 %v7382, %v7517
        %v7523 = vld [vmem:[%s45] sm:$0x3]
        %v7525 = vlaneseq
        %v7526 = vshrl.u32 %v7525, 7
        %v7527 = vsub.s32 0, %v7526
        %v7528 = vrot.slane %v7523, %v7527
        %v7529 = vlaneseq
        %v7530 = vshrl.u32 %v7529, 7
        %v7531 = vsub.s32 1, %v7530
        %v7532 = vrot.slane %v7523, %v7531
        %v7535 = vadd.f32 %v7521, %v7528
        %v7536 = vadd.f32 %v7522, %v7532
        %vm7537 = vcmp.ge.f32.partialorder %v7535, 0.0
        %vm7538 = vcmp.ge.f32.partialorder %v7536, 0.0
        %v7539 = vmul.f32 %v7535, 0.1
        %v7540 = vmul.f32 %v7536, 0.1
        %v7541 = vsel %vm7537, %v7535, %v7539
        %v7542 = vsel %vm7538, %v7536, %v7540
        %7544 = vset.pattern.permute.xlu0 0
        %7545 = vperm.xlu0 %7544, %v5389
        %v7546 = vpop.permute.xlu0 %7545
        %v7548 = vmul.f32 %v7541, %v7546
        %v7549 = vmul.f32 %v7542, %v7546
        %v7550 = vsel %vm2627, %v7548, 0.0
        %v7551 = vrot.slane %v7550, 4
        %v7552 = vadd.f32 %v7550, %v7551
        %v7553 = vrot.slane %v7552, 2
        %v7554 = vadd.f32 %v7552, %v7553
        %v7555 = vrot.slane %v7554, 1
        %v7556 = vadd.f32 %v7554, %v7555
        %v7557 = vsel %vm2627, %v7549, 0.0
        %v7558 = vrot.slane %v7557, 4
        %v7559 = vadd.f32 %v7557, %v7558
        %v7560 = vrot.slane %v7559, 2
        %v7561 = vadd.f32 %v7559, %v7560
        %v7562 = vrot.slane %v7561, 1
        %v7563 = vadd.f32 %v7561, %v7562
        %v7564 = vmul.f32 %v7556, 0.25
        %v7565 = vmul.f32 %v7563, 0.25
        %v7566 = vld [vmem:[#allocation11] sm:$0xff]
        %v7567 = vld [vmem:[#allocation11 + $0x8] sm:$0xff]
        %v7568 = vld [vmem:[#allocation11 + $0x10] sm:$0xff]
        %v7569 = vld [vmem:[#allocation11 + $0x18] sm:$0xff]
        %v7570 = vld [vmem:[#allocation11 + $0x20] sm:$0xff]
        %v7571 = vld [vmem:[#allocation11 + $0x28] sm:$0xff]
        %v7572 = vld [vmem:[#allocation11 + $0x30] sm:$0xff]
        %v7573 = vld [vmem:[#allocation11 + $0x38] sm:$0xff]
        %v7574 = vld [vmem:[#allocation11 + $0x40] sm:$0xff]
        %v7575 = vld [vmem:[#allocation11 + $0x48] sm:$0xff]
        %v7576 = vld [vmem:[#allocation11 + $0x50] sm:$0xff]
        %v7577 = vld [vmem:[#allocation11 + $0x58] sm:$0xff]
        %v7578 = vld [vmem:[#allocation11 + $0x60] sm:$0xff]
        %v7579 = vld [vmem:[#allocation11 + $0x68] sm:$0xff]
        %v7580 = vld [vmem:[#allocation11 + $0x70] sm:$0xff]
        %v7581 = vld [vmem:[#allocation11 + $0x78] sm:$0xff]
        %v7582 = vld [vmem:[#allocation11 + $0x80] sm:$0xff]
        %v7583 = vld [vmem:[#allocation11 + $0x88] sm:$0xff]
        %v7584 = vld [vmem:[#allocation11 + $0x90] sm:$0xff]
        %v7585 = vld [vmem:[#allocation11 + $0x98] sm:$0xff]
        %v7586 = vld [vmem:[#allocation11 + $0xa0] sm:$0xff]
        %v7587 = vld [vmem:[#allocation11 + $0xa8] sm:$0xff]
        %v7588 = vld [vmem:[#allocation11 + $0xb0] sm:$0xff]
        %v7589 = vld [vmem:[#allocation11 + $0xb8] sm:$0xff]
        %v7590 = vld [vmem:[#allocation11 + $0xc0] sm:$0xff]
        %v7591 = vld [vmem:[#allocation11 + $0xc8] sm:$0xff]
        %v7592 = vld [vmem:[#allocation11 + $0xd0] sm:$0xff]
        %v7593 = vld [vmem:[#allocation11 + $0xd8] sm:$0xff]
        %v7594 = vld [vmem:[#allocation11 + $0xe0] sm:$0xff]
        %v7595 = vld [vmem:[#allocation11 + $0xe8] sm:$0xff]
        %v7596 = vld [vmem:[#allocation11 + $0xf0] sm:$0xff]
        %v7597 = vld [vmem:[#allocation11 + $0xf8] sm:$0xff]
        %v7598 = vld [vmem:[%s49] sm:$0x1]
        %7599 = vmatprep.subr.mxu0 0.0
        %7600 = vmatpush1.msra.mxu0 %v7581
        %7601 = vmatprep.subr.mxu0 0.0
        %7602 = vmatpush1.msra.mxu0 %v7580
        %7603 = vmatprep.subr.mxu0 0.0
        %7604 = vmatpush1.msra.mxu0 %v7579
        %7605 = vmatprep.subr.mxu0 0.0
        %7606 = vmatpush1.msra.mxu0 %v7578
        %7607 = vmatprep.subr.mxu0 0.0
        %7608 = vmatpush1.msra.mxu0 %v7577
        %7609 = vmatprep.subr.mxu0 0.0
        %7610 = vmatpush1.msra.mxu0 %v7576
        %7611 = vmatprep.subr.mxu0 0.0
        %7612 = vmatpush1.msra.mxu0 %v7575
        %7613 = vmatprep.subr.mxu0 0.0
        %7614 = vmatpush1.msra.mxu0 %v7574
        %7615 = vmatprep.subr.mxu0 0.0
        %7616 = vmatpush1.msra.mxu0 %v7573
        %7617 = vmatprep.subr.mxu0 0.0
        %7618 = vmatpush1.msra.mxu0 %v7572
        %7619 = vmatprep.subr.mxu0 0.0
        %7620 = vmatpush1.msra.mxu0 %v7571
        %7621 = vmatprep.subr.mxu0 0.0
        %7622 = vmatpush1.msra.mxu0 %v7570
        %7623 = vmatprep.subr.mxu0 0.0
        %7624 = vmatpush1.msra.mxu0 %v7569
        %7625 = vmatprep.subr.mxu0 0.0
        %7626 = vmatpush1.msra.mxu0 %v7568
        %7627 = vmatprep.subr.mxu0 0.0
        %7628 = vmatpush1.msra.mxu0 %v7567
        %7629 = vmatprep.subr.mxu0 0.0
        %7630 = vmatpush1.msra.mxu0 %v7566
        %7631 = vmatprep.subr.mxu0 0.0
        %7632 = vmatpush2.msra.mxu0 %v7597
        %7633 = vmatprep.subr.mxu0 0.0
        %7634 = vmatpush2.msra.mxu0 %v7596
        %7635 = vmatprep.subr.mxu0 0.0
        %7636 = vmatpush2.msra.mxu0 %v7595
        %7637 = vmatprep.subr.mxu0 0.0
        %7638 = vmatpush2.msra.mxu0 %v7594
        %7639 = vmatprep.subr.mxu0 0.0
        %7640 = vmatpush2.msra.mxu0 %v7593
        %7641 = vmatprep.subr.mxu0 0.0
        %7642 = vmatpush2.msra.mxu0 %v7592
        %7643 = vmatprep.subr.mxu0 0.0
        %7644 = vmatpush2.msra.mxu0 %v7591
        %7645 = vmatprep.subr.mxu0 0.0
        %7646 = vmatpush2.msra.mxu0 %v7590
        %7647 = vmatprep.subr.mxu0 0.0
        %7648 = vmatpush2.msra.mxu0 %v7589
        %7649 = vmatprep.subr.mxu0 0.0
        %7650 = vmatpush2.msra.mxu0 %v7588
        %7651 = vmatprep.subr.mxu0 0.0
        %7652 = vmatpush2.msra.mxu0 %v7587
        %7653 = vmatprep.subr.mxu0 0.0
        %7654 = vmatpush2.msra.mxu0 %v7586
        %7655 = vmatprep.subr.mxu0 0.0
        %7656 = vmatpush2.msra.mxu0 %v7585
        %7657 = vmatprep.subr.mxu0 0.0
        %7658 = vmatpush2.msra.mxu0 %v7584
        %7659 = vmatprep.subr.mxu0 0.0
        %7660 = vmatpush2.msra.mxu0 %v7583
        %7661 = vmatprep.subr.mxu0 0.0
        %7662 = vmatpush2.msra.mxu0 %v7582
        %7663 = vmatprep.mubr.f32.mxu0 %v7565
        %7664 = vmatmul.mubr.f32.gmra.mxu0 %v7564
        %v7665 = vpop.f32.mrf.mxu0
        %v7666 = vadd.f32 %v7598, %v7665
        %v7667 = vpop.f32.mrf.mxu0
        %7668 = vdwg.mxu0
        %v7669 = vxor.u32 %v7666, 2147483648
        %v7670 = vmul.f32 %v7669, 1.442695
        %v7671 = vpow.pop %v7670
        %v7672 = vadd.f32 %v7671, 1.0
        %v7673 = vrcp.pop %v7672
        %v7674 = vmul.f32 1.0, %v7673
        %v7675 = vmul.f32 %v7666, %v7674
        %v7676 = vld [vmem:[%s51] sm:$0xff]
        %v7677 = vld [vmem:[%s51 + $0x8] sm:$0xff]
        %v7678 = vld [vmem:[%s51 + $0x10] sm:$0xff]
        %v7679 = vld [vmem:[%s51 + $0x18] sm:$0xff]
        %v7680 = vld [vmem:[%s51 + $0x20] sm:$0xff]
        %v7681 = vld [vmem:[%s51 + $0x28] sm:$0xff]
        %v7682 = vld [vmem:[%s51 + $0x30] sm:$0xff]
        %v7683 = vld [vmem:[%s51 + $0x38] sm:$0xff]
        %v7684 = vld [vmem:[%s51 + $0x40] sm:$0xff]
        %v7685 = vld [vmem:[%s51 + $0x48] sm:$0xff]
        %v7686 = vld [vmem:[%s51 + $0x50] sm:$0xff]
        %v7687 = vld [vmem:[%s51 + $0x58] sm:$0xff]
        %v7688 = vld [vmem:[%s51 + $0x60] sm:$0xff]
        %v7689 = vld [vmem:[%s51 + $0x68] sm:$0xff]
        %v7690 = vld [vmem:[%s51 + $0x70] sm:$0xff]
        %v7691 = vld [vmem:[%s51 + $0x78] sm:$0xff]
        %v7692 = vld [vmem:[%s53] sm:$0x1]
        %7693 = vmatprep.subr.mxu0 0.0
        %7694 = vmatpush1.msra.mxu0 %v7691
        %7695 = vmatprep.subr.mxu0 0.0
        %7696 = vmatpush1.msra.mxu0 %v7690
        %7697 = vmatprep.subr.mxu0 0.0
        %7698 = vmatpush1.msra.mxu0 %v7689
        %7699 = vmatprep.subr.mxu0 0.0
        %7700 = vmatpush1.msra.mxu0 %v7688
        %7701 = vmatprep.subr.mxu0 0.0
        %7702 = vmatpush1.msra.mxu0 %v7687
        %7703 = vmatprep.subr.mxu0 0.0
        %7704 = vmatpush1.msra.mxu0 %v7686
        %7705 = vmatprep.subr.mxu0 0.0
        %7706 = vmatpush1.msra.mxu0 %v7685
        %7707 = vmatprep.subr.mxu0 0.0
        %7708 = vmatpush1.msra.mxu0 %v7684
        %7709 = vmatprep.subr.mxu0 0.0
        %7710 = vmatpush1.msra.mxu0 %v7683
        %7711 = vmatprep.subr.mxu0 0.0
        %7712 = vmatpush1.msra.mxu0 %v7682
        %7713 = vmatprep.subr.mxu0 0.0
        %7714 = vmatpush1.msra.mxu0 %v7681
        %7715 = vmatprep.subr.mxu0 0.0
        %7716 = vmatpush1.msra.mxu0 %v7680
        %7717 = vmatprep.subr.mxu0 0.0
        %7718 = vmatpush1.msra.mxu0 %v7679
        %7719 = vmatprep.subr.mxu0 0.0
        %7720 = vmatpush1.msra.mxu0 %v7678
        %7721 = vmatprep.subr.mxu0 0.0
        %7722 = vmatpush1.msra.mxu0 %v7677
        %7723 = vmatprep.subr.mxu0 0.0
        %7724 = vmatpush1.msra.mxu0 %v7676
        %7725 = vmatprep.subr.mxu0 0.0
        %7726 = vmatpush2.msra.mxu0 0.0
        %7727 = vmatprep.subr.mxu0 0.0
        %7728 = vmatpush2.msra.mxu0 0.0
        %7729 = vmatprep.subr.mxu0 0.0
        %7730 = vmatpush2.msra.mxu0 0.0
        %7731 = vmatprep.subr.mxu0 0.0
        %7732 = vmatpush2.msra.mxu0 0.0
        %7733 = vmatprep.subr.mxu0 0.0
        %7734 = vmatpush2.msra.mxu0 0.0
        %7735 = vmatprep.subr.mxu0 0.0
        %7736 = vmatpush2.msra.mxu0 0.0
        %7737 = vmatprep.subr.mxu0 0.0
        %7738 = vmatpush2.msra.mxu0 0.0
        %7739 = vmatprep.subr.mxu0 0.0
        %7740 = vmatpush2.msra.mxu0 0.0
        %7741 = vmatprep.subr.mxu0 0.0
        %7742 = vmatpush2.msra.mxu0 0.0
        %7743 = vmatprep.subr.mxu0 0.0
        %7744 = vmatpush2.msra.mxu0 0.0
        %7745 = vmatprep.subr.mxu0 0.0
        %7746 = vmatpush2.msra.mxu0 0.0
        %7747 = vmatprep.subr.mxu0 0.0
        %7748 = vmatpush2.msra.mxu0 0.0
        %7749 = vmatprep.subr.mxu0 0.0
        %7750 = vmatpush2.msra.mxu0 0.0
        %7751 = vmatprep.subr.mxu0 0.0
        %7752 = vmatpush2.msra.mxu0 0.0
        %7753 = vmatprep.subr.mxu0 0.0
        %7754 = vmatpush2.msra.mxu0 0.0
        %7755 = vmatprep.subr.mxu0 0.0
        %7756 = vmatpush2.msra.mxu0 0.0
        %7757 = vmatprep.mubr.f32.mxu0 0.0
        %7758 = vmatmul.mubr.f32.gmra.mxu0 %v7675
        %v7759 = vpop.f32.mrf.mxu0
        %v7760 = vadd.f32 %v7692, %v7759
        %v7761 = vpop.f32.mrf.mxu0
        %7762 = vdwg.mxu0
        %v7763 = vxor.u32 %v7760, 2147483648
        %v7764 = vmul.f32 %v7763, 1.442695
        %v7765 = vpow.pop %v7764
        %v7766 = vadd.f32 %v7765, 1.0
        %v7767 = vrcp.pop %v7766
        %v7768 = vmul.f32 1.0, %v7767
        %v7769 = vmul.f32 %v7760, %v7768
        %v7770 = vld [vmem:[#allocation13] sm:$0xff]
        %v7771 = vld [vmem:[#allocation13 + $0x8] sm:$0xff]
        %v7772 = vld [vmem:[#allocation13 + $0x10] sm:$0xff]
        %v7773 = vld [vmem:[#allocation13 + $0x18] sm:$0xff]
        %v7774 = vld [vmem:[#allocation13 + $0x20] sm:$0xff]
        %v7775 = vld [vmem:[#allocation13 + $0x28] sm:$0xff]
        %v7776 = vld [vmem:[#allocation13 + $0x30] sm:$0xff]
        %v7777 = vld [vmem:[#allocation13 + $0x38] sm:$0xff]
        %v7778 = vld [vmem:[%s57] sm:$0x1]
        %v7780 = vsel %vm3028, %v7769, 0
        %7782 = vmatprep.subr.mxu0 0.0
        %7783 = vmatpush1.msra.mxu0 0.0
        %7784 = vmatprep.subr.mxu0 0.0
        %7785 = vmatpush1.msra.mxu0 0.0
        %7786 = vmatprep.subr.mxu0 0.0
        %7787 = vmatpush1.msra.mxu0 0.0
        %7788 = vmatprep.subr.mxu0 0.0
        %7789 = vmatpush1.msra.mxu0 0.0
        %7790 = vmatprep.subr.mxu0 0.0
        %7791 = vmatpush1.msra.mxu0 0.0
        %7792 = vmatprep.subr.mxu0 0.0
        %7793 = vmatpush1.msra.mxu0 0.0
        %7794 = vmatprep.subr.mxu0 0.0
        %7795 = vmatpush1.msra.mxu0 0.0
        %7796 = vmatprep.subr.mxu0 0.0
        %7797 = vmatpush1.msra.mxu0 0.0
        %7798 = vmatprep.subr.mxu0 0.0
        %7799 = vmatpush1.msra.mxu0 %v7777
        %7800 = vmatprep.subr.mxu0 0.0
        %7801 = vmatpush1.msra.mxu0 %v7776
        %7802 = vmatprep.subr.mxu0 0.0
        %7803 = vmatpush1.msra.mxu0 %v7775
        %7804 = vmatprep.subr.mxu0 0.0
        %7805 = vmatpush1.msra.mxu0 %v7774
        %7806 = vmatprep.subr.mxu0 0.0
        %7807 = vmatpush1.msra.mxu0 %v7773
        %7808 = vmatprep.subr.mxu0 0.0
        %7809 = vmatpush1.msra.mxu0 %v7772
        %7810 = vmatprep.subr.mxu0 0.0
        %7811 = vmatpush1.msra.mxu0 %v7771
        %7812 = vmatprep.subr.mxu0 0.0
        %7813 = vmatpush1.msra.mxu0 %v7770
        %7814 = vmatprep.subr.mxu0 0.0
        %7815 = vmatpush2.msra.mxu0 0.0
        %7816 = vmatprep.subr.mxu0 0.0
        %7817 = vmatpush2.msra.mxu0 0.0
        %7818 = vmatprep.subr.mxu0 0.0
        %7819 = vmatpush2.msra.mxu0 0.0
        %7820 = vmatprep.subr.mxu0 0.0
        %7821 = vmatpush2.msra.mxu0 0.0
        %7822 = vmatprep.subr.mxu0 0.0
        %7823 = vmatpush2.msra.mxu0 0.0
        %7824 = vmatprep.subr.mxu0 0.0
        %7825 = vmatpush2.msra.mxu0 0.0
        %7826 = vmatprep.subr.mxu0 0.0
        %7827 = vmatpush2.msra.mxu0 0.0
        %7828 = vmatprep.subr.mxu0 0.0
        %7829 = vmatpush2.msra.mxu0 0.0
        %7830 = vmatprep.subr.mxu0 0.0
        %7831 = vmatpush2.msra.mxu0 0.0
        %7832 = vmatprep.subr.mxu0 0.0
        %7833 = vmatpush2.msra.mxu0 0.0
        %7834 = vmatprep.subr.mxu0 0.0
        %7835 = vmatpush2.msra.mxu0 0.0
        %7836 = vmatprep.subr.mxu0 0.0
        %7837 = vmatpush2.msra.mxu0 0.0
        %7838 = vmatprep.subr.mxu0 0.0
        %7839 = vmatpush2.msra.mxu0 0.0
        %7840 = vmatprep.subr.mxu0 0.0
        %7841 = vmatpush2.msra.mxu0 0.0
        %7842 = vmatprep.subr.mxu0 0.0
        %7843 = vmatpush2.msra.mxu0 0.0
        %7844 = vmatprep.subr.mxu0 0.0
        %7845 = vmatpush2.msra.mxu0 0.0
        %7846 = vmatprep.mubr.f32.mxu0 0.0
        %7847 = vmatmul.mubr.f32.gmra.mxu0 %v7780
        %v7848 = vpop.f32.mrf.mxu0
        %v7849 = vadd.f32 %v7778, %v7848
        %v7850 = vpop.f32.mrf.mxu0
        %7851 = vdwg.mxu0
        %7852 = vst [vmem:[%s942] sm:$0x1] %v7849
        %s7853 = sand.u32 %s701, 1
        %s7854 = scalar_lea.sflag [#allocation10], %s7853
        %s7855 = sand.u32 %s701, 1
        %s7856 = scalar_lea.vmem [#allocation14], %s7855
        // Predicated region
        $region149: #{hyperspectral_cnn_forward.1} parent=135 // pred_check
          %p7857 = pneg %p711
        $region150: #{hyperspectral_cnn_forward.1} parent=135 // pred_check_branch
          %7859 = sbr.rel (%p7857) target = $region152
        $region151: #{hyperspectral_cnn_forward.1} parent=135 // pred_region
          %s7861 = ssub.s32 16, 16
          %7862 = vsyncadd %s7854, %s7861
          %s7863 = smul.addr %s79, 16
          %s7864 = scalar_lea.hbm %s59, %s7863
          %s7866 = sshll.u32 %s7856, 4
          %s7867 = int_to_ptr.vmem [resolvable:$true] %s7866
          %7869 = dma.vmem_to_hbm [thread:$0]  %s7867, 16, %s7864, %s7854
        $region152: #{hyperspectral_cnn_forward.1} parent=135 // pred_fallthru
          _
      $region136: #{hyperspectral_cnn_forward.1} parent=5 // pred_fallthru
        _
      %p7870 = scmp.le.s32.totalorder 2, %s74
      // Predicated region
      $region153: #{hyperspectral_cnn_forward.1} parent=5 // pred_check
        %p7871 = pneg %p7870
      $region154: #{hyperspectral_cnn_forward.1} parent=5 // pred_check_branch
        %7873 = sbr.rel (%p7871) target = $region156
      $region155: #{hyperspectral_cnn_forward.1} parent=5 // pred_region
        %s7874 = ssub.s32 %s74, 2
        // Predicated region
        $region157: #{hyperspectral_cnn_forward.1} parent=155 // pred_check
          %p7875 = pneg %p717
        $region158: #{hyperspectral_cnn_forward.1} parent=155 // pred_check_branch
          %7877 = sbr.rel (%p7875) target = $region160
        $region159: #{hyperspectral_cnn_forward.1} parent=155 // pred_region
          %s7878 = sand.u32 %s702, 1
          %s7879 = scalar_lea.sflag [#allocation10], %s7878
          %s7880 = sand.u32 %s702, 1
          %s7881 = scalar_lea.vmem [#allocation14], %s7880
          %7882 = dma.done %s7879, 16
        $region160: #{hyperspectral_cnn_forward.1} parent=155 // pred_fallthru
          _
      $region156: #{hyperspectral_cnn_forward.1} parent=5 // pred_fallthru
        _
    $region6: #{hyperspectral_cnn_forward.1} parent=1 // loop_footer
      %s78 = sadd.s32 1, %s74
    $region7: #{hyperspectral_cnn_forward.1} parent=1 // loop_footer_branch
      %73 = sbr.rel target = $region3
    $region8: #{hyperspectral_cnn_forward.1} parent=1 // loop_exit
      _
    %7883 = vsyncpa [#allocation9], 1
    %s7884 = scalar_lea.sflag [#allocation9], 1
    %7885 = vsyncpa %s7884, 1
    %7886 = vsyncpa [#allocation12], 1
    %7887 = vsyncpa [#allocation10], 1
    %s7888 = scalar_lea.sflag [#allocation10], 1
    %7889 = vsyncpa %s7888, 1

</llo_original>
